<compile_context>
chip_gen: v6e
topology: v6e:2x2x1
jax: 0.10.0
libtpu: 0.0.40
codegen_flags: <defaults>
</compile_context>

<pallas_src>
import functools
import itertools

import numpy as np
import jax
import jax.numpy as jnp
from jax.experimental import pallas as pl
from jax.experimental.pallas import tpu as pltpu


def _conv_out(n, k, s):
    return (n - k) // s + 1


def _round_up(x, m):
    return -(-x // m) * m


# ----------------------------------------------------------------------------
# Fused ConvDQN forward kernel: one grid step == one image.
# ----------------------------------------------------------------------------
def _convdqn_kernel(x8_ref, w1_ref, b1_ref, w2_ref, b2_ref, w3_ref, b3_ref,
                    wf1_ref, bf1_ref, wf2_ref, bf2_ref, wf3_ref, bf3_ref,
                    o_ref, y1_ref, y2_ref, y3_ref,
                    *, na, nd, h2, w2, h3, w3):
    cdt = w1_ref.dtype  # matmul compute dtype (bf16 by default)

    # conv1: 8x8 stride-4 conv == 2x2 stride-1 conv over the s2d(8) input.
    # Row `a` of y1 holds conv1 outputs for rows {2a, 2a+1} x cols {2d, 2d+1}
    # packed into 4*32 lanes (parity-grouped), so conv2's stride-2 access
    # below is unit-stride.
    for a in range(na):
        acc = None
        for p in range(2):
            for q in range(2):
                v = x8_ref[0, a + p, q:q + nd, :].astype(cdt)      # (nd, 8*8*C)
                t = jnp.dot(v, w1_ref[p * 2 + q],
                            preferred_element_type=jnp.float32)    # (nd, 128)
                acc = t if acc is None else acc + t
        y1_ref[a] = jnp.maximum(acc + b1_ref[...], 0.0)

    # conv2: 4x4 stride-2 conv == 2x2 stride-1 conv over the parity-grouped
    # conv1 output.
    for e in range(h2):
        acc = None
        for p in range(2):
            for q in range(2):
                v = y1_ref[e + p, q:q + w2, :].astype(cdt)         # (w2, 128)
                t = jnp.dot(v, w2_ref[p * 2 + q],
                            preferred_element_type=jnp.float32)    # (w2, 64)
                acc = t if acc is None else acc + t
        y2_ref[e] = jnp.maximum(acc + b2_ref[...], 0.0)

    # conv3: plain 3x3 stride-1 conv.
    for e in range(h3):
        acc = None
        for i in range(3):
            for j in range(3):
                v = y2_ref[e + i, j:j + w3, :].astype(cdt)         # (w3, 64)
                t = jnp.dot(v, w3_ref[i * 3 + j],
                            preferred_element_type=jnp.float32)    # (w3, 64)
                acc = t if acc is None else acc + t
        y3_ref[e] = jnp.maximum(acc + b3_ref[...], 0.0)

    # FC head. fc1's weight rows were regrouped per spatial position at pack
    # time, so torch's NCHW flatten is just a sum over positions here.
    acc = None
    for e in range(h3):
        for g in range(w3):
            v = y3_ref[e, g:g + 1, :].astype(cdt)                  # (1, 64)
            t = jnp.dot(v, wf1_ref[e * w3 + g],
                        preferred_element_type=jnp.float32)        # (1, 128)
            acc = t if acc is None else acc + t
    h = jnp.maximum(acc + bf1_ref[...], 0.0).astype(cdt)           # (1, 128)
    h = jnp.dot(h, wf2_ref[...], preferred_element_type=jnp.float32)
    h = jnp.maximum(h + bf2_ref[...], 0.0).astype(cdt)             # (1, 256)
    qv = jnp.dot(h, wf3_ref[...], preferred_element_type=jnp.float32)
    qv = qv + bf3_ref[...]                                         # (1, Npad)
    o_ref[...] = qv.reshape(1, 1, -1).astype(o_ref.dtype)


def _fused_forward(x8, packed):
    g = packed["geom"]
    B, nA, nD, F1 = x8.shape
    n_pad = packed["wf3"].shape[1]

    kernel = functools.partial(
        _convdqn_kernel, na=g["na"], nd=g["nd"],
        h2=g["h2"], w2=g["w2"], h3=g["h3"], w3=g["w3"])

    def full(shape):  # whole array, resident across the grid
        return pl.BlockSpec(shape, lambda b, _n=len(shape): (0,) * _n)

    out = pl.pallas_call(
        kernel,
        out_shape=jax.ShapeDtypeStruct((B, 1, n_pad), jnp.float32),
        grid=(B,),
        in_specs=[
            pl.BlockSpec((1, nA, nD, F1), lambda b: (b, 0, 0, 0)),
            full(packed["w1"].shape), full(packed["b1"].shape),
            full(packed["w2"].shape), full(packed["b2"].shape),
            full(packed["w3"].shape), full(packed["b3"].shape),
            full(packed["wf1"].shape), full(packed["bf1"].shape),
            full(packed["wf2"].shape), full(packed["bf2"].shape),
            full(packed["wf3"].shape), full(packed["bf3"].shape),
        ],
        out_specs=pl.BlockSpec((1, 1, n_pad), lambda b: (b, 0, 0)),
        scratch_shapes=[
            pltpu.VMEM((g["na"], g["nd"], 4 * 32), jnp.float32),   # conv1 out
            pltpu.VMEM((g["h2"], g["w2"], 64), jnp.float32),       # conv2 out
            pltpu.VMEM((g["h3"], g["w3"], 64), jnp.float32),       # conv3 out
        ],
        compiler_params=pltpu.CompilerParams(
            dimension_semantics=("parallel",)),
    )(x8, packed["w1"], packed["b1"], packed["w2"], packed["b2"],
      packed["w3"], packed["b3"], packed["wf1"], packed["bf1"],
      packed["wf2"], packed["bf2"], packed["wf3"], packed["bf3"])
    return out.reshape(B, n_pad)[:, :g["out_dim"]]


def convdqn_forward(state_nchw, packed):
    """state: (B, C, H, W) float32 -> q-values (B, output_dim) float32."""
    g = packed["geom"]
    B = state_nchw.shape[0]
    C, H, W, Hp, Wp = g["C"], g["H"], g["W"], g["Hp"], g["Wp"]
    # One-time-per-call layout plumbing (tiny tensors): NCHW -> NHWC, zero-pad
    # to a multiple of 8, space-to-depth(8).  Not expressible via BlockSpec.
    x = jnp.transpose(state_nchw, (0, 2, 3, 1)).astype(jnp.float32)
    x = jnp.pad(x, ((0, 0), (0, Hp - H), (0, Wp - W), (0, 0)))
    x = x.reshape(B, Hp // 8, 8, Wp // 8, 8, C)
    x = jnp.transpose(x, (0, 1, 3, 2, 4, 5)).reshape(B, Hp // 8, Wp // 8,
                                                     8 * 8 * C)
    return _fused_forward(x, packed)


# ----------------------------------------------------------------------------
# ConvDQN parameters (torch layout) + one-time packing
# ----------------------------------------------------------------------------
def init_params(key, input_dim, output_dim):
    """Parameters in PyTorch layout (conv OIHW, linear stored as (in, out))."""
    C, H, W = input_dim
    h1, w1 = _conv_out(H, 8, 4), _conv_out(W, 8, 4)
    h2, w2 = _conv_out(h1, 4, 2), _conv_out(w1, 4, 2)
    h3, w3 = _conv_out(h2, 3, 1), _conv_out(w2, 3, 1)
    fc_input_dim = 64 * h3 * w3  # == ConvDQN.feature_size()

    ks = jax.random.split(key, 12)

    def lin_init(kw_, kb_, fan_in, shape_w, shape_b):
        s = 1.0 / jnp.sqrt(fan_in)
        return (jax.random.uniform(kw_, shape_w, jnp.float32, -s, s),
                jax.random.uniform(kb_, shape_b, jnp.float32, -s, s))

    p = {}
    p["c1_w"], p["c1_b"] = lin_init(ks[0], ks[1], C * 8 * 8, (32, C, 8, 8), (32,))
    p["c2_w"], p["c2_b"] = lin_init(ks[2], ks[3], 32 * 4 * 4, (64, 32, 4, 4), (64,))
    p["c3_w"], p["c3_b"] = lin_init(ks[4], ks[5], 64 * 3 * 3, (64, 64, 3, 3), (64,))
    p["f1_w"], p["f1_b"] = lin_init(ks[6], ks[7], fc_input_dim,
                                    (fc_input_dim, 128), (128,))
    p["f2_w"], p["f2_b"] = lin_init(ks[8], ks[9], 128, (128, 256), (256,))
    p["f3_w"], p["f3_b"] = lin_init(ks[10], ks[11], 256,
                                    (256, output_dim), (output_dim,))
    return p, fc_input_dim


def prepare_params(p, input_dim, compute_dtype=jnp.bfloat16):
    """One-time weight repacking for the fused kernel (all stride handling is
    baked in here).  compute_dtype=jnp.float32 gives tighter numerics."""
    C, H, W = input_dim
    h1, w1 = _conv_out(H, 8, 4), _conv_out(W, 8, 4)
    h2, w2 = _conv_out(h1, 4, 2), _conv_out(w1, 4, 2)
    h3, w3 = _conv_out(h2, 3, 1), _conv_out(w2, 3, 1)
    # TODO(synk): generalize to odd conv1 output sizes (needs one extra padded
    # parity row/column); DQN-style inputs used here give even sizes.
    assert h1 % 2 == 0 and w1 % 2 == 0, "conv1 output H/W must be even"
    na, nd = h1 // 2, w1 // 2
    Hp, Wp = 8 * (na + 1), 8 * (nd + 1)
    out_dim = p["f3_w"].shape[1]
    n_pad = _round_up(out_dim, 128)

    # conv1 weights: (4[p,q], 8*8*C, 4*32) — columns grouped by output parity
    # (r,t); rows indexed by the s2d(8) feature (rho, tau, c).
    c1 = np.asarray(p["c1_w"], np.float32)            # (32, C, 8, 8)
    w1h = np.zeros((4, 8 * 8 * C, 4 * 32), np.float32)
    for pp, q, r, t in itertools.product(range(2), repeat=4):
        col = (2 * r + t) * 32
        for rho in range(8):
            i = 8 * pp + rho - 4 * r
            if not 0 <= i < 8:
                continue
            for tau in range(8):
                j = 8 * q + tau - 4 * t
                if not 0 <= j < 8:
                    continue
                f0 = (rho * 8 + tau) * C
                w1h[pp * 2 + q, f0:f0 + C, col:col + 32] = c1[:, :, i, j].T
    b1h = np.tile(np.asarray(p["c1_b"], np.float32).reshape(1, 32), (1, 4))

    # conv2 weights: (4[p,q], 4*32, 64) — rows match conv1's parity-grouped
    # lane layout.
    c2 = np.asarray(p["c2_w"], np.float32)            # (64, 32, 4, 4)
    w2h = np.zeros((4, 4 * 32, 64), np.float32)
    for pp, q, r, t in itertools.product(range(2), repeat=4):
        w2h[pp * 2 + q, (2 * r + t) * 32:(2 * r + t + 1) * 32, :] = (
            c2[:, :, 2 * pp + r, 2 * q + t].T)

    # conv3 weights: (9[i,j], 64, 64).
    c3 = np.asarray(p["c3_w"], np.float32)            # (64, 64, 3, 3)
    w3h = np.stack([c3[:, :, i, j].T for i in range(3) for j in range(3)], 0)

    # fc1 weights regrouped per spatial position: (h3*w3, 64, 128); matches
    # torch's NCHW flatten order feats[ch*h3*w3 + s].
    f1 = np.asarray(p["f1_w"], np.float32)            # (64*h3*w3, 128)
    wf1 = f1.reshape(64, h3 * w3, f1.shape[1]).transpose(1, 0, 2)

    # fc3 padded to a lane-dense width.
    wf3 = np.zeros((p["f3_w"].shape[0], n_pad), np.float32)
    wf3[:, :out_dim] = np.asarray(p["f3_w"], np.float32)
    bf3 = np.zeros((1, n_pad), np.float32)
    bf3[0, :out_dim] = np.asarray(p["f3_b"], np.float32)

    cvt = lambda a: jnp.asarray(a, dtype=compute_dtype)
    fb = lambda a: jnp.asarray(a, dtype=jnp.float32).reshape(1, -1)
    return {
        "geom": dict(C=C, H=H, W=W, Hp=Hp, Wp=Wp, na=na, nd=nd,
                     h2=h2, w2=w2, h3=h3, w3=w3, out_dim=out_dim),
        "w1": cvt(w1h), "b1": fb(b1h),
        "w2": cvt(w2h), "b2": fb(p["c2_b"]),
        "w3": cvt(w3h), "b3": fb(p["c3_b"]),
        "wf1": cvt(wf1), "bf1": fb(p["f1_b"]),
        "wf2": cvt(np.asarray(p["f2_w"], np.float32)), "bf2": fb(p["f2_b"]),
        "wf3": cvt(wf3), "bf3": fb(bf3),
    }


# ----------------------------------------------------------------------------
# Pure-JAX reference (torch layout/semantics, for the correctness check only)
# ----------------------------------------------------------------------------
def _ref_forward(state, p):
    def conv(x, w, b, s):
        y = jax.lax.conv_general_dilated(
            x, w, (s, s), "VALID",
            dimension_numbers=("NCHW", "OIHW", "NCHW"))
        return jax.nn.relu(y + b[None, :, None, None])

    x = conv(state, p["c1_w"], p["c1_b"], 4)
    x = conv(x, p["c2_w"], p["c2_b"], 2)
    x = conv(x, p["c3_w"], p["c3_b"], 1)
    feats = x.reshape(x.shape[0], -1)            # NCHW flatten, as in torch
    h = jax.nn.relu(feats @ p["f1_w"] + p["f1_b"])
    h = jax.nn.relu(h @ p["f2_w"] + p["f2_b"])
    return h @ p["f3_w"] + p["f3_b"]


if __name__ == "__main__":
    # 44x44 input gives a 2x2x64 final feature map so the NHWC<->NCHW flatten
    # permutation is exercised; batch=2, 4 input channels, 6 actions.
    input_dim = (4, 44, 44)
    output_dim = 6
    batch = 2

    key = jax.random.PRNGKey(0)
    k_param, k_state = jax.random.split(key)
    params, fc_input_dim = init_params(k_param, input_dim, output_dim)
    packed = prepare_params(params, input_dim, compute_dtype=jnp.bfloat16)
    state = jax.random.normal(k_state, (batch,) + input_dim, dtype=jnp.float32)

    fwd = jax.jit(lambda s: convdqn_forward(s, packed))
    q = jax.block_until_ready(fwd(state))
    q_ref = jax.block_until_ready(_ref_forward(state, params))

    assert q.shape == (batch, output_dim)
    # bf16 weights/activation casts with f32 accumulation: loose tolerance.
    # (compute_dtype=jnp.float32 passes at 2e-3.)
    assert jnp.allclose(q, q_ref, atol=5e-2, rtol=5e-2), (q, q_ref)
    print("KERNEL_OK")
</pallas_src>

<mosaic_0001>
module attributes {stable_mosaic.version = 11 : i64} {
  func.func @_convdqn_kernel(%arg0: i32, %arg1: memref<1x6x6x256xf32, #tpu.memory_space<vmem>>, %arg2: memref<4x256x128xbf16, #tpu.memory_space<vmem>>, %arg3: memref<1x128xf32, #tpu.memory_space<vmem>>, %arg4: memref<4x128x64xbf16, #tpu.memory_space<vmem>>, %arg5: memref<1x64xf32, #tpu.memory_space<vmem>>, %arg6: memref<9x64x64xbf16, #tpu.memory_space<vmem>>, %arg7: memref<1x64xf32, #tpu.memory_space<vmem>>, %arg8: memref<4x64x128xbf16, #tpu.memory_space<vmem>>, %arg9: memref<1x128xf32, #tpu.memory_space<vmem>>, %arg10: memref<128x256xbf16, #tpu.memory_space<vmem>>, %arg11: memref<1x256xf32, #tpu.memory_space<vmem>>, %arg12: memref<256x128xbf16, #tpu.memory_space<vmem>>, %arg13: memref<1x128xf32, #tpu.memory_space<vmem>>, %arg14: memref<1x1x128xf32, #tpu.memory_space<vmem>>, %arg15: memref<5x5x128xf32, #tpu.memory_space<vmem>>, %arg16: memref<4x4x64xf32, #tpu.memory_space<vmem>>, %arg17: memref<2x2x64xf32, #tpu.memory_space<vmem>>) attributes {dimension_semantics = [#tpu.dimension_semantics<parallel>], iteration_bounds = array<i64: 2>, scalar_prefetch = 0 : i64, scratch_operands = 3 : i64, tpu.core_type = #tpu.core_type<tc>, window_params = [{transform_indices = @transform_0, window_bounds = array<i64: 1, 6, 6, 256>}, {pipeline_mode = #tpu.pipeline_mode<synchronous>, transform_indices = @transform_1, window_bounds = array<i64: 4, 256, 128>}, {pipeline_mode = #tpu.pipeline_mode<synchronous>, transform_indices = @transform_2, window_bounds = array<i64: 1, 128>}, {pipeline_mode = #tpu.pipeline_mode<synchronous>, transform_indices = @transform_3, window_bounds = array<i64: 4, 128, 64>}, {pipeline_mode = #tpu.pipeline_mode<synchronous>, transform_indices = @transform_4, window_bounds = array<i64: 1, 64>}, {pipeline_mode = #tpu.pipeline_mode<synchronous>, transform_indices = @transform_5, window_bounds = array<i64: 9, 64, 64>}, {pipeline_mode = #tpu.pipeline_mode<synchronous>, transform_indices = @transform_6, window_bounds = array<i64: 1, 64>}, {pipeline_mode = #tpu.pipeline_mode<synchronous>, transform_indices = @transform_7, window_bounds = array<i64: 4, 64, 128>}, {pipeline_mode = #tpu.pipeline_mode<synchronous>, transform_indices = @transform_8, window_bounds = array<i64: 1, 128>}, {pipeline_mode = #tpu.pipeline_mode<synchronous>, transform_indices = @transform_9, window_bounds = array<i64: 128, 256>}, {pipeline_mode = #tpu.pipeline_mode<synchronous>, transform_indices = @transform_10, window_bounds = array<i64: 1, 256>}, {pipeline_mode = #tpu.pipeline_mode<synchronous>, transform_indices = @transform_11, window_bounds = array<i64: 256, 128>}, {pipeline_mode = #tpu.pipeline_mode<synchronous>, transform_indices = @transform_12, window_bounds = array<i64: 1, 128>}, {transform_indices = @transform_13, window_bounds = array<i64: 1, 1, 128>}]} {
    %c0 = arith.constant 0 : index
    %c0_0 = arith.constant 0 : index
    %c0_1 = arith.constant 0 : index
    %c0_2 = arith.constant 0 : index
    %0 = vector.load %arg1[%c0, %c0_0, %c0_1, %c0_2] : memref<1x6x6x256xf32, #tpu.memory_space<vmem>>, vector<1x1x5x256xf32>
    %1 = vector.shape_cast %0 : vector<1x1x5x256xf32> to vector<5x256xf32>
    %2 = arith.truncf %1 : vector<5x256xf32> to vector<5x256xbf16>
    %c0_3 = arith.constant 0 : index
    %c0_4 = arith.constant 0 : index
    %c0_5 = arith.constant 0 : index
    %3 = vector.load %arg2[%c0_3, %c0_4, %c0_5] : memref<4x256x128xbf16, #tpu.memory_space<vmem>>, vector<1x256x128xbf16>
    %4 = vector.shape_cast %3 : vector<1x256x128xbf16> to vector<256x128xbf16>
    %cst = arith.constant dense<0.000000e+00> : vector<5x128xf32>
    %5 = tpu.matmul %2, %4, %cst {dimension_numbers = #tpu.dot_dimension_numbers<[1], [0], [0], [1], [0, 0, 1, 1], [], []>} : vector<5x256xbf16>, vector<256x128xbf16>, vector<5x128xf32> -> vector<5x128xf32>
    %c0_6 = arith.constant 0 : index
    %c0_7 = arith.constant 0 : index
    %c1 = arith.constant 1 : index
    %c0_8 = arith.constant 0 : index
    %6 = vector.load %arg1[%c0_6, %c0_7, %c1, %c0_8] : memref<1x6x6x256xf32, #tpu.memory_space<vmem>>, vector<1x1x5x256xf32>
    %7 = vector.shape_cast %6 : vector<1x1x5x256xf32> to vector<5x256xf32>
    %8 = arith.truncf %7 : vector<5x256xf32> to vector<5x256xbf16>
    %c1_9 = arith.constant 1 : index
    %c0_10 = arith.constant 0 : index
    %c0_11 = arith.constant 0 : index
    %9 = vector.load %arg2[%c1_9, %c0_10, %c0_11] : memref<4x256x128xbf16, #tpu.memory_space<vmem>>, vector<1x256x128xbf16>
    %10 = vector.shape_cast %9 : vector<1x256x128xbf16> to vector<256x128xbf16>
    %cst_12 = arith.constant dense<0.000000e+00> : vector<5x128xf32>
    %11 = tpu.matmul %8, %10, %cst_12 {dimension_numbers = #tpu.dot_dimension_numbers<[1], [0], [0], [1], [0, 0, 1, 1], [], []>} : vector<5x256xbf16>, vector<256x128xbf16>, vector<5x128xf32> -> vector<5x128xf32>
    %12 = arith.addf %5, %11 : vector<5x128xf32>
    %c0_13 = arith.constant 0 : index
    %c1_14 = arith.constant 1 : index
    %c0_15 = arith.constant 0 : index
    %c0_16 = arith.constant 0 : index
    %13 = vector.load %arg1[%c0_13, %c1_14, %c0_15, %c0_16] : memref<1x6x6x256xf32, #tpu.memory_space<vmem>>, vector<1x1x5x256xf32>
    %14 = vector.shape_cast %13 : vector<1x1x5x256xf32> to vector<5x256xf32>
    %15 = arith.truncf %14 : vector<5x256xf32> to vector<5x256xbf16>
    %c2 = arith.constant 2 : index
    %c0_17 = arith.constant 0 : index
    %c0_18 = arith.constant 0 : index
    %16 = vector.load %arg2[%c2, %c0_17, %c0_18] : memref<4x256x128xbf16, #tpu.memory_space<vmem>>, vector<1x256x128xbf16>
    %17 = vector.shape_cast %16 : vector<1x256x128xbf16> to vector<256x128xbf16>
    %cst_19 = arith.constant dense<0.000000e+00> : vector<5x128xf32>
    %18 = tpu.matmul %15, %17, %cst_19 {dimension_numbers = #tpu.dot_dimension_numbers<[1], [0], [0], [1], [0, 0, 1, 1], [], []>} : vector<5x256xbf16>, vector<256x128xbf16>, vector<5x128xf32> -> vector<5x128xf32>
    %19 = arith.addf %12, %18 : vector<5x128xf32>
    %c0_20 = arith.constant 0 : index
    %c1_21 = arith.constant 1 : index
    %c1_22 = arith.constant 1 : index
    %c0_23 = arith.constant 0 : index
    %20 = vector.load %arg1[%c0_20, %c1_21, %c1_22, %c0_23] : memref<1x6x6x256xf32, #tpu.memory_space<vmem>>, vector<1x1x5x256xf32>
    %21 = vector.shape_cast %20 : vector<1x1x5x256xf32> to vector<5x256xf32>
    %22 = arith.truncf %21 : vector<5x256xf32> to vector<5x256xbf16>
    %c3 = arith.constant 3 : index
    %c0_24 = arith.constant 0 : index
    %c0_25 = arith.constant 0 : index
    %23 = vector.load %arg2[%c3, %c0_24, %c0_25] : memref<4x256x128xbf16, #tpu.memory_space<vmem>>, vector<1x256x128xbf16>
    %24 = vector.shape_cast %23 : vector<1x256x128xbf16> to vector<256x128xbf16>
    %cst_26 = arith.constant dense<0.000000e+00> : vector<5x128xf32>
    %25 = tpu.matmul %22, %24, %cst_26 {dimension_numbers = #tpu.dot_dimension_numbers<[1], [0], [0], [1], [0, 0, 1, 1], [], []>} : vector<5x256xbf16>, vector<256x128xbf16>, vector<5x128xf32> -> vector<5x128xf32>
    %26 = arith.addf %19, %25 : vector<5x128xf32>
    %c0_27 = arith.constant 0 : index
    %c0_28 = arith.constant 0 : index
    %27 = vector.load %arg3[%c0_27, %c0_28] : memref<1x128xf32, #tpu.memory_space<vmem>>, vector<1x128xf32>
    %28 = vector.broadcast %27 : vector<1x128xf32> to vector<5x128xf32>
    %29 = arith.addf %26, %28 : vector<5x128xf32>
    %cst_29 = arith.constant 0.000000e+00 : f32
    %30 = vector.broadcast %cst_29 : f32 to vector<5x128xf32>
    %31 = arith.maximumf %29, %30 : vector<5x128xf32>
    %c0_30 = arith.constant 0 : index
    %c0_31 = arith.constant 0 : index
    %c0_32 = arith.constant 0 : index
    %32 = vector.load %arg15[%c0_30, %c0_31, %c0_32] : memref<5x5x128xf32, #tpu.memory_space<vmem>>, vector<1x5x128xf32>
    %33 = vector.shape_cast %32 : vector<1x5x128xf32> to vector<5x128xf32>
    %34 = vector.shape_cast %31 : vector<5x128xf32> to vector<1x5x128xf32>
    tpu.vector_store %arg15[%c0_30, %c0_31, %c0_32], %34 {strides = array<i32>} : memref<5x5x128xf32, #tpu.memory_space<vmem>>, vector<1x5x128xf32>,
    %c0_33 = arith.constant 0 : index
    %c1_34 = arith.constant 1 : index
    %c0_35 = arith.constant 0 : index
    %c0_36 = arith.constant 0 : index
    %35 = vector.load %arg1[%c0_33, %c1_34, %c0_35, %c0_36] : memref<1x6x6x256xf32, #tpu.memory_space<vmem>>, vector<1x1x5x256xf32>
    %36 = vector.shape_cast %35 : vector<1x1x5x256xf32> to vector<5x256xf32>
    %37 = arith.truncf %36 : vector<5x256xf32> to vector<5x256xbf16>
    %c0_37 = arith.constant 0 : index
    %c0_38 = arith.constant 0 : index
    %c0_39 = arith.constant 0 : index
    %38 = vector.load %arg2[%c0_37, %c0_38, %c0_39] : memref<4x256x128xbf16, #tpu.memory_space<vmem>>, vector<1x256x128xbf16>
    %39 = vector.shape_cast %38 : vector<1x256x128xbf16> to vector<256x128xbf16>
    %cst_40 = arith.constant dense<0.000000e+00> : vector<5x128xf32>
    %40 = tpu.matmul %37, %39, %cst_40 {dimension_numbers = #tpu.dot_dimension_numbers<[1], [0], [0], [1], [0, 0, 1, 1], [], []>} : vector<5x256xbf16>, vector<256x128xbf16>, vector<5x128xf32> -> vector<5x128xf32>
    %c0_41 = arith.constant 0 : index
    %c1_42 = arith.constant 1 : index
    %c1_43 = arith.constant 1 : index
    %c0_44 = arith.constant 0 : index
    %41 = vector.load %arg1[%c0_41, %c1_42, %c1_43, %c0_44] : memref<1x6x6x256xf32, #tpu.memory_space<vmem>>, vector<1x1x5x256xf32>
    %42 = vector.shape_cast %41 : vector<1x1x5x256xf32> to vector<5x256xf32>
    %43 = arith.truncf %42 : vector<5x256xf32> to vector<5x256xbf16>
    %c1_45 = arith.constant 1 : index
    %c0_46 = arith.constant 0 : index
    %c0_47 = arith.constant 0 : index
    %44 = vector.load %arg2[%c1_45, %c0_46, %c0_47] : memref<4x256x128xbf16, #tpu.memory_space<vmem>>, vector<1x256x128xbf16>
    %45 = vector.shape_cast %44 : vector<1x256x128xbf16> to vector<256x128xbf16>
    %cst_48 = arith.constant dense<0.000000e+00> : vector<5x128xf32>
    %46 = tpu.matmul %43, %45, %cst_48 {dimension_numbers = #tpu.dot_dimension_numbers<[1], [0], [0], [1], [0, 0, 1, 1], [], []>} : vector<5x256xbf16>, vector<256x128xbf16>, vector<5x128xf32> -> vector<5x128xf32>
    %47 = arith.addf %40, %46 : vector<5x128xf32>
    %c0_49 = arith.constant 0 : index
    %c2_50 = arith.constant 2 : index
    %c0_51 = arith.constant 0 : index
    %c0_52 = arith.constant 0 : index
    %48 = vector.load %arg1[%c0_49, %c2_50, %c0_51, %c0_52] : memref<1x6x6x256xf32, #tpu.memory_space<vmem>>, vector<1x1x5x256xf32>
    %49 = vector.shape_cast %48 : vector<1x1x5x256xf32> to vector<5x256xf32>
    %50 = arith.truncf %49 : vector<5x256xf32> to vector<5x256xbf16>
    %c2_53 = arith.constant 2 : index
    %c0_54 = arith.constant 0 : index
    %c0_55 = arith.constant 0 : index
    %51 = vector.load %arg2[%c2_53, %c0_54, %c0_55] : memref<4x256x128xbf16, #tpu.memory_space<vmem>>, vector<1x256x128xbf16>
    %52 = vector.shape_cast %51 : vector<1x256x128xbf16> to vector<256x128xbf16>
    %cst_56 = arith.constant dense<0.000000e+00> : vector<5x128xf32>
    %53 = tpu.matmul %50, %52, %cst_56 {dimension_numbers = #tpu.dot_dimension_numbers<[1], [0], [0], [1], [0, 0, 1, 1], [], []>} : vector<5x256xbf16>, vector<256x128xbf16>, vector<5x128xf32> -> vector<5x128xf32>
    %54 = arith.addf %47, %53 : vector<5x128xf32>
    %c0_57 = arith.constant 0 : index
    %c2_58 = arith.constant 2 : index
    %c1_59 = arith.constant 1 : index
    %c0_60 = arith.constant 0 : index
    %55 = vector.load %arg1[%c0_57, %c2_58, %c1_59, %c0_60] : memref<1x6x6x256xf32, #tpu.memory_space<vmem>>, vector<1x1x5x256xf32>
    %56 = vector.shape_cast %55 : vector<1x1x5x256xf32> to vector<5x256xf32>
    %57 = arith.truncf %56 : vector<5x256xf32> to vector<5x256xbf16>
    %c3_61 = arith.constant 3 : index
    %c0_62 = arith.constant 0 : index
    %c0_63 = arith.constant 0 : index
    %58 = vector.load %arg2[%c3_61, %c0_62, %c0_63] : memref<4x256x128xbf16, #tpu.memory_space<vmem>>, vector<1x256x128xbf16>
    %59 = vector.shape_cast %58 : vector<1x256x128xbf16> to vector<256x128xbf16>
    %cst_64 = arith.constant dense<0.000000e+00> : vector<5x128xf32>
    %60 = tpu.matmul %57, %59, %cst_64 {dimension_numbers = #tpu.dot_dimension_numbers<[1], [0], [0], [1], [0, 0, 1, 1], [], []>} : vector<5x256xbf16>, vector<256x128xbf16>, vector<5x128xf32> -> vector<5x128xf32>
    %61 = arith.addf %54, %60 : vector<5x128xf32>
    %c0_65 = arith.constant 0 : index
    %c0_66 = arith.constant 0 : index
    %62 = vector.load %arg3[%c0_65, %c0_66] : memref<1x128xf32, #tpu.memory_space<vmem>>, vector<1x128xf32>
    %63 = vector.broadcast %62 : vector<1x128xf32> to vector<5x128xf32>
    %64 = arith.addf %61, %63 : vector<5x128xf32>
    %cst_67 = arith.constant 0.000000e+00 : f32
    %65 = vector.broadcast %cst_67 : f32 to vector<5x128xf32>
    %66 = arith.maximumf %64, %65 : vector<5x128xf32>
    %c1_68 = arith.constant 1 : index
    %c0_69 = arith.constant 0 : index
    %c0_70 = arith.constant 0 : index
    %67 = vector.load %arg15[%c1_68, %c0_69, %c0_70] : memref<5x5x128xf32, #tpu.memory_space<vmem>>, vector<1x5x128xf32>
    %68 = vector.shape_cast %67 : vector<1x5x128xf32> to vector<5x128xf32>
    %69 = vector.shape_cast %66 : vector<5x128xf32> to vector<1x5x128xf32>
    tpu.vector_store %arg15[%c1_68, %c0_69, %c0_70], %69 {strides = array<i32>} : memref<5x5x128xf32, #tpu.memory_space<vmem>>, vector<1x5x128xf32>,
    %c0_71 = arith.constant 0 : index
    %c2_72 = arith.constant 2 : index
    %c0_73 = arith.constant 0 : index
    %c0_74 = arith.constant 0 : index
    %70 = vector.load %arg1[%c0_71, %c2_72, %c0_73, %c0_74] : memref<1x6x6x256xf32, #tpu.memory_space<vmem>>, vector<1x1x5x256xf32>
    %71 = vector.shape_cast %70 : vector<1x1x5x256xf32> to vector<5x256xf32>
    %72 = arith.truncf %71 : vector<5x256xf32> to vector<5x256xbf16>
    %c0_75 = arith.constant 0 : index
    %c0_76 = arith.constant 0 : index
    %c0_77 = arith.constant 0 : index
    %73 = vector.load %arg2[%c0_75, %c0_76, %c0_77] : memref<4x256x128xbf16, #tpu.memory_space<vmem>>, vector<1x256x128xbf16>
    %74 = vector.shape_cast %73 : vector<1x256x128xbf16> to vector<256x128xbf16>
    %cst_78 = arith.constant dense<0.000000e+00> : vector<5x128xf32>
    %75 = tpu.matmul %72, %74, %cst_78 {dimension_numbers = #tpu.dot_dimension_numbers<[1], [0], [0], [1], [0, 0, 1, 1], [], []>} : vector<5x256xbf16>, vector<256x128xbf16>, vector<5x128xf32> -> vector<5x128xf32>
    %c0_79 = arith.constant 0 : index
    %c2_80 = arith.constant 2 : index
    %c1_81 = arith.constant 1 : index
    %c0_82 = arith.constant 0 : index
    %76 = vector.load %arg1[%c0_79, %c2_80, %c1_81, %c0_82] : memref<1x6x6x256xf32, #tpu.memory_space<vmem>>, vector<1x1x5x256xf32>
    %77 = vector.shape_cast %76 : vector<1x1x5x256xf32> to vector<5x256xf32>
    %78 = arith.truncf %77 : vector<5x256xf32> to vector<5x256xbf16>
    %c1_83 = arith.constant 1 : index
    %c0_84 = arith.constant 0 : index
    %c0_85 = arith.constant 0 : index
    %79 = vector.load %arg2[%c1_83, %c0_84, %c0_85] : memref<4x256x128xbf16, #tpu.memory_space<vmem>>, vector<1x256x128xbf16>
    %80 = vector.shape_cast %79 : vector<1x256x128xbf16> to vector<256x128xbf16>
    %cst_86 = arith.constant dense<0.000000e+00> : vector<5x128xf32>
    %81 = tpu.matmul %78, %80, %cst_86 {dimension_numbers = #tpu.dot_dimension_numbers<[1], [0], [0], [1], [0, 0, 1, 1], [], []>} : vector<5x256xbf16>, vector<256x128xbf16>, vector<5x128xf32> -> vector<5x128xf32>
    %82 = arith.addf %75, %81 : vector<5x128xf32>
    %c0_87 = arith.constant 0 : index
    %c3_88 = arith.constant 3 : index
    %c0_89 = arith.constant 0 : index
    %c0_90 = arith.constant 0 : index
    %83 = vector.load %arg1[%c0_87, %c3_88, %c0_89, %c0_90] : memref<1x6x6x256xf32, #tpu.memory_space<vmem>>, vector<1x1x5x256xf32>
    %84 = vector.shape_cast %83 : vector<1x1x5x256xf32> to vector<5x256xf32>
    %85 = arith.truncf %84 : vector<5x256xf32> to vector<5x256xbf16>
    %c2_91 = arith.constant 2 : index
    %c0_92 = arith.constant 0 : index
    %c0_93 = arith.constant 0 : index
    %86 = vector.load %arg2[%c2_91, %c0_92, %c0_93] : memref<4x256x128xbf16, #tpu.memory_space<vmem>>, vector<1x256x128xbf16>
    %87 = vector.shape_cast %86 : vector<1x256x128xbf16> to vector<256x128xbf16>
    %cst_94 = arith.constant dense<0.000000e+00> : vector<5x128xf32>
    %88 = tpu.matmul %85, %87, %cst_94 {dimension_numbers = #tpu.dot_dimension_numbers<[1], [0], [0], [1], [0, 0, 1, 1], [], []>} : vector<5x256xbf16>, vector<256x128xbf16>, vector<5x128xf32> -> vector<5x128xf32>
    %89 = arith.addf %82, %88 : vector<5x128xf32>
    %c0_95 = arith.constant 0 : index
    %c3_96 = arith.constant 3 : index
    %c1_97 = arith.constant 1 : index
    %c0_98 = arith.constant 0 : index
    %90 = vector.load %arg1[%c0_95, %c3_96, %c1_97, %c0_98] : memref<1x6x6x256xf32, #tpu.memory_space<vmem>>, vector<1x1x5x256xf32>
    %91 = vector.shape_cast %90 : vector<1x1x5x256xf32> to vector<5x256xf32>
    %92 = arith.truncf %91 : vector<5x256xf32> to vector<5x256xbf16>
    %c3_99 = arith.constant 3 : index
    %c0_100 = arith.constant 0 : index
    %c0_101 = arith.constant 0 : index
    %93 = vector.load %arg2[%c3_99, %c0_100, %c0_101] : memref<4x256x128xbf16, #tpu.memory_space<vmem>>, vector<1x256x128xbf16>
    %94 = vector.shape_cast %93 : vector<1x256x128xbf16> to vector<256x128xbf16>
    %cst_102 = arith.constant dense<0.000000e+00> : vector<5x128xf32>
    %95 = tpu.matmul %92, %94, %cst_102 {dimension_numbers = #tpu.dot_dimension_numbers<[1], [0], [0], [1], [0, 0, 1, 1], [], []>} : vector<5x256xbf16>, vector<256x128xbf16>, vector<5x128xf32> -> vector<5x128xf32>
    %96 = arith.addf %89, %95 : vector<5x128xf32>
    %c0_103 = arith.constant 0 : index
    %c0_104 = arith.constant 0 : index
    %97 = vector.load %arg3[%c0_103, %c0_104] : memref<1x128xf32, #tpu.memory_space<vmem>>, vector<1x128xf32>
    %98 = vector.broadcast %97 : vector<1x128xf32> to vector<5x128xf32>
    %99 = arith.addf %96, %98 : vector<5x128xf32>
    %cst_105 = arith.constant 0.000000e+00 : f32
    %100 = vector.broadcast %cst_105 : f32 to vector<5x128xf32>
    %101 = arith.maximumf %99, %100 : vector<5x128xf32>
    %c2_106 = arith.constant 2 : index
    %c0_107 = arith.constant 0 : index
    %c0_108 = arith.constant 0 : index
    %102 = vector.load %arg15[%c2_106, %c0_107, %c0_108] : memref<5x5x128xf32, #tpu.memory_space<vmem>>, vector<1x5x128xf32>
    %103 = vector.shape_cast %102 : vector<1x5x128xf32> to vector<5x128xf32>
    %104 = vector.shape_cast %101 : vector<5x128xf32> to vector<1x5x128xf32>
    tpu.vector_store %arg15[%c2_106, %c0_107, %c0_108], %104 {strides = array<i32>} : memref<5x5x128xf32, #tpu.memory_space<vmem>>, vector<1x5x128xf32>,
    %c0_109 = arith.constant 0 : index
    %c3_110 = arith.constant 3 : index
    %c0_111 = arith.constant 0 : index
    %c0_112 = arith.constant 0 : index
    %105 = vector.load %arg1[%c0_109, %c3_110, %c0_111, %c0_112] : memref<1x6x6x256xf32, #tpu.memory_space<vmem>>, vector<1x1x5x256xf32>
    %106 = vector.shape_cast %105 : vector<1x1x5x256xf32> to vector<5x256xf32>
    %107 = arith.truncf %106 : vector<5x256xf32> to vector<5x256xbf16>
    %c0_113 = arith.constant 0 : index
    %c0_114 = arith.constant 0 : index
    %c0_115 = arith.constant 0 : index
    %108 = vector.load %arg2[%c0_113, %c0_114, %c0_115] : memref<4x256x128xbf16, #tpu.memory_space<vmem>>, vector<1x256x128xbf16>
    %109 = vector.shape_cast %108 : vector<1x256x128xbf16> to vector<256x128xbf16>
    %cst_116 = arith.constant dense<0.000000e+00> : vector<5x128xf32>
    %110 = tpu.matmul %107, %109, %cst_116 {dimension_numbers = #tpu.dot_dimension_numbers<[1], [0], [0], [1], [0, 0, 1, 1], [], []>} : vector<5x256xbf16>, vector<256x128xbf16>, vector<5x128xf32> -> vector<5x128xf32>
    %c0_117 = arith.constant 0 : index
    %c3_118 = arith.constant 3 : index
    %c1_119 = arith.constant 1 : index
    %c0_120 = arith.constant 0 : index
    %111 = vector.load %arg1[%c0_117, %c3_118, %c1_119, %c0_120] : memref<1x6x6x256xf32, #tpu.memory_space<vmem>>, vector<1x1x5x256xf32>
    %112 = vector.shape_cast %111 : vector<1x1x5x256xf32> to vector<5x256xf32>
    %113 = arith.truncf %112 : vector<5x256xf32> to vector<5x256xbf16>
    %c1_121 = arith.constant 1 : index
    %c0_122 = arith.constant 0 : index
    %c0_123 = arith.constant 0 : index
    %114 = vector.load %arg2[%c1_121, %c0_122, %c0_123] : memref<4x256x128xbf16, #tpu.memory_space<vmem>>, vector<1x256x128xbf16>
    %115 = vector.shape_cast %114 : vector<1x256x128xbf16> to vector<256x128xbf16>
    %cst_124 = arith.constant dense<0.000000e+00> : vector<5x128xf32>
    %116 = tpu.matmul %113, %115, %cst_124 {dimension_numbers = #tpu.dot_dimension_numbers<[1], [0], [0], [1], [0, 0, 1, 1], [], []>} : vector<5x256xbf16>, vector<256x128xbf16>, vector<5x128xf32> -> vector<5x128xf32>
    %117 = arith.addf %110, %116 : vector<5x128xf32>
    %c0_125 = arith.constant 0 : index
    %c4 = arith.constant 4 : index
    %c0_126 = arith.constant 0 : index
    %c0_127 = arith.constant 0 : index
    %118 = vector.load %arg1[%c0_125, %c4, %c0_126, %c0_127] : memref<1x6x6x256xf32, #tpu.memory_space<vmem>>, vector<1x1x5x256xf32>
    %119 = vector.shape_cast %118 : vector<1x1x5x256xf32> to vector<5x256xf32>
    %120 = arith.truncf %119 : vector<5x256xf32> to vector<5x256xbf16>
    %c2_128 = arith.constant 2 : index
    %c0_129 = arith.constant 0 : index
    %c0_130 = arith.constant 0 : index
    %121 = vector.load %arg2[%c2_128, %c0_129, %c0_130] : memref<4x256x128xbf16, #tpu.memory_space<vmem>>, vector<1x256x128xbf16>
    %122 = vector.shape_cast %121 : vector<1x256x128xbf16> to vector<256x128xbf16>
    %cst_131 = arith.constant dense<0.000000e+00> : vector<5x128xf32>
    %123 = tpu.matmul %120, %122, %cst_131 {dimension_numbers = #tpu.dot_dimension_numbers<[1], [0], [0], [1], [0, 0, 1, 1], [], []>} : vector<5x256xbf16>, vector<256x128xbf16>, vector<5x128xf32> -> vector<5x128xf32>
    %124 = arith.addf %117, %123 : vector<5x128xf32>
    %c0_132 = arith.constant 0 : index
    %c4_133 = arith.constant 4 : index
    %c1_134 = arith.constant 1 : index
    %c0_135 = arith.constant 0 : index
    %125 = vector.load %arg1[%c0_132, %c4_133, %c1_134, %c0_135] : memref<1x6x6x256xf32, #tpu.memory_space<vmem>>, vector<1x1x5x256xf32>
    %126 = vector.shape_cast %125 : vector<1x1x5x256xf32> to vector<5x256xf32>
    %127 = arith.truncf %126 : vector<5x256xf32> to vector<5x256xbf16>
    %c3_136 = arith.constant 3 : index
    %c0_137 = arith.constant 0 : index
    %c0_138 = arith.constant 0 : index
    %128 = vector.load %arg2[%c3_136, %c0_137, %c0_138] : memref<4x256x128xbf16, #tpu.memory_space<vmem>>, vector<1x256x128xbf16>
    %129 = vector.shape_cast %128 : vector<1x256x128xbf16> to vector<256x128xbf16>
    %cst_139 = arith.constant dense<0.000000e+00> : vector<5x128xf32>
    %130 = tpu.matmul %127, %129, %cst_139 {dimension_numbers = #tpu.dot_dimension_numbers<[1], [0], [0], [1], [0, 0, 1, 1], [], []>} : vector<5x256xbf16>, vector<256x128xbf16>, vector<5x128xf32> -> vector<5x128xf32>
    %131 = arith.addf %124, %130 : vector<5x128xf32>
    %c0_140 = arith.constant 0 : index
    %c0_141 = arith.constant 0 : index
    %132 = vector.load %arg3[%c0_140, %c0_141] : memref<1x128xf32, #tpu.memory_space<vmem>>, vector<1x128xf32>
    %133 = vector.broadcast %132 : vector<1x128xf32> to vector<5x128xf32>
    %134 = arith.addf %131, %133 : vector<5x128xf32>
    %cst_142 = arith.constant 0.000000e+00 : f32
    %135 = vector.broadcast %cst_142 : f32 to vector<5x128xf32>
    %136 = arith.maximumf %134, %135 : vector<5x128xf32>
    %c3_143 = arith.constant 3 : index
    %c0_144 = arith.constant 0 : index
    %c0_145 = arith.constant 0 : index
    %137 = vector.load %arg15[%c3_143, %c0_144, %c0_145] : memref<5x5x128xf32, #tpu.memory_space<vmem>>, vector<1x5x128xf32>
    %138 = vector.shape_cast %137 : vector<1x5x128xf32> to vector<5x128xf32>
    %139 = vector.shape_cast %136 : vector<5x128xf32> to vector<1x5x128xf32>
    tpu.vector_store %arg15[%c3_143, %c0_144, %c0_145], %139 {strides = array<i32>} : memref<5x5x128xf32, #tpu.memory_space<vmem>>, vector<1x5x128xf32>,
    %c0_146 = arith.constant 0 : index
    %c4_147 = arith.constant 4 : index
    %c0_148 = arith.constant 0 : index
    %c0_149 = arith.constant 0 : index
    %140 = vector.load %arg1[%c0_146, %c4_147, %c0_148, %c0_149] : memref<1x6x6x256xf32, #tpu.memory_space<vmem>>, vector<1x1x5x256xf32>
    %141 = vector.shape_cast %140 : vector<1x1x5x256xf32> to vector<5x256xf32>
    %142 = arith.truncf %141 : vector<5x256xf32> to vector<5x256xbf16>
    %c0_150 = arith.constant 0 : index
    %c0_151 = arith.constant 0 : index
    %c0_152 = arith.constant 0 : index
    %143 = vector.load %arg2[%c0_150, %c0_151, %c0_152] : memref<4x256x128xbf16, #tpu.memory_space<vmem>>, vector<1x256x128xbf16>
    %144 = vector.shape_cast %143 : vector<1x256x128xbf16> to vector<256x128xbf16>
    %cst_153 = arith.constant dense<0.000000e+00> : vector<5x128xf32>
    %145 = tpu.matmul %142, %144, %cst_153 {dimension_numbers = #tpu.dot_dimension_numbers<[1], [0], [0], [1], [0, 0, 1, 1], [], []>} : vector<5x256xbf16>, vector<256x128xbf16>, vector<5x128xf32> -> vector<5x128xf32>
    %c0_154 = arith.constant 0 : index
    %c4_155 = arith.constant 4 : index
    %c1_156 = arith.constant 1 : index
    %c0_157 = arith.constant 0 : index
    %146 = vector.load %arg1[%c0_154, %c4_155, %c1_156, %c0_157] : memref<1x6x6x256xf32, #tpu.memory_space<vmem>>, vector<1x1x5x256xf32>
    %147 = vector.shape_cast %146 : vector<1x1x5x256xf32> to vector<5x256xf32>
    %148 = arith.truncf %147 : vector<5x256xf32> to vector<5x256xbf16>
    %c1_158 = arith.constant 1 : index
    %c0_159 = arith.constant 0 : index
    %c0_160 = arith.constant 0 : index
    %149 = vector.load %arg2[%c1_158, %c0_159, %c0_160] : memref<4x256x128xbf16, #tpu.memory_space<vmem>>, vector<1x256x128xbf16>
    %150 = vector.shape_cast %149 : vector<1x256x128xbf16> to vector<256x128xbf16>
    %cst_161 = arith.constant dense<0.000000e+00> : vector<5x128xf32>
    %151 = tpu.matmul %148, %150, %cst_161 {dimension_numbers = #tpu.dot_dimension_numbers<[1], [0], [0], [1], [0, 0, 1, 1], [], []>} : vector<5x256xbf16>, vector<256x128xbf16>, vector<5x128xf32> -> vector<5x128xf32>
    %152 = arith.addf %145, %151 : vector<5x128xf32>
    %c0_162 = arith.constant 0 : index
    %c5 = arith.constant 5 : index
    %c0_163 = arith.constant 0 : index
    %c0_164 = arith.constant 0 : index
    %153 = vector.load %arg1[%c0_162, %c5, %c0_163, %c0_164] : memref<1x6x6x256xf32, #tpu.memory_space<vmem>>, vector<1x1x5x256xf32>
    %154 = vector.shape_cast %153 : vector<1x1x5x256xf32> to vector<5x256xf32>
    %155 = arith.truncf %154 : vector<5x256xf32> to vector<5x256xbf16>
    %c2_165 = arith.constant 2 : index
    %c0_166 = arith.constant 0 : index
    %c0_167 = arith.constant 0 : index
    %156 = vector.load %arg2[%c2_165, %c0_166, %c0_167] : memref<4x256x128xbf16, #tpu.memory_space<vmem>>, vector<1x256x128xbf16>
    %157 = vector.shape_cast %156 : vector<1x256x128xbf16> to vector<256x128xbf16>
    %cst_168 = arith.constant dense<0.000000e+00> : vector<5x128xf32>
    %158 = tpu.matmul %155, %157, %cst_168 {dimension_numbers = #tpu.dot_dimension_numbers<[1], [0], [0], [1], [0, 0, 1, 1], [], []>} : vector<5x256xbf16>, vector<256x128xbf16>, vector<5x128xf32> -> vector<5x128xf32>
    %159 = arith.addf %152, %158 : vector<5x128xf32>
    %c0_169 = arith.constant 0 : index
    %c5_170 = arith.constant 5 : index
    %c1_171 = arith.constant 1 : index
    %c0_172 = arith.constant 0 : index
    %160 = vector.load %arg1[%c0_169, %c5_170, %c1_171, %c0_172] : memref<1x6x6x256xf32, #tpu.memory_space<vmem>>, vector<1x1x5x256xf32>
    %161 = vector.shape_cast %160 : vector<1x1x5x256xf32> to vector<5x256xf32>
    %162 = arith.truncf %161 : vector<5x256xf32> to vector<5x256xbf16>
    %c3_173 = arith.constant 3 : index
    %c0_174 = arith.constant 0 : index
    %c0_175 = arith.constant 0 : index
    %163 = vector.load %arg2[%c3_173, %c0_174, %c0_175] : memref<4x256x128xbf16, #tpu.memory_space<vmem>>, vector<1x256x128xbf16>
    %164 = vector.shape_cast %163 : vector<1x256x128xbf16> to vector<256x128xbf16>
    %cst_176 = arith.constant dense<0.000000e+00> : vector<5x128xf32>
    %165 = tpu.matmul %162, %164, %cst_176 {dimension_numbers = #tpu.dot_dimension_numbers<[1], [0], [0], [1], [0, 0, 1, 1], [], []>} : vector<5x256xbf16>, vector<256x128xbf16>, vector<5x128xf32> -> vector<5x128xf32>
    %166 = arith.addf %159, %165 : vector<5x128xf32>
    %c0_177 = arith.constant 0 : index
    %c0_178 = arith.constant 0 : index
    %167 = vector.load %arg3[%c0_177, %c0_178] : memref<1x128xf32, #tpu.memory_space<vmem>>, vector<1x128xf32>
    %168 = vector.broadcast %167 : vector<1x128xf32> to vector<5x128xf32>
    %169 = arith.addf %166, %168 : vector<5x128xf32>
    %cst_179 = arith.constant 0.000000e+00 : f32
    %170 = vector.broadcast %cst_179 : f32 to vector<5x128xf32>
    %171 = arith.maximumf %169, %170 : vector<5x128xf32>
    %c4_180 = arith.constant 4 : index
    %c0_181 = arith.constant 0 : index
    %c0_182 = arith.constant 0 : index
    %172 = vector.load %arg15[%c4_180, %c0_181, %c0_182] : memref<5x5x128xf32, #tpu.memory_space<vmem>>, vector<1x5x128xf32>
    %173 = vector.shape_cast %172 : vector<1x5x128xf32> to vector<5x128xf32>
    %174 = vector.shape_cast %171 : vector<5x128xf32> to vector<1x5x128xf32>
    tpu.vector_store %arg15[%c4_180, %c0_181, %c0_182], %174 {strides = array<i32>} : memref<5x5x128xf32, #tpu.memory_space<vmem>>, vector<1x5x128xf32>,
    %c0_183 = arith.constant 0 : index
    %c0_184 = arith.constant 0 : index
    %c0_185 = arith.constant 0 : index
    %175 = vector.load %arg15[%c0_183, %c0_184, %c0_185] : memref<5x5x128xf32, #tpu.memory_space<vmem>>, vector<1x4x128xf32>
    %176 = vector.shape_cast %175 : vector<1x4x128xf32> to vector<4x128xf32>
    %177 = arith.truncf %176 : vector<4x128xf32> to vector<4x128xbf16>
    %c0_186 = arith.constant 0 : index
    %c0_187 = arith.constant 0 : index
    %c0_188 = arith.constant 0 : index
    %178 = vector.load %arg4[%c0_186, %c0_187, %c0_188] : memref<4x128x64xbf16, #tpu.memory_space<vmem>>, vector<1x128x64xbf16>
    %179 = vector.shape_cast %178 : vector<1x128x64xbf16> to vector<128x64xbf16>
    %cst_189 = arith.constant dense<0.000000e+00> : vector<4x64xf32>
    %180 = tpu.matmul %177, %179, %cst_189 {dimension_numbers = #tpu.dot_dimension_numbers<[1], [0], [0], [1], [0, 0, 1, 1], [], []>} : vector<4x128xbf16>, vector<128x64xbf16>, vector<4x64xf32> -> vector<4x64xf32>
    %c0_190 = arith.constant 0 : index
    %c1_191 = arith.constant 1 : index
    %c0_192 = arith.constant 0 : index
    %181 = vector.load %arg15[%c0_190, %c1_191, %c0_192] : memref<5x5x128xf32, #tpu.memory_space<vmem>>, vector<1x4x128xf32>
    %182 = vector.shape_cast %181 : vector<1x4x128xf32> to vector<4x128xf32>
    %183 = arith.truncf %182 : vector<4x128xf32> to vector<4x128xbf16>
    %c1_193 = arith.constant 1 : index
    %c0_194 = arith.constant 0 : index
    %c0_195 = arith.constant 0 : index
    %184 = vector.load %arg4[%c1_193, %c0_194, %c0_195] : memref<4x128x64xbf16, #tpu.memory_space<vmem>>, vector<1x128x64xbf16>
    %185 = vector.shape_cast %184 : vector<1x128x64xbf16> to vector<128x64xbf16>
    %cst_196 = arith.constant dense<0.000000e+00> : vector<4x64xf32>
    %186 = tpu.matmul %183, %185, %cst_196 {dimension_numbers = #tpu.dot_dimension_numbers<[1], [0], [0], [1], [0, 0, 1, 1], [], []>} : vector<4x128xbf16>, vector<128x64xbf16>, vector<4x64xf32> -> vector<4x64xf32>
    %187 = arith.addf %180, %186 : vector<4x64xf32>
    %c1_197 = arith.constant 1 : index
    %c0_198 = arith.constant 0 : index
    %c0_199 = arith.constant 0 : index
    %188 = vector.load %arg15[%c1_197, %c0_198, %c0_199] : memref<5x5x128xf32, #tpu.memory_space<vmem>>, vector<1x4x128xf32>
    %189 = vector.shape_cast %188 : vector<1x4x128xf32> to vector<4x128xf32>
    %190 = arith.truncf %189 : vector<4x128xf32> to vector<4x128xbf16>
    %c2_200 = arith.constant 2 : index
    %c0_201 = arith.constant 0 : index
    %c0_202 = arith.constant 0 : index
    %191 = vector.load %arg4[%c2_200, %c0_201, %c0_202] : memref<4x128x64xbf16, #tpu.memory_space<vmem>>, vector<1x128x64xbf16>
    %192 = vector.shape_cast %191 : vector<1x128x64xbf16> to vector<128x64xbf16>
    %cst_203 = arith.constant dense<0.000000e+00> : vector<4x64xf32>
    %193 = tpu.matmul %190, %192, %cst_203 {dimension_numbers = #tpu.dot_dimension_numbers<[1], [0], [0], [1], [0, 0, 1, 1], [], []>} : vector<4x128xbf16>, vector<128x64xbf16>, vector<4x64xf32> -> vector<4x64xf32>
    %194 = arith.addf %187, %193 : vector<4x64xf32>
    %c1_204 = arith.constant 1 : index
    %c1_205 = arith.constant 1 : index
    %c0_206 = arith.constant 0 : index
    %195 = vector.load %arg15[%c1_204, %c1_205, %c0_206] : memref<5x5x128xf32, #tpu.memory_space<vmem>>, vector<1x4x128xf32>
    %196 = vector.shape_cast %195 : vector<1x4x128xf32> to vector<4x128xf32>
    %197 = arith.truncf %196 : vector<4x128xf32> to vector<4x128xbf16>
    %c3_207 = arith.constant 3 : index
    %c0_208 = arith.constant 0 : index
    %c0_209 = arith.constant 0 : index
    %198 = vector.load %arg4[%c3_207, %c0_208, %c0_209] : memref<4x128x64xbf16, #tpu.memory_space<vmem>>, vector<1x128x64xbf16>
    %199 = vector.shape_cast %198 : vector<1x128x64xbf16> to vector<128x64xbf16>
    %cst_210 = arith.constant dense<0.000000e+00> : vector<4x64xf32>
    %200 = tpu.matmul %197, %199, %cst_210 {dimension_numbers = #tpu.dot_dimension_numbers<[1], [0], [0], [1], [0, 0, 1, 1], [], []>} : vector<4x128xbf16>, vector<128x64xbf16>, vector<4x64xf32> -> vector<4x64xf32>
    %201 = arith.addf %194, %200 : vector<4x64xf32>
    %c0_211 = arith.constant 0 : index
    %c0_212 = arith.constant 0 : index
    %202 = vector.load %arg5[%c0_211, %c0_212] : memref<1x64xf32, #tpu.memory_space<vmem>>, vector<1x64xf32>
    %203 = vector.broadcast %202 : vector<1x64xf32> to vector<4x64xf32>
    %204 = arith.addf %201, %203 : vector<4x64xf32>
    %cst_213 = arith.constant 0.000000e+00 : f32
    %205 = vector.broadcast %cst_213 : f32 to vector<4x64xf32>
    %206 = arith.maximumf %204, %205 : vector<4x64xf32>
    %c0_214 = arith.constant 0 : index
    %c0_215 = arith.constant 0 : index
    %c0_216 = arith.constant 0 : index
    %207 = vector.load %arg16[%c0_214, %c0_215, %c0_216] : memref<4x4x64xf32, #tpu.memory_space<vmem>>, vector<1x4x64xf32>
    %208 = vector.shape_cast %207 : vector<1x4x64xf32> to vector<4x64xf32>
    %209 = vector.shape_cast %206 : vector<4x64xf32> to vector<1x4x64xf32>
    tpu.vector_store %arg16[%c0_214, %c0_215, %c0_216], %209 {strides = array<i32>} : memref<4x4x64xf32, #tpu.memory_space<vmem>>, vector<1x4x64xf32>,
    %c1_217 = arith.constant 1 : index
    %c0_218 = arith.constant 0 : index
    %c0_219 = arith.constant 0 : index
    %210 = vector.load %arg15[%c1_217, %c0_218, %c0_219] : memref<5x5x128xf32, #tpu.memory_space<vmem>>, vector<1x4x128xf32>
    %211 = vector.shape_cast %210 : vector<1x4x128xf32> to vector<4x128xf32>
    %212 = arith.truncf %211 : vector<4x128xf32> to vector<4x128xbf16>
    %c0_220 = arith.constant 0 : index
    %c0_221 = arith.constant 0 : index
    %c0_222 = arith.constant 0 : index
    %213 = vector.load %arg4[%c0_220, %c0_221, %c0_222] : memref<4x128x64xbf16, #tpu.memory_space<vmem>>, vector<1x128x64xbf16>
    %214 = vector.shape_cast %213 : vector<1x128x64xbf16> to vector<128x64xbf16>
    %cst_223 = arith.constant dense<0.000000e+00> : vector<4x64xf32>
    %215 = tpu.matmul %212, %214, %cst_223 {dimension_numbers = #tpu.dot_dimension_numbers<[1], [0], [0], [1], [0, 0, 1, 1], [], []>} : vector<4x128xbf16>, vector<128x64xbf16>, vector<4x64xf32> -> vector<4x64xf32>
    %c1_224 = arith.constant 1 : index
    %c1_225 = arith.constant 1 : index
    %c0_226 = arith.constant 0 : index
    %216 = vector.load %arg15[%c1_224, %c1_225, %c0_226] : memref<5x5x128xf32, #tpu.memory_space<vmem>>, vector<1x4x128xf32>
    %217 = vector.shape_cast %216 : vector<1x4x128xf32> to vector<4x128xf32>
    %218 = arith.truncf %217 : vector<4x128xf32> to vector<4x128xbf16>
    %c1_227 = arith.constant 1 : index
    %c0_228 = arith.constant 0 : index
    %c0_229 = arith.constant 0 : index
    %219 = vector.load %arg4[%c1_227, %c0_228, %c0_229] : memref<4x128x64xbf16, #tpu.memory_space<vmem>>, vector<1x128x64xbf16>
    %220 = vector.shape_cast %219 : vector<1x128x64xbf16> to vector<128x64xbf16>
    %cst_230 = arith.constant dense<0.000000e+00> : vector<4x64xf32>
    %221 = tpu.matmul %218, %220, %cst_230 {dimension_numbers = #tpu.dot_dimension_numbers<[1], [0], [0], [1], [0, 0, 1, 1], [], []>} : vector<4x128xbf16>, vector<128x64xbf16>, vector<4x64xf32> -> vector<4x64xf32>
    %222 = arith.addf %215, %221 : vector<4x64xf32>
    %c2_231 = arith.constant 2 : index
    %c0_232 = arith.constant 0 : index
    %c0_233 = arith.constant 0 : index
    %223 = vector.load %arg15[%c2_231, %c0_232, %c0_233] : memref<5x5x128xf32, #tpu.memory_space<vmem>>, vector<1x4x128xf32>
    %224 = vector.shape_cast %223 : vector<1x4x128xf32> to vector<4x128xf32>
    %225 = arith.truncf %224 : vector<4x128xf32> to vector<4x128xbf16>
    %c2_234 = arith.constant 2 : index
    %c0_235 = arith.constant 0 : index
    %c0_236 = arith.constant 0 : index
    %226 = vector.load %arg4[%c2_234, %c0_235, %c0_236] : memref<4x128x64xbf16, #tpu.memory_space<vmem>>, vector<1x128x64xbf16>
    %227 = vector.shape_cast %226 : vector<1x128x64xbf16> to vector<128x64xbf16>
    %cst_237 = arith.constant dense<0.000000e+00> : vector<4x64xf32>
    %228 = tpu.matmul %225, %227, %cst_237 {dimension_numbers = #tpu.dot_dimension_numbers<[1], [0], [0], [1], [0, 0, 1, 1], [], []>} : vector<4x128xbf16>, vector<128x64xbf16>, vector<4x64xf32> -> vector<4x64xf32>
    %229 = arith.addf %222, %228 : vector<4x64xf32>
    %c2_238 = arith.constant 2 : index
    %c1_239 = arith.constant 1 : index
    %c0_240 = arith.constant 0 : index
    %230 = vector.load %arg15[%c2_238, %c1_239, %c0_240] : memref<5x5x128xf32, #tpu.memory_space<vmem>>, vector<1x4x128xf32>
    %231 = vector.shape_cast %230 : vector<1x4x128xf32> to vector<4x128xf32>
    %232 = arith.truncf %231 : vector<4x128xf32> to vector<4x128xbf16>
    %c3_241 = arith.constant 3 : index
    %c0_242 = arith.constant 0 : index
    %c0_243 = arith.constant 0 : index
    %233 = vector.load %arg4[%c3_241, %c0_242, %c0_243] : memref<4x128x64xbf16, #tpu.memory_space<vmem>>, vector<1x128x64xbf16>
    %234 = vector.shape_cast %233 : vector<1x128x64xbf16> to vector<128x64xbf16>
    %cst_244 = arith.constant dense<0.000000e+00> : vector<4x64xf32>
    %235 = tpu.matmul %232, %234, %cst_244 {dimension_numbers = #tpu.dot_dimension_numbers<[1], [0], [0], [1], [0, 0, 1, 1], [], []>} : vector<4x128xbf16>, vector<128x64xbf16>, vector<4x64xf32> -> vector<4x64xf32>
    %236 = arith.addf %229, %235 : vector<4x64xf32>
    %c0_245 = arith.constant 0 : index
    %c0_246 = arith.constant 0 : index
    %237 = vector.load %arg5[%c0_245, %c0_246] : memref<1x64xf32, #tpu.memory_space<vmem>>, vector<1x64xf32>
    %238 = vector.broadcast %237 : vector<1x64xf32> to vector<4x64xf32>
    %239 = arith.addf %236, %238 : vector<4x64xf32>
    %cst_247 = arith.constant 0.000000e+00 : f32
    %240 = vector.broadcast %cst_247 : f32 to vector<4x64xf32>
    %241 = arith.maximumf %239, %240 : vector<4x64xf32>
    %c1_248 = arith.constant 1 : index
    %c0_249 = arith.constant 0 : index
    %c0_250 = arith.constant 0 : index
    %242 = vector.load %arg16[%c1_248, %c0_249, %c0_250] : memref<4x4x64xf32, #tpu.memory_space<vmem>>, vector<1x4x64xf32>
    %243 = vector.shape_cast %242 : vector<1x4x64xf32> to vector<4x64xf32>
    %244 = vector.shape_cast %241 : vector<4x64xf32> to vector<1x4x64xf32>
    tpu.vector_store %arg16[%c1_248, %c0_249, %c0_250], %244 {strides = array<i32>} : memref<4x4x64xf32, #tpu.memory_space<vmem>>, vector<1x4x64xf32>,
    %c2_251 = arith.constant 2 : index
    %c0_252 = arith.constant 0 : index
    %c0_253 = arith.constant 0 : index
    %245 = vector.load %arg15[%c2_251, %c0_252, %c0_253] : memref<5x5x128xf32, #tpu.memory_space<vmem>>, vector<1x4x128xf32>
    %246 = vector.shape_cast %245 : vector<1x4x128xf32> to vector<4x128xf32>
    %247 = arith.truncf %246 : vector<4x128xf32> to vector<4x128xbf16>
    %c0_254 = arith.constant 0 : index
    %c0_255 = arith.constant 0 : index
    %c0_256 = arith.constant 0 : index
    %248 = vector.load %arg4[%c0_254, %c0_255, %c0_256] : memref<4x128x64xbf16, #tpu.memory_space<vmem>>, vector<1x128x64xbf16>
    %249 = vector.shape_cast %248 : vector<1x128x64xbf16> to vector<128x64xbf16>
    %cst_257 = arith.constant dense<0.000000e+00> : vector<4x64xf32>
    %250 = tpu.matmul %247, %249, %cst_257 {dimension_numbers = #tpu.dot_dimension_numbers<[1], [0], [0], [1], [0, 0, 1, 1], [], []>} : vector<4x128xbf16>, vector<128x64xbf16>, vector<4x64xf32> -> vector<4x64xf32>
    %c2_258 = arith.constant 2 : index
    %c1_259 = arith.constant 1 : index
    %c0_260 = arith.constant 0 : index
    %251 = vector.load %arg15[%c2_258, %c1_259, %c0_260] : memref<5x5x128xf32, #tpu.memory_space<vmem>>, vector<1x4x128xf32>
    %252 = vector.shape_cast %251 : vector<1x4x128xf32> to vector<4x128xf32>
    %253 = arith.truncf %252 : vector<4x128xf32> to vector<4x128xbf16>
    %c1_261 = arith.constant 1 : index
    %c0_262 = arith.constant 0 : index
    %c0_263 = arith.constant 0 : index
    %254 = vector.load %arg4[%c1_261, %c0_262, %c0_263] : memref<4x128x64xbf16, #tpu.memory_space<vmem>>, vector<1x128x64xbf16>
    %255 = vector.shape_cast %254 : vector<1x128x64xbf16> to vector<128x64xbf16>
    %cst_264 = arith.constant dense<0.000000e+00> : vector<4x64xf32>
    %256 = tpu.matmul %253, %255, %cst_264 {dimension_numbers = #tpu.dot_dimension_numbers<[1], [0], [0], [1], [0, 0, 1, 1], [], []>} : vector<4x128xbf16>, vector<128x64xbf16>, vector<4x64xf32> -> vector<4x64xf32>
    %257 = arith.addf %250, %256 : vector<4x64xf32>
    %c3_265 = arith.constant 3 : index
    %c0_266 = arith.constant 0 : index
    %c0_267 = arith.constant 0 : index
    %258 = vector.load %arg15[%c3_265, %c0_266, %c0_267] : memref<5x5x128xf32, #tpu.memory_space<vmem>>, vector<1x4x128xf32>
    %259 = vector.shape_cast %258 : vector<1x4x128xf32> to vector<4x128xf32>
    %260 = arith.truncf %259 : vector<4x128xf32> to vector<4x128xbf16>
    %c2_268 = arith.constant 2 : index
    %c0_269 = arith.constant 0 : index
    %c0_270 = arith.constant 0 : index
    %261 = vector.load %arg4[%c2_268, %c0_269, %c0_270] : memref<4x128x64xbf16, #tpu.memory_space<vmem>>, vector<1x128x64xbf16>
    %262 = vector.shape_cast %261 : vector<1x128x64xbf16> to vector<128x64xbf16>
    %cst_271 = arith.constant dense<0.000000e+00> : vector<4x64xf32>
    %263 = tpu.matmul %260, %262, %cst_271 {dimension_numbers = #tpu.dot_dimension_numbers<[1], [0], [0], [1], [0, 0, 1, 1], [], []>} : vector<4x128xbf16>, vector<128x64xbf16>, vector<4x64xf32> -> vector<4x64xf32>
    %264 = arith.addf %257, %263 : vector<4x64xf32>
    %c3_272 = arith.constant 3 : index
    %c1_273 = arith.constant 1 : index
    %c0_274 = arith.constant 0 : index
    %265 = vector.load %arg15[%c3_272, %c1_273, %c0_274] : memref<5x5x128xf32, #tpu.memory_space<vmem>>, vector<1x4x128xf32>
    %266 = vector.shape_cast %265 : vector<1x4x128xf32> to vector<4x128xf32>
    %267 = arith.truncf %266 : vector<4x128xf32> to vector<4x128xbf16>
    %c3_275 = arith.constant 3 : index
    %c0_276 = arith.constant 0 : index
    %c0_277 = arith.constant 0 : index
    %268 = vector.load %arg4[%c3_275, %c0_276, %c0_277] : memref<4x128x64xbf16, #tpu.memory_space<vmem>>, vector<1x128x64xbf16>
    %269 = vector.shape_cast %268 : vector<1x128x64xbf16> to vector<128x64xbf16>
    %cst_278 = arith.constant dense<0.000000e+00> : vector<4x64xf32>
    %270 = tpu.matmul %267, %269, %cst_278 {dimension_numbers = #tpu.dot_dimension_numbers<[1], [0], [0], [1], [0, 0, 1, 1], [], []>} : vector<4x128xbf16>, vector<128x64xbf16>, vector<4x64xf32> -> vector<4x64xf32>
    %271 = arith.addf %264, %270 : vector<4x64xf32>
    %c0_279 = arith.constant 0 : index
    %c0_280 = arith.constant 0 : index
    %272 = vector.load %arg5[%c0_279, %c0_280] : memref<1x64xf32, #tpu.memory_space<vmem>>, vector<1x64xf32>
    %273 = vector.broadcast %272 : vector<1x64xf32> to vector<4x64xf32>
    %274 = arith.addf %271, %273 : vector<4x64xf32>
    %cst_281 = arith.constant 0.000000e+00 : f32
    %275 = vector.broadcast %cst_281 : f32 to vector<4x64xf32>
    %276 = arith.maximumf %274, %275 : vector<4x64xf32>
    %c2_282 = arith.constant 2 : index
    %c0_283 = arith.constant 0 : index
    %c0_284 = arith.constant 0 : index
    %277 = vector.load %arg16[%c2_282, %c0_283, %c0_284] : memref<4x4x64xf32, #tpu.memory_space<vmem>>, vector<1x4x64xf32>
    %278 = vector.shape_cast %277 : vector<1x4x64xf32> to vector<4x64xf32>
    %279 = vector.shape_cast %276 : vector<4x64xf32> to vector<1x4x64xf32>
    tpu.vector_store %arg16[%c2_282, %c0_283, %c0_284], %279 {strides = array<i32>} : memref<4x4x64xf32, #tpu.memory_space<vmem>>, vector<1x4x64xf32>,
    %c3_285 = arith.constant 3 : index
    %c0_286 = arith.constant 0 : index
    %c0_287 = arith.constant 0 : index
    %280 = vector.load %arg15[%c3_285, %c0_286, %c0_287] : memref<5x5x128xf32, #tpu.memory_space<vmem>>, vector<1x4x128xf32>
    %281 = vector.shape_cast %280 : vector<1x4x128xf32> to vector<4x128xf32>
    %282 = arith.truncf %281 : vector<4x128xf32> to vector<4x128xbf16>
    %c0_288 = arith.constant 0 : index
    %c0_289 = arith.constant 0 : index
    %c0_290 = arith.constant 0 : index
    %283 = vector.load %arg4[%c0_288, %c0_289, %c0_290] : memref<4x128x64xbf16, #tpu.memory_space<vmem>>, vector<1x128x64xbf16>
    %284 = vector.shape_cast %283 : vector<1x128x64xbf16> to vector<128x64xbf16>
    %cst_291 = arith.constant dense<0.000000e+00> : vector<4x64xf32>
    %285 = tpu.matmul %282, %284, %cst_291 {dimension_numbers = #tpu.dot_dimension_numbers<[1], [0], [0], [1], [0, 0, 1, 1], [], []>} : vector<4x128xbf16>, vector<128x64xbf16>, vector<4x64xf32> -> vector<4x64xf32>
    %c3_292 = arith.constant 3 : index
    %c1_293 = arith.constant 1 : index
    %c0_294 = arith.constant 0 : index
    %286 = vector.load %arg15[%c3_292, %c1_293, %c0_294] : memref<5x5x128xf32, #tpu.memory_space<vmem>>, vector<1x4x128xf32>
    %287 = vector.shape_cast %286 : vector<1x4x128xf32> to vector<4x128xf32>
    %288 = arith.truncf %287 : vector<4x128xf32> to vector<4x128xbf16>
    %c1_295 = arith.constant 1 : index
    %c0_296 = arith.constant 0 : index
    %c0_297 = arith.constant 0 : index
    %289 = vector.load %arg4[%c1_295, %c0_296, %c0_297] : memref<4x128x64xbf16, #tpu.memory_space<vmem>>, vector<1x128x64xbf16>
    %290 = vector.shape_cast %289 : vector<1x128x64xbf16> to vector<128x64xbf16>
    %cst_298 = arith.constant dense<0.000000e+00> : vector<4x64xf32>
    %291 = tpu.matmul %288, %290, %cst_298 {dimension_numbers = #tpu.dot_dimension_numbers<[1], [0], [0], [1], [0, 0, 1, 1], [], []>} : vector<4x128xbf16>, vector<128x64xbf16>, vector<4x64xf32> -> vector<4x64xf32>
    %292 = arith.addf %285, %291 : vector<4x64xf32>
    %c4_299 = arith.constant 4 : index
    %c0_300 = arith.constant 0 : index
    %c0_301 = arith.constant 0 : index
    %293 = vector.load %arg15[%c4_299, %c0_300, %c0_301] : memref<5x5x128xf32, #tpu.memory_space<vmem>>, vector<1x4x128xf32>
    %294 = vector.shape_cast %293 : vector<1x4x128xf32> to vector<4x128xf32>
    %295 = arith.truncf %294 : vector<4x128xf32> to vector<4x128xbf16>
    %c2_302 = arith.constant 2 : index
    %c0_303 = arith.constant 0 : index
    %c0_304 = arith.constant 0 : index
    %296 = vector.load %arg4[%c2_302, %c0_303, %c0_304] : memref<4x128x64xbf16, #tpu.memory_space<vmem>>, vector<1x128x64xbf16>
    %297 = vector.shape_cast %296 : vector<1x128x64xbf16> to vector<128x64xbf16>
    %cst_305 = arith.constant dense<0.000000e+00> : vector<4x64xf32>
    %298 = tpu.matmul %295, %297, %cst_305 {dimension_numbers = #tpu.dot_dimension_numbers<[1], [0], [0], [1], [0, 0, 1, 1], [], []>} : vector<4x128xbf16>, vector<128x64xbf16>, vector<4x64xf32> -> vector<4x64xf32>
    %299 = arith.addf %292, %298 : vector<4x64xf32>
    %c4_306 = arith.constant 4 : index
    %c1_307 = arith.constant 1 : index
    %c0_308 = arith.constant 0 : index
    %300 = vector.load %arg15[%c4_306, %c1_307, %c0_308] : memref<5x5x128xf32, #tpu.memory_space<vmem>>, vector<1x4x128xf32>
    %301 = vector.shape_cast %300 : vector<1x4x128xf32> to vector<4x128xf32>
    %302 = arith.truncf %301 : vector<4x128xf32> to vector<4x128xbf16>
    %c3_309 = arith.constant 3 : index
    %c0_310 = arith.constant 0 : index
    %c0_311 = arith.constant 0 : index
    %303 = vector.load %arg4[%c3_309, %c0_310, %c0_311] : memref<4x128x64xbf16, #tpu.memory_space<vmem>>, vector<1x128x64xbf16>
    %304 = vector.shape_cast %303 : vector<1x128x64xbf16> to vector<128x64xbf16>
    %cst_312 = arith.constant dense<0.000000e+00> : vector<4x64xf32>
    %305 = tpu.matmul %302, %304, %cst_312 {dimension_numbers = #tpu.dot_dimension_numbers<[1], [0], [0], [1], [0, 0, 1, 1], [], []>} : vector<4x128xbf16>, vector<128x64xbf16>, vector<4x64xf32> -> vector<4x64xf32>
    %306 = arith.addf %299, %305 : vector<4x64xf32>
    %c0_313 = arith.constant 0 : index
    %c0_314 = arith.constant 0 : index
    %307 = vector.load %arg5[%c0_313, %c0_314] : memref<1x64xf32, #tpu.memory_space<vmem>>, vector<1x64xf32>
    %308 = vector.broadcast %307 : vector<1x64xf32> to vector<4x64xf32>
    %309 = arith.addf %306, %308 : vector<4x64xf32>
    %cst_315 = arith.constant 0.000000e+00 : f32
    %310 = vector.broadcast %cst_315 : f32 to vector<4x64xf32>
    %311 = arith.maximumf %309, %310 : vector<4x64xf32>
    %c3_316 = arith.constant 3 : index
    %c0_317 = arith.constant 0 : index
    %c0_318 = arith.constant 0 : index
    %312 = vector.load %arg16[%c3_316, %c0_317, %c0_318] : memref<4x4x64xf32, #tpu.memory_space<vmem>>, vector<1x4x64xf32>
    %313 = vector.shape_cast %312 : vector<1x4x64xf32> to vector<4x64xf32>
    %314 = vector.shape_cast %311 : vector<4x64xf32> to vector<1x4x64xf32>
    tpu.vector_store %arg16[%c3_316, %c0_317, %c0_318], %314 {strides = array<i32>} : memref<4x4x64xf32, #tpu.memory_space<vmem>>, vector<1x4x64xf32>,
    %c0_319 = arith.constant 0 : index
    %c0_320 = arith.constant 0 : index
    %c0_321 = arith.constant 0 : index
    %315 = vector.load %arg16[%c0_319, %c0_320, %c0_321] : memref<4x4x64xf32, #tpu.memory_space<vmem>>, vector<1x2x64xf32>
    %316 = vector.shape_cast %315 : vector<1x2x64xf32> to vector<2x64xf32>
    %317 = arith.truncf %316 : vector<2x64xf32> to vector<2x64xbf16>
    %c0_322 = arith.constant 0 : index
    %c0_323 = arith.constant 0 : index
    %c0_324 = arith.constant 0 : index
    %318 = vector.load %arg6[%c0_322, %c0_323, %c0_324] : memref<9x64x64xbf16, #tpu.memory_space<vmem>>, vector<1x64x64xbf16>
    %319 = vector.shape_cast %318 : vector<1x64x64xbf16> to vector<64x64xbf16>
    %cst_325 = arith.constant dense<0.000000e+00> : vector<2x64xf32>
    %320 = tpu.matmul %317, %319, %cst_325 {dimension_numbers = #tpu.dot_dimension_numbers<[1], [0], [0], [1], [0, 0, 1, 1], [], []>} : vector<2x64xbf16>, vector<64x64xbf16>, vector<2x64xf32> -> vector<2x64xf32>
    %c0_326 = arith.constant 0 : index
    %c1_327 = arith.constant 1 : index
    %c0_328 = arith.constant 0 : index
    %321 = vector.load %arg16[%c0_326, %c1_327, %c0_328] : memref<4x4x64xf32, #tpu.memory_space<vmem>>, vector<1x2x64xf32>
    %322 = vector.shape_cast %321 : vector<1x2x64xf32> to vector<2x64xf32>
    %323 = arith.truncf %322 : vector<2x64xf32> to vector<2x64xbf16>
    %c1_329 = arith.constant 1 : index
    %c0_330 = arith.constant 0 : index
    %c0_331 = arith.constant 0 : index
    %324 = vector.load %arg6[%c1_329, %c0_330, %c0_331] : memref<9x64x64xbf16, #tpu.memory_space<vmem>>, vector<1x64x64xbf16>
    %325 = vector.shape_cast %324 : vector<1x64x64xbf16> to vector<64x64xbf16>
    %cst_332 = arith.constant dense<0.000000e+00> : vector<2x64xf32>
    %326 = tpu.matmul %323, %325, %cst_332 {dimension_numbers = #tpu.dot_dimension_numbers<[1], [0], [0], [1], [0, 0, 1, 1], [], []>} : vector<2x64xbf16>, vector<64x64xbf16>, vector<2x64xf32> -> vector<2x64xf32>
    %327 = arith.addf %320, %326 : vector<2x64xf32>
    %c0_333 = arith.constant 0 : index
    %c2_334 = arith.constant 2 : index
    %c0_335 = arith.constant 0 : index
    %328 = vector.load %arg16[%c0_333, %c2_334, %c0_335] : memref<4x4x64xf32, #tpu.memory_space<vmem>>, vector<1x2x64xf32>
    %329 = vector.shape_cast %328 : vector<1x2x64xf32> to vector<2x64xf32>
    %330 = arith.truncf %329 : vector<2x64xf32> to vector<2x64xbf16>
    %c2_336 = arith.constant 2 : index
    %c0_337 = arith.constant 0 : index
    %c0_338 = arith.constant 0 : index
    %331 = vector.load %arg6[%c2_336, %c0_337, %c0_338] : memref<9x64x64xbf16, #tpu.memory_space<vmem>>, vector<1x64x64xbf16>
    %332 = vector.shape_cast %331 : vector<1x64x64xbf16> to vector<64x64xbf16>
    %cst_339 = arith.constant dense<0.000000e+00> : vector<2x64xf32>
    %333 = tpu.matmul %330, %332, %cst_339 {dimension_numbers = #tpu.dot_dimension_numbers<[1], [0], [0], [1], [0, 0, 1, 1], [], []>} : vector<2x64xbf16>, vector<64x64xbf16>, vector<2x64xf32> -> vector<2x64xf32>
    %334 = arith.addf %327, %333 : vector<2x64xf32>
    %c1_340 = arith.constant 1 : index
    %c0_341 = arith.constant 0 : index
    %c0_342 = arith.constant 0 : index
    %335 = vector.load %arg16[%c1_340, %c0_341, %c0_342] : memref<4x4x64xf32, #tpu.memory_space<vmem>>, vector<1x2x64xf32>
    %336 = vector.shape_cast %335 : vector<1x2x64xf32> to vector<2x64xf32>
    %337 = arith.truncf %336 : vector<2x64xf32> to vector<2x64xbf16>
    %c3_343 = arith.constant 3 : index
    %c0_344 = arith.constant 0 : index
    %c0_345 = arith.constant 0 : index
    %338 = vector.load %arg6[%c3_343, %c0_344, %c0_345] : memref<9x64x64xbf16, #tpu.memory_space<vmem>>, vector<1x64x64xbf16>
    %339 = vector.shape_cast %338 : vector<1x64x64xbf16> to vector<64x64xbf16>
    %cst_346 = arith.constant dense<0.000000e+00> : vector<2x64xf32>
    %340 = tpu.matmul %337, %339, %cst_346 {dimension_numbers = #tpu.dot_dimension_numbers<[1], [0], [0], [1], [0, 0, 1, 1], [], []>} : vector<2x64xbf16>, vector<64x64xbf16>, vector<2x64xf32> -> vector<2x64xf32>
    %341 = arith.addf %334, %340 : vector<2x64xf32>
    %c1_347 = arith.constant 1 : index
    %c1_348 = arith.constant 1 : index
    %c0_349 = arith.constant 0 : index
    %342 = vector.load %arg16[%c1_347, %c1_348, %c0_349] : memref<4x4x64xf32, #tpu.memory_space<vmem>>, vector<1x2x64xf32>
    %343 = vector.shape_cast %342 : vector<1x2x64xf32> to vector<2x64xf32>
    %344 = arith.truncf %343 : vector<2x64xf32> to vector<2x64xbf16>
    %c4_350 = arith.constant 4 : index
    %c0_351 = arith.constant 0 : index
    %c0_352 = arith.constant 0 : index
    %345 = vector.load %arg6[%c4_350, %c0_351, %c0_352] : memref<9x64x64xbf16, #tpu.memory_space<vmem>>, vector<1x64x64xbf16>
    %346 = vector.shape_cast %345 : vector<1x64x64xbf16> to vector<64x64xbf16>
    %cst_353 = arith.constant dense<0.000000e+00> : vector<2x64xf32>
    %347 = tpu.matmul %344, %346, %cst_353 {dimension_numbers = #tpu.dot_dimension_numbers<[1], [0], [0], [1], [0, 0, 1, 1], [], []>} : vector<2x64xbf16>, vector<64x64xbf16>, vector<2x64xf32> -> vector<2x64xf32>
    %348 = arith.addf %341, %347 : vector<2x64xf32>
    %c1_354 = arith.constant 1 : index
    %c2_355 = arith.constant 2 : index
    %c0_356 = arith.constant 0 : index
    %349 = vector.load %arg16[%c1_354, %c2_355, %c0_356] : memref<4x4x64xf32, #tpu.memory_space<vmem>>, vector<1x2x64xf32>
    %350 = vector.shape_cast %349 : vector<1x2x64xf32> to vector<2x64xf32>
    %351 = arith.truncf %350 : vector<2x64xf32> to vector<2x64xbf16>
    %c5_357 = arith.constant 5 : index
    %c0_358 = arith.constant 0 : index
    %c0_359 = arith.constant 0 : index
    %352 = vector.load %arg6[%c5_357, %c0_358, %c0_359] : memref<9x64x64xbf16, #tpu.memory_space<vmem>>, vector<1x64x64xbf16>
    %353 = vector.shape_cast %352 : vector<1x64x64xbf16> to vector<64x64xbf16>
    %cst_360 = arith.constant dense<0.000000e+00> : vector<2x64xf32>
    %354 = tpu.matmul %351, %353, %cst_360 {dimension_numbers = #tpu.dot_dimension_numbers<[1], [0], [0], [1], [0, 0, 1, 1], [], []>} : vector<2x64xbf16>, vector<64x64xbf16>, vector<2x64xf32> -> vector<2x64xf32>
    %355 = arith.addf %348, %354 : vector<2x64xf32>
    %c2_361 = arith.constant 2 : index
    %c0_362 = arith.constant 0 : index
    %c0_363 = arith.constant 0 : index
    %356 = vector.load %arg16[%c2_361, %c0_362, %c0_363] : memref<4x4x64xf32, #tpu.memory_space<vmem>>, vector<1x2x64xf32>
    %357 = vector.shape_cast %356 : vector<1x2x64xf32> to vector<2x64xf32>
    %358 = arith.truncf %357 : vector<2x64xf32> to vector<2x64xbf16>
    %c6 = arith.constant 6 : index
    %c0_364 = arith.constant 0 : index
    %c0_365 = arith.constant 0 : index
    %359 = vector.load %arg6[%c6, %c0_364, %c0_365] : memref<9x64x64xbf16, #tpu.memory_space<vmem>>, vector<1x64x64xbf16>
    %360 = vector.shape_cast %359 : vector<1x64x64xbf16> to vector<64x64xbf16>
    %cst_366 = arith.constant dense<0.000000e+00> : vector<2x64xf32>
    %361 = tpu.matmul %358, %360, %cst_366 {dimension_numbers = #tpu.dot_dimension_numbers<[1], [0], [0], [1], [0, 0, 1, 1], [], []>} : vector<2x64xbf16>, vector<64x64xbf16>, vector<2x64xf32> -> vector<2x64xf32>
    %362 = arith.addf %355, %361 : vector<2x64xf32>
    %c2_367 = arith.constant 2 : index
    %c1_368 = arith.constant 1 : index
    %c0_369 = arith.constant 0 : index
    %363 = vector.load %arg16[%c2_367, %c1_368, %c0_369] : memref<4x4x64xf32, #tpu.memory_space<vmem>>, vector<1x2x64xf32>
    %364 = vector.shape_cast %363 : vector<1x2x64xf32> to vector<2x64xf32>
    %365 = arith.truncf %364 : vector<2x64xf32> to vector<2x64xbf16>
    %c7 = arith.constant 7 : index
    %c0_370 = arith.constant 0 : index
    %c0_371 = arith.constant 0 : index
    %366 = vector.load %arg6[%c7, %c0_370, %c0_371] : memref<9x64x64xbf16, #tpu.memory_space<vmem>>, vector<1x64x64xbf16>
    %367 = vector.shape_cast %366 : vector<1x64x64xbf16> to vector<64x64xbf16>
    %cst_372 = arith.constant dense<0.000000e+00> : vector<2x64xf32>
    %368 = tpu.matmul %365, %367, %cst_372 {dimension_numbers = #tpu.dot_dimension_numbers<[1], [0], [0], [1], [0, 0, 1, 1], [], []>} : vector<2x64xbf16>, vector<64x64xbf16>, vector<2x64xf32> -> vector<2x64xf32>
    %369 = arith.addf %362, %368 : vector<2x64xf32>
    %c2_373 = arith.constant 2 : index
    %c2_374 = arith.constant 2 : index
    %c0_375 = arith.constant 0 : index
    %370 = vector.load %arg16[%c2_373, %c2_374, %c0_375] : memref<4x4x64xf32, #tpu.memory_space<vmem>>, vector<1x2x64xf32>
    %371 = vector.shape_cast %370 : vector<1x2x64xf32> to vector<2x64xf32>
    %372 = arith.truncf %371 : vector<2x64xf32> to vector<2x64xbf16>
    %c8 = arith.constant 8 : index
    %c0_376 = arith.constant 0 : index
    %c0_377 = arith.constant 0 : index
    %373 = vector.load %arg6[%c8, %c0_376, %c0_377] : memref<9x64x64xbf16, #tpu.memory_space<vmem>>, vector<1x64x64xbf16>
    %374 = vector.shape_cast %373 : vector<1x64x64xbf16> to vector<64x64xbf16>
    %cst_378 = arith.constant dense<0.000000e+00> : vector<2x64xf32>
    %375 = tpu.matmul %372, %374, %cst_378 {dimension_numbers = #tpu.dot_dimension_numbers<[1], [0], [0], [1], [0, 0, 1, 1], [], []>} : vector<2x64xbf16>, vector<64x64xbf16>, vector<2x64xf32> -> vector<2x64xf32>
    %376 = arith.addf %369, %375 : vector<2x64xf32>
    %c0_379 = arith.constant 0 : index
    %c0_380 = arith.constant 0 : index
    %377 = vector.load %arg7[%c0_379, %c0_380] : memref<1x64xf32, #tpu.memory_space<vmem>>, vector<1x64xf32>
    %378 = vector.broadcast %377 : vector<1x64xf32> to vector<2x64xf32>
    %379 = arith.addf %376, %378 : vector<2x64xf32>
    %cst_381 = arith.constant 0.000000e+00 : f32
    %380 = vector.broadcast %cst_381 : f32 to vector<2x64xf32>
    %381 = arith.maximumf %379, %380 : vector<2x64xf32>
    %c0_382 = arith.constant 0 : index
    %c0_383 = arith.constant 0 : index
    %c0_384 = arith.constant 0 : index
    %382 = vector.load %arg17[%c0_382, %c0_383, %c0_384] : memref<2x2x64xf32, #tpu.memory_space<vmem>>, vector<1x2x64xf32>
    %383 = vector.shape_cast %382 : vector<1x2x64xf32> to vector<2x64xf32>
    %384 = vector.shape_cast %381 : vector<2x64xf32> to vector<1x2x64xf32>
    tpu.vector_store %arg17[%c0_382, %c0_383, %c0_384], %384 {strides = array<i32>} : memref<2x2x64xf32, #tpu.memory_space<vmem>>, vector<1x2x64xf32>,
    %c1_385 = arith.constant 1 : index
    %c0_386 = arith.constant 0 : index
    %c0_387 = arith.constant 0 : index
    %385 = vector.load %arg16[%c1_385, %c0_386, %c0_387] : memref<4x4x64xf32, #tpu.memory_space<vmem>>, vector<1x2x64xf32>
    %386 = vector.shape_cast %385 : vector<1x2x64xf32> to vector<2x64xf32>
    %387 = arith.truncf %386 : vector<2x64xf32> to vector<2x64xbf16>
    %c0_388 = arith.constant 0 : index
    %c0_389 = arith.constant 0 : index
    %c0_390 = arith.constant 0 : index
    %388 = vector.load %arg6[%c0_388, %c0_389, %c0_390] : memref<9x64x64xbf16, #tpu.memory_space<vmem>>, vector<1x64x64xbf16>
    %389 = vector.shape_cast %388 : vector<1x64x64xbf16> to vector<64x64xbf16>
    %cst_391 = arith.constant dense<0.000000e+00> : vector<2x64xf32>
    %390 = tpu.matmul %387, %389, %cst_391 {dimension_numbers = #tpu.dot_dimension_numbers<[1], [0], [0], [1], [0, 0, 1, 1], [], []>} : vector<2x64xbf16>, vector<64x64xbf16>, vector<2x64xf32> -> vector<2x64xf32>
    %c1_392 = arith.constant 1 : index
    %c1_393 = arith.constant 1 : index
    %c0_394 = arith.constant 0 : index
    %391 = vector.load %arg16[%c1_392, %c1_393, %c0_394] : memref<4x4x64xf32, #tpu.memory_space<vmem>>, vector<1x2x64xf32>
    %392 = vector.shape_cast %391 : vector<1x2x64xf32> to vector<2x64xf32>
    %393 = arith.truncf %392 : vector<2x64xf32> to vector<2x64xbf16>
    %c1_395 = arith.constant 1 : index
    %c0_396 = arith.constant 0 : index
    %c0_397 = arith.constant 0 : index
    %394 = vector.load %arg6[%c1_395, %c0_396, %c0_397] : memref<9x64x64xbf16, #tpu.memory_space<vmem>>, vector<1x64x64xbf16>
    %395 = vector.shape_cast %394 : vector<1x64x64xbf16> to vector<64x64xbf16>
    %cst_398 = arith.constant dense<0.000000e+00> : vector<2x64xf32>
    %396 = tpu.matmul %393, %395, %cst_398 {dimension_numbers = #tpu.dot_dimension_numbers<[1], [0], [0], [1], [0, 0, 1, 1], [], []>} : vector<2x64xbf16>, vector<64x64xbf16>, vector<2x64xf32> -> vector<2x64xf32>
    %397 = arith.addf %390, %396 : vector<2x64xf32>
    %c1_399 = arith.constant 1 : index
    %c2_400 = arith.constant 2 : index
    %c0_401 = arith.constant 0 : index
    %398 = vector.load %arg16[%c1_399, %c2_400, %c0_401] : memref<4x4x64xf32, #tpu.memory_space<vmem>>, vector<1x2x64xf32>
    %399 = vector.shape_cast %398 : vector<1x2x64xf32> to vector<2x64xf32>
    %400 = arith.truncf %399 : vector<2x64xf32> to vector<2x64xbf16>
    %c2_402 = arith.constant 2 : index
    %c0_403 = arith.constant 0 : index
    %c0_404 = arith.constant 0 : index
    %401 = vector.load %arg6[%c2_402, %c0_403, %c0_404] : memref<9x64x64xbf16, #tpu.memory_space<vmem>>, vector<1x64x64xbf16>
    %402 = vector.shape_cast %401 : vector<1x64x64xbf16> to vector<64x64xbf16>
    %cst_405 = arith.constant dense<0.000000e+00> : vector<2x64xf32>
    %403 = tpu.matmul %400, %402, %cst_405 {dimension_numbers = #tpu.dot_dimension_numbers<[1], [0], [0], [1], [0, 0, 1, 1], [], []>} : vector<2x64xbf16>, vector<64x64xbf16>, vector<2x64xf32> -> vector<2x64xf32>
    %404 = arith.addf %397, %403 : vector<2x64xf32>
    %c2_406 = arith.constant 2 : index
    %c0_407 = arith.constant 0 : index
    %c0_408 = arith.constant 0 : index
    %405 = vector.load %arg16[%c2_406, %c0_407, %c0_408] : memref<4x4x64xf32, #tpu.memory_space<vmem>>, vector<1x2x64xf32>
    %406 = vector.shape_cast %405 : vector<1x2x64xf32> to vector<2x64xf32>
    %407 = arith.truncf %406 : vector<2x64xf32> to vector<2x64xbf16>
    %c3_409 = arith.constant 3 : index
    %c0_410 = arith.constant 0 : index
    %c0_411 = arith.constant 0 : index
    %408 = vector.load %arg6[%c3_409, %c0_410, %c0_411] : memref<9x64x64xbf16, #tpu.memory_space<vmem>>, vector<1x64x64xbf16>
    %409 = vector.shape_cast %408 : vector<1x64x64xbf16> to vector<64x64xbf16>
    %cst_412 = arith.constant dense<0.000000e+00> : vector<2x64xf32>
    %410 = tpu.matmul %407, %409, %cst_412 {dimension_numbers = #tpu.dot_dimension_numbers<[1], [0], [0], [1], [0, 0, 1, 1], [], []>} : vector<2x64xbf16>, vector<64x64xbf16>, vector<2x64xf32> -> vector<2x64xf32>
    %411 = arith.addf %404, %410 : vector<2x64xf32>
    %c2_413 = arith.constant 2 : index
    %c1_414 = arith.constant 1 : index
    %c0_415 = arith.constant 0 : index
    %412 = vector.load %arg16[%c2_413, %c1_414, %c0_415] : memref<4x4x64xf32, #tpu.memory_space<vmem>>, vector<1x2x64xf32>
    %413 = vector.shape_cast %412 : vector<1x2x64xf32> to vector<2x64xf32>
    %414 = arith.truncf %413 : vector<2x64xf32> to vector<2x64xbf16>
    %c4_416 = arith.constant 4 : index
    %c0_417 = arith.constant 0 : index
    %c0_418 = arith.constant 0 : index
    %415 = vector.load %arg6[%c4_416, %c0_417, %c0_418] : memref<9x64x64xbf16, #tpu.memory_space<vmem>>, vector<1x64x64xbf16>
    %416 = vector.shape_cast %415 : vector<1x64x64xbf16> to vector<64x64xbf16>
    %cst_419 = arith.constant dense<0.000000e+00> : vector<2x64xf32>
    %417 = tpu.matmul %414, %416, %cst_419 {dimension_numbers = #tpu.dot_dimension_numbers<[1], [0], [0], [1], [0, 0, 1, 1], [], []>} : vector<2x64xbf16>, vector<64x64xbf16>, vector<2x64xf32> -> vector<2x64xf32>
    %418 = arith.addf %411, %417 : vector<2x64xf32>
    %c2_420 = arith.constant 2 : index
    %c2_421 = arith.constant 2 : index
    %c0_422 = arith.constant 0 : index
    %419 = vector.load %arg16[%c2_420, %c2_421, %c0_422] : memref<4x4x64xf32, #tpu.memory_space<vmem>>, vector<1x2x64xf32>
    %420 = vector.shape_cast %419 : vector<1x2x64xf32> to vector<2x64xf32>
    %421 = arith.truncf %420 : vector<2x64xf32> to vector<2x64xbf16>
    %c5_423 = arith.constant 5 : index
    %c0_424 = arith.constant 0 : index
    %c0_425 = arith.constant 0 : index
    %422 = vector.load %arg6[%c5_423, %c0_424, %c0_425] : memref<9x64x64xbf16, #tpu.memory_space<vmem>>, vector<1x64x64xbf16>
    %423 = vector.shape_cast %422 : vector<1x64x64xbf16> to vector<64x64xbf16>
    %cst_426 = arith.constant dense<0.000000e+00> : vector<2x64xf32>
    %424 = tpu.matmul %421, %423, %cst_426 {dimension_numbers = #tpu.dot_dimension_numbers<[1], [0], [0], [1], [0, 0, 1, 1], [], []>} : vector<2x64xbf16>, vector<64x64xbf16>, vector<2x64xf32> -> vector<2x64xf32>
    %425 = arith.addf %418, %424 : vector<2x64xf32>
    %c3_427 = arith.constant 3 : index
    %c0_428 = arith.constant 0 : index
    %c0_429 = arith.constant 0 : index
    %426 = vector.load %arg16[%c3_427, %c0_428, %c0_429] : memref<4x4x64xf32, #tpu.memory_space<vmem>>, vector<1x2x64xf32>
    %427 = vector.shape_cast %426 : vector<1x2x64xf32> to vector<2x64xf32>
    %428 = arith.truncf %427 : vector<2x64xf32> to vector<2x64xbf16>
    %c6_430 = arith.constant 6 : index
    %c0_431 = arith.constant 0 : index
    %c0_432 = arith.constant 0 : index
    %429 = vector.load %arg6[%c6_430, %c0_431, %c0_432] : memref<9x64x64xbf16, #tpu.memory_space<vmem>>, vector<1x64x64xbf16>
    %430 = vector.shape_cast %429 : vector<1x64x64xbf16> to vector<64x64xbf16>
    %cst_433 = arith.constant dense<0.000000e+00> : vector<2x64xf32>
    %431 = tpu.matmul %428, %430, %cst_433 {dimension_numbers = #tpu.dot_dimension_numbers<[1], [0], [0], [1], [0, 0, 1, 1], [], []>} : vector<2x64xbf16>, vector<64x64xbf16>, vector<2x64xf32> -> vector<2x64xf32>
    %432 = arith.addf %425, %431 : vector<2x64xf32>
    %c3_434 = arith.constant 3 : index
    %c1_435 = arith.constant 1 : index
    %c0_436 = arith.constant 0 : index
    %433 = vector.load %arg16[%c3_434, %c1_435, %c0_436] : memref<4x4x64xf32, #tpu.memory_space<vmem>>, vector<1x2x64xf32>
    %434 = vector.shape_cast %433 : vector<1x2x64xf32> to vector<2x64xf32>
    %435 = arith.truncf %434 : vector<2x64xf32> to vector<2x64xbf16>
    %c7_437 = arith.constant 7 : index
    %c0_438 = arith.constant 0 : index
    %c0_439 = arith.constant 0 : index
    %436 = vector.load %arg6[%c7_437, %c0_438, %c0_439] : memref<9x64x64xbf16, #tpu.memory_space<vmem>>, vector<1x64x64xbf16>
    %437 = vector.shape_cast %436 : vector<1x64x64xbf16> to vector<64x64xbf16>
    %cst_440 = arith.constant dense<0.000000e+00> : vector<2x64xf32>
    %438 = tpu.matmul %435, %437, %cst_440 {dimension_numbers = #tpu.dot_dimension_numbers<[1], [0], [0], [1], [0, 0, 1, 1], [], []>} : vector<2x64xbf16>, vector<64x64xbf16>, vector<2x64xf32> -> vector<2x64xf32>
    %439 = arith.addf %432, %438 : vector<2x64xf32>
    %c3_441 = arith.constant 3 : index
    %c2_442 = arith.constant 2 : index
    %c0_443 = arith.constant 0 : index
    %440 = vector.load %arg16[%c3_441, %c2_442, %c0_443] : memref<4x4x64xf32, #tpu.memory_space<vmem>>, vector<1x2x64xf32>
    %441 = vector.shape_cast %440 : vector<1x2x64xf32> to vector<2x64xf32>
    %442 = arith.truncf %441 : vector<2x64xf32> to vector<2x64xbf16>
    %c8_444 = arith.constant 8 : index
    %c0_445 = arith.constant 0 : index
    %c0_446 = arith.constant 0 : index
    %443 = vector.load %arg6[%c8_444, %c0_445, %c0_446] : memref<9x64x64xbf16, #tpu.memory_space<vmem>>, vector<1x64x64xbf16>
    %444 = vector.shape_cast %443 : vector<1x64x64xbf16> to vector<64x64xbf16>
    %cst_447 = arith.constant dense<0.000000e+00> : vector<2x64xf32>
    %445 = tpu.matmul %442, %444, %cst_447 {dimension_numbers = #tpu.dot_dimension_numbers<[1], [0], [0], [1], [0, 0, 1, 1], [], []>} : vector<2x64xbf16>, vector<64x64xbf16>, vector<2x64xf32> -> vector<2x64xf32>
    %446 = arith.addf %439, %445 : vector<2x64xf32>
    %c0_448 = arith.constant 0 : index
    %c0_449 = arith.constant 0 : index
    %447 = vector.load %arg7[%c0_448, %c0_449] : memref<1x64xf32, #tpu.memory_space<vmem>>, vector<1x64xf32>
    %448 = vector.broadcast %447 : vector<1x64xf32> to vector<2x64xf32>
    %449 = arith.addf %446, %448 : vector<2x64xf32>
    %cst_450 = arith.constant 0.000000e+00 : f32
    %450 = vector.broadcast %cst_450 : f32 to vector<2x64xf32>
    %451 = arith.maximumf %449, %450 : vector<2x64xf32>
    %c1_451 = arith.constant 1 : index
    %c0_452 = arith.constant 0 : index
    %c0_453 = arith.constant 0 : index
    %452 = vector.load %arg17[%c1_451, %c0_452, %c0_453] : memref<2x2x64xf32, #tpu.memory_space<vmem>>, vector<1x2x64xf32>
    %453 = vector.shape_cast %452 : vector<1x2x64xf32> to vector<2x64xf32>
    %454 = vector.shape_cast %451 : vector<2x64xf32> to vector<1x2x64xf32>
    tpu.vector_store %arg17[%c1_451, %c0_452, %c0_453], %454 {strides = array<i32>} : memref<2x2x64xf32, #tpu.memory_space<vmem>>, vector<1x2x64xf32>,
    %c0_454 = arith.constant 0 : index
    %c0_455 = arith.constant 0 : index
    %c0_456 = arith.constant 0 : index
    %455 = vector.load %arg17[%c0_454, %c0_455, %c0_456] : memref<2x2x64xf32, #tpu.memory_space<vmem>>, vector<1x1x64xf32>
    %456 = vector.shape_cast %455 : vector<1x1x64xf32> to vector<1x64xf32>
    %457 = arith.truncf %456 : vector<1x64xf32> to vector<1x64xbf16>
    %c0_457 = arith.constant 0 : index
    %c0_458 = arith.constant 0 : index
    %c0_459 = arith.constant 0 : index
    %458 = vector.load %arg8[%c0_457, %c0_458, %c0_459] : memref<4x64x128xbf16, #tpu.memory_space<vmem>>, vector<1x64x128xbf16>
    %459 = vector.shape_cast %458 : vector<1x64x128xbf16> to vector<64x128xbf16>
    %cst_460 = arith.constant dense<0.000000e+00> : vector<1x128xf32>
    %460 = tpu.matmul %457, %459, %cst_460 {dimension_numbers = #tpu.dot_dimension_numbers<[1], [0], [0], [1], [0, 0, 1, 1], [], []>} : vector<1x64xbf16>, vector<64x128xbf16>, vector<1x128xf32> -> vector<1x128xf32>
    %c0_461 = arith.constant 0 : index
    %c1_462 = arith.constant 1 : index
    %c0_463 = arith.constant 0 : index
    %461 = vector.load %arg17[%c0_461, %c1_462, %c0_463] : memref<2x2x64xf32, #tpu.memory_space<vmem>>, vector<1x1x64xf32>
    %462 = vector.shape_cast %461 : vector<1x1x64xf32> to vector<1x64xf32>
    %463 = arith.truncf %462 : vector<1x64xf32> to vector<1x64xbf16>
    %c1_464 = arith.constant 1 : index
    %c0_465 = arith.constant 0 : index
    %c0_466 = arith.constant 0 : index
    %464 = vector.load %arg8[%c1_464, %c0_465, %c0_466] : memref<4x64x128xbf16, #tpu.memory_space<vmem>>, vector<1x64x128xbf16>
    %465 = vector.shape_cast %464 : vector<1x64x128xbf16> to vector<64x128xbf16>
    %cst_467 = arith.constant dense<0.000000e+00> : vector<1x128xf32>
    %466 = tpu.matmul %463, %465, %cst_467 {dimension_numbers = #tpu.dot_dimension_numbers<[1], [0], [0], [1], [0, 0, 1, 1], [], []>} : vector<1x64xbf16>, vector<64x128xbf16>, vector<1x128xf32> -> vector<1x128xf32>
    %467 = arith.addf %460, %466 : vector<1x128xf32>
    %c1_468 = arith.constant 1 : index
    %c0_469 = arith.constant 0 : index
    %c0_470 = arith.constant 0 : index
    %468 = vector.load %arg17[%c1_468, %c0_469, %c0_470] : memref<2x2x64xf32, #tpu.memory_space<vmem>>, vector<1x1x64xf32>
    %469 = vector.shape_cast %468 : vector<1x1x64xf32> to vector<1x64xf32>
    %470 = arith.truncf %469 : vector<1x64xf32> to vector<1x64xbf16>
    %c2_471 = arith.constant 2 : index
    %c0_472 = arith.constant 0 : index
    %c0_473 = arith.constant 0 : index
    %471 = vector.load %arg8[%c2_471, %c0_472, %c0_473] : memref<4x64x128xbf16, #tpu.memory_space<vmem>>, vector<1x64x128xbf16>
    %472 = vector.shape_cast %471 : vector<1x64x128xbf16> to vector<64x128xbf16>
    %cst_474 = arith.constant dense<0.000000e+00> : vector<1x128xf32>
    %473 = tpu.matmul %470, %472, %cst_474 {dimension_numbers = #tpu.dot_dimension_numbers<[1], [0], [0], [1], [0, 0, 1, 1], [], []>} : vector<1x64xbf16>, vector<64x128xbf16>, vector<1x128xf32> -> vector<1x128xf32>
    %474 = arith.addf %467, %473 : vector<1x128xf32>
    %c1_475 = arith.constant 1 : index
    %c1_476 = arith.constant 1 : index
    %c0_477 = arith.constant 0 : index
    %475 = vector.load %arg17[%c1_475, %c1_476, %c0_477] : memref<2x2x64xf32, #tpu.memory_space<vmem>>, vector<1x1x64xf32>
    %476 = vector.shape_cast %475 : vector<1x1x64xf32> to vector<1x64xf32>
    %477 = arith.truncf %476 : vector<1x64xf32> to vector<1x64xbf16>
    %c3_478 = arith.constant 3 : index
    %c0_479 = arith.constant 0 : index
    %c0_480 = arith.constant 0 : index
    %478 = vector.load %arg8[%c3_478, %c0_479, %c0_480] : memref<4x64x128xbf16, #tpu.memory_space<vmem>>, vector<1x64x128xbf16>
    %479 = vector.shape_cast %478 : vector<1x64x128xbf16> to vector<64x128xbf16>
    %cst_481 = arith.constant dense<0.000000e+00> : vector<1x128xf32>
    %480 = tpu.matmul %477, %479, %cst_481 {dimension_numbers = #tpu.dot_dimension_numbers<[1], [0], [0], [1], [0, 0, 1, 1], [], []>} : vector<1x64xbf16>, vector<64x128xbf16>, vector<1x128xf32> -> vector<1x128xf32>
    %481 = arith.addf %474, %480 : vector<1x128xf32>
    %c0_482 = arith.constant 0 : index
    %c0_483 = arith.constant 0 : index
    %482 = vector.load %arg9[%c0_482, %c0_483] : memref<1x128xf32, #tpu.memory_space<vmem>>, vector<1x128xf32>
    %483 = arith.addf %481, %482 : vector<1x128xf32>
    %cst_484 = arith.constant 0.000000e+00 : f32
    %484 = vector.broadcast %cst_484 : f32 to vector<1x128xf32>
    %485 = arith.maximumf %483, %484 : vector<1x128xf32>
    %486 = arith.truncf %485 : vector<1x128xf32> to vector<1x128xbf16>
    %c0_485 = arith.constant 0 : index
    %c0_486 = arith.constant 0 : index
    %487 = vector.load %arg10[%c0_485, %c0_486] : memref<128x256xbf16, #tpu.memory_space<vmem>>, vector<128x256xbf16>
    %cst_487 = arith.constant dense<0.000000e+00> : vector<1x256xf32>
    %488 = tpu.matmul %486, %487, %cst_487 {dimension_numbers = #tpu.dot_dimension_numbers<[1], [0], [0], [1], [0, 0, 1, 1], [], []>} : vector<1x128xbf16>, vector<128x256xbf16>, vector<1x256xf32> -> vector<1x256xf32>
    %c0_488 = arith.constant 0 : index
    %c0_489 = arith.constant 0 : index
    %489 = vector.load %arg11[%c0_488, %c0_489] : memref<1x256xf32, #tpu.memory_space<vmem>>, vector<1x256xf32>
    %490 = arith.addf %488, %489 : vector<1x256xf32>
    %cst_490 = arith.constant 0.000000e+00 : f32
    %491 = vector.broadcast %cst_490 : f32 to vector<1x256xf32>
    %492 = arith.maximumf %490, %491 : vector<1x256xf32>
    %493 = arith.truncf %492 : vector<1x256xf32> to vector<1x256xbf16>
    %c0_491 = arith.constant 0 : index
    %c0_492 = arith.constant 0 : index
    %494 = vector.load %arg12[%c0_491, %c0_492] : memref<256x128xbf16, #tpu.memory_space<vmem>>, vector<256x128xbf16>
    %cst_493 = arith.constant dense<0.000000e+00> : vector<1x128xf32>
    %495 = tpu.matmul %493, %494, %cst_493 {dimension_numbers = #tpu.dot_dimension_numbers<[1], [0], [0], [1], [0, 0, 1, 1], [], []>} : vector<1x256xbf16>, vector<256x128xbf16>, vector<1x128xf32> -> vector<1x128xf32>
    %c0_494 = arith.constant 0 : index
    %c0_495 = arith.constant 0 : index
    %496 = vector.load %arg13[%c0_494, %c0_495] : memref<1x128xf32, #tpu.memory_space<vmem>>, vector<1x128xf32>
    %497 = arith.addf %495, %496 : vector<1x128xf32>
    %498 = vector.shape_cast %497 : vector<1x128xf32> to vector<1x1x128xf32>
    %c0_496 = arith.constant 0 : index
    %c0_497 = arith.constant 0 : index
    %c0_498 = arith.constant 0 : index
    %499 = vector.load %arg14[%c0_496, %c0_497, %c0_498] : memref<1x1x128xf32, #tpu.memory_space<vmem>>, vector<1x1x128xf32>
    tpu.vector_store %arg14[%c0_496, %c0_497, %c0_498], %498 {strides = array<i32>} : memref<1x1x128xf32, #tpu.memory_space<vmem>>, vector<1x1x128xf32>,
    return
  }
  func.func @transform_0(%arg0: i32) -> (i32, i32, i32, i32) {
    %c0_i32 = arith.constant 0 : i32
    %c0_i32_0 = arith.constant 0 : i32
    %c0_i32_1 = arith.constant 0 : i32
    %c0_i32_2 = arith.constant 0 : i32
    return %arg0, %c0_i32, %c0_i32_0, %c0_i32_1 : i32, i32, i32, i32
  }
  func.func @transform_1(%arg0: i32) -> (i32, i32, i32) {
    %c0_i32 = arith.constant 0 : i32
    %c0_i32_0 = arith.constant 0 : i32
    %c0_i32_1 = arith.constant 0 : i32
    %c0_i32_2 = arith.constant 0 : i32
    return %c0_i32, %c0_i32_0, %c0_i32_1 : i32, i32, i32
  }
  func.func @transform_2(%arg0: i32) -> (i32, i32) {
    %c0_i32 = arith.constant 0 : i32
    %c0_i32_0 = arith.constant 0 : i32
    %c0_i32_1 = arith.constant 0 : i32
    return %c0_i32, %c0_i32_0 : i32, i32
  }
  func.func @transform_3(%arg0: i32) -> (i32, i32, i32) {
    %c0_i32 = arith.constant 0 : i32
    %c0_i32_0 = arith.constant 0 : i32
    %c0_i32_1 = arith.constant 0 : i32
    %c0_i32_2 = arith.constant 0 : i32
    return %c0_i32, %c0_i32_0, %c0_i32_1 : i32, i32, i32
  }
  func.func @transform_4(%arg0: i32) -> (i32, i32) {
    %c0_i32 = arith.constant 0 : i32
    %c0_i32_0 = arith.constant 0 : i32
    %c0_i32_1 = arith.constant 0 : i32
    return %c0_i32, %c0_i32_0 : i32, i32
  }
  func.func @transform_5(%arg0: i32) -> (i32, i32, i32) {
    %c0_i32 = arith.constant 0 : i32
    %c0_i32_0 = arith.constant 0 : i32
    %c0_i32_1 = arith.constant 0 : i32
    %c0_i32_2 = arith.constant 0 : i32
    return %c0_i32, %c0_i32_0, %c0_i32_1 : i32, i32, i32
  }
  func.func @transform_6(%arg0: i32) -> (i32, i32) {
    %c0_i32 = arith.constant 0 : i32
    %c0_i32_0 = arith.constant 0 : i32
    %c0_i32_1 = arith.constant 0 : i32
    return %c0_i32, %c0_i32_0 : i32, i32
  }
  func.func @transform_7(%arg0: i32) -> (i32, i32, i32) {
    %c0_i32 = arith.constant 0 : i32
    %c0_i32_0 = arith.constant 0 : i32
    %c0_i32_1 = arith.constant 0 : i32
    %c0_i32_2 = arith.constant 0 : i32
    return %c0_i32, %c0_i32_0, %c0_i32_1 : i32, i32, i32
  }
  func.func @transform_8(%arg0: i32) -> (i32, i32) {
    %c0_i32 = arith.constant 0 : i32
    %c0_i32_0 = arith.constant 0 : i32
    %c0_i32_1 = arith.constant 0 : i32
    return %c0_i32, %c0_i32_0 : i32, i32
  }
  func.func @transform_9(%arg0: i32) -> (i32, i32) {
    %c0_i32 = arith.constant 0 : i32
    %c0_i32_0 = arith.constant 0 : i32
    %c0_i32_1 = arith.constant 0 : i32
    return %c0_i32, %c0_i32_0 : i32, i32
  }
  func.func @transform_10(%arg0: i32) -> (i32, i32) {
    %c0_i32 = arith.constant 0 : i32
    %c0_i32_0 = arith.constant 0 : i32
    %c0_i32_1 = arith.constant 0 : i32
    return %c0_i32, %c0_i32_0 : i32, i32
  }
  func.func @transform_11(%arg0: i32) -> (i32, i32) {
    %c0_i32 = arith.constant 0 : i32
    %c0_i32_0 = arith.constant 0 : i32
    %c0_i32_1 = arith.constant 0 : i32
    return %c0_i32, %c0_i32_0 : i32, i32
  }
  func.func @transform_12(%arg0: i32) -> (i32, i32) {
    %c0_i32 = arith.constant 0 : i32
    %c0_i32_0 = arith.constant 0 : i32
    %c0_i32_1 = arith.constant 0 : i32
    return %c0_i32, %c0_i32_0 : i32, i32
  }
  func.func @transform_13(%arg0: i32) -> (i32, i32, i32) {
    %c0_i32 = arith.constant 0 : i32
    %c0_i32_0 = arith.constant 0 : i32
    %c0_i32_1 = arith.constant 0 : i32
    return %arg0, %c0_i32, %c0_i32_0 : i32, i32, i32
  }
}

</mosaic_0001>

<llo_original>
// kernel: _lambda_.1
$region0: #{_lambda_.1}
  #allocation0 [shape = 'u32[]', space=smem, size = 0x4, offset = 0x4, fixed_abs, tag = 'smem constant byte address 0x4 - core index']
  #allocation1 [shape = 'u32[144,128]{1,0:T(1,128)}', space=vmem, size = 0x12000, scoped, tag = 'internal scratch']
  #allocation2 [shape = 'f32[5,5,128]{2,1,0:T(8,128)}', space=vmem, size = 0x5000, scoped, tag = 'scratch operand']
  #allocation3 [shape = 'f32[4,4,64]{2,1,0:T(4,128)}', space=vmem, size = 0x2000, scoped, tag = 'scratch operand']
  #allocation4 [shape = 'f32[2,2,64]{2,1,0:T(2,128)}', space=vmem, size = 0x800, scoped, tag = 'scratch operand']
  %s0 = inlined_call_operand.vmem [shape: f32[2,6,6,256], index: 0, kind: input, shape index: {}]
  %s1 = inlined_call_operand.vmem [shape: bf16[4,256,128], index: 1, kind: input, shape index: {}]
  %s2 = inlined_call_operand.vmem [shape: f32[1,128], index: 2, kind: input, shape index: {}]
  %s3 = inlined_call_operand.vmem [shape: bf16[4,128,64], index: 3, kind: input, shape index: {}]
  %s4 = inlined_call_operand.vmem [shape: f32[1,64], index: 4, kind: input, shape index: {}]
  %s5 = inlined_call_operand.vmem [shape: bf16[9,64,64], index: 5, kind: input, shape index: {}]
  %s6 = inlined_call_operand.vmem [shape: f32[1,64], index: 6, kind: input, shape index: {}]
  %s7 = inlined_call_operand.vmem [shape: bf16[4,64,128], index: 7, kind: input, shape index: {}]
  %s8 = inlined_call_operand.vmem [shape: f32[1,128], index: 8, kind: input, shape index: {}]
  %s9 = inlined_call_operand.vmem [shape: bf16[128,256], index: 9, kind: input, shape index: {}]
  %s10 = inlined_call_operand.vmem [shape: f32[1,256], index: 10, kind: input, shape index: {}]
  %s11 = inlined_call_operand.vmem [shape: bf16[256,128], index: 11, kind: input, shape index: {}]
  %s12 = inlined_call_operand.vmem [shape: f32[1,128], index: 12, kind: input, shape index: {}]
  %s13 = inlined_call_operand.hbm [shape: f32[2,1,128], index: 13, kind: output, shape index: {}]
  %s14 = sld [smem:[#allocation0]]
  $region85: #{_lambda_.1} parent=0
    _
  %s16 = ssub.s32 1, %s14
  %s17 = scalar_select 0, %s16, %s14
  $region1: #{_lambda_.1} parent=0
    #allocation5 [shape = 'u8[1024]{0}', space=vmem, size = 0x400, scoped, tag = 'output window, operand 0']
    #allocation6 [shape = 's32[2]{0}', space=sflag, size = 0x8, scoped, tag = 'scoped memory for _lambda_.1']
    %18 = vsyncpa [#allocation6], 0
    %s19 = scalar_lea.sflag [#allocation6], 1
    %20 = vsyncpa %s19, 0
    loop: start=0, step=1, limit=4
    $region2: #{_lambda_.1} parent=1 // loop_pre_header
      _
    $region3: #{_lambda_.1} parent=1 // loop_header
      %s22 = sphi 0, %s26
      %p23 = scmp.ge.s32.totalorder %s22, 4
      %s32 = sphi 0, %s34
      %s35 = sphi 0, %s32
      %s36 = sphi 0, %s35
      %s52 = sphi 0, %s36
      %s56 = sphi 0, %s56
      %s58 = sphi 0, %s56
      %s59 = sphi 0, %s58
      %s73 = sphi 0, %s59
      %s77 = sphi 0, %s77
      %s79 = sphi 0, %s77
      %s80 = sphi 0, %s79
      %s94 = sphi 0, %s80
      %s98 = sphi 0, %s98
      %s100 = sphi 0, %s98
      %s101 = sphi 0, %s100
      %s115 = sphi 0, %s101
      %s119 = sphi 0, %s119
      %s121 = sphi 0, %s119
      %s122 = sphi 0, %s121
      %s136 = sphi 0, %s122
      %s140 = sphi 0, %s140
      %s142 = sphi 0, %s140
      %s143 = sphi 0, %s142
      %s157 = sphi 0, %s143
      %s161 = sphi 0, %s161
      %s163 = sphi 0, %s161
      %s164 = sphi 0, %s163
      %s178 = sphi 0, %s164
      %s182 = sphi 0, %s182
      %s184 = sphi 0, %s182
      %s185 = sphi 0, %s184
      %s199 = sphi 0, %s185
      %s203 = sphi 0, %s203
      %s205 = sphi 0, %s203
      %s206 = sphi 0, %s205
      %s220 = sphi 0, %s206
      %s224 = sphi 0, %s224
      %s226 = sphi 0, %s224
      %s227 = sphi 0, %s226
      %s241 = sphi 0, %s227
      %s245 = sphi 0, %s245
      %s247 = sphi 0, %s245
      %s248 = sphi 0, %s247
      %s262 = sphi 0, %s248
      %s266 = sphi 0, %s266
      %s268 = sphi 0, %s266
      %s269 = sphi 0, %s268
      %s283 = sphi 0, %s269
      %s287 = sphi 0, %s287
      %s289 = sphi 0, %s287
      %s290 = sphi 0, %s289
      %s304 = sphi 0, %s290
      %s310 = sphi 0, %s312
      %s313 = sphi 0, %s310
      %s314 = sphi 0, %s313
      %s330 = sphi 0, %s314
    $region4: #{_lambda_.1} parent=1 // loop_header_branch
      %25 = sbr.rel (%p23) target = $region8
    $region5: #{_lambda_.1} parent=1 // loop_body
      %s27 = ssub.s32 %s22, 1
      %s28 = ssub.s32 %s22, 2
      %s29 = sadd.s32 %s22, 1
      %s30 = ssub.s32 %s22, %s29
      %p31 = scmp.eq.s32.totalorder %s30, 0
      %s33 = sadd.s32 %s32, 1
      %s34 = scalar_select %p31, %s32, %s33
      %p37 = pneg %p31
      %p38 = scmp.eq.s32.totalorder %s22, 1
      %p39 = por %p37, %p38
      %p40 = scmp.ne.s32.totalorder %s32, %s35
      %p41 = scmp.eq.s32.totalorder %s22, 0
      %p42 = por %p40, %p41
      %p43 = scmp.ne.s32.totalorder %s32, %s35
      %p44 = scmp.eq.s32.totalorder %s27, 1
      %p45 = por %p43, %p44
      %p46 = scmp.ne.s32.totalorder %s35, %s36
      %p47 = scmp.eq.s32.totalorder %s27, 0
      %p48 = por %p46, %p47
      %p49 = scmp.ne.s32.totalorder %s35, %s36
      %p50 = scmp.eq.s32.totalorder %s28, 1
      %p51 = por %p49, %p50
      %p53 = scmp.ne.s32.totalorder %s36, %s52
      %p54 = scmp.eq.s32.totalorder %s28, 0
      %p55 = por %p53, %p54
      %s57 = sadd.s32 %s56, 1
      %p60 = scmp.eq.s32.totalorder %s22, 1
      %p61 = scmp.ne.s32.totalorder %s56, %s58
      %p62 = scmp.eq.s32.totalorder %s22, 0
      %p63 = por %p61, %p62
      %p64 = scmp.ne.s32.totalorder %s56, %s58
      %p65 = scmp.eq.s32.totalorder %s27, 1
      %p66 = por %p64, %p65
      %p67 = scmp.ne.s32.totalorder %s58, %s59
      %p68 = scmp.eq.s32.totalorder %s27, 0
      %p69 = por %p67, %p68
      %p70 = scmp.ne.s32.totalorder %s58, %s59
      %p71 = scmp.eq.s32.totalorder %s28, 1
      %p72 = por %p70, %p71
      %p74 = scmp.ne.s32.totalorder %s59, %s73
      %p75 = scmp.eq.s32.totalorder %s28, 0
      %p76 = por %p74, %p75
      %s78 = sadd.s32 %s77, 1
      %p81 = scmp.eq.s32.totalorder %s22, 1
      %p82 = scmp.ne.s32.totalorder %s77, %s79
      %p83 = scmp.eq.s32.totalorder %s22, 0
      %p84 = por %p82, %p83
      %p85 = scmp.ne.s32.totalorder %s77, %s79
      %p86 = scmp.eq.s32.totalorder %s27, 1
      %p87 = por %p85, %p86
      %p88 = scmp.ne.s32.totalorder %s79, %s80
      %p89 = scmp.eq.s32.totalorder %s27, 0
      %p90 = por %p88, %p89
      %p91 = scmp.ne.s32.totalorder %s79, %s80
      %p92 = scmp.eq.s32.totalorder %s28, 1
      %p93 = por %p91, %p92
      %p95 = scmp.ne.s32.totalorder %s80, %s94
      %p96 = scmp.eq.s32.totalorder %s28, 0
      %p97 = por %p95, %p96
      %s99 = sadd.s32 %s98, 1
      %p102 = scmp.eq.s32.totalorder %s22, 1
      %p103 = scmp.ne.s32.totalorder %s98, %s100
      %p104 = scmp.eq.s32.totalorder %s22, 0
      %p105 = por %p103, %p104
      %p106 = scmp.ne.s32.totalorder %s98, %s100
      %p107 = scmp.eq.s32.totalorder %s27, 1
      %p108 = por %p106, %p107
      %p109 = scmp.ne.s32.totalorder %s100, %s101
      %p110 = scmp.eq.s32.totalorder %s27, 0
      %p111 = por %p109, %p110
      %p112 = scmp.ne.s32.totalorder %s100, %s101
      %p113 = scmp.eq.s32.totalorder %s28, 1
      %p114 = por %p112, %p113
      %p116 = scmp.ne.s32.totalorder %s101, %s115
      %p117 = scmp.eq.s32.totalorder %s28, 0
      %p118 = por %p116, %p117
      %s120 = sadd.s32 %s119, 1
      %p123 = scmp.eq.s32.totalorder %s22, 1
      %p124 = scmp.ne.s32.totalorder %s119, %s121
      %p125 = scmp.eq.s32.totalorder %s22, 0
      %p126 = por %p124, %p125
      %p127 = scmp.ne.s32.totalorder %s119, %s121
      %p128 = scmp.eq.s32.totalorder %s27, 1
      %p129 = por %p127, %p128
      %p130 = scmp.ne.s32.totalorder %s121, %s122
      %p131 = scmp.eq.s32.totalorder %s27, 0
      %p132 = por %p130, %p131
      %p133 = scmp.ne.s32.totalorder %s121, %s122
      %p134 = scmp.eq.s32.totalorder %s28, 1
      %p135 = por %p133, %p134
      %p137 = scmp.ne.s32.totalorder %s122, %s136
      %p138 = scmp.eq.s32.totalorder %s28, 0
      %p139 = por %p137, %p138
      %s141 = sadd.s32 %s140, 1
      %p144 = scmp.eq.s32.totalorder %s22, 1
      %p145 = scmp.ne.s32.totalorder %s140, %s142
      %p146 = scmp.eq.s32.totalorder %s22, 0
      %p147 = por %p145, %p146
      %p148 = scmp.ne.s32.totalorder %s140, %s142
      %p149 = scmp.eq.s32.totalorder %s27, 1
      %p150 = por %p148, %p149
      %p151 = scmp.ne.s32.totalorder %s142, %s143
      %p152 = scmp.eq.s32.totalorder %s27, 0
      %p153 = por %p151, %p152
      %p154 = scmp.ne.s32.totalorder %s142, %s143
      %p155 = scmp.eq.s32.totalorder %s28, 1
      %p156 = por %p154, %p155
      %p158 = scmp.ne.s32.totalorder %s143, %s157
      %p159 = scmp.eq.s32.totalorder %s28, 0
      %p160 = por %p158, %p159
      %s162 = sadd.s32 %s161, 1
      %p165 = scmp.eq.s32.totalorder %s22, 1
      %p166 = scmp.ne.s32.totalorder %s161, %s163
      %p167 = scmp.eq.s32.totalorder %s22, 0
      %p168 = por %p166, %p167
      %p169 = scmp.ne.s32.totalorder %s161, %s163
      %p170 = scmp.eq.s32.totalorder %s27, 1
      %p171 = por %p169, %p170
      %p172 = scmp.ne.s32.totalorder %s163, %s164
      %p173 = scmp.eq.s32.totalorder %s27, 0
      %p174 = por %p172, %p173
      %p175 = scmp.ne.s32.totalorder %s163, %s164
      %p176 = scmp.eq.s32.totalorder %s28, 1
      %p177 = por %p175, %p176
      %p179 = scmp.ne.s32.totalorder %s164, %s178
      %p180 = scmp.eq.s32.totalorder %s28, 0
      %p181 = por %p179, %p180
      %s183 = sadd.s32 %s182, 1
      %p186 = scmp.eq.s32.totalorder %s22, 1
      %p187 = scmp.ne.s32.totalorder %s182, %s184
      %p188 = scmp.eq.s32.totalorder %s22, 0
      %p189 = por %p187, %p188
      %p190 = scmp.ne.s32.totalorder %s182, %s184
      %p191 = scmp.eq.s32.totalorder %s27, 1
      %p192 = por %p190, %p191
      %p193 = scmp.ne.s32.totalorder %s184, %s185
      %p194 = scmp.eq.s32.totalorder %s27, 0
      %p195 = por %p193, %p194
      %p196 = scmp.ne.s32.totalorder %s184, %s185
      %p197 = scmp.eq.s32.totalorder %s28, 1
      %p198 = por %p196, %p197
      %p200 = scmp.ne.s32.totalorder %s185, %s199
      %p201 = scmp.eq.s32.totalorder %s28, 0
      %p202 = por %p200, %p201
      %s204 = sadd.s32 %s203, 1
      %p207 = scmp.eq.s32.totalorder %s22, 1
      %p208 = scmp.ne.s32.totalorder %s203, %s205
      %p209 = scmp.eq.s32.totalorder %s22, 0
      %p210 = por %p208, %p209
      %p211 = scmp.ne.s32.totalorder %s203, %s205
      %p212 = scmp.eq.s32.totalorder %s27, 1
      %p213 = por %p211, %p212
      %p214 = scmp.ne.s32.totalorder %s205, %s206
      %p215 = scmp.eq.s32.totalorder %s27, 0
      %p216 = por %p214, %p215
      %p217 = scmp.ne.s32.totalorder %s205, %s206
      %p218 = scmp.eq.s32.totalorder %s28, 1
      %p219 = por %p217, %p218
      %p221 = scmp.ne.s32.totalorder %s206, %s220
      %p222 = scmp.eq.s32.totalorder %s28, 0
      %p223 = por %p221, %p222
      %s225 = sadd.s32 %s224, 1
      %p228 = scmp.eq.s32.totalorder %s22, 1
      %p229 = scmp.ne.s32.totalorder %s224, %s226
      %p230 = scmp.eq.s32.totalorder %s22, 0
      %p231 = por %p229, %p230
      %p232 = scmp.ne.s32.totalorder %s224, %s226
      %p233 = scmp.eq.s32.totalorder %s27, 1
      %p234 = por %p232, %p233
      %p235 = scmp.ne.s32.totalorder %s226, %s227
      %p236 = scmp.eq.s32.totalorder %s27, 0
      %p237 = por %p235, %p236
      %p238 = scmp.ne.s32.totalorder %s226, %s227
      %p239 = scmp.eq.s32.totalorder %s28, 1
      %p240 = por %p238, %p239
      %p242 = scmp.ne.s32.totalorder %s227, %s241
      %p243 = scmp.eq.s32.totalorder %s28, 0
      %p244 = por %p242, %p243
      %s246 = sadd.s32 %s245, 1
      %p249 = scmp.eq.s32.totalorder %s22, 1
      %p250 = scmp.ne.s32.totalorder %s245, %s247
      %p251 = scmp.eq.s32.totalorder %s22, 0
      %p252 = por %p250, %p251
      %p253 = scmp.ne.s32.totalorder %s245, %s247
      %p254 = scmp.eq.s32.totalorder %s27, 1
      %p255 = por %p253, %p254
      %p256 = scmp.ne.s32.totalorder %s247, %s248
      %p257 = scmp.eq.s32.totalorder %s27, 0
      %p258 = por %p256, %p257
      %p259 = scmp.ne.s32.totalorder %s247, %s248
      %p260 = scmp.eq.s32.totalorder %s28, 1
      %p261 = por %p259, %p260
      %p263 = scmp.ne.s32.totalorder %s248, %s262
      %p264 = scmp.eq.s32.totalorder %s28, 0
      %p265 = por %p263, %p264
      %s267 = sadd.s32 %s266, 1
      %p270 = scmp.eq.s32.totalorder %s22, 1
      %p271 = scmp.ne.s32.totalorder %s266, %s268
      %p272 = scmp.eq.s32.totalorder %s22, 0
      %p273 = por %p271, %p272
      %p274 = scmp.ne.s32.totalorder %s266, %s268
      %p275 = scmp.eq.s32.totalorder %s27, 1
      %p276 = por %p274, %p275
      %p277 = scmp.ne.s32.totalorder %s268, %s269
      %p278 = scmp.eq.s32.totalorder %s27, 0
      %p279 = por %p277, %p278
      %p280 = scmp.ne.s32.totalorder %s268, %s269
      %p281 = scmp.eq.s32.totalorder %s28, 1
      %p282 = por %p280, %p281
      %p284 = scmp.ne.s32.totalorder %s269, %s283
      %p285 = scmp.eq.s32.totalorder %s28, 0
      %p286 = por %p284, %p285
      %s288 = sadd.s32 %s287, 1
      %p291 = scmp.eq.s32.totalorder %s22, 1
      %p292 = scmp.ne.s32.totalorder %s287, %s289
      %p293 = scmp.eq.s32.totalorder %s22, 0
      %p294 = por %p292, %p293
      %p295 = scmp.ne.s32.totalorder %s287, %s289
      %p296 = scmp.eq.s32.totalorder %s27, 1
      %p297 = por %p295, %p296
      %p298 = scmp.ne.s32.totalorder %s289, %s290
      %p299 = scmp.eq.s32.totalorder %s27, 0
      %p300 = por %p298, %p299
      %p301 = scmp.ne.s32.totalorder %s289, %s290
      %p302 = scmp.eq.s32.totalorder %s28, 1
      %p303 = por %p301, %p302
      %p305 = scmp.ne.s32.totalorder %s290, %s304
      %p306 = scmp.eq.s32.totalorder %s28, 0
      %p307 = por %p305, %p306
      %s308 = ssub.s32 %s22, %s29
      %p309 = scmp.eq.s32.totalorder %s308, 0
      %s311 = sadd.s32 %s310, 1
      %s312 = scalar_select %p309, %s310, %s311
      %p315 = pneg %p309
      %p316 = scmp.eq.s32.totalorder %s22, 1
      %p317 = por %p315, %p316
      %p318 = scmp.ne.s32.totalorder %s310, %s313
      %p319 = scmp.eq.s32.totalorder %s22, 0
      %p320 = por %p318, %p319
      %p321 = scmp.ne.s32.totalorder %s310, %s313
      %p322 = scmp.eq.s32.totalorder %s27, 1
      %p323 = por %p321, %p322
      %p324 = scmp.ne.s32.totalorder %s313, %s314
      %p325 = scmp.eq.s32.totalorder %s27, 0
      %p326 = por %p324, %p325
      %p327 = scmp.ne.s32.totalorder %s313, %s314
      %p328 = scmp.eq.s32.totalorder %s28, 1
      %p329 = por %p327, %p328
      %p331 = scmp.ne.s32.totalorder %s314, %s330
      %p332 = scmp.eq.s32.totalorder %s28, 0
      %p333 = por %p331, %p332
      %p334 = scmp.le.s32.totalorder 1, %s22
      %p335 = scmp.lt.s32.totalorder %s22, 3
      %p336 = pnand %p334, %p335
      %p337 = pneg %p336
      // Predicated region
      $region9: #{_lambda_.1} parent=5 // pred_check
        _
      $region10: #{_lambda_.1} parent=5 // pred_check_branch
        %339 = sbr.rel (%p336) target = $region12
      $region11: #{_lambda_.1} parent=5 // pred_region
        %s340 = ssub.s32 %s22, 1
        // Predicated region
        $region13: #{_lambda_.1} parent=11 // pred_check
          %p341 = pneg %p69
        $region14: #{_lambda_.1} parent=11 // pred_check_branch
          %343 = sbr.rel (%p341) target = $region16
        $region15: #{_lambda_.1} parent=11 // pred_region
          _
        $region16: #{_lambda_.1} parent=11 // pred_fallthru
          _
        // Predicated region
        $region17: #{_lambda_.1} parent=11 // pred_check
          %p344 = pneg %p90
        $region18: #{_lambda_.1} parent=11 // pred_check_branch
          %346 = sbr.rel (%p344) target = $region20
        $region19: #{_lambda_.1} parent=11 // pred_region
          _
        $region20: #{_lambda_.1} parent=11 // pred_fallthru
          _
        // Predicated region
        $region21: #{_lambda_.1} parent=11 // pred_check
          %p347 = pneg %p111
        $region22: #{_lambda_.1} parent=11 // pred_check_branch
          %349 = sbr.rel (%p347) target = $region24
        $region23: #{_lambda_.1} parent=11 // pred_region
          _
        $region24: #{_lambda_.1} parent=11 // pred_fallthru
          _
        // Predicated region
        $region25: #{_lambda_.1} parent=11 // pred_check
          %p350 = pneg %p132
        $region26: #{_lambda_.1} parent=11 // pred_check_branch
          %352 = sbr.rel (%p350) target = $region28
        $region27: #{_lambda_.1} parent=11 // pred_region
          _
        $region28: #{_lambda_.1} parent=11 // pred_fallthru
          _
        // Predicated region
        $region29: #{_lambda_.1} parent=11 // pred_check
          %p353 = pneg %p153
        $region30: #{_lambda_.1} parent=11 // pred_check_branch
          %355 = sbr.rel (%p353) target = $region32
        $region31: #{_lambda_.1} parent=11 // pred_region
          _
        $region32: #{_lambda_.1} parent=11 // pred_fallthru
          _
        // Predicated region
        $region33: #{_lambda_.1} parent=11 // pred_check
          %p356 = pneg %p174
        $region34: #{_lambda_.1} parent=11 // pred_check_branch
          %358 = sbr.rel (%p356) target = $region36
        $region35: #{_lambda_.1} parent=11 // pred_region
          _
        $region36: #{_lambda_.1} parent=11 // pred_fallthru
          _
        // Predicated region
        $region37: #{_lambda_.1} parent=11 // pred_check
          %p359 = pneg %p195
        $region38: #{_lambda_.1} parent=11 // pred_check_branch
          %361 = sbr.rel (%p359) target = $region40
        $region39: #{_lambda_.1} parent=11 // pred_region
          _
        $region40: #{_lambda_.1} parent=11 // pred_fallthru
          _
        // Predicated region
        $region41: #{_lambda_.1} parent=11 // pred_check
          %p362 = pneg %p216
        $region42: #{_lambda_.1} parent=11 // pred_check_branch
          %364 = sbr.rel (%p362) target = $region44
        $region43: #{_lambda_.1} parent=11 // pred_region
          _
        $region44: #{_lambda_.1} parent=11 // pred_fallthru
          _
        // Predicated region
        $region45: #{_lambda_.1} parent=11 // pred_check
          %p365 = pneg %p237
        $region46: #{_lambda_.1} parent=11 // pred_check_branch
          %367 = sbr.rel (%p365) target = $region48
        $region47: #{_lambda_.1} parent=11 // pred_region
          _
        $region48: #{_lambda_.1} parent=11 // pred_fallthru
          _
        // Predicated region
        $region49: #{_lambda_.1} parent=11 // pred_check
          %p368 = pneg %p258
        $region50: #{_lambda_.1} parent=11 // pred_check_branch
          %370 = sbr.rel (%p368) target = $region52
        $region51: #{_lambda_.1} parent=11 // pred_region
          _
        $region52: #{_lambda_.1} parent=11 // pred_fallthru
          _
        // Predicated region
        $region53: #{_lambda_.1} parent=11 // pred_check
          %p371 = pneg %p279
        $region54: #{_lambda_.1} parent=11 // pred_check_branch
          %373 = sbr.rel (%p371) target = $region56
        $region55: #{_lambda_.1} parent=11 // pred_region
          _
        $region56: #{_lambda_.1} parent=11 // pred_fallthru
          _
        // Predicated region
        $region57: #{_lambda_.1} parent=11 // pred_check
          %p374 = pneg %p300
        $region58: #{_lambda_.1} parent=11 // pred_check_branch
          %376 = sbr.rel (%p374) target = $region60
        $region59: #{_lambda_.1} parent=11 // pred_region
          _
        $region60: #{_lambda_.1} parent=11 // pred_fallthru
          _
      $region12: #{_lambda_.1} parent=5 // pred_fallthru
        _
      %p377 = scmp.lt.s32.totalorder %s22, 2
      // Predicated region
      $region61: #{_lambda_.1} parent=5 // pred_check
        %p378 = pneg %p377
      $region62: #{_lambda_.1} parent=5 // pred_check_branch
        %380 = sbr.rel (%p378) target = $region64
      $region63: #{_lambda_.1} parent=5 // pred_region
        // Predicated region
        $region65: #{_lambda_.1} parent=63 // pred_check
          %p381 = pneg %p42
        $region66: #{_lambda_.1} parent=63 // pred_check_branch
          %383 = sbr.rel (%p381) target = $region68
        $region67: #{_lambda_.1} parent=63 // pred_region
          %p384 = scmp.lt.s32.totalorder %s22, 1
          %s385 = scalar_select %p384, %s22, 1
          %s386 = smul.addr %s385, 12
          %s387 = smul.addr %s386, 8
          %s388 = scalar_lea.vmem %s0, %s387
        $region68: #{_lambda_.1} parent=63 // pred_fallthru
          _
      $region64: #{_lambda_.1} parent=5 // pred_fallthru
        _
      %p389 = scmp.le.s32.totalorder 1, %s22
      %p390 = scmp.lt.s32.totalorder %s22, 3
      %p391 = pnand %p389, %p390
      %p392 = pneg %p391
      // Predicated region
      $region69: #{_lambda_.1} parent=5 // pred_check
        _
      $region70: #{_lambda_.1} parent=5 // pred_check_branch
        %394 = sbr.rel (%p391) target = $region72
      $region71: #{_lambda_.1} parent=5 // pred_region
        %s395 = ssub.s32 %s22, 1
        %p396 = scmp.lt.s32.totalorder %s27, 1
        %s397 = scalar_select %p396, %s27, 1
        %s398 = smul.addr %s397, 12
        %s399 = smul.addr %s398, 8
        %s400 = scalar_lea.vmem %s0, %s399
        %p401 = pneg %p48
        %p402 = pneg %p45
        %p403 = pneg %p69
        %p404 = pneg %p66
        %p405 = pneg %p90
        %p406 = pneg %p87
        %p407 = pneg %p111
        %p408 = pneg %p108
        %p409 = pneg %p132
        %p410 = pneg %p129
        %p411 = pneg %p153
        %p412 = pneg %p150
        %p413 = pneg %p174
        %p414 = pneg %p171
        %p415 = pneg %p195
        %p416 = pneg %p192
        %p417 = pneg %p216
        %p418 = pneg %p213
        %p419 = pneg %p237
        %p420 = pneg %p234
        %p421 = pneg %p258
        %p422 = pneg %p255
        %p423 = pneg %p279
        %p424 = pneg %p276
        %p425 = pneg %p300
        %p426 = pneg %p297
        %p427 = pneg %p326
        %p428 = pneg %p323
        %s429 = sand.u32 %s313, 1
        %s430 = scalar_lea.sflag [#allocation6], %s429
        %s431 = sand.u32 %s313, 1
        %s432 = scalar_lea.vmem [#allocation5], %s431
        %p433 = scmp.lt.s32.totalorder %s27, 1
        %s434 = scalar_select %p433, %s27, 1
        %s435 = smul.addr %s434, 12
        %s436 = smul.addr %s435, 8
        %s437 = scalar_lea.vmem %s0, %s436
        %v439 = vld [vmem:[%s437] sm:$0x1f]
        %v440 = vld [vmem:[%s437 + $0x8] sm:$0x1f]
        %v441 = vpack.c.bf16 %v439, %v439
        %v442 = vpack.c.bf16 %v440, %v440
        %v443 = vld [vmem:[%s1] sm:$0xf]
        %v444 = vld [vmem:[%s1 + $0x4] sm:$0xf]
        %v445 = vld [vmem:[%s1 + $0x8] sm:$0xf]
        %v446 = vld [vmem:[%s1 + $0xc] sm:$0xf]
        %v447 = vld [vmem:[%s1 + $0x10] sm:$0xf]
        %v448 = vld [vmem:[%s1 + $0x14] sm:$0xf]
        %v449 = vld [vmem:[%s1 + $0x18] sm:$0xf]
        %v450 = vld [vmem:[%s1 + $0x1c] sm:$0xf]
        %v451 = vld [vmem:[%s1 + $0x20] sm:$0xf]
        %v452 = vld [vmem:[%s1 + $0x24] sm:$0xf]
        %v453 = vld [vmem:[%s1 + $0x28] sm:$0xf]
        %v454 = vld [vmem:[%s1 + $0x2c] sm:$0xf]
        %v455 = vld [vmem:[%s1 + $0x30] sm:$0xf]
        %v456 = vld [vmem:[%s1 + $0x34] sm:$0xf]
        %v457 = vld [vmem:[%s1 + $0x38] sm:$0xf]
        %v458 = vld [vmem:[%s1 + $0x3c] sm:$0xf]
        %v459 = vld [vmem:[%s1 + $0x40] sm:$0xf]
        %v460 = vld [vmem:[%s1 + $0x44] sm:$0xf]
        %v461 = vld [vmem:[%s1 + $0x48] sm:$0xf]
        %v462 = vld [vmem:[%s1 + $0x4c] sm:$0xf]
        %v463 = vld [vmem:[%s1 + $0x50] sm:$0xf]
        %v464 = vld [vmem:[%s1 + $0x54] sm:$0xf]
        %v465 = vld [vmem:[%s1 + $0x58] sm:$0xf]
        %v466 = vld [vmem:[%s1 + $0x5c] sm:$0xf]
        %v467 = vld [vmem:[%s1 + $0x60] sm:$0xf]
        %v468 = vld [vmem:[%s1 + $0x64] sm:$0xf]
        %v469 = vld [vmem:[%s1 + $0x68] sm:$0xf]
        %v470 = vld [vmem:[%s1 + $0x6c] sm:$0xf]
        %v471 = vld [vmem:[%s1 + $0x70] sm:$0xf]
        %v472 = vld [vmem:[%s1 + $0x74] sm:$0xf]
        %v473 = vld [vmem:[%s1 + $0x78] sm:$0xf]
        %v474 = vld [vmem:[%s1 + $0x7c] sm:$0xf]
        %v475 = vld [vmem:[%s437] sm:$0x3e]
        %v476 = vld [vmem:[%s437 + $0x8] sm:$0x3e]
        %v477 = vpack.c.bf16 %v475, %v475
        %v478 = vpack.c.bf16 %v476, %v476
        %s479 = scalar_lea.vmem %s1, 128
        %v480 = vld [vmem:[%s479] sm:$0xf]
        %v481 = vld [vmem:[%s479 + $0x4] sm:$0xf]
        %v482 = vld [vmem:[%s479 + $0x8] sm:$0xf]
        %v483 = vld [vmem:[%s479 + $0xc] sm:$0xf]
        %v484 = vld [vmem:[%s479 + $0x10] sm:$0xf]
        %v485 = vld [vmem:[%s479 + $0x14] sm:$0xf]
        %v486 = vld [vmem:[%s479 + $0x18] sm:$0xf]
        %v487 = vld [vmem:[%s479 + $0x1c] sm:$0xf]
        %v488 = vld [vmem:[%s479 + $0x20] sm:$0xf]
        %v489 = vld [vmem:[%s479 + $0x24] sm:$0xf]
        %v490 = vld [vmem:[%s479 + $0x28] sm:$0xf]
        %v491 = vld [vmem:[%s479 + $0x2c] sm:$0xf]
        %v492 = vld [vmem:[%s479 + $0x30] sm:$0xf]
        %v493 = vld [vmem:[%s479 + $0x34] sm:$0xf]
        %v494 = vld [vmem:[%s479 + $0x38] sm:$0xf]
        %v495 = vld [vmem:[%s479 + $0x3c] sm:$0xf]
        %v496 = vld [vmem:[%s479 + $0x40] sm:$0xf]
        %v497 = vld [vmem:[%s479 + $0x44] sm:$0xf]
        %v498 = vld [vmem:[%s479 + $0x48] sm:$0xf]
        %v499 = vld [vmem:[%s479 + $0x4c] sm:$0xf]
        %v500 = vld [vmem:[%s479 + $0x50] sm:$0xf]
        %v501 = vld [vmem:[%s479 + $0x54] sm:$0xf]
        %v502 = vld [vmem:[%s479 + $0x58] sm:$0xf]
        %v503 = vld [vmem:[%s479 + $0x5c] sm:$0xf]
        %v504 = vld [vmem:[%s479 + $0x60] sm:$0xf]
        %v505 = vld [vmem:[%s479 + $0x64] sm:$0xf]
        %v506 = vld [vmem:[%s479 + $0x68] sm:$0xf]
        %v507 = vld [vmem:[%s479 + $0x6c] sm:$0xf]
        %v508 = vld [vmem:[%s479 + $0x70] sm:$0xf]
        %v509 = vld [vmem:[%s479 + $0x74] sm:$0xf]
        %v510 = vld [vmem:[%s479 + $0x78] sm:$0xf]
        %v511 = vld [vmem:[%s479 + $0x7c] sm:$0xf]
        %v513 = vshrl.u32 %v477, 16
        %v515 = vshll.u32 %v477, 16
        %v517 = vrot.slane %v515, 1
        %v518 = vor.u32 %v513, %v517
        %v520 = vshrl.u32 %v478, 16
        %v522 = vshll.u32 %v478, 16
        %v524 = vrot.slane %v522, 1
        %v525 = vor.u32 %v520, %v524
        %v560 = vunpack.c.l.b16 %v480
        %v561 = vunpack.c.l.b16 %v481
        %v562 = vunpack.c.l.b16 %v482
        %v563 = vunpack.c.l.b16 %v483
        %v564 = vunpack.c.l.b16 %v484
        %v565 = vunpack.c.l.b16 %v485
        %v566 = vunpack.c.l.b16 %v486
        %v567 = vunpack.c.l.b16 %v487
        %v568 = vunpack.c.l.b16 %v488
        %v569 = vunpack.c.l.b16 %v489
        %v570 = vunpack.c.l.b16 %v490
        %v571 = vunpack.c.l.b16 %v491
        %v572 = vunpack.c.l.b16 %v492
        %v573 = vunpack.c.l.b16 %v493
        %v574 = vunpack.c.l.b16 %v494
        %v575 = vunpack.c.l.b16 %v495
        %v576 = vunpack.c.l.b16 %v496
        %v577 = vunpack.c.l.b16 %v497
        %v578 = vunpack.c.l.b16 %v498
        %v579 = vunpack.c.l.b16 %v499
        %v580 = vunpack.c.l.b16 %v500
        %v581 = vunpack.c.l.b16 %v501
        %v582 = vunpack.c.l.b16 %v502
        %v583 = vunpack.c.l.b16 %v503
        %v584 = vunpack.c.l.b16 %v504
        %v585 = vunpack.c.l.b16 %v505
        %v586 = vunpack.c.l.b16 %v506
        %v587 = vunpack.c.l.b16 %v507
        %v588 = vunpack.c.l.b16 %v508
        %v589 = vunpack.c.l.b16 %v509
        %v590 = vunpack.c.l.b16 %v510
        %v591 = vunpack.c.l.b16 %v511
        %v592 = vpack.c.b16 %v561, %v560
        %v593 = vpack.c.b16 %v563, %v562
        %v594 = vpack.c.b16 %v565, %v564
        %v595 = vpack.c.b16 %v567, %v566
        %v596 = vpack.c.b16 %v569, %v568
        %v597 = vpack.c.b16 %v571, %v570
        %v598 = vpack.c.b16 %v573, %v572
        %v599 = vpack.c.b16 %v575, %v574
        %v600 = vpack.c.b16 %v577, %v576
        %v601 = vpack.c.b16 %v579, %v578
        %v602 = vpack.c.b16 %v581, %v580
        %v603 = vpack.c.b16 %v583, %v582
        %v604 = vpack.c.b16 %v585, %v584
        %v605 = vpack.c.b16 %v587, %v586
        %v606 = vpack.c.b16 %v589, %v588
        %v607 = vpack.c.b16 %v591, %v590
        %624 = vmatprep.subr.bf16.mxu0 0
        %625 = vmatpush1.bf16.msra.mxu0 %v599
        %626 = vmatprep.subr.bf16.mxu0 0
        %627 = vmatpush1.bf16.msra.mxu0 %v598
        %628 = vmatprep.subr.bf16.mxu0 0
        %629 = vmatpush1.bf16.msra.mxu0 %v597
        %630 = vmatprep.subr.bf16.mxu0 0
        %631 = vmatpush1.bf16.msra.mxu0 %v596
        %632 = vmatprep.subr.bf16.mxu0 0
        %633 = vmatpush1.bf16.msra.mxu0 %v595
        %634 = vmatprep.subr.bf16.mxu0 0
        %635 = vmatpush1.bf16.msra.mxu0 %v594
        %636 = vmatprep.subr.bf16.mxu0 0
        %637 = vmatpush1.bf16.msra.mxu0 %v593
        %638 = vmatprep.subr.bf16.mxu0 0
        %639 = vmatpush1.bf16.msra.mxu0 %v592
        %640 = vmatprep.subr.bf16.mxu0 0
        %641 = vmatpush2.bf16.msra.mxu0 %v607
        %642 = vmatprep.subr.bf16.mxu0 0
        %643 = vmatpush2.bf16.msra.mxu0 %v606
        %644 = vmatprep.subr.bf16.mxu0 0
        %645 = vmatpush2.bf16.msra.mxu0 %v605
        %646 = vmatprep.subr.bf16.mxu0 0
        %647 = vmatpush2.bf16.msra.mxu0 %v604
        %648 = vmatprep.subr.bf16.mxu0 0
        %649 = vmatpush2.bf16.msra.mxu0 %v603
        %650 = vmatprep.subr.bf16.mxu0 0
        %651 = vmatpush2.bf16.msra.mxu0 %v602
        %652 = vmatprep.subr.bf16.mxu0 0
        %653 = vmatpush2.bf16.msra.mxu0 %v601
        %654 = vmatprep.subr.bf16.mxu0 0
        %655 = vmatpush2.bf16.msra.mxu0 %v600
        %656 = vmatprep.mubr.bf16.mxu0 %v525
        %657 = vmatmul.mubr.bf16.gmra.mxu0 %v518
        %v658 = vpop.f32.mrf.mxu0
        %v659 = vadd.f32 0.0, %v658
        %v660 = vpop.f32.mrf.mxu0
        %v661 = vpop.f32.mrf.mxu0
        %v662 = vpop.f32.mrf.mxu0
        %663 = vdwg.mxu0
        %v696 = vunpack.c.l.b16 %v443
        %v697 = vunpack.c.l.b16 %v444
        %v698 = vunpack.c.l.b16 %v445
        %v699 = vunpack.c.l.b16 %v446
        %v700 = vunpack.c.l.b16 %v447
        %v701 = vunpack.c.l.b16 %v448
        %v702 = vunpack.c.l.b16 %v449
        %v703 = vunpack.c.l.b16 %v450
        %v704 = vunpack.c.l.b16 %v451
        %v705 = vunpack.c.l.b16 %v452
        %v706 = vunpack.c.l.b16 %v453
        %v707 = vunpack.c.l.b16 %v454
        %v708 = vunpack.c.l.b16 %v455
        %v709 = vunpack.c.l.b16 %v456
        %v710 = vunpack.c.l.b16 %v457
        %v711 = vunpack.c.l.b16 %v458
        %v712 = vunpack.c.l.b16 %v459
        %v713 = vunpack.c.l.b16 %v460
        %v714 = vunpack.c.l.b16 %v461
        %v715 = vunpack.c.l.b16 %v462
        %v716 = vunpack.c.l.b16 %v463
        %v717 = vunpack.c.l.b16 %v464
        %v718 = vunpack.c.l.b16 %v465
        %v719 = vunpack.c.l.b16 %v466
        %v720 = vunpack.c.l.b16 %v467
        %v721 = vunpack.c.l.b16 %v468
        %v722 = vunpack.c.l.b16 %v469
        %v723 = vunpack.c.l.b16 %v470
        %v724 = vunpack.c.l.b16 %v471
        %v725 = vunpack.c.l.b16 %v472
        %v726 = vunpack.c.l.b16 %v473
        %v727 = vunpack.c.l.b16 %v474
        %v728 = vpack.c.b16 %v697, %v696
        %v729 = vpack.c.b16 %v699, %v698
        %v730 = vpack.c.b16 %v701, %v700
        %v731 = vpack.c.b16 %v703, %v702
        %v732 = vpack.c.b16 %v705, %v704
        %v733 = vpack.c.b16 %v707, %v706
        %v734 = vpack.c.b16 %v709, %v708
        %v735 = vpack.c.b16 %v711, %v710
        %v736 = vpack.c.b16 %v713, %v712
        %v737 = vpack.c.b16 %v715, %v714
        %v738 = vpack.c.b16 %v717, %v716
        %v739 = vpack.c.b16 %v719, %v718
        %v740 = vpack.c.b16 %v721, %v720
        %v741 = vpack.c.b16 %v723, %v722
        %v742 = vpack.c.b16 %v725, %v724
        %v743 = vpack.c.b16 %v727, %v726
        %760 = vmatprep.subr.bf16.mxu0 0
        %761 = vmatpush1.bf16.msra.mxu0 %v735
        %762 = vmatprep.subr.bf16.mxu0 0
        %763 = vmatpush1.bf16.msra.mxu0 %v734
        %764 = vmatprep.subr.bf16.mxu0 0
        %765 = vmatpush1.bf16.msra.mxu0 %v733
        %766 = vmatprep.subr.bf16.mxu0 0
        %767 = vmatpush1.bf16.msra.mxu0 %v732
        %768 = vmatprep.subr.bf16.mxu0 0
        %769 = vmatpush1.bf16.msra.mxu0 %v731
        %770 = vmatprep.subr.bf16.mxu0 0
        %771 = vmatpush1.bf16.msra.mxu0 %v730
        %772 = vmatprep.subr.bf16.mxu0 0
        %773 = vmatpush1.bf16.msra.mxu0 %v729
        %774 = vmatprep.subr.bf16.mxu0 0
        %775 = vmatpush1.bf16.msra.mxu0 %v728
        %776 = vmatprep.subr.bf16.mxu0 0
        %777 = vmatpush2.bf16.msra.mxu0 %v743
        %778 = vmatprep.subr.bf16.mxu0 0
        %779 = vmatpush2.bf16.msra.mxu0 %v742
        %780 = vmatprep.subr.bf16.mxu0 0
        %781 = vmatpush2.bf16.msra.mxu0 %v741
        %782 = vmatprep.subr.bf16.mxu0 0
        %783 = vmatpush2.bf16.msra.mxu0 %v740
        %784 = vmatprep.subr.bf16.mxu0 0
        %785 = vmatpush2.bf16.msra.mxu0 %v739
        %786 = vmatprep.subr.bf16.mxu0 0
        %787 = vmatpush2.bf16.msra.mxu0 %v738
        %788 = vmatprep.subr.bf16.mxu0 0
        %789 = vmatpush2.bf16.msra.mxu0 %v737
        %790 = vmatprep.subr.bf16.mxu0 0
        %791 = vmatpush2.bf16.msra.mxu0 %v736
        %792 = vmatprep.mubr.bf16.mxu0 %v442
        %793 = vmatmul.mubr.bf16.gmra.mxu0 %v441
        %v794 = vpop.f32.mrf.mxu0
        %v795 = vadd.f32 %v659, %v794
        %v796 = vpop.f32.mrf.mxu0
        %v797 = vpop.f32.mrf.mxu0
        %v798 = vpop.f32.mrf.mxu0
        %799 = vdwg.mxu0
        %s800 = scalar_lea.vmem %s437, 16
        %v801 = vld [vmem:[%s800] sm:$0x1f]
        %v802 = vld [vmem:[%s800 + $0x8] sm:$0x1f]
        %v803 = vpack.c.bf16 %v801, %v801
        %v804 = vpack.c.bf16 %v802, %v802
        %s805 = scalar_lea.vmem %s1, 256
        %v806 = vld [vmem:[%s805] sm:$0xf]
        %v807 = vld [vmem:[%s805 + $0x4] sm:$0xf]
        %v808 = vld [vmem:[%s805 + $0x8] sm:$0xf]
        %v809 = vld [vmem:[%s805 + $0xc] sm:$0xf]
        %v810 = vld [vmem:[%s805 + $0x10] sm:$0xf]
        %v811 = vld [vmem:[%s805 + $0x14] sm:$0xf]
        %v812 = vld [vmem:[%s805 + $0x18] sm:$0xf]
        %v813 = vld [vmem:[%s805 + $0x1c] sm:$0xf]
        %v814 = vld [vmem:[%s805 + $0x20] sm:$0xf]
        %v815 = vld [vmem:[%s805 + $0x24] sm:$0xf]
        %v816 = vld [vmem:[%s805 + $0x28] sm:$0xf]
        %v817 = vld [vmem:[%s805 + $0x2c] sm:$0xf]
        %v818 = vld [vmem:[%s805 + $0x30] sm:$0xf]
        %v819 = vld [vmem:[%s805 + $0x34] sm:$0xf]
        %v820 = vld [vmem:[%s805 + $0x38] sm:$0xf]
        %v821 = vld [vmem:[%s805 + $0x3c] sm:$0xf]
        %v822 = vld [vmem:[%s805 + $0x40] sm:$0xf]
        %v823 = vld [vmem:[%s805 + $0x44] sm:$0xf]
        %v824 = vld [vmem:[%s805 + $0x48] sm:$0xf]
        %v825 = vld [vmem:[%s805 + $0x4c] sm:$0xf]
        %v826 = vld [vmem:[%s805 + $0x50] sm:$0xf]
        %v827 = vld [vmem:[%s805 + $0x54] sm:$0xf]
        %v828 = vld [vmem:[%s805 + $0x58] sm:$0xf]
        %v829 = vld [vmem:[%s805 + $0x5c] sm:$0xf]
        %v830 = vld [vmem:[%s805 + $0x60] sm:$0xf]
        %v831 = vld [vmem:[%s805 + $0x64] sm:$0xf]
        %v832 = vld [vmem:[%s805 + $0x68] sm:$0xf]
        %v833 = vld [vmem:[%s805 + $0x6c] sm:$0xf]
        %v834 = vld [vmem:[%s805 + $0x70] sm:$0xf]
        %v835 = vld [vmem:[%s805 + $0x74] sm:$0xf]
        %v836 = vld [vmem:[%s805 + $0x78] sm:$0xf]
        %v837 = vld [vmem:[%s805 + $0x7c] sm:$0xf]
        %v870 = vunpack.c.l.b16 %v806
        %v871 = vunpack.c.l.b16 %v807
        %v872 = vunpack.c.l.b16 %v808
        %v873 = vunpack.c.l.b16 %v809
        %v874 = vunpack.c.l.b16 %v810
        %v875 = vunpack.c.l.b16 %v811
        %v876 = vunpack.c.l.b16 %v812
        %v877 = vunpack.c.l.b16 %v813
        %v878 = vunpack.c.l.b16 %v814
        %v879 = vunpack.c.l.b16 %v815
        %v880 = vunpack.c.l.b16 %v816
        %v881 = vunpack.c.l.b16 %v817
        %v882 = vunpack.c.l.b16 %v818
        %v883 = vunpack.c.l.b16 %v819
        %v884 = vunpack.c.l.b16 %v820
        %v885 = vunpack.c.l.b16 %v821
        %v886 = vunpack.c.l.b16 %v822
        %v887 = vunpack.c.l.b16 %v823
        %v888 = vunpack.c.l.b16 %v824
        %v889 = vunpack.c.l.b16 %v825
        %v890 = vunpack.c.l.b16 %v826
        %v891 = vunpack.c.l.b16 %v827
        %v892 = vunpack.c.l.b16 %v828
        %v893 = vunpack.c.l.b16 %v829
        %v894 = vunpack.c.l.b16 %v830
        %v895 = vunpack.c.l.b16 %v831
        %v896 = vunpack.c.l.b16 %v832
        %v897 = vunpack.c.l.b16 %v833
        %v898 = vunpack.c.l.b16 %v834
        %v899 = vunpack.c.l.b16 %v835
        %v900 = vunpack.c.l.b16 %v836
        %v901 = vunpack.c.l.b16 %v837
        %v902 = vpack.c.b16 %v871, %v870
        %v903 = vpack.c.b16 %v873, %v872
        %v904 = vpack.c.b16 %v875, %v874
        %v905 = vpack.c.b16 %v877, %v876
        %v906 = vpack.c.b16 %v879, %v878
        %v907 = vpack.c.b16 %v881, %v880
        %v908 = vpack.c.b16 %v883, %v882
        %v909 = vpack.c.b16 %v885, %v884
        %v910 = vpack.c.b16 %v887, %v886
        %v911 = vpack.c.b16 %v889, %v888
        %v912 = vpack.c.b16 %v891, %v890
        %v913 = vpack.c.b16 %v893, %v892
        %v914 = vpack.c.b16 %v895, %v894
        %v915 = vpack.c.b16 %v897, %v896
        %v916 = vpack.c.b16 %v899, %v898
        %v917 = vpack.c.b16 %v901, %v900
        %934 = vmatprep.subr.bf16.mxu0 0
        %935 = vmatpush1.bf16.msra.mxu0 %v909
        %936 = vmatprep.subr.bf16.mxu0 0
        %937 = vmatpush1.bf16.msra.mxu0 %v908
        %938 = vmatprep.subr.bf16.mxu0 0
        %939 = vmatpush1.bf16.msra.mxu0 %v907
        %940 = vmatprep.subr.bf16.mxu0 0
        %941 = vmatpush1.bf16.msra.mxu0 %v906
        %942 = vmatprep.subr.bf16.mxu0 0
        %943 = vmatpush1.bf16.msra.mxu0 %v905
        %944 = vmatprep.subr.bf16.mxu0 0
        %945 = vmatpush1.bf16.msra.mxu0 %v904
        %946 = vmatprep.subr.bf16.mxu0 0
        %947 = vmatpush1.bf16.msra.mxu0 %v903
        %948 = vmatprep.subr.bf16.mxu0 0
        %949 = vmatpush1.bf16.msra.mxu0 %v902
        %950 = vmatprep.subr.bf16.mxu0 0
        %951 = vmatpush2.bf16.msra.mxu0 %v917
        %952 = vmatprep.subr.bf16.mxu0 0
        %953 = vmatpush2.bf16.msra.mxu0 %v916
        %954 = vmatprep.subr.bf16.mxu0 0
        %955 = vmatpush2.bf16.msra.mxu0 %v915
        %956 = vmatprep.subr.bf16.mxu0 0
        %957 = vmatpush2.bf16.msra.mxu0 %v914
        %958 = vmatprep.subr.bf16.mxu0 0
        %959 = vmatpush2.bf16.msra.mxu0 %v913
        %960 = vmatprep.subr.bf16.mxu0 0
        %961 = vmatpush2.bf16.msra.mxu0 %v912
        %962 = vmatprep.subr.bf16.mxu0 0
        %963 = vmatpush2.bf16.msra.mxu0 %v911
        %964 = vmatprep.subr.bf16.mxu0 0
        %965 = vmatpush2.bf16.msra.mxu0 %v910
        %966 = vmatprep.mubr.bf16.mxu0 %v804
        %967 = vmatmul.mubr.bf16.gmra.mxu0 %v803
        %v968 = vpop.f32.mrf.mxu0
        %v969 = vadd.f32 0.0, %v968
        %v970 = vpop.f32.mrf.mxu0
        %v971 = vpop.f32.mrf.mxu0
        %v972 = vpop.f32.mrf.mxu0
        %973 = vdwg.mxu0
        %v974 = vadd.f32 %v795, %v969
        %v975 = vld [vmem:[%s800] sm:$0x3e]
        %v976 = vld [vmem:[%s800 + $0x8] sm:$0x3e]
        %v977 = vpack.c.bf16 %v975, %v975
        %v978 = vpack.c.bf16 %v976, %v976
        %s979 = scalar_lea.vmem %s1, 384
        %v980 = vld [vmem:[%s979] sm:$0xf]
        %v981 = vld [vmem:[%s979 + $0x4] sm:$0xf]
        %v982 = vld [vmem:[%s979 + $0x8] sm:$0xf]
        %v983 = vld [vmem:[%s979 + $0xc] sm:$0xf]
        %v984 = vld [vmem:[%s979 + $0x10] sm:$0xf]
        %v985 = vld [vmem:[%s979 + $0x14] sm:$0xf]
        %v986 = vld [vmem:[%s979 + $0x18] sm:$0xf]
        %v987 = vld [vmem:[%s979 + $0x1c] sm:$0xf]
        %v988 = vld [vmem:[%s979 + $0x20] sm:$0xf]
        %v989 = vld [vmem:[%s979 + $0x24] sm:$0xf]
        %v990 = vld [vmem:[%s979 + $0x28] sm:$0xf]
        %v991 = vld [vmem:[%s979 + $0x2c] sm:$0xf]
        %v992 = vld [vmem:[%s979 + $0x30] sm:$0xf]
        %v993 = vld [vmem:[%s979 + $0x34] sm:$0xf]
        %v994 = vld [vmem:[%s979 + $0x38] sm:$0xf]
        %v995 = vld [vmem:[%s979 + $0x3c] sm:$0xf]
        %v996 = vld [vmem:[%s979 + $0x40] sm:$0xf]
        %v997 = vld [vmem:[%s979 + $0x44] sm:$0xf]
        %v998 = vld [vmem:[%s979 + $0x48] sm:$0xf]
        %v999 = vld [vmem:[%s979 + $0x4c] sm:$0xf]
        %v1000 = vld [vmem:[%s979 + $0x50] sm:$0xf]
        %v1001 = vld [vmem:[%s979 + $0x54] sm:$0xf]
        %v1002 = vld [vmem:[%s979 + $0x58] sm:$0xf]
        %v1003 = vld [vmem:[%s979 + $0x5c] sm:$0xf]
        %v1004 = vld [vmem:[%s979 + $0x60] sm:$0xf]
        %v1005 = vld [vmem:[%s979 + $0x64] sm:$0xf]
        %v1006 = vld [vmem:[%s979 + $0x68] sm:$0xf]
        %v1007 = vld [vmem:[%s979 + $0x6c] sm:$0xf]
        %v1008 = vld [vmem:[%s979 + $0x70] sm:$0xf]
        %v1009 = vld [vmem:[%s979 + $0x74] sm:$0xf]
        %v1010 = vld [vmem:[%s979 + $0x78] sm:$0xf]
        %v1011 = vld [vmem:[%s979 + $0x7c] sm:$0xf]
        %v1013 = vshrl.u32 %v977, 16
        %v1015 = vshll.u32 %v977, 16
        %v1017 = vrot.slane %v1015, 1
        %v1018 = vor.u32 %v1013, %v1017
        %v1020 = vshrl.u32 %v978, 16
        %v1022 = vshll.u32 %v978, 16
        %v1024 = vrot.slane %v1022, 1
        %v1025 = vor.u32 %v1020, %v1024
        %v1060 = vunpack.c.l.b16 %v980
        %v1061 = vunpack.c.l.b16 %v981
        %v1062 = vunpack.c.l.b16 %v982
        %v1063 = vunpack.c.l.b16 %v983
        %v1064 = vunpack.c.l.b16 %v984
        %v1065 = vunpack.c.l.b16 %v985
        %v1066 = vunpack.c.l.b16 %v986
        %v1067 = vunpack.c.l.b16 %v987
        %v1068 = vunpack.c.l.b16 %v988
        %v1069 = vunpack.c.l.b16 %v989
        %v1070 = vunpack.c.l.b16 %v990
        %v1071 = vunpack.c.l.b16 %v991
        %v1072 = vunpack.c.l.b16 %v992
        %v1073 = vunpack.c.l.b16 %v993
        %v1074 = vunpack.c.l.b16 %v994
        %v1075 = vunpack.c.l.b16 %v995
        %v1076 = vunpack.c.l.b16 %v996
        %v1077 = vunpack.c.l.b16 %v997
        %v1078 = vunpack.c.l.b16 %v998
        %v1079 = vunpack.c.l.b16 %v999
        %v1080 = vunpack.c.l.b16 %v1000
        %v1081 = vunpack.c.l.b16 %v1001
        %v1082 = vunpack.c.l.b16 %v1002
        %v1083 = vunpack.c.l.b16 %v1003
        %v1084 = vunpack.c.l.b16 %v1004
        %v1085 = vunpack.c.l.b16 %v1005
        %v1086 = vunpack.c.l.b16 %v1006
        %v1087 = vunpack.c.l.b16 %v1007
        %v1088 = vunpack.c.l.b16 %v1008
        %v1089 = vunpack.c.l.b16 %v1009
        %v1090 = vunpack.c.l.b16 %v1010
        %v1091 = vunpack.c.l.b16 %v1011
        %v1092 = vpack.c.b16 %v1061, %v1060
        %v1093 = vpack.c.b16 %v1063, %v1062
        %v1094 = vpack.c.b16 %v1065, %v1064
        %v1095 = vpack.c.b16 %v1067, %v1066
        %v1096 = vpack.c.b16 %v1069, %v1068
        %v1097 = vpack.c.b16 %v1071, %v1070
        %v1098 = vpack.c.b16 %v1073, %v1072
        %v1099 = vpack.c.b16 %v1075, %v1074
        %v1100 = vpack.c.b16 %v1077, %v1076
        %v1101 = vpack.c.b16 %v1079, %v1078
        %v1102 = vpack.c.b16 %v1081, %v1080
        %v1103 = vpack.c.b16 %v1083, %v1082
        %v1104 = vpack.c.b16 %v1085, %v1084
        %v1105 = vpack.c.b16 %v1087, %v1086
        %v1106 = vpack.c.b16 %v1089, %v1088
        %v1107 = vpack.c.b16 %v1091, %v1090
        %1124 = vmatprep.subr.bf16.mxu0 0
        %1125 = vmatpush1.bf16.msra.mxu0 %v1099
        %1126 = vmatprep.subr.bf16.mxu0 0
        %1127 = vmatpush1.bf16.msra.mxu0 %v1098
        %1128 = vmatprep.subr.bf16.mxu0 0
        %1129 = vmatpush1.bf16.msra.mxu0 %v1097
        %1130 = vmatprep.subr.bf16.mxu0 0
        %1131 = vmatpush1.bf16.msra.mxu0 %v1096
        %1132 = vmatprep.subr.bf16.mxu0 0
        %1133 = vmatpush1.bf16.msra.mxu0 %v1095
        %1134 = vmatprep.subr.bf16.mxu0 0
        %1135 = vmatpush1.bf16.msra.mxu0 %v1094
        %1136 = vmatprep.subr.bf16.mxu0 0
        %1137 = vmatpush1.bf16.msra.mxu0 %v1093
        %1138 = vmatprep.subr.bf16.mxu0 0
        %1139 = vmatpush1.bf16.msra.mxu0 %v1092
        %1140 = vmatprep.subr.bf16.mxu0 0
        %1141 = vmatpush2.bf16.msra.mxu0 %v1107
        %1142 = vmatprep.subr.bf16.mxu0 0
        %1143 = vmatpush2.bf16.msra.mxu0 %v1106
        %1144 = vmatprep.subr.bf16.mxu0 0
        %1145 = vmatpush2.bf16.msra.mxu0 %v1105
        %1146 = vmatprep.subr.bf16.mxu0 0
        %1147 = vmatpush2.bf16.msra.mxu0 %v1104
        %1148 = vmatprep.subr.bf16.mxu0 0
        %1149 = vmatpush2.bf16.msra.mxu0 %v1103
        %1150 = vmatprep.subr.bf16.mxu0 0
        %1151 = vmatpush2.bf16.msra.mxu0 %v1102
        %1152 = vmatprep.subr.bf16.mxu0 0
        %1153 = vmatpush2.bf16.msra.mxu0 %v1101
        %1154 = vmatprep.subr.bf16.mxu0 0
        %1155 = vmatpush2.bf16.msra.mxu0 %v1100
        %1156 = vmatprep.mubr.bf16.mxu0 %v1025
        %1157 = vmatmul.mubr.bf16.gmra.mxu0 %v1018
        %v1158 = vpop.f32.mrf.mxu0
        %v1159 = vadd.f32 0.0, %v1158
        %v1160 = vpop.f32.mrf.mxu0
        %v1161 = vpop.f32.mrf.mxu0
        %v1162 = vpop.f32.mrf.mxu0
        %1163 = vdwg.mxu0
        %v1164 = vadd.f32 %v974, %v1159
        %v1165 = vld [vmem:[%s2] sm:$0x1]
        %v1167 = vlaneseq
        %v1168 = vshrl.u32 %v1167, 7
        %v1169 = vsub.s32 0, %v1168
        %v1170 = vrot.slane %v1165, %v1169
        %v1172 = vadd.f32 %v1164, %v1170
        %v1173 = vmax.f32 %v1172, 0.0
        %1174 = vst [vmem:[#allocation2] sm:$0x1f] %v1173
        %v1175 = vld [vmem:[%s800] sm:$0x1f]
        %v1176 = vld [vmem:[%s800 + $0x8] sm:$0x1f]
        %v1177 = vpack.c.bf16 %v1175, %v1175
        %v1178 = vpack.c.bf16 %v1176, %v1176
        %v1179 = vld [vmem:[%s1] sm:$0xf]
        %v1180 = vld [vmem:[%s1 + $0x4] sm:$0xf]
        %v1181 = vld [vmem:[%s1 + $0x8] sm:$0xf]
        %v1182 = vld [vmem:[%s1 + $0xc] sm:$0xf]
        %v1183 = vld [vmem:[%s1 + $0x10] sm:$0xf]
        %v1184 = vld [vmem:[%s1 + $0x14] sm:$0xf]
        %v1185 = vld [vmem:[%s1 + $0x18] sm:$0xf]
        %v1186 = vld [vmem:[%s1 + $0x1c] sm:$0xf]
        %v1187 = vld [vmem:[%s1 + $0x20] sm:$0xf]
        %v1188 = vld [vmem:[%s1 + $0x24] sm:$0xf]
        %v1189 = vld [vmem:[%s1 + $0x28] sm:$0xf]
        %v1190 = vld [vmem:[%s1 + $0x2c] sm:$0xf]
        %v1191 = vld [vmem:[%s1 + $0x30] sm:$0xf]
        %v1192 = vld [vmem:[%s1 + $0x34] sm:$0xf]
        %v1193 = vld [vmem:[%s1 + $0x38] sm:$0xf]
        %v1194 = vld [vmem:[%s1 + $0x3c] sm:$0xf]
        %v1195 = vld [vmem:[%s1 + $0x40] sm:$0xf]
        %v1196 = vld [vmem:[%s1 + $0x44] sm:$0xf]
        %v1197 = vld [vmem:[%s1 + $0x48] sm:$0xf]
        %v1198 = vld [vmem:[%s1 + $0x4c] sm:$0xf]
        %v1199 = vld [vmem:[%s1 + $0x50] sm:$0xf]
        %v1200 = vld [vmem:[%s1 + $0x54] sm:$0xf]
        %v1201 = vld [vmem:[%s1 + $0x58] sm:$0xf]
        %v1202 = vld [vmem:[%s1 + $0x5c] sm:$0xf]
        %v1203 = vld [vmem:[%s1 + $0x60] sm:$0xf]
        %v1204 = vld [vmem:[%s1 + $0x64] sm:$0xf]
        %v1205 = vld [vmem:[%s1 + $0x68] sm:$0xf]
        %v1206 = vld [vmem:[%s1 + $0x6c] sm:$0xf]
        %v1207 = vld [vmem:[%s1 + $0x70] sm:$0xf]
        %v1208 = vld [vmem:[%s1 + $0x74] sm:$0xf]
        %v1209 = vld [vmem:[%s1 + $0x78] sm:$0xf]
        %v1210 = vld [vmem:[%s1 + $0x7c] sm:$0xf]
        %v1211 = vld [vmem:[%s800] sm:$0x3e]
        %v1212 = vld [vmem:[%s800 + $0x8] sm:$0x3e]
        %v1213 = vpack.c.bf16 %v1211, %v1211
        %v1214 = vpack.c.bf16 %v1212, %v1212
        %v1215 = vld [vmem:[%s479] sm:$0xf]
        %v1216 = vld [vmem:[%s479 + $0x4] sm:$0xf]
        %v1217 = vld [vmem:[%s479 + $0x8] sm:$0xf]
        %v1218 = vld [vmem:[%s479 + $0xc] sm:$0xf]
        %v1219 = vld [vmem:[%s479 + $0x10] sm:$0xf]
        %v1220 = vld [vmem:[%s479 + $0x14] sm:$0xf]
        %v1221 = vld [vmem:[%s479 + $0x18] sm:$0xf]
        %v1222 = vld [vmem:[%s479 + $0x1c] sm:$0xf]
        %v1223 = vld [vmem:[%s479 + $0x20] sm:$0xf]
        %v1224 = vld [vmem:[%s479 + $0x24] sm:$0xf]
        %v1225 = vld [vmem:[%s479 + $0x28] sm:$0xf]
        %v1226 = vld [vmem:[%s479 + $0x2c] sm:$0xf]
        %v1227 = vld [vmem:[%s479 + $0x30] sm:$0xf]
        %v1228 = vld [vmem:[%s479 + $0x34] sm:$0xf]
        %v1229 = vld [vmem:[%s479 + $0x38] sm:$0xf]
        %v1230 = vld [vmem:[%s479 + $0x3c] sm:$0xf]
        %v1231 = vld [vmem:[%s479 + $0x40] sm:$0xf]
        %v1232 = vld [vmem:[%s479 + $0x44] sm:$0xf]
        %v1233 = vld [vmem:[%s479 + $0x48] sm:$0xf]
        %v1234 = vld [vmem:[%s479 + $0x4c] sm:$0xf]
        %v1235 = vld [vmem:[%s479 + $0x50] sm:$0xf]
        %v1236 = vld [vmem:[%s479 + $0x54] sm:$0xf]
        %v1237 = vld [vmem:[%s479 + $0x58] sm:$0xf]
        %v1238 = vld [vmem:[%s479 + $0x5c] sm:$0xf]
        %v1239 = vld [vmem:[%s479 + $0x60] sm:$0xf]
        %v1240 = vld [vmem:[%s479 + $0x64] sm:$0xf]
        %v1241 = vld [vmem:[%s479 + $0x68] sm:$0xf]
        %v1242 = vld [vmem:[%s479 + $0x6c] sm:$0xf]
        %v1243 = vld [vmem:[%s479 + $0x70] sm:$0xf]
        %v1244 = vld [vmem:[%s479 + $0x74] sm:$0xf]
        %v1245 = vld [vmem:[%s479 + $0x78] sm:$0xf]
        %v1246 = vld [vmem:[%s479 + $0x7c] sm:$0xf]
        %v1248 = vshrl.u32 %v1213, 16
        %v1250 = vshll.u32 %v1213, 16
        %v1252 = vrot.slane %v1250, 1
        %v1253 = vor.u32 %v1248, %v1252
        %v1255 = vshrl.u32 %v1214, 16
        %v1257 = vshll.u32 %v1214, 16
        %v1259 = vrot.slane %v1257, 1
        %v1260 = vor.u32 %v1255, %v1259
        %v1295 = vunpack.c.l.b16 %v1215
        %v1296 = vunpack.c.l.b16 %v1216
        %v1297 = vunpack.c.l.b16 %v1217
        %v1298 = vunpack.c.l.b16 %v1218
        %v1299 = vunpack.c.l.b16 %v1219
        %v1300 = vunpack.c.l.b16 %v1220
        %v1301 = vunpack.c.l.b16 %v1221
        %v1302 = vunpack.c.l.b16 %v1222
        %v1303 = vunpack.c.l.b16 %v1223
        %v1304 = vunpack.c.l.b16 %v1224
        %v1305 = vunpack.c.l.b16 %v1225
        %v1306 = vunpack.c.l.b16 %v1226
        %v1307 = vunpack.c.l.b16 %v1227
        %v1308 = vunpack.c.l.b16 %v1228
        %v1309 = vunpack.c.l.b16 %v1229
        %v1310 = vunpack.c.l.b16 %v1230
        %v1311 = vunpack.c.l.b16 %v1231
        %v1312 = vunpack.c.l.b16 %v1232
        %v1313 = vunpack.c.l.b16 %v1233
        %v1314 = vunpack.c.l.b16 %v1234
        %v1315 = vunpack.c.l.b16 %v1235
        %v1316 = vunpack.c.l.b16 %v1236
        %v1317 = vunpack.c.l.b16 %v1237
        %v1318 = vunpack.c.l.b16 %v1238
        %v1319 = vunpack.c.l.b16 %v1239
        %v1320 = vunpack.c.l.b16 %v1240
        %v1321 = vunpack.c.l.b16 %v1241
        %v1322 = vunpack.c.l.b16 %v1242
        %v1323 = vunpack.c.l.b16 %v1243
        %v1324 = vunpack.c.l.b16 %v1244
        %v1325 = vunpack.c.l.b16 %v1245
        %v1326 = vunpack.c.l.b16 %v1246
        %v1327 = vpack.c.b16 %v1296, %v1295
        %v1328 = vpack.c.b16 %v1298, %v1297
        %v1329 = vpack.c.b16 %v1300, %v1299
        %v1330 = vpack.c.b16 %v1302, %v1301
        %v1331 = vpack.c.b16 %v1304, %v1303
        %v1332 = vpack.c.b16 %v1306, %v1305
        %v1333 = vpack.c.b16 %v1308, %v1307
        %v1334 = vpack.c.b16 %v1310, %v1309
        %v1335 = vpack.c.b16 %v1312, %v1311
        %v1336 = vpack.c.b16 %v1314, %v1313
        %v1337 = vpack.c.b16 %v1316, %v1315
        %v1338 = vpack.c.b16 %v1318, %v1317
        %v1339 = vpack.c.b16 %v1320, %v1319
        %v1340 = vpack.c.b16 %v1322, %v1321
        %v1341 = vpack.c.b16 %v1324, %v1323
        %v1342 = vpack.c.b16 %v1326, %v1325
        %1359 = vmatprep.subr.bf16.mxu0 0
        %1360 = vmatpush1.bf16.msra.mxu0 %v1334
        %1361 = vmatprep.subr.bf16.mxu0 0
        %1362 = vmatpush1.bf16.msra.mxu0 %v1333
        %1363 = vmatprep.subr.bf16.mxu0 0
        %1364 = vmatpush1.bf16.msra.mxu0 %v1332
        %1365 = vmatprep.subr.bf16.mxu0 0
        %1366 = vmatpush1.bf16.msra.mxu0 %v1331
        %1367 = vmatprep.subr.bf16.mxu0 0
        %1368 = vmatpush1.bf16.msra.mxu0 %v1330
        %1369 = vmatprep.subr.bf16.mxu0 0
        %1370 = vmatpush1.bf16.msra.mxu0 %v1329
        %1371 = vmatprep.subr.bf16.mxu0 0
        %1372 = vmatpush1.bf16.msra.mxu0 %v1328
        %1373 = vmatprep.subr.bf16.mxu0 0
        %1374 = vmatpush1.bf16.msra.mxu0 %v1327
        %1375 = vmatprep.subr.bf16.mxu0 0
        %1376 = vmatpush2.bf16.msra.mxu0 %v1342
        %1377 = vmatprep.subr.bf16.mxu0 0
        %1378 = vmatpush2.bf16.msra.mxu0 %v1341
        %1379 = vmatprep.subr.bf16.mxu0 0
        %1380 = vmatpush2.bf16.msra.mxu0 %v1340
        %1381 = vmatprep.subr.bf16.mxu0 0
        %1382 = vmatpush2.bf16.msra.mxu0 %v1339
        %1383 = vmatprep.subr.bf16.mxu0 0
        %1384 = vmatpush2.bf16.msra.mxu0 %v1338
        %1385 = vmatprep.subr.bf16.mxu0 0
        %1386 = vmatpush2.bf16.msra.mxu0 %v1337
        %1387 = vmatprep.subr.bf16.mxu0 0
        %1388 = vmatpush2.bf16.msra.mxu0 %v1336
        %1389 = vmatprep.subr.bf16.mxu0 0
        %1390 = vmatpush2.bf16.msra.mxu0 %v1335
        %1391 = vmatprep.mubr.bf16.mxu0 %v1260
        %1392 = vmatmul.mubr.bf16.gmra.mxu0 %v1253
        %v1393 = vpop.f32.mrf.mxu0
        %v1394 = vadd.f32 0.0, %v1393
        %v1395 = vpop.f32.mrf.mxu0
        %v1396 = vpop.f32.mrf.mxu0
        %v1397 = vpop.f32.mrf.mxu0
        %1398 = vdwg.mxu0
        %v1431 = vunpack.c.l.b16 %v1179
        %v1432 = vunpack.c.l.b16 %v1180
        %v1433 = vunpack.c.l.b16 %v1181
        %v1434 = vunpack.c.l.b16 %v1182
        %v1435 = vunpack.c.l.b16 %v1183
        %v1436 = vunpack.c.l.b16 %v1184
        %v1437 = vunpack.c.l.b16 %v1185
        %v1438 = vunpack.c.l.b16 %v1186
        %v1439 = vunpack.c.l.b16 %v1187
        %v1440 = vunpack.c.l.b16 %v1188
        %v1441 = vunpack.c.l.b16 %v1189
        %v1442 = vunpack.c.l.b16 %v1190
        %v1443 = vunpack.c.l.b16 %v1191
        %v1444 = vunpack.c.l.b16 %v1192
        %v1445 = vunpack.c.l.b16 %v1193
        %v1446 = vunpack.c.l.b16 %v1194
        %v1447 = vunpack.c.l.b16 %v1195
        %v1448 = vunpack.c.l.b16 %v1196
        %v1449 = vunpack.c.l.b16 %v1197
        %v1450 = vunpack.c.l.b16 %v1198
        %v1451 = vunpack.c.l.b16 %v1199
        %v1452 = vunpack.c.l.b16 %v1200
        %v1453 = vunpack.c.l.b16 %v1201
        %v1454 = vunpack.c.l.b16 %v1202
        %v1455 = vunpack.c.l.b16 %v1203
        %v1456 = vunpack.c.l.b16 %v1204
        %v1457 = vunpack.c.l.b16 %v1205
        %v1458 = vunpack.c.l.b16 %v1206
        %v1459 = vunpack.c.l.b16 %v1207
        %v1460 = vunpack.c.l.b16 %v1208
        %v1461 = vunpack.c.l.b16 %v1209
        %v1462 = vunpack.c.l.b16 %v1210
        %v1463 = vpack.c.b16 %v1432, %v1431
        %v1464 = vpack.c.b16 %v1434, %v1433
        %v1465 = vpack.c.b16 %v1436, %v1435
        %v1466 = vpack.c.b16 %v1438, %v1437
        %v1467 = vpack.c.b16 %v1440, %v1439
        %v1468 = vpack.c.b16 %v1442, %v1441
        %v1469 = vpack.c.b16 %v1444, %v1443
        %v1470 = vpack.c.b16 %v1446, %v1445
        %v1471 = vpack.c.b16 %v1448, %v1447
        %v1472 = vpack.c.b16 %v1450, %v1449
        %v1473 = vpack.c.b16 %v1452, %v1451
        %v1474 = vpack.c.b16 %v1454, %v1453
        %v1475 = vpack.c.b16 %v1456, %v1455
        %v1476 = vpack.c.b16 %v1458, %v1457
        %v1477 = vpack.c.b16 %v1460, %v1459
        %v1478 = vpack.c.b16 %v1462, %v1461
        %1495 = vmatprep.subr.bf16.mxu0 0
        %1496 = vmatpush1.bf16.msra.mxu0 %v1470
        %1497 = vmatprep.subr.bf16.mxu0 0
        %1498 = vmatpush1.bf16.msra.mxu0 %v1469
        %1499 = vmatprep.subr.bf16.mxu0 0
        %1500 = vmatpush1.bf16.msra.mxu0 %v1468
        %1501 = vmatprep.subr.bf16.mxu0 0
        %1502 = vmatpush1.bf16.msra.mxu0 %v1467
        %1503 = vmatprep.subr.bf16.mxu0 0
        %1504 = vmatpush1.bf16.msra.mxu0 %v1466
        %1505 = vmatprep.subr.bf16.mxu0 0
        %1506 = vmatpush1.bf16.msra.mxu0 %v1465
        %1507 = vmatprep.subr.bf16.mxu0 0
        %1508 = vmatpush1.bf16.msra.mxu0 %v1464
        %1509 = vmatprep.subr.bf16.mxu0 0
        %1510 = vmatpush1.bf16.msra.mxu0 %v1463
        %1511 = vmatprep.subr.bf16.mxu0 0
        %1512 = vmatpush2.bf16.msra.mxu0 %v1478
        %1513 = vmatprep.subr.bf16.mxu0 0
        %1514 = vmatpush2.bf16.msra.mxu0 %v1477
        %1515 = vmatprep.subr.bf16.mxu0 0
        %1516 = vmatpush2.bf16.msra.mxu0 %v1476
        %1517 = vmatprep.subr.bf16.mxu0 0
        %1518 = vmatpush2.bf16.msra.mxu0 %v1475
        %1519 = vmatprep.subr.bf16.mxu0 0
        %1520 = vmatpush2.bf16.msra.mxu0 %v1474
        %1521 = vmatprep.subr.bf16.mxu0 0
        %1522 = vmatpush2.bf16.msra.mxu0 %v1473
        %1523 = vmatprep.subr.bf16.mxu0 0
        %1524 = vmatpush2.bf16.msra.mxu0 %v1472
        %1525 = vmatprep.subr.bf16.mxu0 0
        %1526 = vmatpush2.bf16.msra.mxu0 %v1471
        %1527 = vmatprep.mubr.bf16.mxu0 %v1178
        %1528 = vmatmul.mubr.bf16.gmra.mxu0 %v1177
        %v1529 = vpop.f32.mrf.mxu0
        %v1530 = vadd.f32 %v1394, %v1529
        %v1531 = vpop.f32.mrf.mxu0
        %v1532 = vpop.f32.mrf.mxu0
        %v1533 = vpop.f32.mrf.mxu0
        %1534 = vdwg.mxu0
        %s1535 = scalar_lea.vmem %s437, 32
        %v1536 = vld [vmem:[%s1535] sm:$0x1f]
        %v1537 = vld [vmem:[%s1535 + $0x8] sm:$0x1f]
        %v1538 = vpack.c.bf16 %v1536, %v1536
        %v1539 = vpack.c.bf16 %v1537, %v1537
        %v1540 = vld [vmem:[%s805] sm:$0xf]
        %v1541 = vld [vmem:[%s805 + $0x4] sm:$0xf]
        %v1542 = vld [vmem:[%s805 + $0x8] sm:$0xf]
        %v1543 = vld [vmem:[%s805 + $0xc] sm:$0xf]
        %v1544 = vld [vmem:[%s805 + $0x10] sm:$0xf]
        %v1545 = vld [vmem:[%s805 + $0x14] sm:$0xf]
        %v1546 = vld [vmem:[%s805 + $0x18] sm:$0xf]
        %v1547 = vld [vmem:[%s805 + $0x1c] sm:$0xf]
        %v1548 = vld [vmem:[%s805 + $0x20] sm:$0xf]
        %v1549 = vld [vmem:[%s805 + $0x24] sm:$0xf]
        %v1550 = vld [vmem:[%s805 + $0x28] sm:$0xf]
        %v1551 = vld [vmem:[%s805 + $0x2c] sm:$0xf]
        %v1552 = vld [vmem:[%s805 + $0x30] sm:$0xf]
        %v1553 = vld [vmem:[%s805 + $0x34] sm:$0xf]
        %v1554 = vld [vmem:[%s805 + $0x38] sm:$0xf]
        %v1555 = vld [vmem:[%s805 + $0x3c] sm:$0xf]
        %v1556 = vld [vmem:[%s805 + $0x40] sm:$0xf]
        %v1557 = vld [vmem:[%s805 + $0x44] sm:$0xf]
        %v1558 = vld [vmem:[%s805 + $0x48] sm:$0xf]
        %v1559 = vld [vmem:[%s805 + $0x4c] sm:$0xf]
        %v1560 = vld [vmem:[%s805 + $0x50] sm:$0xf]
        %v1561 = vld [vmem:[%s805 + $0x54] sm:$0xf]
        %v1562 = vld [vmem:[%s805 + $0x58] sm:$0xf]
        %v1563 = vld [vmem:[%s805 + $0x5c] sm:$0xf]
        %v1564 = vld [vmem:[%s805 + $0x60] sm:$0xf]
        %v1565 = vld [vmem:[%s805 + $0x64] sm:$0xf]
        %v1566 = vld [vmem:[%s805 + $0x68] sm:$0xf]
        %v1567 = vld [vmem:[%s805 + $0x6c] sm:$0xf]
        %v1568 = vld [vmem:[%s805 + $0x70] sm:$0xf]
        %v1569 = vld [vmem:[%s805 + $0x74] sm:$0xf]
        %v1570 = vld [vmem:[%s805 + $0x78] sm:$0xf]
        %v1571 = vld [vmem:[%s805 + $0x7c] sm:$0xf]
        %v1604 = vunpack.c.l.b16 %v1540
        %v1605 = vunpack.c.l.b16 %v1541
        %v1606 = vunpack.c.l.b16 %v1542
        %v1607 = vunpack.c.l.b16 %v1543
        %v1608 = vunpack.c.l.b16 %v1544
        %v1609 = vunpack.c.l.b16 %v1545
        %v1610 = vunpack.c.l.b16 %v1546
        %v1611 = vunpack.c.l.b16 %v1547
        %v1612 = vunpack.c.l.b16 %v1548
        %v1613 = vunpack.c.l.b16 %v1549
        %v1614 = vunpack.c.l.b16 %v1550
        %v1615 = vunpack.c.l.b16 %v1551
        %v1616 = vunpack.c.l.b16 %v1552
        %v1617 = vunpack.c.l.b16 %v1553
        %v1618 = vunpack.c.l.b16 %v1554
        %v1619 = vunpack.c.l.b16 %v1555
        %v1620 = vunpack.c.l.b16 %v1556
        %v1621 = vunpack.c.l.b16 %v1557
        %v1622 = vunpack.c.l.b16 %v1558
        %v1623 = vunpack.c.l.b16 %v1559
        %v1624 = vunpack.c.l.b16 %v1560
        %v1625 = vunpack.c.l.b16 %v1561
        %v1626 = vunpack.c.l.b16 %v1562
        %v1627 = vunpack.c.l.b16 %v1563
        %v1628 = vunpack.c.l.b16 %v1564
        %v1629 = vunpack.c.l.b16 %v1565
        %v1630 = vunpack.c.l.b16 %v1566
        %v1631 = vunpack.c.l.b16 %v1567
        %v1632 = vunpack.c.l.b16 %v1568
        %v1633 = vunpack.c.l.b16 %v1569
        %v1634 = vunpack.c.l.b16 %v1570
        %v1635 = vunpack.c.l.b16 %v1571
        %v1636 = vpack.c.b16 %v1605, %v1604
        %v1637 = vpack.c.b16 %v1607, %v1606
        %v1638 = vpack.c.b16 %v1609, %v1608
        %v1639 = vpack.c.b16 %v1611, %v1610
        %v1640 = vpack.c.b16 %v1613, %v1612
        %v1641 = vpack.c.b16 %v1615, %v1614
        %v1642 = vpack.c.b16 %v1617, %v1616
        %v1643 = vpack.c.b16 %v1619, %v1618
        %v1644 = vpack.c.b16 %v1621, %v1620
        %v1645 = vpack.c.b16 %v1623, %v1622
        %v1646 = vpack.c.b16 %v1625, %v1624
        %v1647 = vpack.c.b16 %v1627, %v1626
        %v1648 = vpack.c.b16 %v1629, %v1628
        %v1649 = vpack.c.b16 %v1631, %v1630
        %v1650 = vpack.c.b16 %v1633, %v1632
        %v1651 = vpack.c.b16 %v1635, %v1634
        %1668 = vmatprep.subr.bf16.mxu0 0
        %1669 = vmatpush1.bf16.msra.mxu0 %v1643
        %1670 = vmatprep.subr.bf16.mxu0 0
        %1671 = vmatpush1.bf16.msra.mxu0 %v1642
        %1672 = vmatprep.subr.bf16.mxu0 0
        %1673 = vmatpush1.bf16.msra.mxu0 %v1641
        %1674 = vmatprep.subr.bf16.mxu0 0
        %1675 = vmatpush1.bf16.msra.mxu0 %v1640
        %1676 = vmatprep.subr.bf16.mxu0 0
        %1677 = vmatpush1.bf16.msra.mxu0 %v1639
        %1678 = vmatprep.subr.bf16.mxu0 0
        %1679 = vmatpush1.bf16.msra.mxu0 %v1638
        %1680 = vmatprep.subr.bf16.mxu0 0
        %1681 = vmatpush1.bf16.msra.mxu0 %v1637
        %1682 = vmatprep.subr.bf16.mxu0 0
        %1683 = vmatpush1.bf16.msra.mxu0 %v1636
        %1684 = vmatprep.subr.bf16.mxu0 0
        %1685 = vmatpush2.bf16.msra.mxu0 %v1651
        %1686 = vmatprep.subr.bf16.mxu0 0
        %1687 = vmatpush2.bf16.msra.mxu0 %v1650
        %1688 = vmatprep.subr.bf16.mxu0 0
        %1689 = vmatpush2.bf16.msra.mxu0 %v1649
        %1690 = vmatprep.subr.bf16.mxu0 0
        %1691 = vmatpush2.bf16.msra.mxu0 %v1648
        %1692 = vmatprep.subr.bf16.mxu0 0
        %1693 = vmatpush2.bf16.msra.mxu0 %v1647
        %1694 = vmatprep.subr.bf16.mxu0 0
        %1695 = vmatpush2.bf16.msra.mxu0 %v1646
        %1696 = vmatprep.subr.bf16.mxu0 0
        %1697 = vmatpush2.bf16.msra.mxu0 %v1645
        %1698 = vmatprep.subr.bf16.mxu0 0
        %1699 = vmatpush2.bf16.msra.mxu0 %v1644
        %1700 = vmatprep.mubr.bf16.mxu0 %v1539
        %1701 = vmatmul.mubr.bf16.gmra.mxu0 %v1538
        %v1702 = vpop.f32.mrf.mxu0
        %v1703 = vadd.f32 0.0, %v1702
        %v1704 = vpop.f32.mrf.mxu0
        %v1705 = vpop.f32.mrf.mxu0
        %v1706 = vpop.f32.mrf.mxu0
        %1707 = vdwg.mxu0
        %v1708 = vadd.f32 %v1530, %v1703
        %v1709 = vld [vmem:[%s1535] sm:$0x3e]
        %v1710 = vld [vmem:[%s1535 + $0x8] sm:$0x3e]
        %v1711 = vpack.c.bf16 %v1709, %v1709
        %v1712 = vpack.c.bf16 %v1710, %v1710
        %v1713 = vld [vmem:[%s979] sm:$0xf]
        %v1714 = vld [vmem:[%s979 + $0x4] sm:$0xf]
        %v1715 = vld [vmem:[%s979 + $0x8] sm:$0xf]
        %v1716 = vld [vmem:[%s979 + $0xc] sm:$0xf]
        %v1717 = vld [vmem:[%s979 + $0x10] sm:$0xf]
        %v1718 = vld [vmem:[%s979 + $0x14] sm:$0xf]
        %v1719 = vld [vmem:[%s979 + $0x18] sm:$0xf]
        %v1720 = vld [vmem:[%s979 + $0x1c] sm:$0xf]
        %v1721 = vld [vmem:[%s979 + $0x20] sm:$0xf]
        %v1722 = vld [vmem:[%s979 + $0x24] sm:$0xf]
        %v1723 = vld [vmem:[%s979 + $0x28] sm:$0xf]
        %v1724 = vld [vmem:[%s979 + $0x2c] sm:$0xf]
        %v1725 = vld [vmem:[%s979 + $0x30] sm:$0xf]
        %v1726 = vld [vmem:[%s979 + $0x34] sm:$0xf]
        %v1727 = vld [vmem:[%s979 + $0x38] sm:$0xf]
        %v1728 = vld [vmem:[%s979 + $0x3c] sm:$0xf]
        %v1729 = vld [vmem:[%s979 + $0x40] sm:$0xf]
        %v1730 = vld [vmem:[%s979 + $0x44] sm:$0xf]
        %v1731 = vld [vmem:[%s979 + $0x48] sm:$0xf]
        %v1732 = vld [vmem:[%s979 + $0x4c] sm:$0xf]
        %v1733 = vld [vmem:[%s979 + $0x50] sm:$0xf]
        %v1734 = vld [vmem:[%s979 + $0x54] sm:$0xf]
        %v1735 = vld [vmem:[%s979 + $0x58] sm:$0xf]
        %v1736 = vld [vmem:[%s979 + $0x5c] sm:$0xf]
        %v1737 = vld [vmem:[%s979 + $0x60] sm:$0xf]
        %v1738 = vld [vmem:[%s979 + $0x64] sm:$0xf]
        %v1739 = vld [vmem:[%s979 + $0x68] sm:$0xf]
        %v1740 = vld [vmem:[%s979 + $0x6c] sm:$0xf]
        %v1741 = vld [vmem:[%s979 + $0x70] sm:$0xf]
        %v1742 = vld [vmem:[%s979 + $0x74] sm:$0xf]
        %v1743 = vld [vmem:[%s979 + $0x78] sm:$0xf]
        %v1744 = vld [vmem:[%s979 + $0x7c] sm:$0xf]
        %v1746 = vshrl.u32 %v1711, 16
        %v1748 = vshll.u32 %v1711, 16
        %v1750 = vrot.slane %v1748, 1
        %v1751 = vor.u32 %v1746, %v1750
        %v1753 = vshrl.u32 %v1712, 16
        %v1755 = vshll.u32 %v1712, 16
        %v1757 = vrot.slane %v1755, 1
        %v1758 = vor.u32 %v1753, %v1757
        %v1793 = vunpack.c.l.b16 %v1713
        %v1794 = vunpack.c.l.b16 %v1714
        %v1795 = vunpack.c.l.b16 %v1715
        %v1796 = vunpack.c.l.b16 %v1716
        %v1797 = vunpack.c.l.b16 %v1717
        %v1798 = vunpack.c.l.b16 %v1718
        %v1799 = vunpack.c.l.b16 %v1719
        %v1800 = vunpack.c.l.b16 %v1720
        %v1801 = vunpack.c.l.b16 %v1721
        %v1802 = vunpack.c.l.b16 %v1722
        %v1803 = vunpack.c.l.b16 %v1723
        %v1804 = vunpack.c.l.b16 %v1724
        %v1805 = vunpack.c.l.b16 %v1725
        %v1806 = vunpack.c.l.b16 %v1726
        %v1807 = vunpack.c.l.b16 %v1727
        %v1808 = vunpack.c.l.b16 %v1728
        %v1809 = vunpack.c.l.b16 %v1729
        %v1810 = vunpack.c.l.b16 %v1730
        %v1811 = vunpack.c.l.b16 %v1731
        %v1812 = vunpack.c.l.b16 %v1732
        %v1813 = vunpack.c.l.b16 %v1733
        %v1814 = vunpack.c.l.b16 %v1734
        %v1815 = vunpack.c.l.b16 %v1735
        %v1816 = vunpack.c.l.b16 %v1736
        %v1817 = vunpack.c.l.b16 %v1737
        %v1818 = vunpack.c.l.b16 %v1738
        %v1819 = vunpack.c.l.b16 %v1739
        %v1820 = vunpack.c.l.b16 %v1740
        %v1821 = vunpack.c.l.b16 %v1741
        %v1822 = vunpack.c.l.b16 %v1742
        %v1823 = vunpack.c.l.b16 %v1743
        %v1824 = vunpack.c.l.b16 %v1744
        %v1825 = vpack.c.b16 %v1794, %v1793
        %v1826 = vpack.c.b16 %v1796, %v1795
        %v1827 = vpack.c.b16 %v1798, %v1797
        %v1828 = vpack.c.b16 %v1800, %v1799
        %v1829 = vpack.c.b16 %v1802, %v1801
        %v1830 = vpack.c.b16 %v1804, %v1803
        %v1831 = vpack.c.b16 %v1806, %v1805
        %v1832 = vpack.c.b16 %v1808, %v1807
        %v1833 = vpack.c.b16 %v1810, %v1809
        %v1834 = vpack.c.b16 %v1812, %v1811
        %v1835 = vpack.c.b16 %v1814, %v1813
        %v1836 = vpack.c.b16 %v1816, %v1815
        %v1837 = vpack.c.b16 %v1818, %v1817
        %v1838 = vpack.c.b16 %v1820, %v1819
        %v1839 = vpack.c.b16 %v1822, %v1821
        %v1840 = vpack.c.b16 %v1824, %v1823
        %1857 = vmatprep.subr.bf16.mxu0 0
        %1858 = vmatpush1.bf16.msra.mxu0 %v1832
        %1859 = vmatprep.subr.bf16.mxu0 0
        %1860 = vmatpush1.bf16.msra.mxu0 %v1831
        %1861 = vmatprep.subr.bf16.mxu0 0
        %1862 = vmatpush1.bf16.msra.mxu0 %v1830
        %1863 = vmatprep.subr.bf16.mxu0 0
        %1864 = vmatpush1.bf16.msra.mxu0 %v1829
        %1865 = vmatprep.subr.bf16.mxu0 0
        %1866 = vmatpush1.bf16.msra.mxu0 %v1828
        %1867 = vmatprep.subr.bf16.mxu0 0
        %1868 = vmatpush1.bf16.msra.mxu0 %v1827
        %1869 = vmatprep.subr.bf16.mxu0 0
        %1870 = vmatpush1.bf16.msra.mxu0 %v1826
        %1871 = vmatprep.subr.bf16.mxu0 0
        %1872 = vmatpush1.bf16.msra.mxu0 %v1825
        %1873 = vmatprep.subr.bf16.mxu0 0
        %1874 = vmatpush2.bf16.msra.mxu0 %v1840
        %1875 = vmatprep.subr.bf16.mxu0 0
        %1876 = vmatpush2.bf16.msra.mxu0 %v1839
        %1877 = vmatprep.subr.bf16.mxu0 0
        %1878 = vmatpush2.bf16.msra.mxu0 %v1838
        %1879 = vmatprep.subr.bf16.mxu0 0
        %1880 = vmatpush2.bf16.msra.mxu0 %v1837
        %1881 = vmatprep.subr.bf16.mxu0 0
        %1882 = vmatpush2.bf16.msra.mxu0 %v1836
        %1883 = vmatprep.subr.bf16.mxu0 0
        %1884 = vmatpush2.bf16.msra.mxu0 %v1835
        %1885 = vmatprep.subr.bf16.mxu0 0
        %1886 = vmatpush2.bf16.msra.mxu0 %v1834
        %1887 = vmatprep.subr.bf16.mxu0 0
        %1888 = vmatpush2.bf16.msra.mxu0 %v1833
        %1889 = vmatprep.mubr.bf16.mxu0 %v1758
        %1890 = vmatmul.mubr.bf16.gmra.mxu0 %v1751
        %v1891 = vpop.f32.mrf.mxu0
        %v1892 = vadd.f32 0.0, %v1891
        %v1893 = vpop.f32.mrf.mxu0
        %v1894 = vpop.f32.mrf.mxu0
        %v1895 = vpop.f32.mrf.mxu0
        %1896 = vdwg.mxu0
        %v1897 = vadd.f32 %v1708, %v1892
        %v1898 = vld [vmem:[%s2] sm:$0x1]
        %v1900 = vlaneseq
        %v1901 = vshrl.u32 %v1900, 7
        %v1902 = vsub.s32 0, %v1901
        %v1903 = vrot.slane %v1898, %v1902
        %v1905 = vadd.f32 %v1897, %v1903
        %v1906 = vmax.f32 %v1905, 0.0
        %s1907 = scalar_lea.vmem [#allocation2], 8
        %1908 = vst [vmem:[%s1907] sm:$0x1f] %v1906
        %v1909 = vld [vmem:[%s1535] sm:$0x1f]
        %v1910 = vld [vmem:[%s1535 + $0x8] sm:$0x1f]
        %v1911 = vpack.c.bf16 %v1909, %v1909
        %v1912 = vpack.c.bf16 %v1910, %v1910
        %v1913 = vld [vmem:[%s1] sm:$0xf]
        %v1914 = vld [vmem:[%s1 + $0x4] sm:$0xf]
        %v1915 = vld [vmem:[%s1 + $0x8] sm:$0xf]
        %v1916 = vld [vmem:[%s1 + $0xc] sm:$0xf]
        %v1917 = vld [vmem:[%s1 + $0x10] sm:$0xf]
        %v1918 = vld [vmem:[%s1 + $0x14] sm:$0xf]
        %v1919 = vld [vmem:[%s1 + $0x18] sm:$0xf]
        %v1920 = vld [vmem:[%s1 + $0x1c] sm:$0xf]
        %v1921 = vld [vmem:[%s1 + $0x20] sm:$0xf]
        %v1922 = vld [vmem:[%s1 + $0x24] sm:$0xf]
        %v1923 = vld [vmem:[%s1 + $0x28] sm:$0xf]
        %v1924 = vld [vmem:[%s1 + $0x2c] sm:$0xf]
        %v1925 = vld [vmem:[%s1 + $0x30] sm:$0xf]
        %v1926 = vld [vmem:[%s1 + $0x34] sm:$0xf]
        %v1927 = vld [vmem:[%s1 + $0x38] sm:$0xf]
        %v1928 = vld [vmem:[%s1 + $0x3c] sm:$0xf]
        %v1929 = vld [vmem:[%s1 + $0x40] sm:$0xf]
        %v1930 = vld [vmem:[%s1 + $0x44] sm:$0xf]
        %v1931 = vld [vmem:[%s1 + $0x48] sm:$0xf]
        %v1932 = vld [vmem:[%s1 + $0x4c] sm:$0xf]
        %v1933 = vld [vmem:[%s1 + $0x50] sm:$0xf]
        %v1934 = vld [vmem:[%s1 + $0x54] sm:$0xf]
        %v1935 = vld [vmem:[%s1 + $0x58] sm:$0xf]
        %v1936 = vld [vmem:[%s1 + $0x5c] sm:$0xf]
        %v1937 = vld [vmem:[%s1 + $0x60] sm:$0xf]
        %v1938 = vld [vmem:[%s1 + $0x64] sm:$0xf]
        %v1939 = vld [vmem:[%s1 + $0x68] sm:$0xf]
        %v1940 = vld [vmem:[%s1 + $0x6c] sm:$0xf]
        %v1941 = vld [vmem:[%s1 + $0x70] sm:$0xf]
        %v1942 = vld [vmem:[%s1 + $0x74] sm:$0xf]
        %v1943 = vld [vmem:[%s1 + $0x78] sm:$0xf]
        %v1944 = vld [vmem:[%s1 + $0x7c] sm:$0xf]
        %v1945 = vld [vmem:[%s1535] sm:$0x3e]
        %v1946 = vld [vmem:[%s1535 + $0x8] sm:$0x3e]
        %v1947 = vpack.c.bf16 %v1945, %v1945
        %v1948 = vpack.c.bf16 %v1946, %v1946
        %v1949 = vld [vmem:[%s479] sm:$0xf]
        %v1950 = vld [vmem:[%s479 + $0x4] sm:$0xf]
        %v1951 = vld [vmem:[%s479 + $0x8] sm:$0xf]
        %v1952 = vld [vmem:[%s479 + $0xc] sm:$0xf]
        %v1953 = vld [vmem:[%s479 + $0x10] sm:$0xf]
        %v1954 = vld [vmem:[%s479 + $0x14] sm:$0xf]
        %v1955 = vld [vmem:[%s479 + $0x18] sm:$0xf]
        %v1956 = vld [vmem:[%s479 + $0x1c] sm:$0xf]
        %v1957 = vld [vmem:[%s479 + $0x20] sm:$0xf]
        %v1958 = vld [vmem:[%s479 + $0x24] sm:$0xf]
        %v1959 = vld [vmem:[%s479 + $0x28] sm:$0xf]
        %v1960 = vld [vmem:[%s479 + $0x2c] sm:$0xf]
        %v1961 = vld [vmem:[%s479 + $0x30] sm:$0xf]
        %v1962 = vld [vmem:[%s479 + $0x34] sm:$0xf]
        %v1963 = vld [vmem:[%s479 + $0x38] sm:$0xf]
        %v1964 = vld [vmem:[%s479 + $0x3c] sm:$0xf]
        %v1965 = vld [vmem:[%s479 + $0x40] sm:$0xf]
        %v1966 = vld [vmem:[%s479 + $0x44] sm:$0xf]
        %v1967 = vld [vmem:[%s479 + $0x48] sm:$0xf]
        %v1968 = vld [vmem:[%s479 + $0x4c] sm:$0xf]
        %v1969 = vld [vmem:[%s479 + $0x50] sm:$0xf]
        %v1970 = vld [vmem:[%s479 + $0x54] sm:$0xf]
        %v1971 = vld [vmem:[%s479 + $0x58] sm:$0xf]
        %v1972 = vld [vmem:[%s479 + $0x5c] sm:$0xf]
        %v1973 = vld [vmem:[%s479 + $0x60] sm:$0xf]
        %v1974 = vld [vmem:[%s479 + $0x64] sm:$0xf]
        %v1975 = vld [vmem:[%s479 + $0x68] sm:$0xf]
        %v1976 = vld [vmem:[%s479 + $0x6c] sm:$0xf]
        %v1977 = vld [vmem:[%s479 + $0x70] sm:$0xf]
        %v1978 = vld [vmem:[%s479 + $0x74] sm:$0xf]
        %v1979 = vld [vmem:[%s479 + $0x78] sm:$0xf]
        %v1980 = vld [vmem:[%s479 + $0x7c] sm:$0xf]
        %v1982 = vshrl.u32 %v1947, 16
        %v1984 = vshll.u32 %v1947, 16
        %v1986 = vrot.slane %v1984, 1
        %v1987 = vor.u32 %v1982, %v1986
        %v1989 = vshrl.u32 %v1948, 16
        %v1991 = vshll.u32 %v1948, 16
        %v1993 = vrot.slane %v1991, 1
        %v1994 = vor.u32 %v1989, %v1993
        %v2029 = vunpack.c.l.b16 %v1949
        %v2030 = vunpack.c.l.b16 %v1950
        %v2031 = vunpack.c.l.b16 %v1951
        %v2032 = vunpack.c.l.b16 %v1952
        %v2033 = vunpack.c.l.b16 %v1953
        %v2034 = vunpack.c.l.b16 %v1954
        %v2035 = vunpack.c.l.b16 %v1955
        %v2036 = vunpack.c.l.b16 %v1956
        %v2037 = vunpack.c.l.b16 %v1957
        %v2038 = vunpack.c.l.b16 %v1958
        %v2039 = vunpack.c.l.b16 %v1959
        %v2040 = vunpack.c.l.b16 %v1960
        %v2041 = vunpack.c.l.b16 %v1961
        %v2042 = vunpack.c.l.b16 %v1962
        %v2043 = vunpack.c.l.b16 %v1963
        %v2044 = vunpack.c.l.b16 %v1964
        %v2045 = vunpack.c.l.b16 %v1965
        %v2046 = vunpack.c.l.b16 %v1966
        %v2047 = vunpack.c.l.b16 %v1967
        %v2048 = vunpack.c.l.b16 %v1968
        %v2049 = vunpack.c.l.b16 %v1969
        %v2050 = vunpack.c.l.b16 %v1970
        %v2051 = vunpack.c.l.b16 %v1971
        %v2052 = vunpack.c.l.b16 %v1972
        %v2053 = vunpack.c.l.b16 %v1973
        %v2054 = vunpack.c.l.b16 %v1974
        %v2055 = vunpack.c.l.b16 %v1975
        %v2056 = vunpack.c.l.b16 %v1976
        %v2057 = vunpack.c.l.b16 %v1977
        %v2058 = vunpack.c.l.b16 %v1978
        %v2059 = vunpack.c.l.b16 %v1979
        %v2060 = vunpack.c.l.b16 %v1980
        %v2061 = vpack.c.b16 %v2030, %v2029
        %v2062 = vpack.c.b16 %v2032, %v2031
        %v2063 = vpack.c.b16 %v2034, %v2033
        %v2064 = vpack.c.b16 %v2036, %v2035
        %v2065 = vpack.c.b16 %v2038, %v2037
        %v2066 = vpack.c.b16 %v2040, %v2039
        %v2067 = vpack.c.b16 %v2042, %v2041
        %v2068 = vpack.c.b16 %v2044, %v2043
        %v2069 = vpack.c.b16 %v2046, %v2045
        %v2070 = vpack.c.b16 %v2048, %v2047
        %v2071 = vpack.c.b16 %v2050, %v2049
        %v2072 = vpack.c.b16 %v2052, %v2051
        %v2073 = vpack.c.b16 %v2054, %v2053
        %v2074 = vpack.c.b16 %v2056, %v2055
        %v2075 = vpack.c.b16 %v2058, %v2057
        %v2076 = vpack.c.b16 %v2060, %v2059
        %2093 = vmatprep.subr.bf16.mxu0 0
        %2094 = vmatpush1.bf16.msra.mxu0 %v2068
        %2095 = vmatprep.subr.bf16.mxu0 0
        %2096 = vmatpush1.bf16.msra.mxu0 %v2067
        %2097 = vmatprep.subr.bf16.mxu0 0
        %2098 = vmatpush1.bf16.msra.mxu0 %v2066
        %2099 = vmatprep.subr.bf16.mxu0 0
        %2100 = vmatpush1.bf16.msra.mxu0 %v2065
        %2101 = vmatprep.subr.bf16.mxu0 0
        %2102 = vmatpush1.bf16.msra.mxu0 %v2064
        %2103 = vmatprep.subr.bf16.mxu0 0
        %2104 = vmatpush1.bf16.msra.mxu0 %v2063
        %2105 = vmatprep.subr.bf16.mxu0 0
        %2106 = vmatpush1.bf16.msra.mxu0 %v2062
        %2107 = vmatprep.subr.bf16.mxu0 0
        %2108 = vmatpush1.bf16.msra.mxu0 %v2061
        %2109 = vmatprep.subr.bf16.mxu0 0
        %2110 = vmatpush2.bf16.msra.mxu0 %v2076
        %2111 = vmatprep.subr.bf16.mxu0 0
        %2112 = vmatpush2.bf16.msra.mxu0 %v2075
        %2113 = vmatprep.subr.bf16.mxu0 0
        %2114 = vmatpush2.bf16.msra.mxu0 %v2074
        %2115 = vmatprep.subr.bf16.mxu0 0
        %2116 = vmatpush2.bf16.msra.mxu0 %v2073
        %2117 = vmatprep.subr.bf16.mxu0 0
        %2118 = vmatpush2.bf16.msra.mxu0 %v2072
        %2119 = vmatprep.subr.bf16.mxu0 0
        %2120 = vmatpush2.bf16.msra.mxu0 %v2071
        %2121 = vmatprep.subr.bf16.mxu0 0
        %2122 = vmatpush2.bf16.msra.mxu0 %v2070
        %2123 = vmatprep.subr.bf16.mxu0 0
        %2124 = vmatpush2.bf16.msra.mxu0 %v2069
        %2125 = vmatprep.mubr.bf16.mxu0 %v1994
        %2126 = vmatmul.mubr.bf16.gmra.mxu0 %v1987
        %v2127 = vpop.f32.mrf.mxu0
        %v2128 = vadd.f32 0.0, %v2127
        %v2129 = vpop.f32.mrf.mxu0
        %v2130 = vpop.f32.mrf.mxu0
        %v2131 = vpop.f32.mrf.mxu0
        %2132 = vdwg.mxu0
        %v2165 = vunpack.c.l.b16 %v1913
        %v2166 = vunpack.c.l.b16 %v1914
        %v2167 = vunpack.c.l.b16 %v1915
        %v2168 = vunpack.c.l.b16 %v1916
        %v2169 = vunpack.c.l.b16 %v1917
        %v2170 = vunpack.c.l.b16 %v1918
        %v2171 = vunpack.c.l.b16 %v1919
        %v2172 = vunpack.c.l.b16 %v1920
        %v2173 = vunpack.c.l.b16 %v1921
        %v2174 = vunpack.c.l.b16 %v1922
        %v2175 = vunpack.c.l.b16 %v1923
        %v2176 = vunpack.c.l.b16 %v1924
        %v2177 = vunpack.c.l.b16 %v1925
        %v2178 = vunpack.c.l.b16 %v1926
        %v2179 = vunpack.c.l.b16 %v1927
        %v2180 = vunpack.c.l.b16 %v1928
        %v2181 = vunpack.c.l.b16 %v1929
        %v2182 = vunpack.c.l.b16 %v1930
        %v2183 = vunpack.c.l.b16 %v1931
        %v2184 = vunpack.c.l.b16 %v1932
        %v2185 = vunpack.c.l.b16 %v1933
        %v2186 = vunpack.c.l.b16 %v1934
        %v2187 = vunpack.c.l.b16 %v1935
        %v2188 = vunpack.c.l.b16 %v1936
        %v2189 = vunpack.c.l.b16 %v1937
        %v2190 = vunpack.c.l.b16 %v1938
        %v2191 = vunpack.c.l.b16 %v1939
        %v2192 = vunpack.c.l.b16 %v1940
        %v2193 = vunpack.c.l.b16 %v1941
        %v2194 = vunpack.c.l.b16 %v1942
        %v2195 = vunpack.c.l.b16 %v1943
        %v2196 = vunpack.c.l.b16 %v1944
        %v2197 = vpack.c.b16 %v2166, %v2165
        %v2198 = vpack.c.b16 %v2168, %v2167
        %v2199 = vpack.c.b16 %v2170, %v2169
        %v2200 = vpack.c.b16 %v2172, %v2171
        %v2201 = vpack.c.b16 %v2174, %v2173
        %v2202 = vpack.c.b16 %v2176, %v2175
        %v2203 = vpack.c.b16 %v2178, %v2177
        %v2204 = vpack.c.b16 %v2180, %v2179
        %v2205 = vpack.c.b16 %v2182, %v2181
        %v2206 = vpack.c.b16 %v2184, %v2183
        %v2207 = vpack.c.b16 %v2186, %v2185
        %v2208 = vpack.c.b16 %v2188, %v2187
        %v2209 = vpack.c.b16 %v2190, %v2189
        %v2210 = vpack.c.b16 %v2192, %v2191
        %v2211 = vpack.c.b16 %v2194, %v2193
        %v2212 = vpack.c.b16 %v2196, %v2195
        %2229 = vmatprep.subr.bf16.mxu0 0
        %2230 = vmatpush1.bf16.msra.mxu0 %v2204
        %2231 = vmatprep.subr.bf16.mxu0 0
        %2232 = vmatpush1.bf16.msra.mxu0 %v2203
        %2233 = vmatprep.subr.bf16.mxu0 0
        %2234 = vmatpush1.bf16.msra.mxu0 %v2202
        %2235 = vmatprep.subr.bf16.mxu0 0
        %2236 = vmatpush1.bf16.msra.mxu0 %v2201
        %2237 = vmatprep.subr.bf16.mxu0 0
        %2238 = vmatpush1.bf16.msra.mxu0 %v2200
        %2239 = vmatprep.subr.bf16.mxu0 0
        %2240 = vmatpush1.bf16.msra.mxu0 %v2199
        %2241 = vmatprep.subr.bf16.mxu0 0
        %2242 = vmatpush1.bf16.msra.mxu0 %v2198
        %2243 = vmatprep.subr.bf16.mxu0 0
        %2244 = vmatpush1.bf16.msra.mxu0 %v2197
        %2245 = vmatprep.subr.bf16.mxu0 0
        %2246 = vmatpush2.bf16.msra.mxu0 %v2212
        %2247 = vmatprep.subr.bf16.mxu0 0
        %2248 = vmatpush2.bf16.msra.mxu0 %v2211
        %2249 = vmatprep.subr.bf16.mxu0 0
        %2250 = vmatpush2.bf16.msra.mxu0 %v2210
        %2251 = vmatprep.subr.bf16.mxu0 0
        %2252 = vmatpush2.bf16.msra.mxu0 %v2209
        %2253 = vmatprep.subr.bf16.mxu0 0
        %2254 = vmatpush2.bf16.msra.mxu0 %v2208
        %2255 = vmatprep.subr.bf16.mxu0 0
        %2256 = vmatpush2.bf16.msra.mxu0 %v2207
        %2257 = vmatprep.subr.bf16.mxu0 0
        %2258 = vmatpush2.bf16.msra.mxu0 %v2206
        %2259 = vmatprep.subr.bf16.mxu0 0
        %2260 = vmatpush2.bf16.msra.mxu0 %v2205
        %2261 = vmatprep.mubr.bf16.mxu0 %v1912
        %2262 = vmatmul.mubr.bf16.gmra.mxu0 %v1911
        %v2263 = vpop.f32.mrf.mxu0
        %v2264 = vadd.f32 %v2128, %v2263
        %v2265 = vpop.f32.mrf.mxu0
        %v2266 = vpop.f32.mrf.mxu0
        %v2267 = vpop.f32.mrf.mxu0
        %2268 = vdwg.mxu0
        %s2269 = scalar_lea.vmem %s437, 48
        %v2270 = vld [vmem:[%s2269] sm:$0x1f]
        %v2271 = vld [vmem:[%s2269 + $0x8] sm:$0x1f]
        %v2272 = vpack.c.bf16 %v2270, %v2270
        %v2273 = vpack.c.bf16 %v2271, %v2271
        %v2274 = vld [vmem:[%s805] sm:$0xf]
        %v2275 = vld [vmem:[%s805 + $0x4] sm:$0xf]
        %v2276 = vld [vmem:[%s805 + $0x8] sm:$0xf]
        %v2277 = vld [vmem:[%s805 + $0xc] sm:$0xf]
        %v2278 = vld [vmem:[%s805 + $0x10] sm:$0xf]
        %v2279 = vld [vmem:[%s805 + $0x14] sm:$0xf]
        %v2280 = vld [vmem:[%s805 + $0x18] sm:$0xf]
        %v2281 = vld [vmem:[%s805 + $0x1c] sm:$0xf]
        %v2282 = vld [vmem:[%s805 + $0x20] sm:$0xf]
        %v2283 = vld [vmem:[%s805 + $0x24] sm:$0xf]
        %v2284 = vld [vmem:[%s805 + $0x28] sm:$0xf]
        %v2285 = vld [vmem:[%s805 + $0x2c] sm:$0xf]
        %v2286 = vld [vmem:[%s805 + $0x30] sm:$0xf]
        %v2287 = vld [vmem:[%s805 + $0x34] sm:$0xf]
        %v2288 = vld [vmem:[%s805 + $0x38] sm:$0xf]
        %v2289 = vld [vmem:[%s805 + $0x3c] sm:$0xf]
        %v2290 = vld [vmem:[%s805 + $0x40] sm:$0xf]
        %v2291 = vld [vmem:[%s805 + $0x44] sm:$0xf]
        %v2292 = vld [vmem:[%s805 + $0x48] sm:$0xf]
        %v2293 = vld [vmem:[%s805 + $0x4c] sm:$0xf]
        %v2294 = vld [vmem:[%s805 + $0x50] sm:$0xf]
        %v2295 = vld [vmem:[%s805 + $0x54] sm:$0xf]
        %v2296 = vld [vmem:[%s805 + $0x58] sm:$0xf]
        %v2297 = vld [vmem:[%s805 + $0x5c] sm:$0xf]
        %v2298 = vld [vmem:[%s805 + $0x60] sm:$0xf]
        %v2299 = vld [vmem:[%s805 + $0x64] sm:$0xf]
        %v2300 = vld [vmem:[%s805 + $0x68] sm:$0xf]
        %v2301 = vld [vmem:[%s805 + $0x6c] sm:$0xf]
        %v2302 = vld [vmem:[%s805 + $0x70] sm:$0xf]
        %v2303 = vld [vmem:[%s805 + $0x74] sm:$0xf]
        %v2304 = vld [vmem:[%s805 + $0x78] sm:$0xf]
        %v2305 = vld [vmem:[%s805 + $0x7c] sm:$0xf]
        %v2338 = vunpack.c.l.b16 %v2274
        %v2339 = vunpack.c.l.b16 %v2275
        %v2340 = vunpack.c.l.b16 %v2276
        %v2341 = vunpack.c.l.b16 %v2277
        %v2342 = vunpack.c.l.b16 %v2278
        %v2343 = vunpack.c.l.b16 %v2279
        %v2344 = vunpack.c.l.b16 %v2280
        %v2345 = vunpack.c.l.b16 %v2281
        %v2346 = vunpack.c.l.b16 %v2282
        %v2347 = vunpack.c.l.b16 %v2283
        %v2348 = vunpack.c.l.b16 %v2284
        %v2349 = vunpack.c.l.b16 %v2285
        %v2350 = vunpack.c.l.b16 %v2286
        %v2351 = vunpack.c.l.b16 %v2287
        %v2352 = vunpack.c.l.b16 %v2288
        %v2353 = vunpack.c.l.b16 %v2289
        %v2354 = vunpack.c.l.b16 %v2290
        %v2355 = vunpack.c.l.b16 %v2291
        %v2356 = vunpack.c.l.b16 %v2292
        %v2357 = vunpack.c.l.b16 %v2293
        %v2358 = vunpack.c.l.b16 %v2294
        %v2359 = vunpack.c.l.b16 %v2295
        %v2360 = vunpack.c.l.b16 %v2296
        %v2361 = vunpack.c.l.b16 %v2297
        %v2362 = vunpack.c.l.b16 %v2298
        %v2363 = vunpack.c.l.b16 %v2299
        %v2364 = vunpack.c.l.b16 %v2300
        %v2365 = vunpack.c.l.b16 %v2301
        %v2366 = vunpack.c.l.b16 %v2302
        %v2367 = vunpack.c.l.b16 %v2303
        %v2368 = vunpack.c.l.b16 %v2304
        %v2369 = vunpack.c.l.b16 %v2305
        %v2370 = vpack.c.b16 %v2339, %v2338
        %v2371 = vpack.c.b16 %v2341, %v2340
        %v2372 = vpack.c.b16 %v2343, %v2342
        %v2373 = vpack.c.b16 %v2345, %v2344
        %v2374 = vpack.c.b16 %v2347, %v2346
        %v2375 = vpack.c.b16 %v2349, %v2348
        %v2376 = vpack.c.b16 %v2351, %v2350
        %v2377 = vpack.c.b16 %v2353, %v2352
        %v2378 = vpack.c.b16 %v2355, %v2354
        %v2379 = vpack.c.b16 %v2357, %v2356
        %v2380 = vpack.c.b16 %v2359, %v2358
        %v2381 = vpack.c.b16 %v2361, %v2360
        %v2382 = vpack.c.b16 %v2363, %v2362
        %v2383 = vpack.c.b16 %v2365, %v2364
        %v2384 = vpack.c.b16 %v2367, %v2366
        %v2385 = vpack.c.b16 %v2369, %v2368
        %2402 = vmatprep.subr.bf16.mxu0 0
        %2403 = vmatpush1.bf16.msra.mxu0 %v2377
        %2404 = vmatprep.subr.bf16.mxu0 0
        %2405 = vmatpush1.bf16.msra.mxu0 %v2376
        %2406 = vmatprep.subr.bf16.mxu0 0
        %2407 = vmatpush1.bf16.msra.mxu0 %v2375
        %2408 = vmatprep.subr.bf16.mxu0 0
        %2409 = vmatpush1.bf16.msra.mxu0 %v2374
        %2410 = vmatprep.subr.bf16.mxu0 0
        %2411 = vmatpush1.bf16.msra.mxu0 %v2373
        %2412 = vmatprep.subr.bf16.mxu0 0
        %2413 = vmatpush1.bf16.msra.mxu0 %v2372
        %2414 = vmatprep.subr.bf16.mxu0 0
        %2415 = vmatpush1.bf16.msra.mxu0 %v2371
        %2416 = vmatprep.subr.bf16.mxu0 0
        %2417 = vmatpush1.bf16.msra.mxu0 %v2370
        %2418 = vmatprep.subr.bf16.mxu0 0
        %2419 = vmatpush2.bf16.msra.mxu0 %v2385
        %2420 = vmatprep.subr.bf16.mxu0 0
        %2421 = vmatpush2.bf16.msra.mxu0 %v2384
        %2422 = vmatprep.subr.bf16.mxu0 0
        %2423 = vmatpush2.bf16.msra.mxu0 %v2383
        %2424 = vmatprep.subr.bf16.mxu0 0
        %2425 = vmatpush2.bf16.msra.mxu0 %v2382
        %2426 = vmatprep.subr.bf16.mxu0 0
        %2427 = vmatpush2.bf16.msra.mxu0 %v2381
        %2428 = vmatprep.subr.bf16.mxu0 0
        %2429 = vmatpush2.bf16.msra.mxu0 %v2380
        %2430 = vmatprep.subr.bf16.mxu0 0
        %2431 = vmatpush2.bf16.msra.mxu0 %v2379
        %2432 = vmatprep.subr.bf16.mxu0 0
        %2433 = vmatpush2.bf16.msra.mxu0 %v2378
        %2434 = vmatprep.mubr.bf16.mxu0 %v2273
        %2435 = vmatmul.mubr.bf16.gmra.mxu0 %v2272
        %v2436 = vpop.f32.mrf.mxu0
        %v2437 = vadd.f32 0.0, %v2436
        %v2438 = vpop.f32.mrf.mxu0
        %v2439 = vpop.f32.mrf.mxu0
        %v2440 = vpop.f32.mrf.mxu0
        %2441 = vdwg.mxu0
        %v2442 = vadd.f32 %v2264, %v2437
        %v2443 = vld [vmem:[%s2269] sm:$0x3e]
        %v2444 = vld [vmem:[%s2269 + $0x8] sm:$0x3e]
        %v2445 = vpack.c.bf16 %v2443, %v2443
        %v2446 = vpack.c.bf16 %v2444, %v2444
        %v2447 = vld [vmem:[%s979] sm:$0xf]
        %v2448 = vld [vmem:[%s979 + $0x4] sm:$0xf]
        %v2449 = vld [vmem:[%s979 + $0x8] sm:$0xf]
        %v2450 = vld [vmem:[%s979 + $0xc] sm:$0xf]
        %v2451 = vld [vmem:[%s979 + $0x10] sm:$0xf]
        %v2452 = vld [vmem:[%s979 + $0x14] sm:$0xf]
        %v2453 = vld [vmem:[%s979 + $0x18] sm:$0xf]
        %v2454 = vld [vmem:[%s979 + $0x1c] sm:$0xf]
        %v2455 = vld [vmem:[%s979 + $0x20] sm:$0xf]
        %v2456 = vld [vmem:[%s979 + $0x24] sm:$0xf]
        %v2457 = vld [vmem:[%s979 + $0x28] sm:$0xf]
        %v2458 = vld [vmem:[%s979 + $0x2c] sm:$0xf]
        %v2459 = vld [vmem:[%s979 + $0x30] sm:$0xf]
        %v2460 = vld [vmem:[%s979 + $0x34] sm:$0xf]
        %v2461 = vld [vmem:[%s979 + $0x38] sm:$0xf]
        %v2462 = vld [vmem:[%s979 + $0x3c] sm:$0xf]
        %v2463 = vld [vmem:[%s979 + $0x40] sm:$0xf]
        %v2464 = vld [vmem:[%s979 + $0x44] sm:$0xf]
        %v2465 = vld [vmem:[%s979 + $0x48] sm:$0xf]
        %v2466 = vld [vmem:[%s979 + $0x4c] sm:$0xf]
        %v2467 = vld [vmem:[%s979 + $0x50] sm:$0xf]
        %v2468 = vld [vmem:[%s979 + $0x54] sm:$0xf]
        %v2469 = vld [vmem:[%s979 + $0x58] sm:$0xf]
        %v2470 = vld [vmem:[%s979 + $0x5c] sm:$0xf]
        %v2471 = vld [vmem:[%s979 + $0x60] sm:$0xf]
        %v2472 = vld [vmem:[%s979 + $0x64] sm:$0xf]
        %v2473 = vld [vmem:[%s979 + $0x68] sm:$0xf]
        %v2474 = vld [vmem:[%s979 + $0x6c] sm:$0xf]
        %v2475 = vld [vmem:[%s979 + $0x70] sm:$0xf]
        %v2476 = vld [vmem:[%s979 + $0x74] sm:$0xf]
        %v2477 = vld [vmem:[%s979 + $0x78] sm:$0xf]
        %v2478 = vld [vmem:[%s979 + $0x7c] sm:$0xf]
        %v2480 = vshrl.u32 %v2445, 16
        %v2482 = vshll.u32 %v2445, 16
        %v2484 = vrot.slane %v2482, 1
        %v2485 = vor.u32 %v2480, %v2484
        %v2487 = vshrl.u32 %v2446, 16
        %v2489 = vshll.u32 %v2446, 16
        %v2491 = vrot.slane %v2489, 1
        %v2492 = vor.u32 %v2487, %v2491
        %v2527 = vunpack.c.l.b16 %v2447
        %v2528 = vunpack.c.l.b16 %v2448
        %v2529 = vunpack.c.l.b16 %v2449
        %v2530 = vunpack.c.l.b16 %v2450
        %v2531 = vunpack.c.l.b16 %v2451
        %v2532 = vunpack.c.l.b16 %v2452
        %v2533 = vunpack.c.l.b16 %v2453
        %v2534 = vunpack.c.l.b16 %v2454
        %v2535 = vunpack.c.l.b16 %v2455
        %v2536 = vunpack.c.l.b16 %v2456
        %v2537 = vunpack.c.l.b16 %v2457
        %v2538 = vunpack.c.l.b16 %v2458
        %v2539 = vunpack.c.l.b16 %v2459
        %v2540 = vunpack.c.l.b16 %v2460
        %v2541 = vunpack.c.l.b16 %v2461
        %v2542 = vunpack.c.l.b16 %v2462
        %v2543 = vunpack.c.l.b16 %v2463
        %v2544 = vunpack.c.l.b16 %v2464
        %v2545 = vunpack.c.l.b16 %v2465
        %v2546 = vunpack.c.l.b16 %v2466
        %v2547 = vunpack.c.l.b16 %v2467
        %v2548 = vunpack.c.l.b16 %v2468
        %v2549 = vunpack.c.l.b16 %v2469
        %v2550 = vunpack.c.l.b16 %v2470
        %v2551 = vunpack.c.l.b16 %v2471
        %v2552 = vunpack.c.l.b16 %v2472
        %v2553 = vunpack.c.l.b16 %v2473
        %v2554 = vunpack.c.l.b16 %v2474
        %v2555 = vunpack.c.l.b16 %v2475
        %v2556 = vunpack.c.l.b16 %v2476
        %v2557 = vunpack.c.l.b16 %v2477
        %v2558 = vunpack.c.l.b16 %v2478
        %v2559 = vpack.c.b16 %v2528, %v2527
        %v2560 = vpack.c.b16 %v2530, %v2529
        %v2561 = vpack.c.b16 %v2532, %v2531
        %v2562 = vpack.c.b16 %v2534, %v2533
        %v2563 = vpack.c.b16 %v2536, %v2535
        %v2564 = vpack.c.b16 %v2538, %v2537
        %v2565 = vpack.c.b16 %v2540, %v2539
        %v2566 = vpack.c.b16 %v2542, %v2541
        %v2567 = vpack.c.b16 %v2544, %v2543
        %v2568 = vpack.c.b16 %v2546, %v2545
        %v2569 = vpack.c.b16 %v2548, %v2547
        %v2570 = vpack.c.b16 %v2550, %v2549
        %v2571 = vpack.c.b16 %v2552, %v2551
        %v2572 = vpack.c.b16 %v2554, %v2553
        %v2573 = vpack.c.b16 %v2556, %v2555
        %v2574 = vpack.c.b16 %v2558, %v2557
        %2591 = vmatprep.subr.bf16.mxu0 0
        %2592 = vmatpush1.bf16.msra.mxu0 %v2566
        %2593 = vmatprep.subr.bf16.mxu0 0
        %2594 = vmatpush1.bf16.msra.mxu0 %v2565
        %2595 = vmatprep.subr.bf16.mxu0 0
        %2596 = vmatpush1.bf16.msra.mxu0 %v2564
        %2597 = vmatprep.subr.bf16.mxu0 0
        %2598 = vmatpush1.bf16.msra.mxu0 %v2563
        %2599 = vmatprep.subr.bf16.mxu0 0
        %2600 = vmatpush1.bf16.msra.mxu0 %v2562
        %2601 = vmatprep.subr.bf16.mxu0 0
        %2602 = vmatpush1.bf16.msra.mxu0 %v2561
        %2603 = vmatprep.subr.bf16.mxu0 0
        %2604 = vmatpush1.bf16.msra.mxu0 %v2560
        %2605 = vmatprep.subr.bf16.mxu0 0
        %2606 = vmatpush1.bf16.msra.mxu0 %v2559
        %2607 = vmatprep.subr.bf16.mxu0 0
        %2608 = vmatpush2.bf16.msra.mxu0 %v2574
        %2609 = vmatprep.subr.bf16.mxu0 0
        %2610 = vmatpush2.bf16.msra.mxu0 %v2573
        %2611 = vmatprep.subr.bf16.mxu0 0
        %2612 = vmatpush2.bf16.msra.mxu0 %v2572
        %2613 = vmatprep.subr.bf16.mxu0 0
        %2614 = vmatpush2.bf16.msra.mxu0 %v2571
        %2615 = vmatprep.subr.bf16.mxu0 0
        %2616 = vmatpush2.bf16.msra.mxu0 %v2570
        %2617 = vmatprep.subr.bf16.mxu0 0
        %2618 = vmatpush2.bf16.msra.mxu0 %v2569
        %2619 = vmatprep.subr.bf16.mxu0 0
        %2620 = vmatpush2.bf16.msra.mxu0 %v2568
        %2621 = vmatprep.subr.bf16.mxu0 0
        %2622 = vmatpush2.bf16.msra.mxu0 %v2567
        %2623 = vmatprep.mubr.bf16.mxu0 %v2492
        %2624 = vmatmul.mubr.bf16.gmra.mxu0 %v2485
        %v2625 = vpop.f32.mrf.mxu0
        %v2626 = vadd.f32 0.0, %v2625
        %v2627 = vpop.f32.mrf.mxu0
        %v2628 = vpop.f32.mrf.mxu0
        %v2629 = vpop.f32.mrf.mxu0
        %2630 = vdwg.mxu0
        %v2631 = vadd.f32 %v2442, %v2626
        %v2632 = vld [vmem:[%s2] sm:$0x1]
        %v2634 = vlaneseq
        %v2635 = vshrl.u32 %v2634, 7
        %v2636 = vsub.s32 0, %v2635
        %v2637 = vrot.slane %v2632, %v2636
        %v2639 = vadd.f32 %v2631, %v2637
        %v2640 = vmax.f32 %v2639, 0.0
        %s2641 = scalar_lea.vmem [#allocation2], 16
        %2642 = vst [vmem:[%s2641] sm:$0x1f] %v2640
        %v2643 = vld [vmem:[%s2269] sm:$0x1f]
        %v2644 = vld [vmem:[%s2269 + $0x8] sm:$0x1f]
        %v2645 = vpack.c.bf16 %v2643, %v2643
        %v2646 = vpack.c.bf16 %v2644, %v2644
        %v2647 = vld [vmem:[%s1] sm:$0xf]
        %v2648 = vld [vmem:[%s1 + $0x4] sm:$0xf]
        %v2649 = vld [vmem:[%s1 + $0x8] sm:$0xf]
        %v2650 = vld [vmem:[%s1 + $0xc] sm:$0xf]
        %v2651 = vld [vmem:[%s1 + $0x10] sm:$0xf]
        %v2652 = vld [vmem:[%s1 + $0x14] sm:$0xf]
        %v2653 = vld [vmem:[%s1 + $0x18] sm:$0xf]
        %v2654 = vld [vmem:[%s1 + $0x1c] sm:$0xf]
        %v2655 = vld [vmem:[%s1 + $0x20] sm:$0xf]
        %v2656 = vld [vmem:[%s1 + $0x24] sm:$0xf]
        %v2657 = vld [vmem:[%s1 + $0x28] sm:$0xf]
        %v2658 = vld [vmem:[%s1 + $0x2c] sm:$0xf]
        %v2659 = vld [vmem:[%s1 + $0x30] sm:$0xf]
        %v2660 = vld [vmem:[%s1 + $0x34] sm:$0xf]
        %v2661 = vld [vmem:[%s1 + $0x38] sm:$0xf]
        %v2662 = vld [vmem:[%s1 + $0x3c] sm:$0xf]
        %v2663 = vld [vmem:[%s1 + $0x40] sm:$0xf]
        %v2664 = vld [vmem:[%s1 + $0x44] sm:$0xf]
        %v2665 = vld [vmem:[%s1 + $0x48] sm:$0xf]
        %v2666 = vld [vmem:[%s1 + $0x4c] sm:$0xf]
        %v2667 = vld [vmem:[%s1 + $0x50] sm:$0xf]
        %v2668 = vld [vmem:[%s1 + $0x54] sm:$0xf]
        %v2669 = vld [vmem:[%s1 + $0x58] sm:$0xf]
        %v2670 = vld [vmem:[%s1 + $0x5c] sm:$0xf]
        %v2671 = vld [vmem:[%s1 + $0x60] sm:$0xf]
        %v2672 = vld [vmem:[%s1 + $0x64] sm:$0xf]
        %v2673 = vld [vmem:[%s1 + $0x68] sm:$0xf]
        %v2674 = vld [vmem:[%s1 + $0x6c] sm:$0xf]
        %v2675 = vld [vmem:[%s1 + $0x70] sm:$0xf]
        %v2676 = vld [vmem:[%s1 + $0x74] sm:$0xf]
        %v2677 = vld [vmem:[%s1 + $0x78] sm:$0xf]
        %v2678 = vld [vmem:[%s1 + $0x7c] sm:$0xf]
        %v2679 = vld [vmem:[%s2269] sm:$0x3e]
        %v2680 = vld [vmem:[%s2269 + $0x8] sm:$0x3e]
        %v2681 = vpack.c.bf16 %v2679, %v2679
        %v2682 = vpack.c.bf16 %v2680, %v2680
        %v2683 = vld [vmem:[%s479] sm:$0xf]
        %v2684 = vld [vmem:[%s479 + $0x4] sm:$0xf]
        %v2685 = vld [vmem:[%s479 + $0x8] sm:$0xf]
        %v2686 = vld [vmem:[%s479 + $0xc] sm:$0xf]
        %v2687 = vld [vmem:[%s479 + $0x10] sm:$0xf]
        %v2688 = vld [vmem:[%s479 + $0x14] sm:$0xf]
        %v2689 = vld [vmem:[%s479 + $0x18] sm:$0xf]
        %v2690 = vld [vmem:[%s479 + $0x1c] sm:$0xf]
        %v2691 = vld [vmem:[%s479 + $0x20] sm:$0xf]
        %v2692 = vld [vmem:[%s479 + $0x24] sm:$0xf]
        %v2693 = vld [vmem:[%s479 + $0x28] sm:$0xf]
        %v2694 = vld [vmem:[%s479 + $0x2c] sm:$0xf]
        %v2695 = vld [vmem:[%s479 + $0x30] sm:$0xf]
        %v2696 = vld [vmem:[%s479 + $0x34] sm:$0xf]
        %v2697 = vld [vmem:[%s479 + $0x38] sm:$0xf]
        %v2698 = vld [vmem:[%s479 + $0x3c] sm:$0xf]
        %v2699 = vld [vmem:[%s479 + $0x40] sm:$0xf]
        %v2700 = vld [vmem:[%s479 + $0x44] sm:$0xf]
        %v2701 = vld [vmem:[%s479 + $0x48] sm:$0xf]
        %v2702 = vld [vmem:[%s479 + $0x4c] sm:$0xf]
        %v2703 = vld [vmem:[%s479 + $0x50] sm:$0xf]
        %v2704 = vld [vmem:[%s479 + $0x54] sm:$0xf]
        %v2705 = vld [vmem:[%s479 + $0x58] sm:$0xf]
        %v2706 = vld [vmem:[%s479 + $0x5c] sm:$0xf]
        %v2707 = vld [vmem:[%s479 + $0x60] sm:$0xf]
        %v2708 = vld [vmem:[%s479 + $0x64] sm:$0xf]
        %v2709 = vld [vmem:[%s479 + $0x68] sm:$0xf]
        %v2710 = vld [vmem:[%s479 + $0x6c] sm:$0xf]
        %v2711 = vld [vmem:[%s479 + $0x70] sm:$0xf]
        %v2712 = vld [vmem:[%s479 + $0x74] sm:$0xf]
        %v2713 = vld [vmem:[%s479 + $0x78] sm:$0xf]
        %v2714 = vld [vmem:[%s479 + $0x7c] sm:$0xf]
        %v2716 = vshrl.u32 %v2681, 16
        %v2718 = vshll.u32 %v2681, 16
        %v2720 = vrot.slane %v2718, 1
        %v2721 = vor.u32 %v2716, %v2720
        %v2723 = vshrl.u32 %v2682, 16
        %v2725 = vshll.u32 %v2682, 16
        %v2727 = vrot.slane %v2725, 1
        %v2728 = vor.u32 %v2723, %v2727
        %v2763 = vunpack.c.l.b16 %v2683
        %v2764 = vunpack.c.l.b16 %v2684
        %v2765 = vunpack.c.l.b16 %v2685
        %v2766 = vunpack.c.l.b16 %v2686
        %v2767 = vunpack.c.l.b16 %v2687
        %v2768 = vunpack.c.l.b16 %v2688
        %v2769 = vunpack.c.l.b16 %v2689
        %v2770 = vunpack.c.l.b16 %v2690
        %v2771 = vunpack.c.l.b16 %v2691
        %v2772 = vunpack.c.l.b16 %v2692
        %v2773 = vunpack.c.l.b16 %v2693
        %v2774 = vunpack.c.l.b16 %v2694
        %v2775 = vunpack.c.l.b16 %v2695
        %v2776 = vunpack.c.l.b16 %v2696
        %v2777 = vunpack.c.l.b16 %v2697
        %v2778 = vunpack.c.l.b16 %v2698
        %v2779 = vunpack.c.l.b16 %v2699
        %v2780 = vunpack.c.l.b16 %v2700
        %v2781 = vunpack.c.l.b16 %v2701
        %v2782 = vunpack.c.l.b16 %v2702
        %v2783 = vunpack.c.l.b16 %v2703
        %v2784 = vunpack.c.l.b16 %v2704
        %v2785 = vunpack.c.l.b16 %v2705
        %v2786 = vunpack.c.l.b16 %v2706
        %v2787 = vunpack.c.l.b16 %v2707
        %v2788 = vunpack.c.l.b16 %v2708
        %v2789 = vunpack.c.l.b16 %v2709
        %v2790 = vunpack.c.l.b16 %v2710
        %v2791 = vunpack.c.l.b16 %v2711
        %v2792 = vunpack.c.l.b16 %v2712
        %v2793 = vunpack.c.l.b16 %v2713
        %v2794 = vunpack.c.l.b16 %v2714
        %v2795 = vpack.c.b16 %v2764, %v2763
        %v2796 = vpack.c.b16 %v2766, %v2765
        %v2797 = vpack.c.b16 %v2768, %v2767
        %v2798 = vpack.c.b16 %v2770, %v2769
        %v2799 = vpack.c.b16 %v2772, %v2771
        %v2800 = vpack.c.b16 %v2774, %v2773
        %v2801 = vpack.c.b16 %v2776, %v2775
        %v2802 = vpack.c.b16 %v2778, %v2777
        %v2803 = vpack.c.b16 %v2780, %v2779
        %v2804 = vpack.c.b16 %v2782, %v2781
        %v2805 = vpack.c.b16 %v2784, %v2783
        %v2806 = vpack.c.b16 %v2786, %v2785
        %v2807 = vpack.c.b16 %v2788, %v2787
        %v2808 = vpack.c.b16 %v2790, %v2789
        %v2809 = vpack.c.b16 %v2792, %v2791
        %v2810 = vpack.c.b16 %v2794, %v2793
        %2827 = vmatprep.subr.bf16.mxu0 0
        %2828 = vmatpush1.bf16.msra.mxu0 %v2802
        %2829 = vmatprep.subr.bf16.mxu0 0
        %2830 = vmatpush1.bf16.msra.mxu0 %v2801
        %2831 = vmatprep.subr.bf16.mxu0 0
        %2832 = vmatpush1.bf16.msra.mxu0 %v2800
        %2833 = vmatprep.subr.bf16.mxu0 0
        %2834 = vmatpush1.bf16.msra.mxu0 %v2799
        %2835 = vmatprep.subr.bf16.mxu0 0
        %2836 = vmatpush1.bf16.msra.mxu0 %v2798
        %2837 = vmatprep.subr.bf16.mxu0 0
        %2838 = vmatpush1.bf16.msra.mxu0 %v2797
        %2839 = vmatprep.subr.bf16.mxu0 0
        %2840 = vmatpush1.bf16.msra.mxu0 %v2796
        %2841 = vmatprep.subr.bf16.mxu0 0
        %2842 = vmatpush1.bf16.msra.mxu0 %v2795
        %2843 = vmatprep.subr.bf16.mxu0 0
        %2844 = vmatpush2.bf16.msra.mxu0 %v2810
        %2845 = vmatprep.subr.bf16.mxu0 0
        %2846 = vmatpush2.bf16.msra.mxu0 %v2809
        %2847 = vmatprep.subr.bf16.mxu0 0
        %2848 = vmatpush2.bf16.msra.mxu0 %v2808
        %2849 = vmatprep.subr.bf16.mxu0 0
        %2850 = vmatpush2.bf16.msra.mxu0 %v2807
        %2851 = vmatprep.subr.bf16.mxu0 0
        %2852 = vmatpush2.bf16.msra.mxu0 %v2806
        %2853 = vmatprep.subr.bf16.mxu0 0
        %2854 = vmatpush2.bf16.msra.mxu0 %v2805
        %2855 = vmatprep.subr.bf16.mxu0 0
        %2856 = vmatpush2.bf16.msra.mxu0 %v2804
        %2857 = vmatprep.subr.bf16.mxu0 0
        %2858 = vmatpush2.bf16.msra.mxu0 %v2803
        %2859 = vmatprep.mubr.bf16.mxu0 %v2728
        %2860 = vmatmul.mubr.bf16.gmra.mxu0 %v2721
        %v2861 = vpop.f32.mrf.mxu0
        %v2862 = vadd.f32 0.0, %v2861
        %v2863 = vpop.f32.mrf.mxu0
        %v2864 = vpop.f32.mrf.mxu0
        %v2865 = vpop.f32.mrf.mxu0
        %2866 = vdwg.mxu0
        %v2899 = vunpack.c.l.b16 %v2647
        %v2900 = vunpack.c.l.b16 %v2648
        %v2901 = vunpack.c.l.b16 %v2649
        %v2902 = vunpack.c.l.b16 %v2650
        %v2903 = vunpack.c.l.b16 %v2651
        %v2904 = vunpack.c.l.b16 %v2652
        %v2905 = vunpack.c.l.b16 %v2653
        %v2906 = vunpack.c.l.b16 %v2654
        %v2907 = vunpack.c.l.b16 %v2655
        %v2908 = vunpack.c.l.b16 %v2656
        %v2909 = vunpack.c.l.b16 %v2657
        %v2910 = vunpack.c.l.b16 %v2658
        %v2911 = vunpack.c.l.b16 %v2659
        %v2912 = vunpack.c.l.b16 %v2660
        %v2913 = vunpack.c.l.b16 %v2661
        %v2914 = vunpack.c.l.b16 %v2662
        %v2915 = vunpack.c.l.b16 %v2663
        %v2916 = vunpack.c.l.b16 %v2664
        %v2917 = vunpack.c.l.b16 %v2665
        %v2918 = vunpack.c.l.b16 %v2666
        %v2919 = vunpack.c.l.b16 %v2667
        %v2920 = vunpack.c.l.b16 %v2668
        %v2921 = vunpack.c.l.b16 %v2669
        %v2922 = vunpack.c.l.b16 %v2670
        %v2923 = vunpack.c.l.b16 %v2671
        %v2924 = vunpack.c.l.b16 %v2672
        %v2925 = vunpack.c.l.b16 %v2673
        %v2926 = vunpack.c.l.b16 %v2674
        %v2927 = vunpack.c.l.b16 %v2675
        %v2928 = vunpack.c.l.b16 %v2676
        %v2929 = vunpack.c.l.b16 %v2677
        %v2930 = vunpack.c.l.b16 %v2678
        %v2931 = vpack.c.b16 %v2900, %v2899
        %v2932 = vpack.c.b16 %v2902, %v2901
        %v2933 = vpack.c.b16 %v2904, %v2903
        %v2934 = vpack.c.b16 %v2906, %v2905
        %v2935 = vpack.c.b16 %v2908, %v2907
        %v2936 = vpack.c.b16 %v2910, %v2909
        %v2937 = vpack.c.b16 %v2912, %v2911
        %v2938 = vpack.c.b16 %v2914, %v2913
        %v2939 = vpack.c.b16 %v2916, %v2915
        %v2940 = vpack.c.b16 %v2918, %v2917
        %v2941 = vpack.c.b16 %v2920, %v2919
        %v2942 = vpack.c.b16 %v2922, %v2921
        %v2943 = vpack.c.b16 %v2924, %v2923
        %v2944 = vpack.c.b16 %v2926, %v2925
        %v2945 = vpack.c.b16 %v2928, %v2927
        %v2946 = vpack.c.b16 %v2930, %v2929
        %2963 = vmatprep.subr.bf16.mxu0 0
        %2964 = vmatpush1.bf16.msra.mxu0 %v2938
        %2965 = vmatprep.subr.bf16.mxu0 0
        %2966 = vmatpush1.bf16.msra.mxu0 %v2937
        %2967 = vmatprep.subr.bf16.mxu0 0
        %2968 = vmatpush1.bf16.msra.mxu0 %v2936
        %2969 = vmatprep.subr.bf16.mxu0 0
        %2970 = vmatpush1.bf16.msra.mxu0 %v2935
        %2971 = vmatprep.subr.bf16.mxu0 0
        %2972 = vmatpush1.bf16.msra.mxu0 %v2934
        %2973 = vmatprep.subr.bf16.mxu0 0
        %2974 = vmatpush1.bf16.msra.mxu0 %v2933
        %2975 = vmatprep.subr.bf16.mxu0 0
        %2976 = vmatpush1.bf16.msra.mxu0 %v2932
        %2977 = vmatprep.subr.bf16.mxu0 0
        %2978 = vmatpush1.bf16.msra.mxu0 %v2931
        %2979 = vmatprep.subr.bf16.mxu0 0
        %2980 = vmatpush2.bf16.msra.mxu0 %v2946
        %2981 = vmatprep.subr.bf16.mxu0 0
        %2982 = vmatpush2.bf16.msra.mxu0 %v2945
        %2983 = vmatprep.subr.bf16.mxu0 0
        %2984 = vmatpush2.bf16.msra.mxu0 %v2944
        %2985 = vmatprep.subr.bf16.mxu0 0
        %2986 = vmatpush2.bf16.msra.mxu0 %v2943
        %2987 = vmatprep.subr.bf16.mxu0 0
        %2988 = vmatpush2.bf16.msra.mxu0 %v2942
        %2989 = vmatprep.subr.bf16.mxu0 0
        %2990 = vmatpush2.bf16.msra.mxu0 %v2941
        %2991 = vmatprep.subr.bf16.mxu0 0
        %2992 = vmatpush2.bf16.msra.mxu0 %v2940
        %2993 = vmatprep.subr.bf16.mxu0 0
        %2994 = vmatpush2.bf16.msra.mxu0 %v2939
        %2995 = vmatprep.mubr.bf16.mxu0 %v2646
        %2996 = vmatmul.mubr.bf16.gmra.mxu0 %v2645
        %v2997 = vpop.f32.mrf.mxu0
        %v2998 = vadd.f32 %v2862, %v2997
        %v2999 = vpop.f32.mrf.mxu0
        %v3000 = vpop.f32.mrf.mxu0
        %v3001 = vpop.f32.mrf.mxu0
        %3002 = vdwg.mxu0
        %s3003 = scalar_lea.vmem %s437, 64
        %v3004 = vld [vmem:[%s3003] sm:$0x1f]
        %v3005 = vld [vmem:[%s3003 + $0x8] sm:$0x1f]
        %v3006 = vpack.c.bf16 %v3004, %v3004
        %v3007 = vpack.c.bf16 %v3005, %v3005
        %v3008 = vld [vmem:[%s805] sm:$0xf]
        %v3009 = vld [vmem:[%s805 + $0x4] sm:$0xf]
        %v3010 = vld [vmem:[%s805 + $0x8] sm:$0xf]
        %v3011 = vld [vmem:[%s805 + $0xc] sm:$0xf]
        %v3012 = vld [vmem:[%s805 + $0x10] sm:$0xf]
        %v3013 = vld [vmem:[%s805 + $0x14] sm:$0xf]
        %v3014 = vld [vmem:[%s805 + $0x18] sm:$0xf]
        %v3015 = vld [vmem:[%s805 + $0x1c] sm:$0xf]
        %v3016 = vld [vmem:[%s805 + $0x20] sm:$0xf]
        %v3017 = vld [vmem:[%s805 + $0x24] sm:$0xf]
        %v3018 = vld [vmem:[%s805 + $0x28] sm:$0xf]
        %v3019 = vld [vmem:[%s805 + $0x2c] sm:$0xf]
        %v3020 = vld [vmem:[%s805 + $0x30] sm:$0xf]
        %v3021 = vld [vmem:[%s805 + $0x34] sm:$0xf]
        %v3022 = vld [vmem:[%s805 + $0x38] sm:$0xf]
        %v3023 = vld [vmem:[%s805 + $0x3c] sm:$0xf]
        %v3024 = vld [vmem:[%s805 + $0x40] sm:$0xf]
        %v3025 = vld [vmem:[%s805 + $0x44] sm:$0xf]
        %v3026 = vld [vmem:[%s805 + $0x48] sm:$0xf]
        %v3027 = vld [vmem:[%s805 + $0x4c] sm:$0xf]
        %v3028 = vld [vmem:[%s805 + $0x50] sm:$0xf]
        %v3029 = vld [vmem:[%s805 + $0x54] sm:$0xf]
        %v3030 = vld [vmem:[%s805 + $0x58] sm:$0xf]
        %v3031 = vld [vmem:[%s805 + $0x5c] sm:$0xf]
        %v3032 = vld [vmem:[%s805 + $0x60] sm:$0xf]
        %v3033 = vld [vmem:[%s805 + $0x64] sm:$0xf]
        %v3034 = vld [vmem:[%s805 + $0x68] sm:$0xf]
        %v3035 = vld [vmem:[%s805 + $0x6c] sm:$0xf]
        %v3036 = vld [vmem:[%s805 + $0x70] sm:$0xf]
        %v3037 = vld [vmem:[%s805 + $0x74] sm:$0xf]
        %v3038 = vld [vmem:[%s805 + $0x78] sm:$0xf]
        %v3039 = vld [vmem:[%s805 + $0x7c] sm:$0xf]
        %v3072 = vunpack.c.l.b16 %v3008
        %v3073 = vunpack.c.l.b16 %v3009
        %v3074 = vunpack.c.l.b16 %v3010
        %v3075 = vunpack.c.l.b16 %v3011
        %v3076 = vunpack.c.l.b16 %v3012
        %v3077 = vunpack.c.l.b16 %v3013
        %v3078 = vunpack.c.l.b16 %v3014
        %v3079 = vunpack.c.l.b16 %v3015
        %v3080 = vunpack.c.l.b16 %v3016
        %v3081 = vunpack.c.l.b16 %v3017
        %v3082 = vunpack.c.l.b16 %v3018
        %v3083 = vunpack.c.l.b16 %v3019
        %v3084 = vunpack.c.l.b16 %v3020
        %v3085 = vunpack.c.l.b16 %v3021
        %v3086 = vunpack.c.l.b16 %v3022
        %v3087 = vunpack.c.l.b16 %v3023
        %v3088 = vunpack.c.l.b16 %v3024
        %v3089 = vunpack.c.l.b16 %v3025
        %v3090 = vunpack.c.l.b16 %v3026
        %v3091 = vunpack.c.l.b16 %v3027
        %v3092 = vunpack.c.l.b16 %v3028
        %v3093 = vunpack.c.l.b16 %v3029
        %v3094 = vunpack.c.l.b16 %v3030
        %v3095 = vunpack.c.l.b16 %v3031
        %v3096 = vunpack.c.l.b16 %v3032
        %v3097 = vunpack.c.l.b16 %v3033
        %v3098 = vunpack.c.l.b16 %v3034
        %v3099 = vunpack.c.l.b16 %v3035
        %v3100 = vunpack.c.l.b16 %v3036
        %v3101 = vunpack.c.l.b16 %v3037
        %v3102 = vunpack.c.l.b16 %v3038
        %v3103 = vunpack.c.l.b16 %v3039
        %v3104 = vpack.c.b16 %v3073, %v3072
        %v3105 = vpack.c.b16 %v3075, %v3074
        %v3106 = vpack.c.b16 %v3077, %v3076
        %v3107 = vpack.c.b16 %v3079, %v3078
        %v3108 = vpack.c.b16 %v3081, %v3080
        %v3109 = vpack.c.b16 %v3083, %v3082
        %v3110 = vpack.c.b16 %v3085, %v3084
        %v3111 = vpack.c.b16 %v3087, %v3086
        %v3112 = vpack.c.b16 %v3089, %v3088
        %v3113 = vpack.c.b16 %v3091, %v3090
        %v3114 = vpack.c.b16 %v3093, %v3092
        %v3115 = vpack.c.b16 %v3095, %v3094
        %v3116 = vpack.c.b16 %v3097, %v3096
        %v3117 = vpack.c.b16 %v3099, %v3098
        %v3118 = vpack.c.b16 %v3101, %v3100
        %v3119 = vpack.c.b16 %v3103, %v3102
        %3136 = vmatprep.subr.bf16.mxu0 0
        %3137 = vmatpush1.bf16.msra.mxu0 %v3111
        %3138 = vmatprep.subr.bf16.mxu0 0
        %3139 = vmatpush1.bf16.msra.mxu0 %v3110
        %3140 = vmatprep.subr.bf16.mxu0 0
        %3141 = vmatpush1.bf16.msra.mxu0 %v3109
        %3142 = vmatprep.subr.bf16.mxu0 0
        %3143 = vmatpush1.bf16.msra.mxu0 %v3108
        %3144 = vmatprep.subr.bf16.mxu0 0
        %3145 = vmatpush1.bf16.msra.mxu0 %v3107
        %3146 = vmatprep.subr.bf16.mxu0 0
        %3147 = vmatpush1.bf16.msra.mxu0 %v3106
        %3148 = vmatprep.subr.bf16.mxu0 0
        %3149 = vmatpush1.bf16.msra.mxu0 %v3105
        %3150 = vmatprep.subr.bf16.mxu0 0
        %3151 = vmatpush1.bf16.msra.mxu0 %v3104
        %3152 = vmatprep.subr.bf16.mxu0 0
        %3153 = vmatpush2.bf16.msra.mxu0 %v3119
        %3154 = vmatprep.subr.bf16.mxu0 0
        %3155 = vmatpush2.bf16.msra.mxu0 %v3118
        %3156 = vmatprep.subr.bf16.mxu0 0
        %3157 = vmatpush2.bf16.msra.mxu0 %v3117
        %3158 = vmatprep.subr.bf16.mxu0 0
        %3159 = vmatpush2.bf16.msra.mxu0 %v3116
        %3160 = vmatprep.subr.bf16.mxu0 0
        %3161 = vmatpush2.bf16.msra.mxu0 %v3115
        %3162 = vmatprep.subr.bf16.mxu0 0
        %3163 = vmatpush2.bf16.msra.mxu0 %v3114
        %3164 = vmatprep.subr.bf16.mxu0 0
        %3165 = vmatpush2.bf16.msra.mxu0 %v3113
        %3166 = vmatprep.subr.bf16.mxu0 0
        %3167 = vmatpush2.bf16.msra.mxu0 %v3112
        %3168 = vmatprep.mubr.bf16.mxu0 %v3007
        %3169 = vmatmul.mubr.bf16.gmra.mxu0 %v3006
        %v3170 = vpop.f32.mrf.mxu0
        %v3171 = vadd.f32 0.0, %v3170
        %v3172 = vpop.f32.mrf.mxu0
        %v3173 = vpop.f32.mrf.mxu0
        %v3174 = vpop.f32.mrf.mxu0
        %3175 = vdwg.mxu0
        %v3176 = vadd.f32 %v2998, %v3171
        %v3177 = vld [vmem:[%s3003] sm:$0x3e]
        %v3178 = vld [vmem:[%s3003 + $0x8] sm:$0x3e]
        %v3179 = vpack.c.bf16 %v3177, %v3177
        %v3180 = vpack.c.bf16 %v3178, %v3178
        %v3181 = vld [vmem:[%s979] sm:$0xf]
        %v3182 = vld [vmem:[%s979 + $0x4] sm:$0xf]
        %v3183 = vld [vmem:[%s979 + $0x8] sm:$0xf]
        %v3184 = vld [vmem:[%s979 + $0xc] sm:$0xf]
        %v3185 = vld [vmem:[%s979 + $0x10] sm:$0xf]
        %v3186 = vld [vmem:[%s979 + $0x14] sm:$0xf]
        %v3187 = vld [vmem:[%s979 + $0x18] sm:$0xf]
        %v3188 = vld [vmem:[%s979 + $0x1c] sm:$0xf]
        %v3189 = vld [vmem:[%s979 + $0x20] sm:$0xf]
        %v3190 = vld [vmem:[%s979 + $0x24] sm:$0xf]
        %v3191 = vld [vmem:[%s979 + $0x28] sm:$0xf]
        %v3192 = vld [vmem:[%s979 + $0x2c] sm:$0xf]
        %v3193 = vld [vmem:[%s979 + $0x30] sm:$0xf]
        %v3194 = vld [vmem:[%s979 + $0x34] sm:$0xf]
        %v3195 = vld [vmem:[%s979 + $0x38] sm:$0xf]
        %v3196 = vld [vmem:[%s979 + $0x3c] sm:$0xf]
        %v3197 = vld [vmem:[%s979 + $0x40] sm:$0xf]
        %v3198 = vld [vmem:[%s979 + $0x44] sm:$0xf]
        %v3199 = vld [vmem:[%s979 + $0x48] sm:$0xf]
        %v3200 = vld [vmem:[%s979 + $0x4c] sm:$0xf]
        %v3201 = vld [vmem:[%s979 + $0x50] sm:$0xf]
        %v3202 = vld [vmem:[%s979 + $0x54] sm:$0xf]
        %v3203 = vld [vmem:[%s979 + $0x58] sm:$0xf]
        %v3204 = vld [vmem:[%s979 + $0x5c] sm:$0xf]
        %v3205 = vld [vmem:[%s979 + $0x60] sm:$0xf]
        %v3206 = vld [vmem:[%s979 + $0x64] sm:$0xf]
        %v3207 = vld [vmem:[%s979 + $0x68] sm:$0xf]
        %v3208 = vld [vmem:[%s979 + $0x6c] sm:$0xf]
        %v3209 = vld [vmem:[%s979 + $0x70] sm:$0xf]
        %v3210 = vld [vmem:[%s979 + $0x74] sm:$0xf]
        %v3211 = vld [vmem:[%s979 + $0x78] sm:$0xf]
        %v3212 = vld [vmem:[%s979 + $0x7c] sm:$0xf]
        %v3214 = vshrl.u32 %v3179, 16
        %v3216 = vshll.u32 %v3179, 16
        %v3218 = vrot.slane %v3216, 1
        %v3219 = vor.u32 %v3214, %v3218
        %v3221 = vshrl.u32 %v3180, 16
        %v3223 = vshll.u32 %v3180, 16
        %v3225 = vrot.slane %v3223, 1
        %v3226 = vor.u32 %v3221, %v3225
        %v3261 = vunpack.c.l.b16 %v3181
        %v3262 = vunpack.c.l.b16 %v3182
        %v3263 = vunpack.c.l.b16 %v3183
        %v3264 = vunpack.c.l.b16 %v3184
        %v3265 = vunpack.c.l.b16 %v3185
        %v3266 = vunpack.c.l.b16 %v3186
        %v3267 = vunpack.c.l.b16 %v3187
        %v3268 = vunpack.c.l.b16 %v3188
        %v3269 = vunpack.c.l.b16 %v3189
        %v3270 = vunpack.c.l.b16 %v3190
        %v3271 = vunpack.c.l.b16 %v3191
        %v3272 = vunpack.c.l.b16 %v3192
        %v3273 = vunpack.c.l.b16 %v3193
        %v3274 = vunpack.c.l.b16 %v3194
        %v3275 = vunpack.c.l.b16 %v3195
        %v3276 = vunpack.c.l.b16 %v3196
        %v3277 = vunpack.c.l.b16 %v3197
        %v3278 = vunpack.c.l.b16 %v3198
        %v3279 = vunpack.c.l.b16 %v3199
        %v3280 = vunpack.c.l.b16 %v3200
        %v3281 = vunpack.c.l.b16 %v3201
        %v3282 = vunpack.c.l.b16 %v3202
        %v3283 = vunpack.c.l.b16 %v3203
        %v3284 = vunpack.c.l.b16 %v3204
        %v3285 = vunpack.c.l.b16 %v3205
        %v3286 = vunpack.c.l.b16 %v3206
        %v3287 = vunpack.c.l.b16 %v3207
        %v3288 = vunpack.c.l.b16 %v3208
        %v3289 = vunpack.c.l.b16 %v3209
        %v3290 = vunpack.c.l.b16 %v3210
        %v3291 = vunpack.c.l.b16 %v3211
        %v3292 = vunpack.c.l.b16 %v3212
        %v3293 = vpack.c.b16 %v3262, %v3261
        %v3294 = vpack.c.b16 %v3264, %v3263
        %v3295 = vpack.c.b16 %v3266, %v3265
        %v3296 = vpack.c.b16 %v3268, %v3267
        %v3297 = vpack.c.b16 %v3270, %v3269
        %v3298 = vpack.c.b16 %v3272, %v3271
        %v3299 = vpack.c.b16 %v3274, %v3273
        %v3300 = vpack.c.b16 %v3276, %v3275
        %v3301 = vpack.c.b16 %v3278, %v3277
        %v3302 = vpack.c.b16 %v3280, %v3279
        %v3303 = vpack.c.b16 %v3282, %v3281
        %v3304 = vpack.c.b16 %v3284, %v3283
        %v3305 = vpack.c.b16 %v3286, %v3285
        %v3306 = vpack.c.b16 %v3288, %v3287
        %v3307 = vpack.c.b16 %v3290, %v3289
        %v3308 = vpack.c.b16 %v3292, %v3291
        %3325 = vmatprep.subr.bf16.mxu0 0
        %3326 = vmatpush1.bf16.msra.mxu0 %v3300
        %3327 = vmatprep.subr.bf16.mxu0 0
        %3328 = vmatpush1.bf16.msra.mxu0 %v3299
        %3329 = vmatprep.subr.bf16.mxu0 0
        %3330 = vmatpush1.bf16.msra.mxu0 %v3298
        %3331 = vmatprep.subr.bf16.mxu0 0
        %3332 = vmatpush1.bf16.msra.mxu0 %v3297
        %3333 = vmatprep.subr.bf16.mxu0 0
        %3334 = vmatpush1.bf16.msra.mxu0 %v3296
        %3335 = vmatprep.subr.bf16.mxu0 0
        %3336 = vmatpush1.bf16.msra.mxu0 %v3295
        %3337 = vmatprep.subr.bf16.mxu0 0
        %3338 = vmatpush1.bf16.msra.mxu0 %v3294
        %3339 = vmatprep.subr.bf16.mxu0 0
        %3340 = vmatpush1.bf16.msra.mxu0 %v3293
        %3341 = vmatprep.subr.bf16.mxu0 0
        %3342 = vmatpush2.bf16.msra.mxu0 %v3308
        %3343 = vmatprep.subr.bf16.mxu0 0
        %3344 = vmatpush2.bf16.msra.mxu0 %v3307
        %3345 = vmatprep.subr.bf16.mxu0 0
        %3346 = vmatpush2.bf16.msra.mxu0 %v3306
        %3347 = vmatprep.subr.bf16.mxu0 0
        %3348 = vmatpush2.bf16.msra.mxu0 %v3305
        %3349 = vmatprep.subr.bf16.mxu0 0
        %3350 = vmatpush2.bf16.msra.mxu0 %v3304
        %3351 = vmatprep.subr.bf16.mxu0 0
        %3352 = vmatpush2.bf16.msra.mxu0 %v3303
        %3353 = vmatprep.subr.bf16.mxu0 0
        %3354 = vmatpush2.bf16.msra.mxu0 %v3302
        %3355 = vmatprep.subr.bf16.mxu0 0
        %3356 = vmatpush2.bf16.msra.mxu0 %v3301
        %3357 = vmatprep.mubr.bf16.mxu0 %v3226
        %3358 = vmatmul.mubr.bf16.gmra.mxu0 %v3219
        %v3359 = vpop.f32.mrf.mxu0
        %v3360 = vadd.f32 0.0, %v3359
        %v3361 = vpop.f32.mrf.mxu0
        %v3362 = vpop.f32.mrf.mxu0
        %v3363 = vpop.f32.mrf.mxu0
        %3364 = vdwg.mxu0
        %v3365 = vadd.f32 %v3176, %v3360
        %v3366 = vld [vmem:[%s2] sm:$0x1]
        %v3368 = vlaneseq
        %v3369 = vshrl.u32 %v3368, 7
        %v3370 = vsub.s32 0, %v3369
        %v3371 = vrot.slane %v3366, %v3370
        %v3373 = vadd.f32 %v3365, %v3371
        %v3374 = vmax.f32 %v3373, 0.0
        %s3375 = scalar_lea.vmem [#allocation2], 24
        %3376 = vst [vmem:[%s3375] sm:$0x1f] %v3374
        %v3377 = vld [vmem:[%s3003] sm:$0x1f]
        %v3378 = vld [vmem:[%s3003 + $0x8] sm:$0x1f]
        %v3379 = vpack.c.bf16 %v3377, %v3377
        %v3380 = vpack.c.bf16 %v3378, %v3378
        %v3381 = vld [vmem:[%s1] sm:$0xf]
        %v3382 = vld [vmem:[%s1 + $0x4] sm:$0xf]
        %v3383 = vld [vmem:[%s1 + $0x8] sm:$0xf]
        %v3384 = vld [vmem:[%s1 + $0xc] sm:$0xf]
        %v3385 = vld [vmem:[%s1 + $0x10] sm:$0xf]
        %v3386 = vld [vmem:[%s1 + $0x14] sm:$0xf]
        %v3387 = vld [vmem:[%s1 + $0x18] sm:$0xf]
        %v3388 = vld [vmem:[%s1 + $0x1c] sm:$0xf]
        %v3389 = vld [vmem:[%s1 + $0x20] sm:$0xf]
        %v3390 = vld [vmem:[%s1 + $0x24] sm:$0xf]
        %v3391 = vld [vmem:[%s1 + $0x28] sm:$0xf]
        %v3392 = vld [vmem:[%s1 + $0x2c] sm:$0xf]
        %v3393 = vld [vmem:[%s1 + $0x30] sm:$0xf]
        %v3394 = vld [vmem:[%s1 + $0x34] sm:$0xf]
        %v3395 = vld [vmem:[%s1 + $0x38] sm:$0xf]
        %v3396 = vld [vmem:[%s1 + $0x3c] sm:$0xf]
        %v3397 = vld [vmem:[%s1 + $0x40] sm:$0xf]
        %v3398 = vld [vmem:[%s1 + $0x44] sm:$0xf]
        %v3399 = vld [vmem:[%s1 + $0x48] sm:$0xf]
        %v3400 = vld [vmem:[%s1 + $0x4c] sm:$0xf]
        %v3401 = vld [vmem:[%s1 + $0x50] sm:$0xf]
        %v3402 = vld [vmem:[%s1 + $0x54] sm:$0xf]
        %v3403 = vld [vmem:[%s1 + $0x58] sm:$0xf]
        %v3404 = vld [vmem:[%s1 + $0x5c] sm:$0xf]
        %v3405 = vld [vmem:[%s1 + $0x60] sm:$0xf]
        %v3406 = vld [vmem:[%s1 + $0x64] sm:$0xf]
        %v3407 = vld [vmem:[%s1 + $0x68] sm:$0xf]
        %v3408 = vld [vmem:[%s1 + $0x6c] sm:$0xf]
        %v3409 = vld [vmem:[%s1 + $0x70] sm:$0xf]
        %v3410 = vld [vmem:[%s1 + $0x74] sm:$0xf]
        %v3411 = vld [vmem:[%s1 + $0x78] sm:$0xf]
        %v3412 = vld [vmem:[%s1 + $0x7c] sm:$0xf]
        %v3413 = vld [vmem:[%s3003] sm:$0x3e]
        %v3414 = vld [vmem:[%s3003 + $0x8] sm:$0x3e]
        %v3415 = vpack.c.bf16 %v3413, %v3413
        %v3416 = vpack.c.bf16 %v3414, %v3414
        %v3417 = vld [vmem:[%s479] sm:$0xf]
        %v3418 = vld [vmem:[%s479 + $0x4] sm:$0xf]
        %v3419 = vld [vmem:[%s479 + $0x8] sm:$0xf]
        %v3420 = vld [vmem:[%s479 + $0xc] sm:$0xf]
        %v3421 = vld [vmem:[%s479 + $0x10] sm:$0xf]
        %v3422 = vld [vmem:[%s479 + $0x14] sm:$0xf]
        %v3423 = vld [vmem:[%s479 + $0x18] sm:$0xf]
        %v3424 = vld [vmem:[%s479 + $0x1c] sm:$0xf]
        %v3425 = vld [vmem:[%s479 + $0x20] sm:$0xf]
        %v3426 = vld [vmem:[%s479 + $0x24] sm:$0xf]
        %v3427 = vld [vmem:[%s479 + $0x28] sm:$0xf]
        %v3428 = vld [vmem:[%s479 + $0x2c] sm:$0xf]
        %v3429 = vld [vmem:[%s479 + $0x30] sm:$0xf]
        %v3430 = vld [vmem:[%s479 + $0x34] sm:$0xf]
        %v3431 = vld [vmem:[%s479 + $0x38] sm:$0xf]
        %v3432 = vld [vmem:[%s479 + $0x3c] sm:$0xf]
        %v3433 = vld [vmem:[%s479 + $0x40] sm:$0xf]
        %v3434 = vld [vmem:[%s479 + $0x44] sm:$0xf]
        %v3435 = vld [vmem:[%s479 + $0x48] sm:$0xf]
        %v3436 = vld [vmem:[%s479 + $0x4c] sm:$0xf]
        %v3437 = vld [vmem:[%s479 + $0x50] sm:$0xf]
        %v3438 = vld [vmem:[%s479 + $0x54] sm:$0xf]
        %v3439 = vld [vmem:[%s479 + $0x58] sm:$0xf]
        %v3440 = vld [vmem:[%s479 + $0x5c] sm:$0xf]
        %v3441 = vld [vmem:[%s479 + $0x60] sm:$0xf]
        %v3442 = vld [vmem:[%s479 + $0x64] sm:$0xf]
        %v3443 = vld [vmem:[%s479 + $0x68] sm:$0xf]
        %v3444 = vld [vmem:[%s479 + $0x6c] sm:$0xf]
        %v3445 = vld [vmem:[%s479 + $0x70] sm:$0xf]
        %v3446 = vld [vmem:[%s479 + $0x74] sm:$0xf]
        %v3447 = vld [vmem:[%s479 + $0x78] sm:$0xf]
        %v3448 = vld [vmem:[%s479 + $0x7c] sm:$0xf]
        %v3450 = vshrl.u32 %v3415, 16
        %v3452 = vshll.u32 %v3415, 16
        %v3454 = vrot.slane %v3452, 1
        %v3455 = vor.u32 %v3450, %v3454
        %v3457 = vshrl.u32 %v3416, 16
        %v3459 = vshll.u32 %v3416, 16
        %v3461 = vrot.slane %v3459, 1
        %v3462 = vor.u32 %v3457, %v3461
        %v3497 = vunpack.c.l.b16 %v3417
        %v3498 = vunpack.c.l.b16 %v3418
        %v3499 = vunpack.c.l.b16 %v3419
        %v3500 = vunpack.c.l.b16 %v3420
        %v3501 = vunpack.c.l.b16 %v3421
        %v3502 = vunpack.c.l.b16 %v3422
        %v3503 = vunpack.c.l.b16 %v3423
        %v3504 = vunpack.c.l.b16 %v3424
        %v3505 = vunpack.c.l.b16 %v3425
        %v3506 = vunpack.c.l.b16 %v3426
        %v3507 = vunpack.c.l.b16 %v3427
        %v3508 = vunpack.c.l.b16 %v3428
        %v3509 = vunpack.c.l.b16 %v3429
        %v3510 = vunpack.c.l.b16 %v3430
        %v3511 = vunpack.c.l.b16 %v3431
        %v3512 = vunpack.c.l.b16 %v3432
        %v3513 = vunpack.c.l.b16 %v3433
        %v3514 = vunpack.c.l.b16 %v3434
        %v3515 = vunpack.c.l.b16 %v3435
        %v3516 = vunpack.c.l.b16 %v3436
        %v3517 = vunpack.c.l.b16 %v3437
        %v3518 = vunpack.c.l.b16 %v3438
        %v3519 = vunpack.c.l.b16 %v3439
        %v3520 = vunpack.c.l.b16 %v3440
        %v3521 = vunpack.c.l.b16 %v3441
        %v3522 = vunpack.c.l.b16 %v3442
        %v3523 = vunpack.c.l.b16 %v3443
        %v3524 = vunpack.c.l.b16 %v3444
        %v3525 = vunpack.c.l.b16 %v3445
        %v3526 = vunpack.c.l.b16 %v3446
        %v3527 = vunpack.c.l.b16 %v3447
        %v3528 = vunpack.c.l.b16 %v3448
        %v3529 = vpack.c.b16 %v3498, %v3497
        %v3530 = vpack.c.b16 %v3500, %v3499
        %v3531 = vpack.c.b16 %v3502, %v3501
        %v3532 = vpack.c.b16 %v3504, %v3503
        %v3533 = vpack.c.b16 %v3506, %v3505
        %v3534 = vpack.c.b16 %v3508, %v3507
        %v3535 = vpack.c.b16 %v3510, %v3509
        %v3536 = vpack.c.b16 %v3512, %v3511
        %v3537 = vpack.c.b16 %v3514, %v3513
        %v3538 = vpack.c.b16 %v3516, %v3515
        %v3539 = vpack.c.b16 %v3518, %v3517
        %v3540 = vpack.c.b16 %v3520, %v3519
        %v3541 = vpack.c.b16 %v3522, %v3521
        %v3542 = vpack.c.b16 %v3524, %v3523
        %v3543 = vpack.c.b16 %v3526, %v3525
        %v3544 = vpack.c.b16 %v3528, %v3527
        %3561 = vmatprep.subr.bf16.mxu0 0
        %3562 = vmatpush1.bf16.msra.mxu0 %v3536
        %3563 = vmatprep.subr.bf16.mxu0 0
        %3564 = vmatpush1.bf16.msra.mxu0 %v3535
        %3565 = vmatprep.subr.bf16.mxu0 0
        %3566 = vmatpush1.bf16.msra.mxu0 %v3534
        %3567 = vmatprep.subr.bf16.mxu0 0
        %3568 = vmatpush1.bf16.msra.mxu0 %v3533
        %3569 = vmatprep.subr.bf16.mxu0 0
        %3570 = vmatpush1.bf16.msra.mxu0 %v3532
        %3571 = vmatprep.subr.bf16.mxu0 0
        %3572 = vmatpush1.bf16.msra.mxu0 %v3531
        %3573 = vmatprep.subr.bf16.mxu0 0
        %3574 = vmatpush1.bf16.msra.mxu0 %v3530
        %3575 = vmatprep.subr.bf16.mxu0 0
        %3576 = vmatpush1.bf16.msra.mxu0 %v3529
        %3577 = vmatprep.subr.bf16.mxu0 0
        %3578 = vmatpush2.bf16.msra.mxu0 %v3544
        %3579 = vmatprep.subr.bf16.mxu0 0
        %3580 = vmatpush2.bf16.msra.mxu0 %v3543
        %3581 = vmatprep.subr.bf16.mxu0 0
        %3582 = vmatpush2.bf16.msra.mxu0 %v3542
        %3583 = vmatprep.subr.bf16.mxu0 0
        %3584 = vmatpush2.bf16.msra.mxu0 %v3541
        %3585 = vmatprep.subr.bf16.mxu0 0
        %3586 = vmatpush2.bf16.msra.mxu0 %v3540
        %3587 = vmatprep.subr.bf16.mxu0 0
        %3588 = vmatpush2.bf16.msra.mxu0 %v3539
        %3589 = vmatprep.subr.bf16.mxu0 0
        %3590 = vmatpush2.bf16.msra.mxu0 %v3538
        %3591 = vmatprep.subr.bf16.mxu0 0
        %3592 = vmatpush2.bf16.msra.mxu0 %v3537
        %3593 = vmatprep.mubr.bf16.mxu0 %v3462
        %3594 = vmatmul.mubr.bf16.gmra.mxu0 %v3455
        %v3595 = vpop.f32.mrf.mxu0
        %v3596 = vadd.f32 0.0, %v3595
        %v3597 = vpop.f32.mrf.mxu0
        %v3598 = vpop.f32.mrf.mxu0
        %v3599 = vpop.f32.mrf.mxu0
        %3600 = vdwg.mxu0
        %v3633 = vunpack.c.l.b16 %v3381
        %v3634 = vunpack.c.l.b16 %v3382
        %v3635 = vunpack.c.l.b16 %v3383
        %v3636 = vunpack.c.l.b16 %v3384
        %v3637 = vunpack.c.l.b16 %v3385
        %v3638 = vunpack.c.l.b16 %v3386
        %v3639 = vunpack.c.l.b16 %v3387
        %v3640 = vunpack.c.l.b16 %v3388
        %v3641 = vunpack.c.l.b16 %v3389
        %v3642 = vunpack.c.l.b16 %v3390
        %v3643 = vunpack.c.l.b16 %v3391
        %v3644 = vunpack.c.l.b16 %v3392
        %v3645 = vunpack.c.l.b16 %v3393
        %v3646 = vunpack.c.l.b16 %v3394
        %v3647 = vunpack.c.l.b16 %v3395
        %v3648 = vunpack.c.l.b16 %v3396
        %v3649 = vunpack.c.l.b16 %v3397
        %v3650 = vunpack.c.l.b16 %v3398
        %v3651 = vunpack.c.l.b16 %v3399
        %v3652 = vunpack.c.l.b16 %v3400
        %v3653 = vunpack.c.l.b16 %v3401
        %v3654 = vunpack.c.l.b16 %v3402
        %v3655 = vunpack.c.l.b16 %v3403
        %v3656 = vunpack.c.l.b16 %v3404
        %v3657 = vunpack.c.l.b16 %v3405
        %v3658 = vunpack.c.l.b16 %v3406
        %v3659 = vunpack.c.l.b16 %v3407
        %v3660 = vunpack.c.l.b16 %v3408
        %v3661 = vunpack.c.l.b16 %v3409
        %v3662 = vunpack.c.l.b16 %v3410
        %v3663 = vunpack.c.l.b16 %v3411
        %v3664 = vunpack.c.l.b16 %v3412
        %v3665 = vpack.c.b16 %v3634, %v3633
        %v3666 = vpack.c.b16 %v3636, %v3635
        %v3667 = vpack.c.b16 %v3638, %v3637
        %v3668 = vpack.c.b16 %v3640, %v3639
        %v3669 = vpack.c.b16 %v3642, %v3641
        %v3670 = vpack.c.b16 %v3644, %v3643
        %v3671 = vpack.c.b16 %v3646, %v3645
        %v3672 = vpack.c.b16 %v3648, %v3647
        %v3673 = vpack.c.b16 %v3650, %v3649
        %v3674 = vpack.c.b16 %v3652, %v3651
        %v3675 = vpack.c.b16 %v3654, %v3653
        %v3676 = vpack.c.b16 %v3656, %v3655
        %v3677 = vpack.c.b16 %v3658, %v3657
        %v3678 = vpack.c.b16 %v3660, %v3659
        %v3679 = vpack.c.b16 %v3662, %v3661
        %v3680 = vpack.c.b16 %v3664, %v3663
        %3697 = vmatprep.subr.bf16.mxu0 0
        %3698 = vmatpush1.bf16.msra.mxu0 %v3672
        %3699 = vmatprep.subr.bf16.mxu0 0
        %3700 = vmatpush1.bf16.msra.mxu0 %v3671
        %3701 = vmatprep.subr.bf16.mxu0 0
        %3702 = vmatpush1.bf16.msra.mxu0 %v3670
        %3703 = vmatprep.subr.bf16.mxu0 0
        %3704 = vmatpush1.bf16.msra.mxu0 %v3669
        %3705 = vmatprep.subr.bf16.mxu0 0
        %3706 = vmatpush1.bf16.msra.mxu0 %v3668
        %3707 = vmatprep.subr.bf16.mxu0 0
        %3708 = vmatpush1.bf16.msra.mxu0 %v3667
        %3709 = vmatprep.subr.bf16.mxu0 0
        %3710 = vmatpush1.bf16.msra.mxu0 %v3666
        %3711 = vmatprep.subr.bf16.mxu0 0
        %3712 = vmatpush1.bf16.msra.mxu0 %v3665
        %3713 = vmatprep.subr.bf16.mxu0 0
        %3714 = vmatpush2.bf16.msra.mxu0 %v3680
        %3715 = vmatprep.subr.bf16.mxu0 0
        %3716 = vmatpush2.bf16.msra.mxu0 %v3679
        %3717 = vmatprep.subr.bf16.mxu0 0
        %3718 = vmatpush2.bf16.msra.mxu0 %v3678
        %3719 = vmatprep.subr.bf16.mxu0 0
        %3720 = vmatpush2.bf16.msra.mxu0 %v3677
        %3721 = vmatprep.subr.bf16.mxu0 0
        %3722 = vmatpush2.bf16.msra.mxu0 %v3676
        %3723 = vmatprep.subr.bf16.mxu0 0
        %3724 = vmatpush2.bf16.msra.mxu0 %v3675
        %3725 = vmatprep.subr.bf16.mxu0 0
        %3726 = vmatpush2.bf16.msra.mxu0 %v3674
        %3727 = vmatprep.subr.bf16.mxu0 0
        %3728 = vmatpush2.bf16.msra.mxu0 %v3673
        %3729 = vmatprep.mubr.bf16.mxu0 %v3380
        %3730 = vmatmul.mubr.bf16.gmra.mxu0 %v3379
        %v3731 = vpop.f32.mrf.mxu0
        %v3732 = vadd.f32 %v3596, %v3731
        %v3733 = vpop.f32.mrf.mxu0
        %v3734 = vpop.f32.mrf.mxu0
        %v3735 = vpop.f32.mrf.mxu0
        %3736 = vdwg.mxu0
        %s3737 = scalar_lea.vmem %s437, 80
        %v3738 = vld [vmem:[%s3737] sm:$0x1f]
        %v3739 = vld [vmem:[%s3737 + $0x8] sm:$0x1f]
        %v3740 = vpack.c.bf16 %v3738, %v3738
        %v3741 = vpack.c.bf16 %v3739, %v3739
        %v3742 = vld [vmem:[%s805] sm:$0xf]
        %v3743 = vld [vmem:[%s805 + $0x4] sm:$0xf]
        %v3744 = vld [vmem:[%s805 + $0x8] sm:$0xf]
        %v3745 = vld [vmem:[%s805 + $0xc] sm:$0xf]
        %v3746 = vld [vmem:[%s805 + $0x10] sm:$0xf]
        %v3747 = vld [vmem:[%s805 + $0x14] sm:$0xf]
        %v3748 = vld [vmem:[%s805 + $0x18] sm:$0xf]
        %v3749 = vld [vmem:[%s805 + $0x1c] sm:$0xf]
        %v3750 = vld [vmem:[%s805 + $0x20] sm:$0xf]
        %v3751 = vld [vmem:[%s805 + $0x24] sm:$0xf]
        %v3752 = vld [vmem:[%s805 + $0x28] sm:$0xf]
        %v3753 = vld [vmem:[%s805 + $0x2c] sm:$0xf]
        %v3754 = vld [vmem:[%s805 + $0x30] sm:$0xf]
        %v3755 = vld [vmem:[%s805 + $0x34] sm:$0xf]
        %v3756 = vld [vmem:[%s805 + $0x38] sm:$0xf]
        %v3757 = vld [vmem:[%s805 + $0x3c] sm:$0xf]
        %v3758 = vld [vmem:[%s805 + $0x40] sm:$0xf]
        %v3759 = vld [vmem:[%s805 + $0x44] sm:$0xf]
        %v3760 = vld [vmem:[%s805 + $0x48] sm:$0xf]
        %v3761 = vld [vmem:[%s805 + $0x4c] sm:$0xf]
        %v3762 = vld [vmem:[%s805 + $0x50] sm:$0xf]
        %v3763 = vld [vmem:[%s805 + $0x54] sm:$0xf]
        %v3764 = vld [vmem:[%s805 + $0x58] sm:$0xf]
        %v3765 = vld [vmem:[%s805 + $0x5c] sm:$0xf]
        %v3766 = vld [vmem:[%s805 + $0x60] sm:$0xf]
        %v3767 = vld [vmem:[%s805 + $0x64] sm:$0xf]
        %v3768 = vld [vmem:[%s805 + $0x68] sm:$0xf]
        %v3769 = vld [vmem:[%s805 + $0x6c] sm:$0xf]
        %v3770 = vld [vmem:[%s805 + $0x70] sm:$0xf]
        %v3771 = vld [vmem:[%s805 + $0x74] sm:$0xf]
        %v3772 = vld [vmem:[%s805 + $0x78] sm:$0xf]
        %v3773 = vld [vmem:[%s805 + $0x7c] sm:$0xf]
        %v3806 = vunpack.c.l.b16 %v3742
        %v3807 = vunpack.c.l.b16 %v3743
        %v3808 = vunpack.c.l.b16 %v3744
        %v3809 = vunpack.c.l.b16 %v3745
        %v3810 = vunpack.c.l.b16 %v3746
        %v3811 = vunpack.c.l.b16 %v3747
        %v3812 = vunpack.c.l.b16 %v3748
        %v3813 = vunpack.c.l.b16 %v3749
        %v3814 = vunpack.c.l.b16 %v3750
        %v3815 = vunpack.c.l.b16 %v3751
        %v3816 = vunpack.c.l.b16 %v3752
        %v3817 = vunpack.c.l.b16 %v3753
        %v3818 = vunpack.c.l.b16 %v3754
        %v3819 = vunpack.c.l.b16 %v3755
        %v3820 = vunpack.c.l.b16 %v3756
        %v3821 = vunpack.c.l.b16 %v3757
        %v3822 = vunpack.c.l.b16 %v3758
        %v3823 = vunpack.c.l.b16 %v3759
        %v3824 = vunpack.c.l.b16 %v3760
        %v3825 = vunpack.c.l.b16 %v3761
        %v3826 = vunpack.c.l.b16 %v3762
        %v3827 = vunpack.c.l.b16 %v3763
        %v3828 = vunpack.c.l.b16 %v3764
        %v3829 = vunpack.c.l.b16 %v3765
        %v3830 = vunpack.c.l.b16 %v3766
        %v3831 = vunpack.c.l.b16 %v3767
        %v3832 = vunpack.c.l.b16 %v3768
        %v3833 = vunpack.c.l.b16 %v3769
        %v3834 = vunpack.c.l.b16 %v3770
        %v3835 = vunpack.c.l.b16 %v3771
        %v3836 = vunpack.c.l.b16 %v3772
        %v3837 = vunpack.c.l.b16 %v3773
        %v3838 = vpack.c.b16 %v3807, %v3806
        %v3839 = vpack.c.b16 %v3809, %v3808
        %v3840 = vpack.c.b16 %v3811, %v3810
        %v3841 = vpack.c.b16 %v3813, %v3812
        %v3842 = vpack.c.b16 %v3815, %v3814
        %v3843 = vpack.c.b16 %v3817, %v3816
        %v3844 = vpack.c.b16 %v3819, %v3818
        %v3845 = vpack.c.b16 %v3821, %v3820
        %v3846 = vpack.c.b16 %v3823, %v3822
        %v3847 = vpack.c.b16 %v3825, %v3824
        %v3848 = vpack.c.b16 %v3827, %v3826
        %v3849 = vpack.c.b16 %v3829, %v3828
        %v3850 = vpack.c.b16 %v3831, %v3830
        %v3851 = vpack.c.b16 %v3833, %v3832
        %v3852 = vpack.c.b16 %v3835, %v3834
        %v3853 = vpack.c.b16 %v3837, %v3836
        %3870 = vmatprep.subr.bf16.mxu0 0
        %3871 = vmatpush1.bf16.msra.mxu0 %v3845
        %3872 = vmatprep.subr.bf16.mxu0 0
        %3873 = vmatpush1.bf16.msra.mxu0 %v3844
        %3874 = vmatprep.subr.bf16.mxu0 0
        %3875 = vmatpush1.bf16.msra.mxu0 %v3843
        %3876 = vmatprep.subr.bf16.mxu0 0
        %3877 = vmatpush1.bf16.msra.mxu0 %v3842
        %3878 = vmatprep.subr.bf16.mxu0 0
        %3879 = vmatpush1.bf16.msra.mxu0 %v3841
        %3880 = vmatprep.subr.bf16.mxu0 0
        %3881 = vmatpush1.bf16.msra.mxu0 %v3840
        %3882 = vmatprep.subr.bf16.mxu0 0
        %3883 = vmatpush1.bf16.msra.mxu0 %v3839
        %3884 = vmatprep.subr.bf16.mxu0 0
        %3885 = vmatpush1.bf16.msra.mxu0 %v3838
        %3886 = vmatprep.subr.bf16.mxu0 0
        %3887 = vmatpush2.bf16.msra.mxu0 %v3853
        %3888 = vmatprep.subr.bf16.mxu0 0
        %3889 = vmatpush2.bf16.msra.mxu0 %v3852
        %3890 = vmatprep.subr.bf16.mxu0 0
        %3891 = vmatpush2.bf16.msra.mxu0 %v3851
        %3892 = vmatprep.subr.bf16.mxu0 0
        %3893 = vmatpush2.bf16.msra.mxu0 %v3850
        %3894 = vmatprep.subr.bf16.mxu0 0
        %3895 = vmatpush2.bf16.msra.mxu0 %v3849
        %3896 = vmatprep.subr.bf16.mxu0 0
        %3897 = vmatpush2.bf16.msra.mxu0 %v3848
        %3898 = vmatprep.subr.bf16.mxu0 0
        %3899 = vmatpush2.bf16.msra.mxu0 %v3847
        %3900 = vmatprep.subr.bf16.mxu0 0
        %3901 = vmatpush2.bf16.msra.mxu0 %v3846
        %3902 = vmatprep.mubr.bf16.mxu0 %v3741
        %3903 = vmatmul.mubr.bf16.gmra.mxu0 %v3740
        %v3904 = vpop.f32.mrf.mxu0
        %v3905 = vadd.f32 0.0, %v3904
        %v3906 = vpop.f32.mrf.mxu0
        %v3907 = vpop.f32.mrf.mxu0
        %v3908 = vpop.f32.mrf.mxu0
        %3909 = vdwg.mxu0
        %v3910 = vadd.f32 %v3732, %v3905
        %v3911 = vld [vmem:[%s3737] sm:$0x3e]
        %v3912 = vld [vmem:[%s3737 + $0x8] sm:$0x3e]
        %v3913 = vpack.c.bf16 %v3911, %v3911
        %v3914 = vpack.c.bf16 %v3912, %v3912
        %v3915 = vld [vmem:[%s979] sm:$0xf]
        %v3916 = vld [vmem:[%s979 + $0x4] sm:$0xf]
        %v3917 = vld [vmem:[%s979 + $0x8] sm:$0xf]
        %v3918 = vld [vmem:[%s979 + $0xc] sm:$0xf]
        %v3919 = vld [vmem:[%s979 + $0x10] sm:$0xf]
        %v3920 = vld [vmem:[%s979 + $0x14] sm:$0xf]
        %v3921 = vld [vmem:[%s979 + $0x18] sm:$0xf]
        %v3922 = vld [vmem:[%s979 + $0x1c] sm:$0xf]
        %v3923 = vld [vmem:[%s979 + $0x20] sm:$0xf]
        %v3924 = vld [vmem:[%s979 + $0x24] sm:$0xf]
        %v3925 = vld [vmem:[%s979 + $0x28] sm:$0xf]
        %v3926 = vld [vmem:[%s979 + $0x2c] sm:$0xf]
        %v3927 = vld [vmem:[%s979 + $0x30] sm:$0xf]
        %v3928 = vld [vmem:[%s979 + $0x34] sm:$0xf]
        %v3929 = vld [vmem:[%s979 + $0x38] sm:$0xf]
        %v3930 = vld [vmem:[%s979 + $0x3c] sm:$0xf]
        %v3931 = vld [vmem:[%s979 + $0x40] sm:$0xf]
        %v3932 = vld [vmem:[%s979 + $0x44] sm:$0xf]
        %v3933 = vld [vmem:[%s979 + $0x48] sm:$0xf]
        %v3934 = vld [vmem:[%s979 + $0x4c] sm:$0xf]
        %v3935 = vld [vmem:[%s979 + $0x50] sm:$0xf]
        %v3936 = vld [vmem:[%s979 + $0x54] sm:$0xf]
        %v3937 = vld [vmem:[%s979 + $0x58] sm:$0xf]
        %v3938 = vld [vmem:[%s979 + $0x5c] sm:$0xf]
        %v3939 = vld [vmem:[%s979 + $0x60] sm:$0xf]
        %v3940 = vld [vmem:[%s979 + $0x64] sm:$0xf]
        %v3941 = vld [vmem:[%s979 + $0x68] sm:$0xf]
        %v3942 = vld [vmem:[%s979 + $0x6c] sm:$0xf]
        %v3943 = vld [vmem:[%s979 + $0x70] sm:$0xf]
        %v3944 = vld [vmem:[%s979 + $0x74] sm:$0xf]
        %v3945 = vld [vmem:[%s979 + $0x78] sm:$0xf]
        %v3946 = vld [vmem:[%s979 + $0x7c] sm:$0xf]
        %v3948 = vshrl.u32 %v3913, 16
        %v3950 = vshll.u32 %v3913, 16
        %v3952 = vrot.slane %v3950, 1
        %v3953 = vor.u32 %v3948, %v3952
        %v3955 = vshrl.u32 %v3914, 16
        %v3957 = vshll.u32 %v3914, 16
        %v3959 = vrot.slane %v3957, 1
        %v3960 = vor.u32 %v3955, %v3959
        %v3995 = vunpack.c.l.b16 %v3915
        %v3996 = vunpack.c.l.b16 %v3916
        %v3997 = vunpack.c.l.b16 %v3917
        %v3998 = vunpack.c.l.b16 %v3918
        %v3999 = vunpack.c.l.b16 %v3919
        %v4000 = vunpack.c.l.b16 %v3920
        %v4001 = vunpack.c.l.b16 %v3921
        %v4002 = vunpack.c.l.b16 %v3922
        %v4003 = vunpack.c.l.b16 %v3923
        %v4004 = vunpack.c.l.b16 %v3924
        %v4005 = vunpack.c.l.b16 %v3925
        %v4006 = vunpack.c.l.b16 %v3926
        %v4007 = vunpack.c.l.b16 %v3927
        %v4008 = vunpack.c.l.b16 %v3928
        %v4009 = vunpack.c.l.b16 %v3929
        %v4010 = vunpack.c.l.b16 %v3930
        %v4011 = vunpack.c.l.b16 %v3931
        %v4012 = vunpack.c.l.b16 %v3932
        %v4013 = vunpack.c.l.b16 %v3933
        %v4014 = vunpack.c.l.b16 %v3934
        %v4015 = vunpack.c.l.b16 %v3935
        %v4016 = vunpack.c.l.b16 %v3936
        %v4017 = vunpack.c.l.b16 %v3937
        %v4018 = vunpack.c.l.b16 %v3938
        %v4019 = vunpack.c.l.b16 %v3939
        %v4020 = vunpack.c.l.b16 %v3940
        %v4021 = vunpack.c.l.b16 %v3941
        %v4022 = vunpack.c.l.b16 %v3942
        %v4023 = vunpack.c.l.b16 %v3943
        %v4024 = vunpack.c.l.b16 %v3944
        %v4025 = vunpack.c.l.b16 %v3945
        %v4026 = vunpack.c.l.b16 %v3946
        %v4027 = vpack.c.b16 %v3996, %v3995
        %v4028 = vpack.c.b16 %v3998, %v3997
        %v4029 = vpack.c.b16 %v4000, %v3999
        %v4030 = vpack.c.b16 %v4002, %v4001
        %v4031 = vpack.c.b16 %v4004, %v4003
        %v4032 = vpack.c.b16 %v4006, %v4005
        %v4033 = vpack.c.b16 %v4008, %v4007
        %v4034 = vpack.c.b16 %v4010, %v4009
        %v4035 = vpack.c.b16 %v4012, %v4011
        %v4036 = vpack.c.b16 %v4014, %v4013
        %v4037 = vpack.c.b16 %v4016, %v4015
        %v4038 = vpack.c.b16 %v4018, %v4017
        %v4039 = vpack.c.b16 %v4020, %v4019
        %v4040 = vpack.c.b16 %v4022, %v4021
        %v4041 = vpack.c.b16 %v4024, %v4023
        %v4042 = vpack.c.b16 %v4026, %v4025
        %4059 = vmatprep.subr.bf16.mxu0 0
        %4060 = vmatpush1.bf16.msra.mxu0 %v4034
        %4061 = vmatprep.subr.bf16.mxu0 0
        %4062 = vmatpush1.bf16.msra.mxu0 %v4033
        %4063 = vmatprep.subr.bf16.mxu0 0
        %4064 = vmatpush1.bf16.msra.mxu0 %v4032
        %4065 = vmatprep.subr.bf16.mxu0 0
        %4066 = vmatpush1.bf16.msra.mxu0 %v4031
        %4067 = vmatprep.subr.bf16.mxu0 0
        %4068 = vmatpush1.bf16.msra.mxu0 %v4030
        %4069 = vmatprep.subr.bf16.mxu0 0
        %4070 = vmatpush1.bf16.msra.mxu0 %v4029
        %4071 = vmatprep.subr.bf16.mxu0 0
        %4072 = vmatpush1.bf16.msra.mxu0 %v4028
        %4073 = vmatprep.subr.bf16.mxu0 0
        %4074 = vmatpush1.bf16.msra.mxu0 %v4027
        %4075 = vmatprep.subr.bf16.mxu0 0
        %4076 = vmatpush2.bf16.msra.mxu0 %v4042
        %4077 = vmatprep.subr.bf16.mxu0 0
        %4078 = vmatpush2.bf16.msra.mxu0 %v4041
        %4079 = vmatprep.subr.bf16.mxu0 0
        %4080 = vmatpush2.bf16.msra.mxu0 %v4040
        %4081 = vmatprep.subr.bf16.mxu0 0
        %4082 = vmatpush2.bf16.msra.mxu0 %v4039
        %4083 = vmatprep.subr.bf16.mxu0 0
        %4084 = vmatpush2.bf16.msra.mxu0 %v4038
        %4085 = vmatprep.subr.bf16.mxu0 0
        %4086 = vmatpush2.bf16.msra.mxu0 %v4037
        %4087 = vmatprep.subr.bf16.mxu0 0
        %4088 = vmatpush2.bf16.msra.mxu0 %v4036
        %4089 = vmatprep.subr.bf16.mxu0 0
        %4090 = vmatpush2.bf16.msra.mxu0 %v4035
        %4091 = vmatprep.mubr.bf16.mxu0 %v3960
        %4092 = vmatmul.mubr.bf16.gmra.mxu0 %v3953
        %v4093 = vpop.f32.mrf.mxu0
        %v4094 = vadd.f32 0.0, %v4093
        %v4095 = vpop.f32.mrf.mxu0
        %v4096 = vpop.f32.mrf.mxu0
        %v4097 = vpop.f32.mrf.mxu0
        %4098 = vdwg.mxu0
        %v4099 = vadd.f32 %v3910, %v4094
        %v4100 = vld [vmem:[%s2] sm:$0x1]
        %v4102 = vlaneseq
        %v4103 = vshrl.u32 %v4102, 7
        %v4104 = vsub.s32 0, %v4103
        %v4105 = vrot.slane %v4100, %v4104
        %v4107 = vadd.f32 %v4099, %v4105
        %v4108 = vmax.f32 %v4107, 0.0
        %s4109 = scalar_lea.vmem [#allocation2], 32
        %4110 = vst [vmem:[%s4109] sm:$0x1f] %v4108
        %v4111 = vld [vmem:[#allocation2] sm:$0xf]
        %v4112 = vpack.c.bf16 %v4111, %v4111
        %v4113 = vld [vmem:[%s3] sm:$0xf]
        %v4114 = vld [vmem:[%s3 + $0x4] sm:$0xf]
        %v4115 = vld [vmem:[%s3 + $0x8] sm:$0xf]
        %v4116 = vld [vmem:[%s3 + $0xc] sm:$0xf]
        %v4117 = vld [vmem:[%s3 + $0x10] sm:$0xf]
        %v4118 = vld [vmem:[%s3 + $0x14] sm:$0xf]
        %v4119 = vld [vmem:[%s3 + $0x18] sm:$0xf]
        %v4120 = vld [vmem:[%s3 + $0x1c] sm:$0xf]
        %v4121 = vld [vmem:[%s3 + $0x20] sm:$0xf]
        %v4122 = vld [vmem:[%s3 + $0x24] sm:$0xf]
        %v4123 = vld [vmem:[%s3 + $0x28] sm:$0xf]
        %v4124 = vld [vmem:[%s3 + $0x2c] sm:$0xf]
        %v4125 = vld [vmem:[%s3 + $0x30] sm:$0xf]
        %v4126 = vld [vmem:[%s3 + $0x34] sm:$0xf]
        %v4127 = vld [vmem:[%s3 + $0x38] sm:$0xf]
        %v4128 = vld [vmem:[%s3 + $0x3c] sm:$0xf]
        %v4129 = vld [vmem:[#allocation2 + $0x1] sm:$0xf]
        %v4130 = vpack.c.bf16 %v4129, %v4129
        %s4131 = scalar_lea.vmem %s3, 64
        %v4132 = vld [vmem:[%s4131] sm:$0xf]
        %v4133 = vld [vmem:[%s4131 + $0x4] sm:$0xf]
        %v4134 = vld [vmem:[%s4131 + $0x8] sm:$0xf]
        %v4135 = vld [vmem:[%s4131 + $0xc] sm:$0xf]
        %v4136 = vld [vmem:[%s4131 + $0x10] sm:$0xf]
        %v4137 = vld [vmem:[%s4131 + $0x14] sm:$0xf]
        %v4138 = vld [vmem:[%s4131 + $0x18] sm:$0xf]
        %v4139 = vld [vmem:[%s4131 + $0x1c] sm:$0xf]
        %v4140 = vld [vmem:[%s4131 + $0x20] sm:$0xf]
        %v4141 = vld [vmem:[%s4131 + $0x24] sm:$0xf]
        %v4142 = vld [vmem:[%s4131 + $0x28] sm:$0xf]
        %v4143 = vld [vmem:[%s4131 + $0x2c] sm:$0xf]
        %v4144 = vld [vmem:[%s4131 + $0x30] sm:$0xf]
        %v4145 = vld [vmem:[%s4131 + $0x34] sm:$0xf]
        %v4146 = vld [vmem:[%s4131 + $0x38] sm:$0xf]
        %v4147 = vld [vmem:[%s4131 + $0x3c] sm:$0xf]
        %v4164 = vunpack.c.l.b16 %v4132
        %v4165 = vunpack.c.l.b16 %v4133
        %v4166 = vunpack.c.l.b16 %v4134
        %v4167 = vunpack.c.l.b16 %v4135
        %v4168 = vunpack.c.l.b16 %v4136
        %v4169 = vunpack.c.l.b16 %v4137
        %v4170 = vunpack.c.l.b16 %v4138
        %v4171 = vunpack.c.l.b16 %v4139
        %v4172 = vunpack.c.l.b16 %v4140
        %v4173 = vunpack.c.l.b16 %v4141
        %v4174 = vunpack.c.l.b16 %v4142
        %v4175 = vunpack.c.l.b16 %v4143
        %v4176 = vunpack.c.l.b16 %v4144
        %v4177 = vunpack.c.l.b16 %v4145
        %v4178 = vunpack.c.l.b16 %v4146
        %v4179 = vunpack.c.l.b16 %v4147
        %v4180 = vpack.c.b16 %v4165, %v4164
        %v4181 = vpack.c.b16 %v4167, %v4166
        %v4182 = vpack.c.b16 %v4169, %v4168
        %v4183 = vpack.c.b16 %v4171, %v4170
        %v4184 = vpack.c.b16 %v4173, %v4172
        %v4185 = vpack.c.b16 %v4175, %v4174
        %v4186 = vpack.c.b16 %v4177, %v4176
        %v4187 = vpack.c.b16 %v4179, %v4178
        %4196 = vmatprep.subr.bf16.mxu0 0
        %4197 = vmatpush1.bf16.msra.mxu0 %v4187
        %4198 = vmatprep.subr.bf16.mxu0 0
        %4199 = vmatpush1.bf16.msra.mxu0 %v4186
        %4200 = vmatprep.subr.bf16.mxu0 0
        %4201 = vmatpush1.bf16.msra.mxu0 %v4185
        %4202 = vmatprep.subr.bf16.mxu0 0
        %4203 = vmatpush1.bf16.msra.mxu0 %v4184
        %4204 = vmatprep.subr.bf16.mxu0 0
        %4205 = vmatpush1.bf16.msra.mxu0 %v4183
        %4206 = vmatprep.subr.bf16.mxu0 0
        %4207 = vmatpush1.bf16.msra.mxu0 %v4182
        %4208 = vmatprep.subr.bf16.mxu0 0
        %4209 = vmatpush1.bf16.msra.mxu0 %v4181
        %4210 = vmatprep.subr.bf16.mxu0 0
        %4211 = vmatpush1.bf16.msra.mxu0 %v4180
        %4212 = vmatprep.subr.bf16.mxu0 0
        %4213 = vmatpush2.bf16.msra.mxu0 0
        %4214 = vmatprep.subr.bf16.mxu0 0
        %4215 = vmatpush2.bf16.msra.mxu0 0
        %4216 = vmatprep.subr.bf16.mxu0 0
        %4217 = vmatpush2.bf16.msra.mxu0 0
        %4218 = vmatprep.subr.bf16.mxu0 0
        %4219 = vmatpush2.bf16.msra.mxu0 0
        %4220 = vmatprep.subr.bf16.mxu0 0
        %4221 = vmatpush2.bf16.msra.mxu0 0
        %4222 = vmatprep.subr.bf16.mxu0 0
        %4223 = vmatpush2.bf16.msra.mxu0 0
        %4224 = vmatprep.subr.bf16.mxu0 0
        %4225 = vmatpush2.bf16.msra.mxu0 0
        %4226 = vmatprep.subr.bf16.mxu0 0
        %4227 = vmatpush2.bf16.msra.mxu0 0
        %4228 = vmatprep.mubr.bf16.mxu0 0
        %4229 = vmatmul.mubr.bf16.gmra.mxu0 %v4130
        %v4230 = vpop.f32.mrf.mxu0
        %v4231 = vadd.f32 0.0, %v4230
        %v4232 = vpop.f32.mrf.mxu0
        %v4233 = vpop.f32.mrf.mxu0
        %v4234 = vpop.f32.mrf.mxu0
        %4235 = vdwg.mxu0
        %v4252 = vunpack.c.l.b16 %v4113
        %v4253 = vunpack.c.l.b16 %v4114
        %v4254 = vunpack.c.l.b16 %v4115
        %v4255 = vunpack.c.l.b16 %v4116
        %v4256 = vunpack.c.l.b16 %v4117
        %v4257 = vunpack.c.l.b16 %v4118
        %v4258 = vunpack.c.l.b16 %v4119
        %v4259 = vunpack.c.l.b16 %v4120
        %v4260 = vunpack.c.l.b16 %v4121
        %v4261 = vunpack.c.l.b16 %v4122
        %v4262 = vunpack.c.l.b16 %v4123
        %v4263 = vunpack.c.l.b16 %v4124
        %v4264 = vunpack.c.l.b16 %v4125
        %v4265 = vunpack.c.l.b16 %v4126
        %v4266 = vunpack.c.l.b16 %v4127
        %v4267 = vunpack.c.l.b16 %v4128
        %v4268 = vpack.c.b16 %v4253, %v4252
        %v4269 = vpack.c.b16 %v4255, %v4254
        %v4270 = vpack.c.b16 %v4257, %v4256
        %v4271 = vpack.c.b16 %v4259, %v4258
        %v4272 = vpack.c.b16 %v4261, %v4260
        %v4273 = vpack.c.b16 %v4263, %v4262
        %v4274 = vpack.c.b16 %v4265, %v4264
        %v4275 = vpack.c.b16 %v4267, %v4266
        %4284 = vmatprep.subr.bf16.mxu0 0
        %4285 = vmatpush1.bf16.msra.mxu0 %v4275
        %4286 = vmatprep.subr.bf16.mxu0 0
        %4287 = vmatpush1.bf16.msra.mxu0 %v4274
        %4288 = vmatprep.subr.bf16.mxu0 0
        %4289 = vmatpush1.bf16.msra.mxu0 %v4273
        %4290 = vmatprep.subr.bf16.mxu0 0
        %4291 = vmatpush1.bf16.msra.mxu0 %v4272
        %4292 = vmatprep.subr.bf16.mxu0 0
        %4293 = vmatpush1.bf16.msra.mxu0 %v4271
        %4294 = vmatprep.subr.bf16.mxu0 0
        %4295 = vmatpush1.bf16.msra.mxu0 %v4270
        %4296 = vmatprep.subr.bf16.mxu0 0
        %4297 = vmatpush1.bf16.msra.mxu0 %v4269
        %4298 = vmatprep.subr.bf16.mxu0 0
        %4299 = vmatpush1.bf16.msra.mxu0 %v4268
        %4300 = vmatprep.subr.bf16.mxu0 0
        %4301 = vmatpush2.bf16.msra.mxu0 0
        %4302 = vmatprep.subr.bf16.mxu0 0
        %4303 = vmatpush2.bf16.msra.mxu0 0
        %4304 = vmatprep.subr.bf16.mxu0 0
        %4305 = vmatpush2.bf16.msra.mxu0 0
        %4306 = vmatprep.subr.bf16.mxu0 0
        %4307 = vmatpush2.bf16.msra.mxu0 0
        %4308 = vmatprep.subr.bf16.mxu0 0
        %4309 = vmatpush2.bf16.msra.mxu0 0
        %4310 = vmatprep.subr.bf16.mxu0 0
        %4311 = vmatpush2.bf16.msra.mxu0 0
        %4312 = vmatprep.subr.bf16.mxu0 0
        %4313 = vmatpush2.bf16.msra.mxu0 0
        %4314 = vmatprep.subr.bf16.mxu0 0
        %4315 = vmatpush2.bf16.msra.mxu0 0
        %4316 = vmatprep.mubr.bf16.mxu0 0
        %4317 = vmatmul.mubr.bf16.gmra.mxu0 %v4112
        %v4318 = vpop.f32.mrf.mxu0
        %v4319 = vadd.f32 %v4231, %v4318
        %v4320 = vpop.f32.mrf.mxu0
        %v4321 = vpop.f32.mrf.mxu0
        %v4322 = vpop.f32.mrf.mxu0
        %4323 = vdwg.mxu0
        %v4324 = vld [vmem:[%s1907] sm:$0xf]
        %v4325 = vpack.c.bf16 %v4324, %v4324
        %s4326 = scalar_lea.vmem %s3, 128
        %v4327 = vld [vmem:[%s4326] sm:$0xf]
        %v4328 = vld [vmem:[%s4326 + $0x4] sm:$0xf]
        %v4329 = vld [vmem:[%s4326 + $0x8] sm:$0xf]
        %v4330 = vld [vmem:[%s4326 + $0xc] sm:$0xf]
        %v4331 = vld [vmem:[%s4326 + $0x10] sm:$0xf]
        %v4332 = vld [vmem:[%s4326 + $0x14] sm:$0xf]
        %v4333 = vld [vmem:[%s4326 + $0x18] sm:$0xf]
        %v4334 = vld [vmem:[%s4326 + $0x1c] sm:$0xf]
        %v4335 = vld [vmem:[%s4326 + $0x20] sm:$0xf]
        %v4336 = vld [vmem:[%s4326 + $0x24] sm:$0xf]
        %v4337 = vld [vmem:[%s4326 + $0x28] sm:$0xf]
        %v4338 = vld [vmem:[%s4326 + $0x2c] sm:$0xf]
        %v4339 = vld [vmem:[%s4326 + $0x30] sm:$0xf]
        %v4340 = vld [vmem:[%s4326 + $0x34] sm:$0xf]
        %v4341 = vld [vmem:[%s4326 + $0x38] sm:$0xf]
        %v4342 = vld [vmem:[%s4326 + $0x3c] sm:$0xf]
        %v4359 = vunpack.c.l.b16 %v4327
        %v4360 = vunpack.c.l.b16 %v4328
        %v4361 = vunpack.c.l.b16 %v4329
        %v4362 = vunpack.c.l.b16 %v4330
        %v4363 = vunpack.c.l.b16 %v4331
        %v4364 = vunpack.c.l.b16 %v4332
        %v4365 = vunpack.c.l.b16 %v4333
        %v4366 = vunpack.c.l.b16 %v4334
        %v4367 = vunpack.c.l.b16 %v4335
        %v4368 = vunpack.c.l.b16 %v4336
        %v4369 = vunpack.c.l.b16 %v4337
        %v4370 = vunpack.c.l.b16 %v4338
        %v4371 = vunpack.c.l.b16 %v4339
        %v4372 = vunpack.c.l.b16 %v4340
        %v4373 = vunpack.c.l.b16 %v4341
        %v4374 = vunpack.c.l.b16 %v4342
        %v4375 = vpack.c.b16 %v4360, %v4359
        %v4376 = vpack.c.b16 %v4362, %v4361
        %v4377 = vpack.c.b16 %v4364, %v4363
        %v4378 = vpack.c.b16 %v4366, %v4365
        %v4379 = vpack.c.b16 %v4368, %v4367
        %v4380 = vpack.c.b16 %v4370, %v4369
        %v4381 = vpack.c.b16 %v4372, %v4371
        %v4382 = vpack.c.b16 %v4374, %v4373
        %4391 = vmatprep.subr.bf16.mxu0 0
        %4392 = vmatpush1.bf16.msra.mxu0 %v4382
        %4393 = vmatprep.subr.bf16.mxu0 0
        %4394 = vmatpush1.bf16.msra.mxu0 %v4381
        %4395 = vmatprep.subr.bf16.mxu0 0
        %4396 = vmatpush1.bf16.msra.mxu0 %v4380
        %4397 = vmatprep.subr.bf16.mxu0 0
        %4398 = vmatpush1.bf16.msra.mxu0 %v4379
        %4399 = vmatprep.subr.bf16.mxu0 0
        %4400 = vmatpush1.bf16.msra.mxu0 %v4378
        %4401 = vmatprep.subr.bf16.mxu0 0
        %4402 = vmatpush1.bf16.msra.mxu0 %v4377
        %4403 = vmatprep.subr.bf16.mxu0 0
        %4404 = vmatpush1.bf16.msra.mxu0 %v4376
        %4405 = vmatprep.subr.bf16.mxu0 0
        %4406 = vmatpush1.bf16.msra.mxu0 %v4375
        %4407 = vmatprep.subr.bf16.mxu0 0
        %4408 = vmatpush2.bf16.msra.mxu0 0
        %4409 = vmatprep.subr.bf16.mxu0 0
        %4410 = vmatpush2.bf16.msra.mxu0 0
        %4411 = vmatprep.subr.bf16.mxu0 0
        %4412 = vmatpush2.bf16.msra.mxu0 0
        %4413 = vmatprep.subr.bf16.mxu0 0
        %4414 = vmatpush2.bf16.msra.mxu0 0
        %4415 = vmatprep.subr.bf16.mxu0 0
        %4416 = vmatpush2.bf16.msra.mxu0 0
        %4417 = vmatprep.subr.bf16.mxu0 0
        %4418 = vmatpush2.bf16.msra.mxu0 0
        %4419 = vmatprep.subr.bf16.mxu0 0
        %4420 = vmatpush2.bf16.msra.mxu0 0
        %4421 = vmatprep.subr.bf16.mxu0 0
        %4422 = vmatpush2.bf16.msra.mxu0 0
        %4423 = vmatprep.mubr.bf16.mxu0 0
        %4424 = vmatmul.mubr.bf16.gmra.mxu0 %v4325
        %v4425 = vpop.f32.mrf.mxu0
        %v4426 = vadd.f32 0.0, %v4425
        %v4427 = vpop.f32.mrf.mxu0
        %v4428 = vpop.f32.mrf.mxu0
        %v4429 = vpop.f32.mrf.mxu0
        %4430 = vdwg.mxu0
        %v4431 = vadd.f32 %v4319, %v4426
        %v4432 = vld [vmem:[%s1907 + $0x1] sm:$0xf]
        %v4433 = vpack.c.bf16 %v4432, %v4432
        %s4434 = scalar_lea.vmem %s3, 192
        %v4435 = vld [vmem:[%s4434] sm:$0xf]
        %v4436 = vld [vmem:[%s4434 + $0x4] sm:$0xf]
        %v4437 = vld [vmem:[%s4434 + $0x8] sm:$0xf]
        %v4438 = vld [vmem:[%s4434 + $0xc] sm:$0xf]
        %v4439 = vld [vmem:[%s4434 + $0x10] sm:$0xf]
        %v4440 = vld [vmem:[%s4434 + $0x14] sm:$0xf]
        %v4441 = vld [vmem:[%s4434 + $0x18] sm:$0xf]
        %v4442 = vld [vmem:[%s4434 + $0x1c] sm:$0xf]
        %v4443 = vld [vmem:[%s4434 + $0x20] sm:$0xf]
        %v4444 = vld [vmem:[%s4434 + $0x24] sm:$0xf]
        %v4445 = vld [vmem:[%s4434 + $0x28] sm:$0xf]
        %v4446 = vld [vmem:[%s4434 + $0x2c] sm:$0xf]
        %v4447 = vld [vmem:[%s4434 + $0x30] sm:$0xf]
        %v4448 = vld [vmem:[%s4434 + $0x34] sm:$0xf]
        %v4449 = vld [vmem:[%s4434 + $0x38] sm:$0xf]
        %v4450 = vld [vmem:[%s4434 + $0x3c] sm:$0xf]
        %v4467 = vunpack.c.l.b16 %v4435
        %v4468 = vunpack.c.l.b16 %v4436
        %v4469 = vunpack.c.l.b16 %v4437
        %v4470 = vunpack.c.l.b16 %v4438
        %v4471 = vunpack.c.l.b16 %v4439
        %v4472 = vunpack.c.l.b16 %v4440
        %v4473 = vunpack.c.l.b16 %v4441
        %v4474 = vunpack.c.l.b16 %v4442
        %v4475 = vunpack.c.l.b16 %v4443
        %v4476 = vunpack.c.l.b16 %v4444
        %v4477 = vunpack.c.l.b16 %v4445
        %v4478 = vunpack.c.l.b16 %v4446
        %v4479 = vunpack.c.l.b16 %v4447
        %v4480 = vunpack.c.l.b16 %v4448
        %v4481 = vunpack.c.l.b16 %v4449
        %v4482 = vunpack.c.l.b16 %v4450
        %v4483 = vpack.c.b16 %v4468, %v4467
        %v4484 = vpack.c.b16 %v4470, %v4469
        %v4485 = vpack.c.b16 %v4472, %v4471
        %v4486 = vpack.c.b16 %v4474, %v4473
        %v4487 = vpack.c.b16 %v4476, %v4475
        %v4488 = vpack.c.b16 %v4478, %v4477
        %v4489 = vpack.c.b16 %v4480, %v4479
        %v4490 = vpack.c.b16 %v4482, %v4481
        %4499 = vmatprep.subr.bf16.mxu0 0
        %4500 = vmatpush1.bf16.msra.mxu0 %v4490
        %4501 = vmatprep.subr.bf16.mxu0 0
        %4502 = vmatpush1.bf16.msra.mxu0 %v4489
        %4503 = vmatprep.subr.bf16.mxu0 0
        %4504 = vmatpush1.bf16.msra.mxu0 %v4488
        %4505 = vmatprep.subr.bf16.mxu0 0
        %4506 = vmatpush1.bf16.msra.mxu0 %v4487
        %4507 = vmatprep.subr.bf16.mxu0 0
        %4508 = vmatpush1.bf16.msra.mxu0 %v4486
        %4509 = vmatprep.subr.bf16.mxu0 0
        %4510 = vmatpush1.bf16.msra.mxu0 %v4485
        %4511 = vmatprep.subr.bf16.mxu0 0
        %4512 = vmatpush1.bf16.msra.mxu0 %v4484
        %4513 = vmatprep.subr.bf16.mxu0 0
        %4514 = vmatpush1.bf16.msra.mxu0 %v4483
        %4515 = vmatprep.subr.bf16.mxu0 0
        %4516 = vmatpush2.bf16.msra.mxu0 0
        %4517 = vmatprep.subr.bf16.mxu0 0
        %4518 = vmatpush2.bf16.msra.mxu0 0
        %4519 = vmatprep.subr.bf16.mxu0 0
        %4520 = vmatpush2.bf16.msra.mxu0 0
        %4521 = vmatprep.subr.bf16.mxu0 0
        %4522 = vmatpush2.bf16.msra.mxu0 0
        %4523 = vmatprep.subr.bf16.mxu0 0
        %4524 = vmatpush2.bf16.msra.mxu0 0
        %4525 = vmatprep.subr.bf16.mxu0 0
        %4526 = vmatpush2.bf16.msra.mxu0 0
        %4527 = vmatprep.subr.bf16.mxu0 0
        %4528 = vmatpush2.bf16.msra.mxu0 0
        %4529 = vmatprep.subr.bf16.mxu0 0
        %4530 = vmatpush2.bf16.msra.mxu0 0
        %4531 = vmatprep.mubr.bf16.mxu0 0
        %4532 = vmatmul.mubr.bf16.gmra.mxu0 %v4433
        %v4533 = vpop.f32.mrf.mxu0
        %v4534 = vadd.f32 0.0, %v4533
        %v4535 = vpop.f32.mrf.mxu0
        %v4536 = vpop.f32.mrf.mxu0
        %v4537 = vpop.f32.mrf.mxu0
        %4538 = vdwg.mxu0
        %v4539 = vadd.f32 %v4431, %v4534
        %v4540 = vld [vmem:[%s4] sm:$0x1]
        %v4542 = vlaneseq
        %v4543 = vshrl.u32 %v4542, 7
        %v4544 = vsub.s32 0, %v4543
        %v4545 = vrot.slane %v4540, %v4544
        %v4547 = vadd.f32 %v4539, %v4545
        %v4548 = vmax.f32 %v4547, 0.0
        %vm4549 = vcmask 519168
        %4550 = vst.msk [vmem:[#allocation3] sm:$0xf] %vm4549, %v4548
        %v4551 = vld [vmem:[%s1907] sm:$0xf]
        %v4552 = vpack.c.bf16 %v4551, %v4551
        %v4553 = vld [vmem:[%s3] sm:$0xf]
        %v4554 = vld [vmem:[%s3 + $0x4] sm:$0xf]
        %v4555 = vld [vmem:[%s3 + $0x8] sm:$0xf]
        %v4556 = vld [vmem:[%s3 + $0xc] sm:$0xf]
        %v4557 = vld [vmem:[%s3 + $0x10] sm:$0xf]
        %v4558 = vld [vmem:[%s3 + $0x14] sm:$0xf]
        %v4559 = vld [vmem:[%s3 + $0x18] sm:$0xf]
        %v4560 = vld [vmem:[%s3 + $0x1c] sm:$0xf]
        %v4561 = vld [vmem:[%s3 + $0x20] sm:$0xf]
        %v4562 = vld [vmem:[%s3 + $0x24] sm:$0xf]
        %v4563 = vld [vmem:[%s3 + $0x28] sm:$0xf]
        %v4564 = vld [vmem:[%s3 + $0x2c] sm:$0xf]
        %v4565 = vld [vmem:[%s3 + $0x30] sm:$0xf]
        %v4566 = vld [vmem:[%s3 + $0x34] sm:$0xf]
        %v4567 = vld [vmem:[%s3 + $0x38] sm:$0xf]
        %v4568 = vld [vmem:[%s3 + $0x3c] sm:$0xf]
        %v4569 = vld [vmem:[%s1907 + $0x1] sm:$0xf]
        %v4570 = vpack.c.bf16 %v4569, %v4569
        %v4571 = vld [vmem:[%s4131] sm:$0xf]
        %v4572 = vld [vmem:[%s4131 + $0x4] sm:$0xf]
        %v4573 = vld [vmem:[%s4131 + $0x8] sm:$0xf]
        %v4574 = vld [vmem:[%s4131 + $0xc] sm:$0xf]
        %v4575 = vld [vmem:[%s4131 + $0x10] sm:$0xf]
        %v4576 = vld [vmem:[%s4131 + $0x14] sm:$0xf]
        %v4577 = vld [vmem:[%s4131 + $0x18] sm:$0xf]
        %v4578 = vld [vmem:[%s4131 + $0x1c] sm:$0xf]
        %v4579 = vld [vmem:[%s4131 + $0x20] sm:$0xf]
        %v4580 = vld [vmem:[%s4131 + $0x24] sm:$0xf]
        %v4581 = vld [vmem:[%s4131 + $0x28] sm:$0xf]
        %v4582 = vld [vmem:[%s4131 + $0x2c] sm:$0xf]
        %v4583 = vld [vmem:[%s4131 + $0x30] sm:$0xf]
        %v4584 = vld [vmem:[%s4131 + $0x34] sm:$0xf]
        %v4585 = vld [vmem:[%s4131 + $0x38] sm:$0xf]
        %v4586 = vld [vmem:[%s4131 + $0x3c] sm:$0xf]
        %v4603 = vunpack.c.l.b16 %v4571
        %v4604 = vunpack.c.l.b16 %v4572
        %v4605 = vunpack.c.l.b16 %v4573
        %v4606 = vunpack.c.l.b16 %v4574
        %v4607 = vunpack.c.l.b16 %v4575
        %v4608 = vunpack.c.l.b16 %v4576
        %v4609 = vunpack.c.l.b16 %v4577
        %v4610 = vunpack.c.l.b16 %v4578
        %v4611 = vunpack.c.l.b16 %v4579
        %v4612 = vunpack.c.l.b16 %v4580
        %v4613 = vunpack.c.l.b16 %v4581
        %v4614 = vunpack.c.l.b16 %v4582
        %v4615 = vunpack.c.l.b16 %v4583
        %v4616 = vunpack.c.l.b16 %v4584
        %v4617 = vunpack.c.l.b16 %v4585
        %v4618 = vunpack.c.l.b16 %v4586
        %v4619 = vpack.c.b16 %v4604, %v4603
        %v4620 = vpack.c.b16 %v4606, %v4605
        %v4621 = vpack.c.b16 %v4608, %v4607
        %v4622 = vpack.c.b16 %v4610, %v4609
        %v4623 = vpack.c.b16 %v4612, %v4611
        %v4624 = vpack.c.b16 %v4614, %v4613
        %v4625 = vpack.c.b16 %v4616, %v4615
        %v4626 = vpack.c.b16 %v4618, %v4617
        %4635 = vmatprep.subr.bf16.mxu0 0
        %4636 = vmatpush1.bf16.msra.mxu0 %v4626
        %4637 = vmatprep.subr.bf16.mxu0 0
        %4638 = vmatpush1.bf16.msra.mxu0 %v4625
        %4639 = vmatprep.subr.bf16.mxu0 0
        %4640 = vmatpush1.bf16.msra.mxu0 %v4624
        %4641 = vmatprep.subr.bf16.mxu0 0
        %4642 = vmatpush1.bf16.msra.mxu0 %v4623
        %4643 = vmatprep.subr.bf16.mxu0 0
        %4644 = vmatpush1.bf16.msra.mxu0 %v4622
        %4645 = vmatprep.subr.bf16.mxu0 0
        %4646 = vmatpush1.bf16.msra.mxu0 %v4621
        %4647 = vmatprep.subr.bf16.mxu0 0
        %4648 = vmatpush1.bf16.msra.mxu0 %v4620
        %4649 = vmatprep.subr.bf16.mxu0 0
        %4650 = vmatpush1.bf16.msra.mxu0 %v4619
        %4651 = vmatprep.subr.bf16.mxu0 0
        %4652 = vmatpush2.bf16.msra.mxu0 0
        %4653 = vmatprep.subr.bf16.mxu0 0
        %4654 = vmatpush2.bf16.msra.mxu0 0
        %4655 = vmatprep.subr.bf16.mxu0 0
        %4656 = vmatpush2.bf16.msra.mxu0 0
        %4657 = vmatprep.subr.bf16.mxu0 0
        %4658 = vmatpush2.bf16.msra.mxu0 0
        %4659 = vmatprep.subr.bf16.mxu0 0
        %4660 = vmatpush2.bf16.msra.mxu0 0
        %4661 = vmatprep.subr.bf16.mxu0 0
        %4662 = vmatpush2.bf16.msra.mxu0 0
        %4663 = vmatprep.subr.bf16.mxu0 0
        %4664 = vmatpush2.bf16.msra.mxu0 0
        %4665 = vmatprep.subr.bf16.mxu0 0
        %4666 = vmatpush2.bf16.msra.mxu0 0
        %4667 = vmatprep.mubr.bf16.mxu0 0
        %4668 = vmatmul.mubr.bf16.gmra.mxu0 %v4570
        %v4669 = vpop.f32.mrf.mxu0
        %v4670 = vadd.f32 0.0, %v4669
        %v4671 = vpop.f32.mrf.mxu0
        %v4672 = vpop.f32.mrf.mxu0
        %v4673 = vpop.f32.mrf.mxu0
        %4674 = vdwg.mxu0
        %v4691 = vunpack.c.l.b16 %v4553
        %v4692 = vunpack.c.l.b16 %v4554
        %v4693 = vunpack.c.l.b16 %v4555
        %v4694 = vunpack.c.l.b16 %v4556
        %v4695 = vunpack.c.l.b16 %v4557
        %v4696 = vunpack.c.l.b16 %v4558
        %v4697 = vunpack.c.l.b16 %v4559
        %v4698 = vunpack.c.l.b16 %v4560
        %v4699 = vunpack.c.l.b16 %v4561
        %v4700 = vunpack.c.l.b16 %v4562
        %v4701 = vunpack.c.l.b16 %v4563
        %v4702 = vunpack.c.l.b16 %v4564
        %v4703 = vunpack.c.l.b16 %v4565
        %v4704 = vunpack.c.l.b16 %v4566
        %v4705 = vunpack.c.l.b16 %v4567
        %v4706 = vunpack.c.l.b16 %v4568
        %v4707 = vpack.c.b16 %v4692, %v4691
        %v4708 = vpack.c.b16 %v4694, %v4693
        %v4709 = vpack.c.b16 %v4696, %v4695
        %v4710 = vpack.c.b16 %v4698, %v4697
        %v4711 = vpack.c.b16 %v4700, %v4699
        %v4712 = vpack.c.b16 %v4702, %v4701
        %v4713 = vpack.c.b16 %v4704, %v4703
        %v4714 = vpack.c.b16 %v4706, %v4705
        %4723 = vmatprep.subr.bf16.mxu0 0
        %4724 = vmatpush1.bf16.msra.mxu0 %v4714
        %4725 = vmatprep.subr.bf16.mxu0 0
        %4726 = vmatpush1.bf16.msra.mxu0 %v4713
        %4727 = vmatprep.subr.bf16.mxu0 0
        %4728 = vmatpush1.bf16.msra.mxu0 %v4712
        %4729 = vmatprep.subr.bf16.mxu0 0
        %4730 = vmatpush1.bf16.msra.mxu0 %v4711
        %4731 = vmatprep.subr.bf16.mxu0 0
        %4732 = vmatpush1.bf16.msra.mxu0 %v4710
        %4733 = vmatprep.subr.bf16.mxu0 0
        %4734 = vmatpush1.bf16.msra.mxu0 %v4709
        %4735 = vmatprep.subr.bf16.mxu0 0
        %4736 = vmatpush1.bf16.msra.mxu0 %v4708
        %4737 = vmatprep.subr.bf16.mxu0 0
        %4738 = vmatpush1.bf16.msra.mxu0 %v4707
        %4739 = vmatprep.subr.bf16.mxu0 0
        %4740 = vmatpush2.bf16.msra.mxu0 0
        %4741 = vmatprep.subr.bf16.mxu0 0
        %4742 = vmatpush2.bf16.msra.mxu0 0
        %4743 = vmatprep.subr.bf16.mxu0 0
        %4744 = vmatpush2.bf16.msra.mxu0 0
        %4745 = vmatprep.subr.bf16.mxu0 0
        %4746 = vmatpush2.bf16.msra.mxu0 0
        %4747 = vmatprep.subr.bf16.mxu0 0
        %4748 = vmatpush2.bf16.msra.mxu0 0
        %4749 = vmatprep.subr.bf16.mxu0 0
        %4750 = vmatpush2.bf16.msra.mxu0 0
        %4751 = vmatprep.subr.bf16.mxu0 0
        %4752 = vmatpush2.bf16.msra.mxu0 0
        %4753 = vmatprep.subr.bf16.mxu0 0
        %4754 = vmatpush2.bf16.msra.mxu0 0
        %4755 = vmatprep.mubr.bf16.mxu0 0
        %4756 = vmatmul.mubr.bf16.gmra.mxu0 %v4552
        %v4757 = vpop.f32.mrf.mxu0
        %v4758 = vadd.f32 %v4670, %v4757
        %v4759 = vpop.f32.mrf.mxu0
        %v4760 = vpop.f32.mrf.mxu0
        %v4761 = vpop.f32.mrf.mxu0
        %4762 = vdwg.mxu0
        %v4763 = vld [vmem:[%s2641] sm:$0xf]
        %v4764 = vpack.c.bf16 %v4763, %v4763
        %v4765 = vld [vmem:[%s4326] sm:$0xf]
        %v4766 = vld [vmem:[%s4326 + $0x4] sm:$0xf]
        %v4767 = vld [vmem:[%s4326 + $0x8] sm:$0xf]
        %v4768 = vld [vmem:[%s4326 + $0xc] sm:$0xf]
        %v4769 = vld [vmem:[%s4326 + $0x10] sm:$0xf]
        %v4770 = vld [vmem:[%s4326 + $0x14] sm:$0xf]
        %v4771 = vld [vmem:[%s4326 + $0x18] sm:$0xf]
        %v4772 = vld [vmem:[%s4326 + $0x1c] sm:$0xf]
        %v4773 = vld [vmem:[%s4326 + $0x20] sm:$0xf]
        %v4774 = vld [vmem:[%s4326 + $0x24] sm:$0xf]
        %v4775 = vld [vmem:[%s4326 + $0x28] sm:$0xf]
        %v4776 = vld [vmem:[%s4326 + $0x2c] sm:$0xf]
        %v4777 = vld [vmem:[%s4326 + $0x30] sm:$0xf]
        %v4778 = vld [vmem:[%s4326 + $0x34] sm:$0xf]
        %v4779 = vld [vmem:[%s4326 + $0x38] sm:$0xf]
        %v4780 = vld [vmem:[%s4326 + $0x3c] sm:$0xf]
        %v4797 = vunpack.c.l.b16 %v4765
        %v4798 = vunpack.c.l.b16 %v4766
        %v4799 = vunpack.c.l.b16 %v4767
        %v4800 = vunpack.c.l.b16 %v4768
        %v4801 = vunpack.c.l.b16 %v4769
        %v4802 = vunpack.c.l.b16 %v4770
        %v4803 = vunpack.c.l.b16 %v4771
        %v4804 = vunpack.c.l.b16 %v4772
        %v4805 = vunpack.c.l.b16 %v4773
        %v4806 = vunpack.c.l.b16 %v4774
        %v4807 = vunpack.c.l.b16 %v4775
        %v4808 = vunpack.c.l.b16 %v4776
        %v4809 = vunpack.c.l.b16 %v4777
        %v4810 = vunpack.c.l.b16 %v4778
        %v4811 = vunpack.c.l.b16 %v4779
        %v4812 = vunpack.c.l.b16 %v4780
        %v4813 = vpack.c.b16 %v4798, %v4797
        %v4814 = vpack.c.b16 %v4800, %v4799
        %v4815 = vpack.c.b16 %v4802, %v4801
        %v4816 = vpack.c.b16 %v4804, %v4803
        %v4817 = vpack.c.b16 %v4806, %v4805
        %v4818 = vpack.c.b16 %v4808, %v4807
        %v4819 = vpack.c.b16 %v4810, %v4809
        %v4820 = vpack.c.b16 %v4812, %v4811
        %4829 = vmatprep.subr.bf16.mxu0 0
        %4830 = vmatpush1.bf16.msra.mxu0 %v4820
        %4831 = vmatprep.subr.bf16.mxu0 0
        %4832 = vmatpush1.bf16.msra.mxu0 %v4819
        %4833 = vmatprep.subr.bf16.mxu0 0
        %4834 = vmatpush1.bf16.msra.mxu0 %v4818
        %4835 = vmatprep.subr.bf16.mxu0 0
        %4836 = vmatpush1.bf16.msra.mxu0 %v4817
        %4837 = vmatprep.subr.bf16.mxu0 0
        %4838 = vmatpush1.bf16.msra.mxu0 %v4816
        %4839 = vmatprep.subr.bf16.mxu0 0
        %4840 = vmatpush1.bf16.msra.mxu0 %v4815
        %4841 = vmatprep.subr.bf16.mxu0 0
        %4842 = vmatpush1.bf16.msra.mxu0 %v4814
        %4843 = vmatprep.subr.bf16.mxu0 0
        %4844 = vmatpush1.bf16.msra.mxu0 %v4813
        %4845 = vmatprep.subr.bf16.mxu0 0
        %4846 = vmatpush2.bf16.msra.mxu0 0
        %4847 = vmatprep.subr.bf16.mxu0 0
        %4848 = vmatpush2.bf16.msra.mxu0 0
        %4849 = vmatprep.subr.bf16.mxu0 0
        %4850 = vmatpush2.bf16.msra.mxu0 0
        %4851 = vmatprep.subr.bf16.mxu0 0
        %4852 = vmatpush2.bf16.msra.mxu0 0
        %4853 = vmatprep.subr.bf16.mxu0 0
        %4854 = vmatpush2.bf16.msra.mxu0 0
        %4855 = vmatprep.subr.bf16.mxu0 0
        %4856 = vmatpush2.bf16.msra.mxu0 0
        %4857 = vmatprep.subr.bf16.mxu0 0
        %4858 = vmatpush2.bf16.msra.mxu0 0
        %4859 = vmatprep.subr.bf16.mxu0 0
        %4860 = vmatpush2.bf16.msra.mxu0 0
        %4861 = vmatprep.mubr.bf16.mxu0 0
        %4862 = vmatmul.mubr.bf16.gmra.mxu0 %v4764
        %v4863 = vpop.f32.mrf.mxu0
        %v4864 = vadd.f32 0.0, %v4863
        %v4865 = vpop.f32.mrf.mxu0
        %v4866 = vpop.f32.mrf.mxu0
        %v4867 = vpop.f32.mrf.mxu0
        %4868 = vdwg.mxu0
        %v4869 = vadd.f32 %v4758, %v4864
        %v4870 = vld [vmem:[%s2641 + $0x1] sm:$0xf]
        %v4871 = vpack.c.bf16 %v4870, %v4870
        %v4872 = vld [vmem:[%s4434] sm:$0xf]
        %v4873 = vld [vmem:[%s4434 + $0x4] sm:$0xf]
        %v4874 = vld [vmem:[%s4434 + $0x8] sm:$0xf]
        %v4875 = vld [vmem:[%s4434 + $0xc] sm:$0xf]
        %v4876 = vld [vmem:[%s4434 + $0x10] sm:$0xf]
        %v4877 = vld [vmem:[%s4434 + $0x14] sm:$0xf]
        %v4878 = vld [vmem:[%s4434 + $0x18] sm:$0xf]
        %v4879 = vld [vmem:[%s4434 + $0x1c] sm:$0xf]
        %v4880 = vld [vmem:[%s4434 + $0x20] sm:$0xf]
        %v4881 = vld [vmem:[%s4434 + $0x24] sm:$0xf]
        %v4882 = vld [vmem:[%s4434 + $0x28] sm:$0xf]
        %v4883 = vld [vmem:[%s4434 + $0x2c] sm:$0xf]
        %v4884 = vld [vmem:[%s4434 + $0x30] sm:$0xf]
        %v4885 = vld [vmem:[%s4434 + $0x34] sm:$0xf]
        %v4886 = vld [vmem:[%s4434 + $0x38] sm:$0xf]
        %v4887 = vld [vmem:[%s4434 + $0x3c] sm:$0xf]
        %v4904 = vunpack.c.l.b16 %v4872
        %v4905 = vunpack.c.l.b16 %v4873
        %v4906 = vunpack.c.l.b16 %v4874
        %v4907 = vunpack.c.l.b16 %v4875
        %v4908 = vunpack.c.l.b16 %v4876
        %v4909 = vunpack.c.l.b16 %v4877
        %v4910 = vunpack.c.l.b16 %v4878
        %v4911 = vunpack.c.l.b16 %v4879
        %v4912 = vunpack.c.l.b16 %v4880
        %v4913 = vunpack.c.l.b16 %v4881
        %v4914 = vunpack.c.l.b16 %v4882
        %v4915 = vunpack.c.l.b16 %v4883
        %v4916 = vunpack.c.l.b16 %v4884
        %v4917 = vunpack.c.l.b16 %v4885
        %v4918 = vunpack.c.l.b16 %v4886
        %v4919 = vunpack.c.l.b16 %v4887
        %v4920 = vpack.c.b16 %v4905, %v4904
        %v4921 = vpack.c.b16 %v4907, %v4906
        %v4922 = vpack.c.b16 %v4909, %v4908
        %v4923 = vpack.c.b16 %v4911, %v4910
        %v4924 = vpack.c.b16 %v4913, %v4912
        %v4925 = vpack.c.b16 %v4915, %v4914
        %v4926 = vpack.c.b16 %v4917, %v4916
        %v4927 = vpack.c.b16 %v4919, %v4918
        %4936 = vmatprep.subr.bf16.mxu0 0
        %4937 = vmatpush1.bf16.msra.mxu0 %v4927
        %4938 = vmatprep.subr.bf16.mxu0 0
        %4939 = vmatpush1.bf16.msra.mxu0 %v4926
        %4940 = vmatprep.subr.bf16.mxu0 0
        %4941 = vmatpush1.bf16.msra.mxu0 %v4925
        %4942 = vmatprep.subr.bf16.mxu0 0
        %4943 = vmatpush1.bf16.msra.mxu0 %v4924
        %4944 = vmatprep.subr.bf16.mxu0 0
        %4945 = vmatpush1.bf16.msra.mxu0 %v4923
        %4946 = vmatprep.subr.bf16.mxu0 0
        %4947 = vmatpush1.bf16.msra.mxu0 %v4922
        %4948 = vmatprep.subr.bf16.mxu0 0
        %4949 = vmatpush1.bf16.msra.mxu0 %v4921
        %4950 = vmatprep.subr.bf16.mxu0 0
        %4951 = vmatpush1.bf16.msra.mxu0 %v4920
        %4952 = vmatprep.subr.bf16.mxu0 0
        %4953 = vmatpush2.bf16.msra.mxu0 0
        %4954 = vmatprep.subr.bf16.mxu0 0
        %4955 = vmatpush2.bf16.msra.mxu0 0
        %4956 = vmatprep.subr.bf16.mxu0 0
        %4957 = vmatpush2.bf16.msra.mxu0 0
        %4958 = vmatprep.subr.bf16.mxu0 0
        %4959 = vmatpush2.bf16.msra.mxu0 0
        %4960 = vmatprep.subr.bf16.mxu0 0
        %4961 = vmatpush2.bf16.msra.mxu0 0
        %4962 = vmatprep.subr.bf16.mxu0 0
        %4963 = vmatpush2.bf16.msra.mxu0 0
        %4964 = vmatprep.subr.bf16.mxu0 0
        %4965 = vmatpush2.bf16.msra.mxu0 0
        %4966 = vmatprep.subr.bf16.mxu0 0
        %4967 = vmatpush2.bf16.msra.mxu0 0
        %4968 = vmatprep.mubr.bf16.mxu0 0
        %4969 = vmatmul.mubr.bf16.gmra.mxu0 %v4871
        %v4970 = vpop.f32.mrf.mxu0
        %v4971 = vadd.f32 0.0, %v4970
        %v4972 = vpop.f32.mrf.mxu0
        %v4973 = vpop.f32.mrf.mxu0
        %v4974 = vpop.f32.mrf.mxu0
        %4975 = vdwg.mxu0
        %v4976 = vadd.f32 %v4869, %v4971
        %v4977 = vld [vmem:[%s4] sm:$0x1]
        %v4979 = vlaneseq
        %v4980 = vshrl.u32 %v4979, 7
        %v4981 = vsub.s32 0, %v4980
        %v4982 = vrot.slane %v4977, %v4981
        %v4984 = vadd.f32 %v4976, %v4982
        %v4985 = vmax.f32 %v4984, 0.0
        %s4986 = scalar_lea.vmem [#allocation3], 4
        %4987 = vst.msk [vmem:[%s4986] sm:$0xf] %vm4549, %v4985
        %v4988 = vld [vmem:[%s2641] sm:$0xf]
        %v4989 = vpack.c.bf16 %v4988, %v4988
        %v4990 = vld [vmem:[%s3] sm:$0xf]
        %v4991 = vld [vmem:[%s3 + $0x4] sm:$0xf]
        %v4992 = vld [vmem:[%s3 + $0x8] sm:$0xf]
        %v4993 = vld [vmem:[%s3 + $0xc] sm:$0xf]
        %v4994 = vld [vmem:[%s3 + $0x10] sm:$0xf]
        %v4995 = vld [vmem:[%s3 + $0x14] sm:$0xf]
        %v4996 = vld [vmem:[%s3 + $0x18] sm:$0xf]
        %v4997 = vld [vmem:[%s3 + $0x1c] sm:$0xf]
        %v4998 = vld [vmem:[%s3 + $0x20] sm:$0xf]
        %v4999 = vld [vmem:[%s3 + $0x24] sm:$0xf]
        %v5000 = vld [vmem:[%s3 + $0x28] sm:$0xf]
        %v5001 = vld [vmem:[%s3 + $0x2c] sm:$0xf]
        %v5002 = vld [vmem:[%s3 + $0x30] sm:$0xf]
        %v5003 = vld [vmem:[%s3 + $0x34] sm:$0xf]
        %v5004 = vld [vmem:[%s3 + $0x38] sm:$0xf]
        %v5005 = vld [vmem:[%s3 + $0x3c] sm:$0xf]
        %v5006 = vld [vmem:[%s2641 + $0x1] sm:$0xf]
        %v5007 = vpack.c.bf16 %v5006, %v5006
        %v5008 = vld [vmem:[%s4131] sm:$0xf]
        %v5009 = vld [vmem:[%s4131 + $0x4] sm:$0xf]
        %v5010 = vld [vmem:[%s4131 + $0x8] sm:$0xf]
        %v5011 = vld [vmem:[%s4131 + $0xc] sm:$0xf]
        %v5012 = vld [vmem:[%s4131 + $0x10] sm:$0xf]
        %v5013 = vld [vmem:[%s4131 + $0x14] sm:$0xf]
        %v5014 = vld [vmem:[%s4131 + $0x18] sm:$0xf]
        %v5015 = vld [vmem:[%s4131 + $0x1c] sm:$0xf]
        %v5016 = vld [vmem:[%s4131 + $0x20] sm:$0xf]
        %v5017 = vld [vmem:[%s4131 + $0x24] sm:$0xf]
        %v5018 = vld [vmem:[%s4131 + $0x28] sm:$0xf]
        %v5019 = vld [vmem:[%s4131 + $0x2c] sm:$0xf]
        %v5020 = vld [vmem:[%s4131 + $0x30] sm:$0xf]
        %v5021 = vld [vmem:[%s4131 + $0x34] sm:$0xf]
        %v5022 = vld [vmem:[%s4131 + $0x38] sm:$0xf]
        %v5023 = vld [vmem:[%s4131 + $0x3c] sm:$0xf]
        %v5040 = vunpack.c.l.b16 %v5008
        %v5041 = vunpack.c.l.b16 %v5009
        %v5042 = vunpack.c.l.b16 %v5010
        %v5043 = vunpack.c.l.b16 %v5011
        %v5044 = vunpack.c.l.b16 %v5012
        %v5045 = vunpack.c.l.b16 %v5013
        %v5046 = vunpack.c.l.b16 %v5014
        %v5047 = vunpack.c.l.b16 %v5015
        %v5048 = vunpack.c.l.b16 %v5016
        %v5049 = vunpack.c.l.b16 %v5017
        %v5050 = vunpack.c.l.b16 %v5018
        %v5051 = vunpack.c.l.b16 %v5019
        %v5052 = vunpack.c.l.b16 %v5020
        %v5053 = vunpack.c.l.b16 %v5021
        %v5054 = vunpack.c.l.b16 %v5022
        %v5055 = vunpack.c.l.b16 %v5023
        %v5056 = vpack.c.b16 %v5041, %v5040
        %v5057 = vpack.c.b16 %v5043, %v5042
        %v5058 = vpack.c.b16 %v5045, %v5044
        %v5059 = vpack.c.b16 %v5047, %v5046
        %v5060 = vpack.c.b16 %v5049, %v5048
        %v5061 = vpack.c.b16 %v5051, %v5050
        %v5062 = vpack.c.b16 %v5053, %v5052
        %v5063 = vpack.c.b16 %v5055, %v5054
        %5072 = vmatprep.subr.bf16.mxu0 0
        %5073 = vmatpush1.bf16.msra.mxu0 %v5063
        %5074 = vmatprep.subr.bf16.mxu0 0
        %5075 = vmatpush1.bf16.msra.mxu0 %v5062
        %5076 = vmatprep.subr.bf16.mxu0 0
        %5077 = vmatpush1.bf16.msra.mxu0 %v5061
        %5078 = vmatprep.subr.bf16.mxu0 0
        %5079 = vmatpush1.bf16.msra.mxu0 %v5060
        %5080 = vmatprep.subr.bf16.mxu0 0
        %5081 = vmatpush1.bf16.msra.mxu0 %v5059
        %5082 = vmatprep.subr.bf16.mxu0 0
        %5083 = vmatpush1.bf16.msra.mxu0 %v5058
        %5084 = vmatprep.subr.bf16.mxu0 0
        %5085 = vmatpush1.bf16.msra.mxu0 %v5057
        %5086 = vmatprep.subr.bf16.mxu0 0
        %5087 = vmatpush1.bf16.msra.mxu0 %v5056
        %5088 = vmatprep.subr.bf16.mxu0 0
        %5089 = vmatpush2.bf16.msra.mxu0 0
        %5090 = vmatprep.subr.bf16.mxu0 0
        %5091 = vmatpush2.bf16.msra.mxu0 0
        %5092 = vmatprep.subr.bf16.mxu0 0
        %5093 = vmatpush2.bf16.msra.mxu0 0
        %5094 = vmatprep.subr.bf16.mxu0 0
        %5095 = vmatpush2.bf16.msra.mxu0 0
        %5096 = vmatprep.subr.bf16.mxu0 0
        %5097 = vmatpush2.bf16.msra.mxu0 0
        %5098 = vmatprep.subr.bf16.mxu0 0
        %5099 = vmatpush2.bf16.msra.mxu0 0
        %5100 = vmatprep.subr.bf16.mxu0 0
        %5101 = vmatpush2.bf16.msra.mxu0 0
        %5102 = vmatprep.subr.bf16.mxu0 0
        %5103 = vmatpush2.bf16.msra.mxu0 0
        %5104 = vmatprep.mubr.bf16.mxu0 0
        %5105 = vmatmul.mubr.bf16.gmra.mxu0 %v5007
        %v5106 = vpop.f32.mrf.mxu0
        %v5107 = vadd.f32 0.0, %v5106
        %v5108 = vpop.f32.mrf.mxu0
        %v5109 = vpop.f32.mrf.mxu0
        %v5110 = vpop.f32.mrf.mxu0
        %5111 = vdwg.mxu0
        %v5128 = vunpack.c.l.b16 %v4990
        %v5129 = vunpack.c.l.b16 %v4991
        %v5130 = vunpack.c.l.b16 %v4992
        %v5131 = vunpack.c.l.b16 %v4993
        %v5132 = vunpack.c.l.b16 %v4994
        %v5133 = vunpack.c.l.b16 %v4995
        %v5134 = vunpack.c.l.b16 %v4996
        %v5135 = vunpack.c.l.b16 %v4997
        %v5136 = vunpack.c.l.b16 %v4998
        %v5137 = vunpack.c.l.b16 %v4999
        %v5138 = vunpack.c.l.b16 %v5000
        %v5139 = vunpack.c.l.b16 %v5001
        %v5140 = vunpack.c.l.b16 %v5002
        %v5141 = vunpack.c.l.b16 %v5003
        %v5142 = vunpack.c.l.b16 %v5004
        %v5143 = vunpack.c.l.b16 %v5005
        %v5144 = vpack.c.b16 %v5129, %v5128
        %v5145 = vpack.c.b16 %v5131, %v5130
        %v5146 = vpack.c.b16 %v5133, %v5132
        %v5147 = vpack.c.b16 %v5135, %v5134
        %v5148 = vpack.c.b16 %v5137, %v5136
        %v5149 = vpack.c.b16 %v5139, %v5138
        %v5150 = vpack.c.b16 %v5141, %v5140
        %v5151 = vpack.c.b16 %v5143, %v5142
        %5160 = vmatprep.subr.bf16.mxu0 0
        %5161 = vmatpush1.bf16.msra.mxu0 %v5151
        %5162 = vmatprep.subr.bf16.mxu0 0
        %5163 = vmatpush1.bf16.msra.mxu0 %v5150
        %5164 = vmatprep.subr.bf16.mxu0 0
        %5165 = vmatpush1.bf16.msra.mxu0 %v5149
        %5166 = vmatprep.subr.bf16.mxu0 0
        %5167 = vmatpush1.bf16.msra.mxu0 %v5148
        %5168 = vmatprep.subr.bf16.mxu0 0
        %5169 = vmatpush1.bf16.msra.mxu0 %v5147
        %5170 = vmatprep.subr.bf16.mxu0 0
        %5171 = vmatpush1.bf16.msra.mxu0 %v5146
        %5172 = vmatprep.subr.bf16.mxu0 0
        %5173 = vmatpush1.bf16.msra.mxu0 %v5145
        %5174 = vmatprep.subr.bf16.mxu0 0
        %5175 = vmatpush1.bf16.msra.mxu0 %v5144
        %5176 = vmatprep.subr.bf16.mxu0 0
        %5177 = vmatpush2.bf16.msra.mxu0 0
        %5178 = vmatprep.subr.bf16.mxu0 0
        %5179 = vmatpush2.bf16.msra.mxu0 0
        %5180 = vmatprep.subr.bf16.mxu0 0
        %5181 = vmatpush2.bf16.msra.mxu0 0
        %5182 = vmatprep.subr.bf16.mxu0 0
        %5183 = vmatpush2.bf16.msra.mxu0 0
        %5184 = vmatprep.subr.bf16.mxu0 0
        %5185 = vmatpush2.bf16.msra.mxu0 0
        %5186 = vmatprep.subr.bf16.mxu0 0
        %5187 = vmatpush2.bf16.msra.mxu0 0
        %5188 = vmatprep.subr.bf16.mxu0 0
        %5189 = vmatpush2.bf16.msra.mxu0 0
        %5190 = vmatprep.subr.bf16.mxu0 0
        %5191 = vmatpush2.bf16.msra.mxu0 0
        %5192 = vmatprep.mubr.bf16.mxu0 0
        %5193 = vmatmul.mubr.bf16.gmra.mxu0 %v4989
        %v5194 = vpop.f32.mrf.mxu0
        %v5195 = vadd.f32 %v5107, %v5194
        %v5196 = vpop.f32.mrf.mxu0
        %v5197 = vpop.f32.mrf.mxu0
        %v5198 = vpop.f32.mrf.mxu0
        %5199 = vdwg.mxu0
        %v5200 = vld [vmem:[%s3375] sm:$0xf]
        %v5201 = vpack.c.bf16 %v5200, %v5200
        %v5202 = vld [vmem:[%s4326] sm:$0xf]
        %v5203 = vld [vmem:[%s4326 + $0x4] sm:$0xf]
        %v5204 = vld [vmem:[%s4326 + $0x8] sm:$0xf]
        %v5205 = vld [vmem:[%s4326 + $0xc] sm:$0xf]
        %v5206 = vld [vmem:[%s4326 + $0x10] sm:$0xf]
        %v5207 = vld [vmem:[%s4326 + $0x14] sm:$0xf]
        %v5208 = vld [vmem:[%s4326 + $0x18] sm:$0xf]
        %v5209 = vld [vmem:[%s4326 + $0x1c] sm:$0xf]
        %v5210 = vld [vmem:[%s4326 + $0x20] sm:$0xf]
        %v5211 = vld [vmem:[%s4326 + $0x24] sm:$0xf]
        %v5212 = vld [vmem:[%s4326 + $0x28] sm:$0xf]
        %v5213 = vld [vmem:[%s4326 + $0x2c] sm:$0xf]
        %v5214 = vld [vmem:[%s4326 + $0x30] sm:$0xf]
        %v5215 = vld [vmem:[%s4326 + $0x34] sm:$0xf]
        %v5216 = vld [vmem:[%s4326 + $0x38] sm:$0xf]
        %v5217 = vld [vmem:[%s4326 + $0x3c] sm:$0xf]
        %v5234 = vunpack.c.l.b16 %v5202
        %v5235 = vunpack.c.l.b16 %v5203
        %v5236 = vunpack.c.l.b16 %v5204
        %v5237 = vunpack.c.l.b16 %v5205
        %v5238 = vunpack.c.l.b16 %v5206
        %v5239 = vunpack.c.l.b16 %v5207
        %v5240 = vunpack.c.l.b16 %v5208
        %v5241 = vunpack.c.l.b16 %v5209
        %v5242 = vunpack.c.l.b16 %v5210
        %v5243 = vunpack.c.l.b16 %v5211
        %v5244 = vunpack.c.l.b16 %v5212
        %v5245 = vunpack.c.l.b16 %v5213
        %v5246 = vunpack.c.l.b16 %v5214
        %v5247 = vunpack.c.l.b16 %v5215
        %v5248 = vunpack.c.l.b16 %v5216
        %v5249 = vunpack.c.l.b16 %v5217
        %v5250 = vpack.c.b16 %v5235, %v5234
        %v5251 = vpack.c.b16 %v5237, %v5236
        %v5252 = vpack.c.b16 %v5239, %v5238
        %v5253 = vpack.c.b16 %v5241, %v5240
        %v5254 = vpack.c.b16 %v5243, %v5242
        %v5255 = vpack.c.b16 %v5245, %v5244
        %v5256 = vpack.c.b16 %v5247, %v5246
        %v5257 = vpack.c.b16 %v5249, %v5248
        %5266 = vmatprep.subr.bf16.mxu0 0
        %5267 = vmatpush1.bf16.msra.mxu0 %v5257
        %5268 = vmatprep.subr.bf16.mxu0 0
        %5269 = vmatpush1.bf16.msra.mxu0 %v5256
        %5270 = vmatprep.subr.bf16.mxu0 0
        %5271 = vmatpush1.bf16.msra.mxu0 %v5255
        %5272 = vmatprep.subr.bf16.mxu0 0
        %5273 = vmatpush1.bf16.msra.mxu0 %v5254
        %5274 = vmatprep.subr.bf16.mxu0 0
        %5275 = vmatpush1.bf16.msra.mxu0 %v5253
        %5276 = vmatprep.subr.bf16.mxu0 0
        %5277 = vmatpush1.bf16.msra.mxu0 %v5252
        %5278 = vmatprep.subr.bf16.mxu0 0
        %5279 = vmatpush1.bf16.msra.mxu0 %v5251
        %5280 = vmatprep.subr.bf16.mxu0 0
        %5281 = vmatpush1.bf16.msra.mxu0 %v5250
        %5282 = vmatprep.subr.bf16.mxu0 0
        %5283 = vmatpush2.bf16.msra.mxu0 0
        %5284 = vmatprep.subr.bf16.mxu0 0
        %5285 = vmatpush2.bf16.msra.mxu0 0
        %5286 = vmatprep.subr.bf16.mxu0 0
        %5287 = vmatpush2.bf16.msra.mxu0 0
        %5288 = vmatprep.subr.bf16.mxu0 0
        %5289 = vmatpush2.bf16.msra.mxu0 0
        %5290 = vmatprep.subr.bf16.mxu0 0
        %5291 = vmatpush2.bf16.msra.mxu0 0
        %5292 = vmatprep.subr.bf16.mxu0 0
        %5293 = vmatpush2.bf16.msra.mxu0 0
        %5294 = vmatprep.subr.bf16.mxu0 0
        %5295 = vmatpush2.bf16.msra.mxu0 0
        %5296 = vmatprep.subr.bf16.mxu0 0
        %5297 = vmatpush2.bf16.msra.mxu0 0
        %5298 = vmatprep.mubr.bf16.mxu0 0
        %5299 = vmatmul.mubr.bf16.gmra.mxu0 %v5201
        %v5300 = vpop.f32.mrf.mxu0
        %v5301 = vadd.f32 0.0, %v5300
        %v5302 = vpop.f32.mrf.mxu0
        %v5303 = vpop.f32.mrf.mxu0
        %v5304 = vpop.f32.mrf.mxu0
        %5305 = vdwg.mxu0
        %v5306 = vadd.f32 %v5195, %v5301
        %v5307 = vld [vmem:[%s3375 + $0x1] sm:$0xf]
        %v5308 = vpack.c.bf16 %v5307, %v5307
        %v5309 = vld [vmem:[%s4434] sm:$0xf]
        %v5310 = vld [vmem:[%s4434 + $0x4] sm:$0xf]
        %v5311 = vld [vmem:[%s4434 + $0x8] sm:$0xf]
        %v5312 = vld [vmem:[%s4434 + $0xc] sm:$0xf]
        %v5313 = vld [vmem:[%s4434 + $0x10] sm:$0xf]
        %v5314 = vld [vmem:[%s4434 + $0x14] sm:$0xf]
        %v5315 = vld [vmem:[%s4434 + $0x18] sm:$0xf]
        %v5316 = vld [vmem:[%s4434 + $0x1c] sm:$0xf]
        %v5317 = vld [vmem:[%s4434 + $0x20] sm:$0xf]
        %v5318 = vld [vmem:[%s4434 + $0x24] sm:$0xf]
        %v5319 = vld [vmem:[%s4434 + $0x28] sm:$0xf]
        %v5320 = vld [vmem:[%s4434 + $0x2c] sm:$0xf]
        %v5321 = vld [vmem:[%s4434 + $0x30] sm:$0xf]
        %v5322 = vld [vmem:[%s4434 + $0x34] sm:$0xf]
        %v5323 = vld [vmem:[%s4434 + $0x38] sm:$0xf]
        %v5324 = vld [vmem:[%s4434 + $0x3c] sm:$0xf]
        %v5341 = vunpack.c.l.b16 %v5309
        %v5342 = vunpack.c.l.b16 %v5310
        %v5343 = vunpack.c.l.b16 %v5311
        %v5344 = vunpack.c.l.b16 %v5312
        %v5345 = vunpack.c.l.b16 %v5313
        %v5346 = vunpack.c.l.b16 %v5314
        %v5347 = vunpack.c.l.b16 %v5315
        %v5348 = vunpack.c.l.b16 %v5316
        %v5349 = vunpack.c.l.b16 %v5317
        %v5350 = vunpack.c.l.b16 %v5318
        %v5351 = vunpack.c.l.b16 %v5319
        %v5352 = vunpack.c.l.b16 %v5320
        %v5353 = vunpack.c.l.b16 %v5321
        %v5354 = vunpack.c.l.b16 %v5322
        %v5355 = vunpack.c.l.b16 %v5323
        %v5356 = vunpack.c.l.b16 %v5324
        %v5357 = vpack.c.b16 %v5342, %v5341
        %v5358 = vpack.c.b16 %v5344, %v5343
        %v5359 = vpack.c.b16 %v5346, %v5345
        %v5360 = vpack.c.b16 %v5348, %v5347
        %v5361 = vpack.c.b16 %v5350, %v5349
        %v5362 = vpack.c.b16 %v5352, %v5351
        %v5363 = vpack.c.b16 %v5354, %v5353
        %v5364 = vpack.c.b16 %v5356, %v5355
        %5373 = vmatprep.subr.bf16.mxu0 0
        %5374 = vmatpush1.bf16.msra.mxu0 %v5364
        %5375 = vmatprep.subr.bf16.mxu0 0
        %5376 = vmatpush1.bf16.msra.mxu0 %v5363
        %5377 = vmatprep.subr.bf16.mxu0 0
        %5378 = vmatpush1.bf16.msra.mxu0 %v5362
        %5379 = vmatprep.subr.bf16.mxu0 0
        %5380 = vmatpush1.bf16.msra.mxu0 %v5361
        %5381 = vmatprep.subr.bf16.mxu0 0
        %5382 = vmatpush1.bf16.msra.mxu0 %v5360
        %5383 = vmatprep.subr.bf16.mxu0 0
        %5384 = vmatpush1.bf16.msra.mxu0 %v5359
        %5385 = vmatprep.subr.bf16.mxu0 0
        %5386 = vmatpush1.bf16.msra.mxu0 %v5358
        %5387 = vmatprep.subr.bf16.mxu0 0
        %5388 = vmatpush1.bf16.msra.mxu0 %v5357
        %5389 = vmatprep.subr.bf16.mxu0 0
        %5390 = vmatpush2.bf16.msra.mxu0 0
        %5391 = vmatprep.subr.bf16.mxu0 0
        %5392 = vmatpush2.bf16.msra.mxu0 0
        %5393 = vmatprep.subr.bf16.mxu0 0
        %5394 = vmatpush2.bf16.msra.mxu0 0
        %5395 = vmatprep.subr.bf16.mxu0 0
        %5396 = vmatpush2.bf16.msra.mxu0 0
        %5397 = vmatprep.subr.bf16.mxu0 0
        %5398 = vmatpush2.bf16.msra.mxu0 0
        %5399 = vmatprep.subr.bf16.mxu0 0
        %5400 = vmatpush2.bf16.msra.mxu0 0
        %5401 = vmatprep.subr.bf16.mxu0 0
        %5402 = vmatpush2.bf16.msra.mxu0 0
        %5403 = vmatprep.subr.bf16.mxu0 0
        %5404 = vmatpush2.bf16.msra.mxu0 0
        %5405 = vmatprep.mubr.bf16.mxu0 0
        %5406 = vmatmul.mubr.bf16.gmra.mxu0 %v5308
        %v5407 = vpop.f32.mrf.mxu0
        %v5408 = vadd.f32 0.0, %v5407
        %v5409 = vpop.f32.mrf.mxu0
        %v5410 = vpop.f32.mrf.mxu0
        %v5411 = vpop.f32.mrf.mxu0
        %5412 = vdwg.mxu0
        %v5413 = vadd.f32 %v5306, %v5408
        %v5414 = vld [vmem:[%s4] sm:$0x1]
        %v5416 = vlaneseq
        %v5417 = vshrl.u32 %v5416, 7
        %v5418 = vsub.s32 0, %v5417
        %v5419 = vrot.slane %v5414, %v5418
        %v5421 = vadd.f32 %v5413, %v5419
        %v5422 = vmax.f32 %v5421, 0.0
        %s5423 = scalar_lea.vmem [#allocation3], 8
        %5424 = vst.msk [vmem:[%s5423] sm:$0xf] %vm4549, %v5422
        %v5425 = vld [vmem:[%s3375] sm:$0xf]
        %v5426 = vpack.c.bf16 %v5425, %v5425
        %v5427 = vld [vmem:[%s3] sm:$0xf]
        %v5428 = vld [vmem:[%s3 + $0x4] sm:$0xf]
        %v5429 = vld [vmem:[%s3 + $0x8] sm:$0xf]
        %v5430 = vld [vmem:[%s3 + $0xc] sm:$0xf]
        %v5431 = vld [vmem:[%s3 + $0x10] sm:$0xf]
        %v5432 = vld [vmem:[%s3 + $0x14] sm:$0xf]
        %v5433 = vld [vmem:[%s3 + $0x18] sm:$0xf]
        %v5434 = vld [vmem:[%s3 + $0x1c] sm:$0xf]
        %v5435 = vld [vmem:[%s3 + $0x20] sm:$0xf]
        %v5436 = vld [vmem:[%s3 + $0x24] sm:$0xf]
        %v5437 = vld [vmem:[%s3 + $0x28] sm:$0xf]
        %v5438 = vld [vmem:[%s3 + $0x2c] sm:$0xf]
        %v5439 = vld [vmem:[%s3 + $0x30] sm:$0xf]
        %v5440 = vld [vmem:[%s3 + $0x34] sm:$0xf]
        %v5441 = vld [vmem:[%s3 + $0x38] sm:$0xf]
        %v5442 = vld [vmem:[%s3 + $0x3c] sm:$0xf]
        %v5443 = vld [vmem:[%s3375 + $0x1] sm:$0xf]
        %v5444 = vpack.c.bf16 %v5443, %v5443
        %v5445 = vld [vmem:[%s4131] sm:$0xf]
        %v5446 = vld [vmem:[%s4131 + $0x4] sm:$0xf]
        %v5447 = vld [vmem:[%s4131 + $0x8] sm:$0xf]
        %v5448 = vld [vmem:[%s4131 + $0xc] sm:$0xf]
        %v5449 = vld [vmem:[%s4131 + $0x10] sm:$0xf]
        %v5450 = vld [vmem:[%s4131 + $0x14] sm:$0xf]
        %v5451 = vld [vmem:[%s4131 + $0x18] sm:$0xf]
        %v5452 = vld [vmem:[%s4131 + $0x1c] sm:$0xf]
        %v5453 = vld [vmem:[%s4131 + $0x20] sm:$0xf]
        %v5454 = vld [vmem:[%s4131 + $0x24] sm:$0xf]
        %v5455 = vld [vmem:[%s4131 + $0x28] sm:$0xf]
        %v5456 = vld [vmem:[%s4131 + $0x2c] sm:$0xf]
        %v5457 = vld [vmem:[%s4131 + $0x30] sm:$0xf]
        %v5458 = vld [vmem:[%s4131 + $0x34] sm:$0xf]
        %v5459 = vld [vmem:[%s4131 + $0x38] sm:$0xf]
        %v5460 = vld [vmem:[%s4131 + $0x3c] sm:$0xf]
        %v5477 = vunpack.c.l.b16 %v5445
        %v5478 = vunpack.c.l.b16 %v5446
        %v5479 = vunpack.c.l.b16 %v5447
        %v5480 = vunpack.c.l.b16 %v5448
        %v5481 = vunpack.c.l.b16 %v5449
        %v5482 = vunpack.c.l.b16 %v5450
        %v5483 = vunpack.c.l.b16 %v5451
        %v5484 = vunpack.c.l.b16 %v5452
        %v5485 = vunpack.c.l.b16 %v5453
        %v5486 = vunpack.c.l.b16 %v5454
        %v5487 = vunpack.c.l.b16 %v5455
        %v5488 = vunpack.c.l.b16 %v5456
        %v5489 = vunpack.c.l.b16 %v5457
        %v5490 = vunpack.c.l.b16 %v5458
        %v5491 = vunpack.c.l.b16 %v5459
        %v5492 = vunpack.c.l.b16 %v5460
        %v5493 = vpack.c.b16 %v5478, %v5477
        %v5494 = vpack.c.b16 %v5480, %v5479
        %v5495 = vpack.c.b16 %v5482, %v5481
        %v5496 = vpack.c.b16 %v5484, %v5483
        %v5497 = vpack.c.b16 %v5486, %v5485
        %v5498 = vpack.c.b16 %v5488, %v5487
        %v5499 = vpack.c.b16 %v5490, %v5489
        %v5500 = vpack.c.b16 %v5492, %v5491
        %5509 = vmatprep.subr.bf16.mxu0 0
        %5510 = vmatpush1.bf16.msra.mxu0 %v5500
        %5511 = vmatprep.subr.bf16.mxu0 0
        %5512 = vmatpush1.bf16.msra.mxu0 %v5499
        %5513 = vmatprep.subr.bf16.mxu0 0
        %5514 = vmatpush1.bf16.msra.mxu0 %v5498
        %5515 = vmatprep.subr.bf16.mxu0 0
        %5516 = vmatpush1.bf16.msra.mxu0 %v5497
        %5517 = vmatprep.subr.bf16.mxu0 0
        %5518 = vmatpush1.bf16.msra.mxu0 %v5496
        %5519 = vmatprep.subr.bf16.mxu0 0
        %5520 = vmatpush1.bf16.msra.mxu0 %v5495
        %5521 = vmatprep.subr.bf16.mxu0 0
        %5522 = vmatpush1.bf16.msra.mxu0 %v5494
        %5523 = vmatprep.subr.bf16.mxu0 0
        %5524 = vmatpush1.bf16.msra.mxu0 %v5493
        %5525 = vmatprep.subr.bf16.mxu0 0
        %5526 = vmatpush2.bf16.msra.mxu0 0
        %5527 = vmatprep.subr.bf16.mxu0 0
        %5528 = vmatpush2.bf16.msra.mxu0 0
        %5529 = vmatprep.subr.bf16.mxu0 0
        %5530 = vmatpush2.bf16.msra.mxu0 0
        %5531 = vmatprep.subr.bf16.mxu0 0
        %5532 = vmatpush2.bf16.msra.mxu0 0
        %5533 = vmatprep.subr.bf16.mxu0 0
        %5534 = vmatpush2.bf16.msra.mxu0 0
        %5535 = vmatprep.subr.bf16.mxu0 0
        %5536 = vmatpush2.bf16.msra.mxu0 0
        %5537 = vmatprep.subr.bf16.mxu0 0
        %5538 = vmatpush2.bf16.msra.mxu0 0
        %5539 = vmatprep.subr.bf16.mxu0 0
        %5540 = vmatpush2.bf16.msra.mxu0 0
        %5541 = vmatprep.mubr.bf16.mxu0 0
        %5542 = vmatmul.mubr.bf16.gmra.mxu0 %v5444
        %v5543 = vpop.f32.mrf.mxu0
        %v5544 = vadd.f32 0.0, %v5543
        %v5545 = vpop.f32.mrf.mxu0
        %v5546 = vpop.f32.mrf.mxu0
        %v5547 = vpop.f32.mrf.mxu0
        %5548 = vdwg.mxu0
        %v5565 = vunpack.c.l.b16 %v5427
        %v5566 = vunpack.c.l.b16 %v5428
        %v5567 = vunpack.c.l.b16 %v5429
        %v5568 = vunpack.c.l.b16 %v5430
        %v5569 = vunpack.c.l.b16 %v5431
        %v5570 = vunpack.c.l.b16 %v5432
        %v5571 = vunpack.c.l.b16 %v5433
        %v5572 = vunpack.c.l.b16 %v5434
        %v5573 = vunpack.c.l.b16 %v5435
        %v5574 = vunpack.c.l.b16 %v5436
        %v5575 = vunpack.c.l.b16 %v5437
        %v5576 = vunpack.c.l.b16 %v5438
        %v5577 = vunpack.c.l.b16 %v5439
        %v5578 = vunpack.c.l.b16 %v5440
        %v5579 = vunpack.c.l.b16 %v5441
        %v5580 = vunpack.c.l.b16 %v5442
        %v5581 = vpack.c.b16 %v5566, %v5565
        %v5582 = vpack.c.b16 %v5568, %v5567
        %v5583 = vpack.c.b16 %v5570, %v5569
        %v5584 = vpack.c.b16 %v5572, %v5571
        %v5585 = vpack.c.b16 %v5574, %v5573
        %v5586 = vpack.c.b16 %v5576, %v5575
        %v5587 = vpack.c.b16 %v5578, %v5577
        %v5588 = vpack.c.b16 %v5580, %v5579
        %5597 = vmatprep.subr.bf16.mxu0 0
        %5598 = vmatpush1.bf16.msra.mxu0 %v5588
        %5599 = vmatprep.subr.bf16.mxu0 0
        %5600 = vmatpush1.bf16.msra.mxu0 %v5587
        %5601 = vmatprep.subr.bf16.mxu0 0
        %5602 = vmatpush1.bf16.msra.mxu0 %v5586
        %5603 = vmatprep.subr.bf16.mxu0 0
        %5604 = vmatpush1.bf16.msra.mxu0 %v5585
        %5605 = vmatprep.subr.bf16.mxu0 0
        %5606 = vmatpush1.bf16.msra.mxu0 %v5584
        %5607 = vmatprep.subr.bf16.mxu0 0
        %5608 = vmatpush1.bf16.msra.mxu0 %v5583
        %5609 = vmatprep.subr.bf16.mxu0 0
        %5610 = vmatpush1.bf16.msra.mxu0 %v5582
        %5611 = vmatprep.subr.bf16.mxu0 0
        %5612 = vmatpush1.bf16.msra.mxu0 %v5581
        %5613 = vmatprep.subr.bf16.mxu0 0
        %5614 = vmatpush2.bf16.msra.mxu0 0
        %5615 = vmatprep.subr.bf16.mxu0 0
        %5616 = vmatpush2.bf16.msra.mxu0 0
        %5617 = vmatprep.subr.bf16.mxu0 0
        %5618 = vmatpush2.bf16.msra.mxu0 0
        %5619 = vmatprep.subr.bf16.mxu0 0
        %5620 = vmatpush2.bf16.msra.mxu0 0
        %5621 = vmatprep.subr.bf16.mxu0 0
        %5622 = vmatpush2.bf16.msra.mxu0 0
        %5623 = vmatprep.subr.bf16.mxu0 0
        %5624 = vmatpush2.bf16.msra.mxu0 0
        %5625 = vmatprep.subr.bf16.mxu0 0
        %5626 = vmatpush2.bf16.msra.mxu0 0
        %5627 = vmatprep.subr.bf16.mxu0 0
        %5628 = vmatpush2.bf16.msra.mxu0 0
        %5629 = vmatprep.mubr.bf16.mxu0 0
        %5630 = vmatmul.mubr.bf16.gmra.mxu0 %v5426
        %v5631 = vpop.f32.mrf.mxu0
        %v5632 = vadd.f32 %v5544, %v5631
        %v5633 = vpop.f32.mrf.mxu0
        %v5634 = vpop.f32.mrf.mxu0
        %v5635 = vpop.f32.mrf.mxu0
        %5636 = vdwg.mxu0
        %v5637 = vld [vmem:[%s4109] sm:$0xf]
        %v5638 = vpack.c.bf16 %v5637, %v5637
        %v5639 = vld [vmem:[%s4326] sm:$0xf]
        %v5640 = vld [vmem:[%s4326 + $0x4] sm:$0xf]
        %v5641 = vld [vmem:[%s4326 + $0x8] sm:$0xf]
        %v5642 = vld [vmem:[%s4326 + $0xc] sm:$0xf]
        %v5643 = vld [vmem:[%s4326 + $0x10] sm:$0xf]
        %v5644 = vld [vmem:[%s4326 + $0x14] sm:$0xf]
        %v5645 = vld [vmem:[%s4326 + $0x18] sm:$0xf]
        %v5646 = vld [vmem:[%s4326 + $0x1c] sm:$0xf]
        %v5647 = vld [vmem:[%s4326 + $0x20] sm:$0xf]
        %v5648 = vld [vmem:[%s4326 + $0x24] sm:$0xf]
        %v5649 = vld [vmem:[%s4326 + $0x28] sm:$0xf]
        %v5650 = vld [vmem:[%s4326 + $0x2c] sm:$0xf]
        %v5651 = vld [vmem:[%s4326 + $0x30] sm:$0xf]
        %v5652 = vld [vmem:[%s4326 + $0x34] sm:$0xf]
        %v5653 = vld [vmem:[%s4326 + $0x38] sm:$0xf]
        %v5654 = vld [vmem:[%s4326 + $0x3c] sm:$0xf]
        %v5671 = vunpack.c.l.b16 %v5639
        %v5672 = vunpack.c.l.b16 %v5640
        %v5673 = vunpack.c.l.b16 %v5641
        %v5674 = vunpack.c.l.b16 %v5642
        %v5675 = vunpack.c.l.b16 %v5643
        %v5676 = vunpack.c.l.b16 %v5644
        %v5677 = vunpack.c.l.b16 %v5645
        %v5678 = vunpack.c.l.b16 %v5646
        %v5679 = vunpack.c.l.b16 %v5647
        %v5680 = vunpack.c.l.b16 %v5648
        %v5681 = vunpack.c.l.b16 %v5649
        %v5682 = vunpack.c.l.b16 %v5650
        %v5683 = vunpack.c.l.b16 %v5651
        %v5684 = vunpack.c.l.b16 %v5652
        %v5685 = vunpack.c.l.b16 %v5653
        %v5686 = vunpack.c.l.b16 %v5654
        %v5687 = vpack.c.b16 %v5672, %v5671
        %v5688 = vpack.c.b16 %v5674, %v5673
        %v5689 = vpack.c.b16 %v5676, %v5675
        %v5690 = vpack.c.b16 %v5678, %v5677
        %v5691 = vpack.c.b16 %v5680, %v5679
        %v5692 = vpack.c.b16 %v5682, %v5681
        %v5693 = vpack.c.b16 %v5684, %v5683
        %v5694 = vpack.c.b16 %v5686, %v5685
        %5703 = vmatprep.subr.bf16.mxu0 0
        %5704 = vmatpush1.bf16.msra.mxu0 %v5694
        %5705 = vmatprep.subr.bf16.mxu0 0
        %5706 = vmatpush1.bf16.msra.mxu0 %v5693
        %5707 = vmatprep.subr.bf16.mxu0 0
        %5708 = vmatpush1.bf16.msra.mxu0 %v5692
        %5709 = vmatprep.subr.bf16.mxu0 0
        %5710 = vmatpush1.bf16.msra.mxu0 %v5691
        %5711 = vmatprep.subr.bf16.mxu0 0
        %5712 = vmatpush1.bf16.msra.mxu0 %v5690
        %5713 = vmatprep.subr.bf16.mxu0 0
        %5714 = vmatpush1.bf16.msra.mxu0 %v5689
        %5715 = vmatprep.subr.bf16.mxu0 0
        %5716 = vmatpush1.bf16.msra.mxu0 %v5688
        %5717 = vmatprep.subr.bf16.mxu0 0
        %5718 = vmatpush1.bf16.msra.mxu0 %v5687
        %5719 = vmatprep.subr.bf16.mxu0 0
        %5720 = vmatpush2.bf16.msra.mxu0 0
        %5721 = vmatprep.subr.bf16.mxu0 0
        %5722 = vmatpush2.bf16.msra.mxu0 0
        %5723 = vmatprep.subr.bf16.mxu0 0
        %5724 = vmatpush2.bf16.msra.mxu0 0
        %5725 = vmatprep.subr.bf16.mxu0 0
        %5726 = vmatpush2.bf16.msra.mxu0 0
        %5727 = vmatprep.subr.bf16.mxu0 0
        %5728 = vmatpush2.bf16.msra.mxu0 0
        %5729 = vmatprep.subr.bf16.mxu0 0
        %5730 = vmatpush2.bf16.msra.mxu0 0
        %5731 = vmatprep.subr.bf16.mxu0 0
        %5732 = vmatpush2.bf16.msra.mxu0 0
        %5733 = vmatprep.subr.bf16.mxu0 0
        %5734 = vmatpush2.bf16.msra.mxu0 0
        %5735 = vmatprep.mubr.bf16.mxu0 0
        %5736 = vmatmul.mubr.bf16.gmra.mxu0 %v5638
        %v5737 = vpop.f32.mrf.mxu0
        %v5738 = vadd.f32 0.0, %v5737
        %v5739 = vpop.f32.mrf.mxu0
        %v5740 = vpop.f32.mrf.mxu0
        %v5741 = vpop.f32.mrf.mxu0
        %5742 = vdwg.mxu0
        %v5743 = vadd.f32 %v5632, %v5738
        %v5744 = vld [vmem:[%s4109 + $0x1] sm:$0xf]
        %v5745 = vpack.c.bf16 %v5744, %v5744
        %v5746 = vld [vmem:[%s4434] sm:$0xf]
        %v5747 = vld [vmem:[%s4434 + $0x4] sm:$0xf]
        %v5748 = vld [vmem:[%s4434 + $0x8] sm:$0xf]
        %v5749 = vld [vmem:[%s4434 + $0xc] sm:$0xf]
        %v5750 = vld [vmem:[%s4434 + $0x10] sm:$0xf]
        %v5751 = vld [vmem:[%s4434 + $0x14] sm:$0xf]
        %v5752 = vld [vmem:[%s4434 + $0x18] sm:$0xf]
        %v5753 = vld [vmem:[%s4434 + $0x1c] sm:$0xf]
        %v5754 = vld [vmem:[%s4434 + $0x20] sm:$0xf]
        %v5755 = vld [vmem:[%s4434 + $0x24] sm:$0xf]
        %v5756 = vld [vmem:[%s4434 + $0x28] sm:$0xf]
        %v5757 = vld [vmem:[%s4434 + $0x2c] sm:$0xf]
        %v5758 = vld [vmem:[%s4434 + $0x30] sm:$0xf]
        %v5759 = vld [vmem:[%s4434 + $0x34] sm:$0xf]
        %v5760 = vld [vmem:[%s4434 + $0x38] sm:$0xf]
        %v5761 = vld [vmem:[%s4434 + $0x3c] sm:$0xf]
        %v5778 = vunpack.c.l.b16 %v5746
        %v5779 = vunpack.c.l.b16 %v5747
        %v5780 = vunpack.c.l.b16 %v5748
        %v5781 = vunpack.c.l.b16 %v5749
        %v5782 = vunpack.c.l.b16 %v5750
        %v5783 = vunpack.c.l.b16 %v5751
        %v5784 = vunpack.c.l.b16 %v5752
        %v5785 = vunpack.c.l.b16 %v5753
        %v5786 = vunpack.c.l.b16 %v5754
        %v5787 = vunpack.c.l.b16 %v5755
        %v5788 = vunpack.c.l.b16 %v5756
        %v5789 = vunpack.c.l.b16 %v5757
        %v5790 = vunpack.c.l.b16 %v5758
        %v5791 = vunpack.c.l.b16 %v5759
        %v5792 = vunpack.c.l.b16 %v5760
        %v5793 = vunpack.c.l.b16 %v5761
        %v5794 = vpack.c.b16 %v5779, %v5778
        %v5795 = vpack.c.b16 %v5781, %v5780
        %v5796 = vpack.c.b16 %v5783, %v5782
        %v5797 = vpack.c.b16 %v5785, %v5784
        %v5798 = vpack.c.b16 %v5787, %v5786
        %v5799 = vpack.c.b16 %v5789, %v5788
        %v5800 = vpack.c.b16 %v5791, %v5790
        %v5801 = vpack.c.b16 %v5793, %v5792
        %5810 = vmatprep.subr.bf16.mxu0 0
        %5811 = vmatpush1.bf16.msra.mxu0 %v5801
        %5812 = vmatprep.subr.bf16.mxu0 0
        %5813 = vmatpush1.bf16.msra.mxu0 %v5800
        %5814 = vmatprep.subr.bf16.mxu0 0
        %5815 = vmatpush1.bf16.msra.mxu0 %v5799
        %5816 = vmatprep.subr.bf16.mxu0 0
        %5817 = vmatpush1.bf16.msra.mxu0 %v5798
        %5818 = vmatprep.subr.bf16.mxu0 0
        %5819 = vmatpush1.bf16.msra.mxu0 %v5797
        %5820 = vmatprep.subr.bf16.mxu0 0
        %5821 = vmatpush1.bf16.msra.mxu0 %v5796
        %5822 = vmatprep.subr.bf16.mxu0 0
        %5823 = vmatpush1.bf16.msra.mxu0 %v5795
        %5824 = vmatprep.subr.bf16.mxu0 0
        %5825 = vmatpush1.bf16.msra.mxu0 %v5794
        %5826 = vmatprep.subr.bf16.mxu0 0
        %5827 = vmatpush2.bf16.msra.mxu0 0
        %5828 = vmatprep.subr.bf16.mxu0 0
        %5829 = vmatpush2.bf16.msra.mxu0 0
        %5830 = vmatprep.subr.bf16.mxu0 0
        %5831 = vmatpush2.bf16.msra.mxu0 0
        %5832 = vmatprep.subr.bf16.mxu0 0
        %5833 = vmatpush2.bf16.msra.mxu0 0
        %5834 = vmatprep.subr.bf16.mxu0 0
        %5835 = vmatpush2.bf16.msra.mxu0 0
        %5836 = vmatprep.subr.bf16.mxu0 0
        %5837 = vmatpush2.bf16.msra.mxu0 0
        %5838 = vmatprep.subr.bf16.mxu0 0
        %5839 = vmatpush2.bf16.msra.mxu0 0
        %5840 = vmatprep.subr.bf16.mxu0 0
        %5841 = vmatpush2.bf16.msra.mxu0 0
        %5842 = vmatprep.mubr.bf16.mxu0 0
        %5843 = vmatmul.mubr.bf16.gmra.mxu0 %v5745
        %v5844 = vpop.f32.mrf.mxu0
        %v5845 = vadd.f32 0.0, %v5844
        %v5846 = vpop.f32.mrf.mxu0
        %v5847 = vpop.f32.mrf.mxu0
        %v5848 = vpop.f32.mrf.mxu0
        %5849 = vdwg.mxu0
        %v5850 = vadd.f32 %v5743, %v5845
        %v5851 = vld [vmem:[%s4] sm:$0x1]
        %v5853 = vlaneseq
        %v5854 = vshrl.u32 %v5853, 7
        %v5855 = vsub.s32 0, %v5854
        %v5856 = vrot.slane %v5851, %v5855
        %v5858 = vadd.f32 %v5850, %v5856
        %v5859 = vmax.f32 %v5858, 0.0
        %s5860 = scalar_lea.vmem [#allocation3], 12
        %5861 = vst.msk [vmem:[%s5860] sm:$0xf] %vm4549, %v5859
        %v5862 = vld [vmem:[#allocation3] sm:$0x3]
        %v5863 = vpack.c.bf16 %v5862, %v5862
        %v5864 = vld [vmem:[%s5] sm:$0xf]
        %v5865 = vld [vmem:[%s5 + $0x4] sm:$0xf]
        %v5866 = vld [vmem:[%s5 + $0x8] sm:$0xf]
        %v5867 = vld [vmem:[%s5 + $0xc] sm:$0xf]
        %v5868 = vld [vmem:[%s5 + $0x10] sm:$0xf]
        %v5869 = vld [vmem:[%s5 + $0x14] sm:$0xf]
        %v5870 = vld [vmem:[%s5 + $0x18] sm:$0xf]
        %v5871 = vld [vmem:[%s5 + $0x1c] sm:$0xf]
        %v5872 = vld [vmem:[#allocation3 + $0x1] sm:$0x3]
        %v5873 = vpack.c.bf16 %v5872, %v5872
        %s5874 = scalar_lea.vmem %s5, 32
        %v5875 = vld [vmem:[%s5874] sm:$0xf]
        %v5876 = vld [vmem:[%s5874 + $0x4] sm:$0xf]
        %v5877 = vld [vmem:[%s5874 + $0x8] sm:$0xf]
        %v5878 = vld [vmem:[%s5874 + $0xc] sm:$0xf]
        %v5879 = vld [vmem:[%s5874 + $0x10] sm:$0xf]
        %v5880 = vld [vmem:[%s5874 + $0x14] sm:$0xf]
        %v5881 = vld [vmem:[%s5874 + $0x18] sm:$0xf]
        %v5882 = vld [vmem:[%s5874 + $0x1c] sm:$0xf]
        %v5891 = vunpack.c.l.b16 %v5875
        %v5892 = vunpack.c.l.b16 %v5876
        %v5893 = vunpack.c.l.b16 %v5877
        %v5894 = vunpack.c.l.b16 %v5878
        %v5895 = vunpack.c.l.b16 %v5879
        %v5896 = vunpack.c.l.b16 %v5880
        %v5897 = vunpack.c.l.b16 %v5881
        %v5898 = vunpack.c.l.b16 %v5882
        %v5899 = vpack.c.b16 %v5892, %v5891
        %v5900 = vpack.c.b16 %v5894, %v5893
        %v5901 = vpack.c.b16 %v5896, %v5895
        %v5902 = vpack.c.b16 %v5898, %v5897
        %vm5907 = vcmask 523264
        %v5909 = vsel %vm5907, %v5873, 0
        %5911 = vmatprep.subr.bf16.mxu0 0
        %5912 = vmatpush1.bf16.msra.mxu0 0
        %5913 = vmatprep.subr.bf16.mxu0 0
        %5914 = vmatpush1.bf16.msra.mxu0 0
        %5915 = vmatprep.subr.bf16.mxu0 0
        %5916 = vmatpush1.bf16.msra.mxu0 0
        %5917 = vmatprep.subr.bf16.mxu0 0
        %5918 = vmatpush1.bf16.msra.mxu0 0
        %5919 = vmatprep.subr.bf16.mxu0 0
        %5920 = vmatpush1.bf16.msra.mxu0 %v5902
        %5921 = vmatprep.subr.bf16.mxu0 0
        %5922 = vmatpush1.bf16.msra.mxu0 %v5901
        %5923 = vmatprep.subr.bf16.mxu0 0
        %5924 = vmatpush1.bf16.msra.mxu0 %v5900
        %5925 = vmatprep.subr.bf16.mxu0 0
        %5926 = vmatpush1.bf16.msra.mxu0 %v5899
        %5927 = vmatprep.subr.bf16.mxu0 0
        %5928 = vmatpush2.bf16.msra.mxu0 0
        %5929 = vmatprep.subr.bf16.mxu0 0
        %5930 = vmatpush2.bf16.msra.mxu0 0
        %5931 = vmatprep.subr.bf16.mxu0 0
        %5932 = vmatpush2.bf16.msra.mxu0 0
        %5933 = vmatprep.subr.bf16.mxu0 0
        %5934 = vmatpush2.bf16.msra.mxu0 0
        %5935 = vmatprep.subr.bf16.mxu0 0
        %5936 = vmatpush2.bf16.msra.mxu0 0
        %5937 = vmatprep.subr.bf16.mxu0 0
        %5938 = vmatpush2.bf16.msra.mxu0 0
        %5939 = vmatprep.subr.bf16.mxu0 0
        %5940 = vmatpush2.bf16.msra.mxu0 0
        %5941 = vmatprep.subr.bf16.mxu0 0
        %5942 = vmatpush2.bf16.msra.mxu0 0
        %5943 = vmatprep.mubr.bf16.mxu0 0
        %5944 = vmatmul.mubr.bf16.gmra.mxu0 %v5909
        %v5945 = vpop.f32.mrf.mxu0
        %v5946 = vadd.f32 0.0, %v5945
        %v5947 = vpop.f32.mrf.mxu0
        %v5948 = vpop.f32.mrf.mxu0
        %v5949 = vpop.f32.mrf.mxu0
        %5950 = vdwg.mxu0
        %v5959 = vunpack.c.l.b16 %v5864
        %v5960 = vunpack.c.l.b16 %v5865
        %v5961 = vunpack.c.l.b16 %v5866
        %v5962 = vunpack.c.l.b16 %v5867
        %v5963 = vunpack.c.l.b16 %v5868
        %v5964 = vunpack.c.l.b16 %v5869
        %v5965 = vunpack.c.l.b16 %v5870
        %v5966 = vunpack.c.l.b16 %v5871
        %v5967 = vpack.c.b16 %v5960, %v5959
        %v5968 = vpack.c.b16 %v5962, %v5961
        %v5969 = vpack.c.b16 %v5964, %v5963
        %v5970 = vpack.c.b16 %v5966, %v5965
        %v5976 = vsel %vm5907, %v5863, 0
        %5978 = vmatprep.subr.bf16.mxu0 0
        %5979 = vmatpush1.bf16.msra.mxu0 0
        %5980 = vmatprep.subr.bf16.mxu0 0
        %5981 = vmatpush1.bf16.msra.mxu0 0
        %5982 = vmatprep.subr.bf16.mxu0 0
        %5983 = vmatpush1.bf16.msra.mxu0 0
        %5984 = vmatprep.subr.bf16.mxu0 0
        %5985 = vmatpush1.bf16.msra.mxu0 0
        %5986 = vmatprep.subr.bf16.mxu0 0
        %5987 = vmatpush1.bf16.msra.mxu0 %v5970
        %5988 = vmatprep.subr.bf16.mxu0 0
        %5989 = vmatpush1.bf16.msra.mxu0 %v5969
        %5990 = vmatprep.subr.bf16.mxu0 0
        %5991 = vmatpush1.bf16.msra.mxu0 %v5968
        %5992 = vmatprep.subr.bf16.mxu0 0
        %5993 = vmatpush1.bf16.msra.mxu0 %v5967
        %5994 = vmatprep.subr.bf16.mxu0 0
        %5995 = vmatpush2.bf16.msra.mxu0 0
        %5996 = vmatprep.subr.bf16.mxu0 0
        %5997 = vmatpush2.bf16.msra.mxu0 0
        %5998 = vmatprep.subr.bf16.mxu0 0
        %5999 = vmatpush2.bf16.msra.mxu0 0
        %6000 = vmatprep.subr.bf16.mxu0 0
        %6001 = vmatpush2.bf16.msra.mxu0 0
        %6002 = vmatprep.subr.bf16.mxu0 0
        %6003 = vmatpush2.bf16.msra.mxu0 0
        %6004 = vmatprep.subr.bf16.mxu0 0
        %6005 = vmatpush2.bf16.msra.mxu0 0
        %6006 = vmatprep.subr.bf16.mxu0 0
        %6007 = vmatpush2.bf16.msra.mxu0 0
        %6008 = vmatprep.subr.bf16.mxu0 0
        %6009 = vmatpush2.bf16.msra.mxu0 0
        %6010 = vmatprep.mubr.bf16.mxu0 0
        %6011 = vmatmul.mubr.bf16.gmra.mxu0 %v5976
        %v6012 = vpop.f32.mrf.mxu0
        %v6013 = vadd.f32 %v5946, %v6012
        %v6014 = vpop.f32.mrf.mxu0
        %v6015 = vpop.f32.mrf.mxu0
        %v6016 = vpop.f32.mrf.mxu0
        %6017 = vdwg.mxu0
        %v6018 = vld [vmem:[#allocation3 + $0x2] sm:$0x3]
        %v6019 = vpack.c.bf16 %v6018, %v6018
        %s6020 = scalar_lea.vmem %s5, 64
        %v6021 = vld [vmem:[%s6020] sm:$0xf]
        %v6022 = vld [vmem:[%s6020 + $0x4] sm:$0xf]
        %v6023 = vld [vmem:[%s6020 + $0x8] sm:$0xf]
        %v6024 = vld [vmem:[%s6020 + $0xc] sm:$0xf]
        %v6025 = vld [vmem:[%s6020 + $0x10] sm:$0xf]
        %v6026 = vld [vmem:[%s6020 + $0x14] sm:$0xf]
        %v6027 = vld [vmem:[%s6020 + $0x18] sm:$0xf]
        %v6028 = vld [vmem:[%s6020 + $0x1c] sm:$0xf]
        %v6037 = vunpack.c.l.b16 %v6021
        %v6038 = vunpack.c.l.b16 %v6022
        %v6039 = vunpack.c.l.b16 %v6023
        %v6040 = vunpack.c.l.b16 %v6024
        %v6041 = vunpack.c.l.b16 %v6025
        %v6042 = vunpack.c.l.b16 %v6026
        %v6043 = vunpack.c.l.b16 %v6027
        %v6044 = vunpack.c.l.b16 %v6028
        %v6045 = vpack.c.b16 %v6038, %v6037
        %v6046 = vpack.c.b16 %v6040, %v6039
        %v6047 = vpack.c.b16 %v6042, %v6041
        %v6048 = vpack.c.b16 %v6044, %v6043
        %v6054 = vsel %vm5907, %v6019, 0
        %6056 = vmatprep.subr.bf16.mxu0 0
        %6057 = vmatpush1.bf16.msra.mxu0 0
        %6058 = vmatprep.subr.bf16.mxu0 0
        %6059 = vmatpush1.bf16.msra.mxu0 0
        %6060 = vmatprep.subr.bf16.mxu0 0
        %6061 = vmatpush1.bf16.msra.mxu0 0
        %6062 = vmatprep.subr.bf16.mxu0 0
        %6063 = vmatpush1.bf16.msra.mxu0 0
        %6064 = vmatprep.subr.bf16.mxu0 0
        %6065 = vmatpush1.bf16.msra.mxu0 %v6048
        %6066 = vmatprep.subr.bf16.mxu0 0
        %6067 = vmatpush1.bf16.msra.mxu0 %v6047
        %6068 = vmatprep.subr.bf16.mxu0 0
        %6069 = vmatpush1.bf16.msra.mxu0 %v6046
        %6070 = vmatprep.subr.bf16.mxu0 0
        %6071 = vmatpush1.bf16.msra.mxu0 %v6045
        %6072 = vmatprep.subr.bf16.mxu0 0
        %6073 = vmatpush2.bf16.msra.mxu0 0
        %6074 = vmatprep.subr.bf16.mxu0 0
        %6075 = vmatpush2.bf16.msra.mxu0 0
        %6076 = vmatprep.subr.bf16.mxu0 0
        %6077 = vmatpush2.bf16.msra.mxu0 0
        %6078 = vmatprep.subr.bf16.mxu0 0
        %6079 = vmatpush2.bf16.msra.mxu0 0
        %6080 = vmatprep.subr.bf16.mxu0 0
        %6081 = vmatpush2.bf16.msra.mxu0 0
        %6082 = vmatprep.subr.bf16.mxu0 0
        %6083 = vmatpush2.bf16.msra.mxu0 0
        %6084 = vmatprep.subr.bf16.mxu0 0
        %6085 = vmatpush2.bf16.msra.mxu0 0
        %6086 = vmatprep.subr.bf16.mxu0 0
        %6087 = vmatpush2.bf16.msra.mxu0 0
        %6088 = vmatprep.mubr.bf16.mxu0 0
        %6089 = vmatmul.mubr.bf16.gmra.mxu0 %v6054
        %v6090 = vpop.f32.mrf.mxu0
        %v6091 = vadd.f32 0.0, %v6090
        %v6092 = vpop.f32.mrf.mxu0
        %v6093 = vpop.f32.mrf.mxu0
        %v6094 = vpop.f32.mrf.mxu0
        %6095 = vdwg.mxu0
        %v6096 = vadd.f32 %v6013, %v6091
        %v6097 = vld [vmem:[%s4986] sm:$0x3]
        %v6098 = vpack.c.bf16 %v6097, %v6097
        %s6099 = scalar_lea.vmem %s5, 96
        %v6100 = vld [vmem:[%s6099] sm:$0xf]
        %v6101 = vld [vmem:[%s6099 + $0x4] sm:$0xf]
        %v6102 = vld [vmem:[%s6099 + $0x8] sm:$0xf]
        %v6103 = vld [vmem:[%s6099 + $0xc] sm:$0xf]
        %v6104 = vld [vmem:[%s6099 + $0x10] sm:$0xf]
        %v6105 = vld [vmem:[%s6099 + $0x14] sm:$0xf]
        %v6106 = vld [vmem:[%s6099 + $0x18] sm:$0xf]
        %v6107 = vld [vmem:[%s6099 + $0x1c] sm:$0xf]
        %v6116 = vunpack.c.l.b16 %v6100
        %v6117 = vunpack.c.l.b16 %v6101
        %v6118 = vunpack.c.l.b16 %v6102
        %v6119 = vunpack.c.l.b16 %v6103
        %v6120 = vunpack.c.l.b16 %v6104
        %v6121 = vunpack.c.l.b16 %v6105
        %v6122 = vunpack.c.l.b16 %v6106
        %v6123 = vunpack.c.l.b16 %v6107
        %v6124 = vpack.c.b16 %v6117, %v6116
        %v6125 = vpack.c.b16 %v6119, %v6118
        %v6126 = vpack.c.b16 %v6121, %v6120
        %v6127 = vpack.c.b16 %v6123, %v6122
        %v6133 = vsel %vm5907, %v6098, 0
        %6135 = vmatprep.subr.bf16.mxu0 0
        %6136 = vmatpush1.bf16.msra.mxu0 0
        %6137 = vmatprep.subr.bf16.mxu0 0
        %6138 = vmatpush1.bf16.msra.mxu0 0
        %6139 = vmatprep.subr.bf16.mxu0 0
        %6140 = vmatpush1.bf16.msra.mxu0 0
        %6141 = vmatprep.subr.bf16.mxu0 0
        %6142 = vmatpush1.bf16.msra.mxu0 0
        %6143 = vmatprep.subr.bf16.mxu0 0
        %6144 = vmatpush1.bf16.msra.mxu0 %v6127
        %6145 = vmatprep.subr.bf16.mxu0 0
        %6146 = vmatpush1.bf16.msra.mxu0 %v6126
        %6147 = vmatprep.subr.bf16.mxu0 0
        %6148 = vmatpush1.bf16.msra.mxu0 %v6125
        %6149 = vmatprep.subr.bf16.mxu0 0
        %6150 = vmatpush1.bf16.msra.mxu0 %v6124
        %6151 = vmatprep.subr.bf16.mxu0 0
        %6152 = vmatpush2.bf16.msra.mxu0 0
        %6153 = vmatprep.subr.bf16.mxu0 0
        %6154 = vmatpush2.bf16.msra.mxu0 0
        %6155 = vmatprep.subr.bf16.mxu0 0
        %6156 = vmatpush2.bf16.msra.mxu0 0
        %6157 = vmatprep.subr.bf16.mxu0 0
        %6158 = vmatpush2.bf16.msra.mxu0 0
        %6159 = vmatprep.subr.bf16.mxu0 0
        %6160 = vmatpush2.bf16.msra.mxu0 0
        %6161 = vmatprep.subr.bf16.mxu0 0
        %6162 = vmatpush2.bf16.msra.mxu0 0
        %6163 = vmatprep.subr.bf16.mxu0 0
        %6164 = vmatpush2.bf16.msra.mxu0 0
        %6165 = vmatprep.subr.bf16.mxu0 0
        %6166 = vmatpush2.bf16.msra.mxu0 0
        %6167 = vmatprep.mubr.bf16.mxu0 0
        %6168 = vmatmul.mubr.bf16.gmra.mxu0 %v6133
        %v6169 = vpop.f32.mrf.mxu0
        %v6170 = vadd.f32 0.0, %v6169
        %v6171 = vpop.f32.mrf.mxu0
        %v6172 = vpop.f32.mrf.mxu0
        %v6173 = vpop.f32.mrf.mxu0
        %6174 = vdwg.mxu0
        %v6175 = vadd.f32 %v6096, %v6170
        %v6176 = vld [vmem:[%s4986 + $0x1] sm:$0x3]
        %v6177 = vpack.c.bf16 %v6176, %v6176
        %s6178 = scalar_lea.vmem %s5, 128
        %v6179 = vld [vmem:[%s6178] sm:$0xf]
        %v6180 = vld [vmem:[%s6178 + $0x4] sm:$0xf]
        %v6181 = vld [vmem:[%s6178 + $0x8] sm:$0xf]
        %v6182 = vld [vmem:[%s6178 + $0xc] sm:$0xf]
        %v6183 = vld [vmem:[%s6178 + $0x10] sm:$0xf]
        %v6184 = vld [vmem:[%s6178 + $0x14] sm:$0xf]
        %v6185 = vld [vmem:[%s6178 + $0x18] sm:$0xf]
        %v6186 = vld [vmem:[%s6178 + $0x1c] sm:$0xf]
        %v6195 = vunpack.c.l.b16 %v6179
        %v6196 = vunpack.c.l.b16 %v6180
        %v6197 = vunpack.c.l.b16 %v6181
        %v6198 = vunpack.c.l.b16 %v6182
        %v6199 = vunpack.c.l.b16 %v6183
        %v6200 = vunpack.c.l.b16 %v6184
        %v6201 = vunpack.c.l.b16 %v6185
        %v6202 = vunpack.c.l.b16 %v6186
        %v6203 = vpack.c.b16 %v6196, %v6195
        %v6204 = vpack.c.b16 %v6198, %v6197
        %v6205 = vpack.c.b16 %v6200, %v6199
        %v6206 = vpack.c.b16 %v6202, %v6201
        %v6212 = vsel %vm5907, %v6177, 0
        %6214 = vmatprep.subr.bf16.mxu0 0
        %6215 = vmatpush1.bf16.msra.mxu0 0
        %6216 = vmatprep.subr.bf16.mxu0 0
        %6217 = vmatpush1.bf16.msra.mxu0 0
        %6218 = vmatprep.subr.bf16.mxu0 0
        %6219 = vmatpush1.bf16.msra.mxu0 0
        %6220 = vmatprep.subr.bf16.mxu0 0
        %6221 = vmatpush1.bf16.msra.mxu0 0
        %6222 = vmatprep.subr.bf16.mxu0 0
        %6223 = vmatpush1.bf16.msra.mxu0 %v6206
        %6224 = vmatprep.subr.bf16.mxu0 0
        %6225 = vmatpush1.bf16.msra.mxu0 %v6205
        %6226 = vmatprep.subr.bf16.mxu0 0
        %6227 = vmatpush1.bf16.msra.mxu0 %v6204
        %6228 = vmatprep.subr.bf16.mxu0 0
        %6229 = vmatpush1.bf16.msra.mxu0 %v6203
        %6230 = vmatprep.subr.bf16.mxu0 0
        %6231 = vmatpush2.bf16.msra.mxu0 0
        %6232 = vmatprep.subr.bf16.mxu0 0
        %6233 = vmatpush2.bf16.msra.mxu0 0
        %6234 = vmatprep.subr.bf16.mxu0 0
        %6235 = vmatpush2.bf16.msra.mxu0 0
        %6236 = vmatprep.subr.bf16.mxu0 0
        %6237 = vmatpush2.bf16.msra.mxu0 0
        %6238 = vmatprep.subr.bf16.mxu0 0
        %6239 = vmatpush2.bf16.msra.mxu0 0
        %6240 = vmatprep.subr.bf16.mxu0 0
        %6241 = vmatpush2.bf16.msra.mxu0 0
        %6242 = vmatprep.subr.bf16.mxu0 0
        %6243 = vmatpush2.bf16.msra.mxu0 0
        %6244 = vmatprep.subr.bf16.mxu0 0
        %6245 = vmatpush2.bf16.msra.mxu0 0
        %6246 = vmatprep.mubr.bf16.mxu0 0
        %6247 = vmatmul.mubr.bf16.gmra.mxu0 %v6212
        %v6248 = vpop.f32.mrf.mxu0
        %v6249 = vadd.f32 0.0, %v6248
        %v6250 = vpop.f32.mrf.mxu0
        %v6251 = vpop.f32.mrf.mxu0
        %v6252 = vpop.f32.mrf.mxu0
        %6253 = vdwg.mxu0
        %v6254 = vadd.f32 %v6175, %v6249
        %v6255 = vld [vmem:[%s4986 + $0x2] sm:$0x3]
        %v6256 = vpack.c.bf16 %v6255, %v6255
        %s6257 = scalar_lea.vmem %s5, 160
        %v6258 = vld [vmem:[%s6257] sm:$0xf]
        %v6259 = vld [vmem:[%s6257 + $0x4] sm:$0xf]
        %v6260 = vld [vmem:[%s6257 + $0x8] sm:$0xf]
        %v6261 = vld [vmem:[%s6257 + $0xc] sm:$0xf]
        %v6262 = vld [vmem:[%s6257 + $0x10] sm:$0xf]
        %v6263 = vld [vmem:[%s6257 + $0x14] sm:$0xf]
        %v6264 = vld [vmem:[%s6257 + $0x18] sm:$0xf]
        %v6265 = vld [vmem:[%s6257 + $0x1c] sm:$0xf]
        %v6274 = vunpack.c.l.b16 %v6258
        %v6275 = vunpack.c.l.b16 %v6259
        %v6276 = vunpack.c.l.b16 %v6260
        %v6277 = vunpack.c.l.b16 %v6261
        %v6278 = vunpack.c.l.b16 %v6262
        %v6279 = vunpack.c.l.b16 %v6263
        %v6280 = vunpack.c.l.b16 %v6264
        %v6281 = vunpack.c.l.b16 %v6265
        %v6282 = vpack.c.b16 %v6275, %v6274
        %v6283 = vpack.c.b16 %v6277, %v6276
        %v6284 = vpack.c.b16 %v6279, %v6278
        %v6285 = vpack.c.b16 %v6281, %v6280
        %v6291 = vsel %vm5907, %v6256, 0
        %6293 = vmatprep.subr.bf16.mxu0 0
        %6294 = vmatpush1.bf16.msra.mxu0 0
        %6295 = vmatprep.subr.bf16.mxu0 0
        %6296 = vmatpush1.bf16.msra.mxu0 0
        %6297 = vmatprep.subr.bf16.mxu0 0
        %6298 = vmatpush1.bf16.msra.mxu0 0
        %6299 = vmatprep.subr.bf16.mxu0 0
        %6300 = vmatpush1.bf16.msra.mxu0 0
        %6301 = vmatprep.subr.bf16.mxu0 0
        %6302 = vmatpush1.bf16.msra.mxu0 %v6285
        %6303 = vmatprep.subr.bf16.mxu0 0
        %6304 = vmatpush1.bf16.msra.mxu0 %v6284
        %6305 = vmatprep.subr.bf16.mxu0 0
        %6306 = vmatpush1.bf16.msra.mxu0 %v6283
        %6307 = vmatprep.subr.bf16.mxu0 0
        %6308 = vmatpush1.bf16.msra.mxu0 %v6282
        %6309 = vmatprep.subr.bf16.mxu0 0
        %6310 = vmatpush2.bf16.msra.mxu0 0
        %6311 = vmatprep.subr.bf16.mxu0 0
        %6312 = vmatpush2.bf16.msra.mxu0 0
        %6313 = vmatprep.subr.bf16.mxu0 0
        %6314 = vmatpush2.bf16.msra.mxu0 0
        %6315 = vmatprep.subr.bf16.mxu0 0
        %6316 = vmatpush2.bf16.msra.mxu0 0
        %6317 = vmatprep.subr.bf16.mxu0 0
        %6318 = vmatpush2.bf16.msra.mxu0 0
        %6319 = vmatprep.subr.bf16.mxu0 0
        %6320 = vmatpush2.bf16.msra.mxu0 0
        %6321 = vmatprep.subr.bf16.mxu0 0
        %6322 = vmatpush2.bf16.msra.mxu0 0
        %6323 = vmatprep.subr.bf16.mxu0 0
        %6324 = vmatpush2.bf16.msra.mxu0 0
        %6325 = vmatprep.mubr.bf16.mxu0 0
        %6326 = vmatmul.mubr.bf16.gmra.mxu0 %v6291
        %v6327 = vpop.f32.mrf.mxu0
        %v6328 = vadd.f32 0.0, %v6327
        %v6329 = vpop.f32.mrf.mxu0
        %v6330 = vpop.f32.mrf.mxu0
        %v6331 = vpop.f32.mrf.mxu0
        %6332 = vdwg.mxu0
        %v6333 = vadd.f32 %v6254, %v6328
        %v6334 = vld [vmem:[%s5423] sm:$0x3]
        %v6335 = vpack.c.bf16 %v6334, %v6334
        %s6336 = scalar_lea.vmem %s5, 192
        %v6337 = vld [vmem:[%s6336] sm:$0xf]
        %v6338 = vld [vmem:[%s6336 + $0x4] sm:$0xf]
        %v6339 = vld [vmem:[%s6336 + $0x8] sm:$0xf]
        %v6340 = vld [vmem:[%s6336 + $0xc] sm:$0xf]
        %v6341 = vld [vmem:[%s6336 + $0x10] sm:$0xf]
        %v6342 = vld [vmem:[%s6336 + $0x14] sm:$0xf]
        %v6343 = vld [vmem:[%s6336 + $0x18] sm:$0xf]
        %v6344 = vld [vmem:[%s6336 + $0x1c] sm:$0xf]
        %v6353 = vunpack.c.l.b16 %v6337
        %v6354 = vunpack.c.l.b16 %v6338
        %v6355 = vunpack.c.l.b16 %v6339
        %v6356 = vunpack.c.l.b16 %v6340
        %v6357 = vunpack.c.l.b16 %v6341
        %v6358 = vunpack.c.l.b16 %v6342
        %v6359 = vunpack.c.l.b16 %v6343
        %v6360 = vunpack.c.l.b16 %v6344
        %v6361 = vpack.c.b16 %v6354, %v6353
        %v6362 = vpack.c.b16 %v6356, %v6355
        %v6363 = vpack.c.b16 %v6358, %v6357
        %v6364 = vpack.c.b16 %v6360, %v6359
        %v6370 = vsel %vm5907, %v6335, 0
        %6372 = vmatprep.subr.bf16.mxu0 0
        %6373 = vmatpush1.bf16.msra.mxu0 0
        %6374 = vmatprep.subr.bf16.mxu0 0
        %6375 = vmatpush1.bf16.msra.mxu0 0
        %6376 = vmatprep.subr.bf16.mxu0 0
        %6377 = vmatpush1.bf16.msra.mxu0 0
        %6378 = vmatprep.subr.bf16.mxu0 0
        %6379 = vmatpush1.bf16.msra.mxu0 0
        %6380 = vmatprep.subr.bf16.mxu0 0
        %6381 = vmatpush1.bf16.msra.mxu0 %v6364
        %6382 = vmatprep.subr.bf16.mxu0 0
        %6383 = vmatpush1.bf16.msra.mxu0 %v6363
        %6384 = vmatprep.subr.bf16.mxu0 0
        %6385 = vmatpush1.bf16.msra.mxu0 %v6362
        %6386 = vmatprep.subr.bf16.mxu0 0
        %6387 = vmatpush1.bf16.msra.mxu0 %v6361
        %6388 = vmatprep.subr.bf16.mxu0 0
        %6389 = vmatpush2.bf16.msra.mxu0 0
        %6390 = vmatprep.subr.bf16.mxu0 0
        %6391 = vmatpush2.bf16.msra.mxu0 0
        %6392 = vmatprep.subr.bf16.mxu0 0
        %6393 = vmatpush2.bf16.msra.mxu0 0
        %6394 = vmatprep.subr.bf16.mxu0 0
        %6395 = vmatpush2.bf16.msra.mxu0 0
        %6396 = vmatprep.subr.bf16.mxu0 0
        %6397 = vmatpush2.bf16.msra.mxu0 0
        %6398 = vmatprep.subr.bf16.mxu0 0
        %6399 = vmatpush2.bf16.msra.mxu0 0
        %6400 = vmatprep.subr.bf16.mxu0 0
        %6401 = vmatpush2.bf16.msra.mxu0 0
        %6402 = vmatprep.subr.bf16.mxu0 0
        %6403 = vmatpush2.bf16.msra.mxu0 0
        %6404 = vmatprep.mubr.bf16.mxu0 0
        %6405 = vmatmul.mubr.bf16.gmra.mxu0 %v6370
        %v6406 = vpop.f32.mrf.mxu0
        %v6407 = vadd.f32 0.0, %v6406
        %v6408 = vpop.f32.mrf.mxu0
        %v6409 = vpop.f32.mrf.mxu0
        %v6410 = vpop.f32.mrf.mxu0
        %6411 = vdwg.mxu0
        %v6412 = vadd.f32 %v6333, %v6407
        %v6413 = vld [vmem:[%s5423 + $0x1] sm:$0x3]
        %v6414 = vpack.c.bf16 %v6413, %v6413
        %s6415 = scalar_lea.vmem %s5, 224
        %v6416 = vld [vmem:[%s6415] sm:$0xf]
        %v6417 = vld [vmem:[%s6415 + $0x4] sm:$0xf]
        %v6418 = vld [vmem:[%s6415 + $0x8] sm:$0xf]
        %v6419 = vld [vmem:[%s6415 + $0xc] sm:$0xf]
        %v6420 = vld [vmem:[%s6415 + $0x10] sm:$0xf]
        %v6421 = vld [vmem:[%s6415 + $0x14] sm:$0xf]
        %v6422 = vld [vmem:[%s6415 + $0x18] sm:$0xf]
        %v6423 = vld [vmem:[%s6415 + $0x1c] sm:$0xf]
        %v6432 = vunpack.c.l.b16 %v6416
        %v6433 = vunpack.c.l.b16 %v6417
        %v6434 = vunpack.c.l.b16 %v6418
        %v6435 = vunpack.c.l.b16 %v6419
        %v6436 = vunpack.c.l.b16 %v6420
        %v6437 = vunpack.c.l.b16 %v6421
        %v6438 = vunpack.c.l.b16 %v6422
        %v6439 = vunpack.c.l.b16 %v6423
        %v6440 = vpack.c.b16 %v6433, %v6432
        %v6441 = vpack.c.b16 %v6435, %v6434
        %v6442 = vpack.c.b16 %v6437, %v6436
        %v6443 = vpack.c.b16 %v6439, %v6438
        %v6449 = vsel %vm5907, %v6414, 0
        %6451 = vmatprep.subr.bf16.mxu0 0
        %6452 = vmatpush1.bf16.msra.mxu0 0
        %6453 = vmatprep.subr.bf16.mxu0 0
        %6454 = vmatpush1.bf16.msra.mxu0 0
        %6455 = vmatprep.subr.bf16.mxu0 0
        %6456 = vmatpush1.bf16.msra.mxu0 0
        %6457 = vmatprep.subr.bf16.mxu0 0
        %6458 = vmatpush1.bf16.msra.mxu0 0
        %6459 = vmatprep.subr.bf16.mxu0 0
        %6460 = vmatpush1.bf16.msra.mxu0 %v6443
        %6461 = vmatprep.subr.bf16.mxu0 0
        %6462 = vmatpush1.bf16.msra.mxu0 %v6442
        %6463 = vmatprep.subr.bf16.mxu0 0
        %6464 = vmatpush1.bf16.msra.mxu0 %v6441
        %6465 = vmatprep.subr.bf16.mxu0 0
        %6466 = vmatpush1.bf16.msra.mxu0 %v6440
        %6467 = vmatprep.subr.bf16.mxu0 0
        %6468 = vmatpush2.bf16.msra.mxu0 0
        %6469 = vmatprep.subr.bf16.mxu0 0
        %6470 = vmatpush2.bf16.msra.mxu0 0
        %6471 = vmatprep.subr.bf16.mxu0 0
        %6472 = vmatpush2.bf16.msra.mxu0 0
        %6473 = vmatprep.subr.bf16.mxu0 0
        %6474 = vmatpush2.bf16.msra.mxu0 0
        %6475 = vmatprep.subr.bf16.mxu0 0
        %6476 = vmatpush2.bf16.msra.mxu0 0
        %6477 = vmatprep.subr.bf16.mxu0 0
        %6478 = vmatpush2.bf16.msra.mxu0 0
        %6479 = vmatprep.subr.bf16.mxu0 0
        %6480 = vmatpush2.bf16.msra.mxu0 0
        %6481 = vmatprep.subr.bf16.mxu0 0
        %6482 = vmatpush2.bf16.msra.mxu0 0
        %6483 = vmatprep.mubr.bf16.mxu0 0
        %6484 = vmatmul.mubr.bf16.gmra.mxu0 %v6449
        %v6485 = vpop.f32.mrf.mxu0
        %v6486 = vadd.f32 0.0, %v6485
        %v6487 = vpop.f32.mrf.mxu0
        %v6488 = vpop.f32.mrf.mxu0
        %v6489 = vpop.f32.mrf.mxu0
        %6490 = vdwg.mxu0
        %v6491 = vadd.f32 %v6412, %v6486
        %v6492 = vld [vmem:[%s5423 + $0x2] sm:$0x3]
        %v6493 = vpack.c.bf16 %v6492, %v6492
        %s6494 = scalar_lea.vmem %s5, 256
        %v6495 = vld [vmem:[%s6494] sm:$0xf]
        %v6496 = vld [vmem:[%s6494 + $0x4] sm:$0xf]
        %v6497 = vld [vmem:[%s6494 + $0x8] sm:$0xf]
        %v6498 = vld [vmem:[%s6494 + $0xc] sm:$0xf]
        %v6499 = vld [vmem:[%s6494 + $0x10] sm:$0xf]
        %v6500 = vld [vmem:[%s6494 + $0x14] sm:$0xf]
        %v6501 = vld [vmem:[%s6494 + $0x18] sm:$0xf]
        %v6502 = vld [vmem:[%s6494 + $0x1c] sm:$0xf]
        %v6511 = vunpack.c.l.b16 %v6495
        %v6512 = vunpack.c.l.b16 %v6496
        %v6513 = vunpack.c.l.b16 %v6497
        %v6514 = vunpack.c.l.b16 %v6498
        %v6515 = vunpack.c.l.b16 %v6499
        %v6516 = vunpack.c.l.b16 %v6500
        %v6517 = vunpack.c.l.b16 %v6501
        %v6518 = vunpack.c.l.b16 %v6502
        %v6519 = vpack.c.b16 %v6512, %v6511
        %v6520 = vpack.c.b16 %v6514, %v6513
        %v6521 = vpack.c.b16 %v6516, %v6515
        %v6522 = vpack.c.b16 %v6518, %v6517
        %v6528 = vsel %vm5907, %v6493, 0
        %6530 = vmatprep.subr.bf16.mxu0 0
        %6531 = vmatpush1.bf16.msra.mxu0 0
        %6532 = vmatprep.subr.bf16.mxu0 0
        %6533 = vmatpush1.bf16.msra.mxu0 0
        %6534 = vmatprep.subr.bf16.mxu0 0
        %6535 = vmatpush1.bf16.msra.mxu0 0
        %6536 = vmatprep.subr.bf16.mxu0 0
        %6537 = vmatpush1.bf16.msra.mxu0 0
        %6538 = vmatprep.subr.bf16.mxu0 0
        %6539 = vmatpush1.bf16.msra.mxu0 %v6522
        %6540 = vmatprep.subr.bf16.mxu0 0
        %6541 = vmatpush1.bf16.msra.mxu0 %v6521
        %6542 = vmatprep.subr.bf16.mxu0 0
        %6543 = vmatpush1.bf16.msra.mxu0 %v6520
        %6544 = vmatprep.subr.bf16.mxu0 0
        %6545 = vmatpush1.bf16.msra.mxu0 %v6519
        %6546 = vmatprep.subr.bf16.mxu0 0
        %6547 = vmatpush2.bf16.msra.mxu0 0
        %6548 = vmatprep.subr.bf16.mxu0 0
        %6549 = vmatpush2.bf16.msra.mxu0 0
        %6550 = vmatprep.subr.bf16.mxu0 0
        %6551 = vmatpush2.bf16.msra.mxu0 0
        %6552 = vmatprep.subr.bf16.mxu0 0
        %6553 = vmatpush2.bf16.msra.mxu0 0
        %6554 = vmatprep.subr.bf16.mxu0 0
        %6555 = vmatpush2.bf16.msra.mxu0 0
        %6556 = vmatprep.subr.bf16.mxu0 0
        %6557 = vmatpush2.bf16.msra.mxu0 0
        %6558 = vmatprep.subr.bf16.mxu0 0
        %6559 = vmatpush2.bf16.msra.mxu0 0
        %6560 = vmatprep.subr.bf16.mxu0 0
        %6561 = vmatpush2.bf16.msra.mxu0 0
        %6562 = vmatprep.mubr.bf16.mxu0 0
        %6563 = vmatmul.mubr.bf16.gmra.mxu0 %v6528
        %v6564 = vpop.f32.mrf.mxu0
        %v6565 = vadd.f32 0.0, %v6564
        %v6566 = vpop.f32.mrf.mxu0
        %v6567 = vpop.f32.mrf.mxu0
        %v6568 = vpop.f32.mrf.mxu0
        %6569 = vdwg.mxu0
        %v6570 = vadd.f32 %v6491, %v6565
        %v6571 = vld [vmem:[%s6] sm:$0x1]
        %v6573 = vlaneseq
        %v6574 = vshrl.u32 %v6573, 7
        %v6575 = vsub.s32 0, %v6574
        %v6576 = vrot.slane %v6571, %v6575
        %v6578 = vadd.f32 %v6570, %v6576
        %v6579 = vmax.f32 %v6578, 0.0
        %vm6580 = vcmask 517120
        %6581 = vst.msk [vmem:[#allocation4] sm:$0x3] %vm6580, %v6579
        %v6582 = vld [vmem:[%s4986] sm:$0x3]
        %v6583 = vpack.c.bf16 %v6582, %v6582
        %v6584 = vld [vmem:[%s5] sm:$0xf]
        %v6585 = vld [vmem:[%s5 + $0x4] sm:$0xf]
        %v6586 = vld [vmem:[%s5 + $0x8] sm:$0xf]
        %v6587 = vld [vmem:[%s5 + $0xc] sm:$0xf]
        %v6588 = vld [vmem:[%s5 + $0x10] sm:$0xf]
        %v6589 = vld [vmem:[%s5 + $0x14] sm:$0xf]
        %v6590 = vld [vmem:[%s5 + $0x18] sm:$0xf]
        %v6591 = vld [vmem:[%s5 + $0x1c] sm:$0xf]
        %v6592 = vld [vmem:[%s4986 + $0x1] sm:$0x3]
        %v6593 = vpack.c.bf16 %v6592, %v6592
        %v6594 = vld [vmem:[%s5874] sm:$0xf]
        %v6595 = vld [vmem:[%s5874 + $0x4] sm:$0xf]
        %v6596 = vld [vmem:[%s5874 + $0x8] sm:$0xf]
        %v6597 = vld [vmem:[%s5874 + $0xc] sm:$0xf]
        %v6598 = vld [vmem:[%s5874 + $0x10] sm:$0xf]
        %v6599 = vld [vmem:[%s5874 + $0x14] sm:$0xf]
        %v6600 = vld [vmem:[%s5874 + $0x18] sm:$0xf]
        %v6601 = vld [vmem:[%s5874 + $0x1c] sm:$0xf]
        %v6610 = vunpack.c.l.b16 %v6594
        %v6611 = vunpack.c.l.b16 %v6595
        %v6612 = vunpack.c.l.b16 %v6596
        %v6613 = vunpack.c.l.b16 %v6597
        %v6614 = vunpack.c.l.b16 %v6598
        %v6615 = vunpack.c.l.b16 %v6599
        %v6616 = vunpack.c.l.b16 %v6600
        %v6617 = vunpack.c.l.b16 %v6601
        %v6618 = vpack.c.b16 %v6611, %v6610
        %v6619 = vpack.c.b16 %v6613, %v6612
        %v6620 = vpack.c.b16 %v6615, %v6614
        %v6621 = vpack.c.b16 %v6617, %v6616
        %v6627 = vsel %vm5907, %v6593, 0
        %6629 = vmatprep.subr.bf16.mxu0 0
        %6630 = vmatpush1.bf16.msra.mxu0 0
        %6631 = vmatprep.subr.bf16.mxu0 0
        %6632 = vmatpush1.bf16.msra.mxu0 0
        %6633 = vmatprep.subr.bf16.mxu0 0
        %6634 = vmatpush1.bf16.msra.mxu0 0
        %6635 = vmatprep.subr.bf16.mxu0 0
        %6636 = vmatpush1.bf16.msra.mxu0 0
        %6637 = vmatprep.subr.bf16.mxu0 0
        %6638 = vmatpush1.bf16.msra.mxu0 %v6621
        %6639 = vmatprep.subr.bf16.mxu0 0
        %6640 = vmatpush1.bf16.msra.mxu0 %v6620
        %6641 = vmatprep.subr.bf16.mxu0 0
        %6642 = vmatpush1.bf16.msra.mxu0 %v6619
        %6643 = vmatprep.subr.bf16.mxu0 0
        %6644 = vmatpush1.bf16.msra.mxu0 %v6618
        %6645 = vmatprep.subr.bf16.mxu0 0
        %6646 = vmatpush2.bf16.msra.mxu0 0
        %6647 = vmatprep.subr.bf16.mxu0 0
        %6648 = vmatpush2.bf16.msra.mxu0 0
        %6649 = vmatprep.subr.bf16.mxu0 0
        %6650 = vmatpush2.bf16.msra.mxu0 0
        %6651 = vmatprep.subr.bf16.mxu0 0
        %6652 = vmatpush2.bf16.msra.mxu0 0
        %6653 = vmatprep.subr.bf16.mxu0 0
        %6654 = vmatpush2.bf16.msra.mxu0 0
        %6655 = vmatprep.subr.bf16.mxu0 0
        %6656 = vmatpush2.bf16.msra.mxu0 0
        %6657 = vmatprep.subr.bf16.mxu0 0
        %6658 = vmatpush2.bf16.msra.mxu0 0
        %6659 = vmatprep.subr.bf16.mxu0 0
        %6660 = vmatpush2.bf16.msra.mxu0 0
        %6661 = vmatprep.mubr.bf16.mxu0 0
        %6662 = vmatmul.mubr.bf16.gmra.mxu0 %v6627
        %v6663 = vpop.f32.mrf.mxu0
        %v6664 = vadd.f32 0.0, %v6663
        %v6665 = vpop.f32.mrf.mxu0
        %v6666 = vpop.f32.mrf.mxu0
        %v6667 = vpop.f32.mrf.mxu0
        %6668 = vdwg.mxu0
        %v6677 = vunpack.c.l.b16 %v6584
        %v6678 = vunpack.c.l.b16 %v6585
        %v6679 = vunpack.c.l.b16 %v6586
        %v6680 = vunpack.c.l.b16 %v6587
        %v6681 = vunpack.c.l.b16 %v6588
        %v6682 = vunpack.c.l.b16 %v6589
        %v6683 = vunpack.c.l.b16 %v6590
        %v6684 = vunpack.c.l.b16 %v6591
        %v6685 = vpack.c.b16 %v6678, %v6677
        %v6686 = vpack.c.b16 %v6680, %v6679
        %v6687 = vpack.c.b16 %v6682, %v6681
        %v6688 = vpack.c.b16 %v6684, %v6683
        %v6694 = vsel %vm5907, %v6583, 0
        %6696 = vmatprep.subr.bf16.mxu0 0
        %6697 = vmatpush1.bf16.msra.mxu0 0
        %6698 = vmatprep.subr.bf16.mxu0 0
        %6699 = vmatpush1.bf16.msra.mxu0 0
        %6700 = vmatprep.subr.bf16.mxu0 0
        %6701 = vmatpush1.bf16.msra.mxu0 0
        %6702 = vmatprep.subr.bf16.mxu0 0
        %6703 = vmatpush1.bf16.msra.mxu0 0
        %6704 = vmatprep.subr.bf16.mxu0 0
        %6705 = vmatpush1.bf16.msra.mxu0 %v6688
        %6706 = vmatprep.subr.bf16.mxu0 0
        %6707 = vmatpush1.bf16.msra.mxu0 %v6687
        %6708 = vmatprep.subr.bf16.mxu0 0
        %6709 = vmatpush1.bf16.msra.mxu0 %v6686
        %6710 = vmatprep.subr.bf16.mxu0 0
        %6711 = vmatpush1.bf16.msra.mxu0 %v6685
        %6712 = vmatprep.subr.bf16.mxu0 0
        %6713 = vmatpush2.bf16.msra.mxu0 0
        %6714 = vmatprep.subr.bf16.mxu0 0
        %6715 = vmatpush2.bf16.msra.mxu0 0
        %6716 = vmatprep.subr.bf16.mxu0 0
        %6717 = vmatpush2.bf16.msra.mxu0 0
        %6718 = vmatprep.subr.bf16.mxu0 0
        %6719 = vmatpush2.bf16.msra.mxu0 0
        %6720 = vmatprep.subr.bf16.mxu0 0
        %6721 = vmatpush2.bf16.msra.mxu0 0
        %6722 = vmatprep.subr.bf16.mxu0 0
        %6723 = vmatpush2.bf16.msra.mxu0 0
        %6724 = vmatprep.subr.bf16.mxu0 0
        %6725 = vmatpush2.bf16.msra.mxu0 0
        %6726 = vmatprep.subr.bf16.mxu0 0
        %6727 = vmatpush2.bf16.msra.mxu0 0
        %6728 = vmatprep.mubr.bf16.mxu0 0
        %6729 = vmatmul.mubr.bf16.gmra.mxu0 %v6694
        %v6730 = vpop.f32.mrf.mxu0
        %v6731 = vadd.f32 %v6664, %v6730
        %v6732 = vpop.f32.mrf.mxu0
        %v6733 = vpop.f32.mrf.mxu0
        %v6734 = vpop.f32.mrf.mxu0
        %6735 = vdwg.mxu0
        %v6736 = vld [vmem:[%s4986 + $0x2] sm:$0x3]
        %v6737 = vpack.c.bf16 %v6736, %v6736
        %v6738 = vld [vmem:[%s6020] sm:$0xf]
        %v6739 = vld [vmem:[%s6020 + $0x4] sm:$0xf]
        %v6740 = vld [vmem:[%s6020 + $0x8] sm:$0xf]
        %v6741 = vld [vmem:[%s6020 + $0xc] sm:$0xf]
        %v6742 = vld [vmem:[%s6020 + $0x10] sm:$0xf]
        %v6743 = vld [vmem:[%s6020 + $0x14] sm:$0xf]
        %v6744 = vld [vmem:[%s6020 + $0x18] sm:$0xf]
        %v6745 = vld [vmem:[%s6020 + $0x1c] sm:$0xf]
        %v6754 = vunpack.c.l.b16 %v6738
        %v6755 = vunpack.c.l.b16 %v6739
        %v6756 = vunpack.c.l.b16 %v6740
        %v6757 = vunpack.c.l.b16 %v6741
        %v6758 = vunpack.c.l.b16 %v6742
        %v6759 = vunpack.c.l.b16 %v6743
        %v6760 = vunpack.c.l.b16 %v6744
        %v6761 = vunpack.c.l.b16 %v6745
        %v6762 = vpack.c.b16 %v6755, %v6754
        %v6763 = vpack.c.b16 %v6757, %v6756
        %v6764 = vpack.c.b16 %v6759, %v6758
        %v6765 = vpack.c.b16 %v6761, %v6760
        %v6771 = vsel %vm5907, %v6737, 0
        %6773 = vmatprep.subr.bf16.mxu0 0
        %6774 = vmatpush1.bf16.msra.mxu0 0
        %6775 = vmatprep.subr.bf16.mxu0 0
        %6776 = vmatpush1.bf16.msra.mxu0 0
        %6777 = vmatprep.subr.bf16.mxu0 0
        %6778 = vmatpush1.bf16.msra.mxu0 0
        %6779 = vmatprep.subr.bf16.mxu0 0
        %6780 = vmatpush1.bf16.msra.mxu0 0
        %6781 = vmatprep.subr.bf16.mxu0 0
        %6782 = vmatpush1.bf16.msra.mxu0 %v6765
        %6783 = vmatprep.subr.bf16.mxu0 0
        %6784 = vmatpush1.bf16.msra.mxu0 %v6764
        %6785 = vmatprep.subr.bf16.mxu0 0
        %6786 = vmatpush1.bf16.msra.mxu0 %v6763
        %6787 = vmatprep.subr.bf16.mxu0 0
        %6788 = vmatpush1.bf16.msra.mxu0 %v6762
        %6789 = vmatprep.subr.bf16.mxu0 0
        %6790 = vmatpush2.bf16.msra.mxu0 0
        %6791 = vmatprep.subr.bf16.mxu0 0
        %6792 = vmatpush2.bf16.msra.mxu0 0
        %6793 = vmatprep.subr.bf16.mxu0 0
        %6794 = vmatpush2.bf16.msra.mxu0 0
        %6795 = vmatprep.subr.bf16.mxu0 0
        %6796 = vmatpush2.bf16.msra.mxu0 0
        %6797 = vmatprep.subr.bf16.mxu0 0
        %6798 = vmatpush2.bf16.msra.mxu0 0
        %6799 = vmatprep.subr.bf16.mxu0 0
        %6800 = vmatpush2.bf16.msra.mxu0 0
        %6801 = vmatprep.subr.bf16.mxu0 0
        %6802 = vmatpush2.bf16.msra.mxu0 0
        %6803 = vmatprep.subr.bf16.mxu0 0
        %6804 = vmatpush2.bf16.msra.mxu0 0
        %6805 = vmatprep.mubr.bf16.mxu0 0
        %6806 = vmatmul.mubr.bf16.gmra.mxu0 %v6771
        %v6807 = vpop.f32.mrf.mxu0
        %v6808 = vadd.f32 0.0, %v6807
        %v6809 = vpop.f32.mrf.mxu0
        %v6810 = vpop.f32.mrf.mxu0
        %v6811 = vpop.f32.mrf.mxu0
        %6812 = vdwg.mxu0
        %v6813 = vadd.f32 %v6731, %v6808
        %v6814 = vld [vmem:[%s5423] sm:$0x3]
        %v6815 = vpack.c.bf16 %v6814, %v6814
        %v6816 = vld [vmem:[%s6099] sm:$0xf]
        %v6817 = vld [vmem:[%s6099 + $0x4] sm:$0xf]
        %v6818 = vld [vmem:[%s6099 + $0x8] sm:$0xf]
        %v6819 = vld [vmem:[%s6099 + $0xc] sm:$0xf]
        %v6820 = vld [vmem:[%s6099 + $0x10] sm:$0xf]
        %v6821 = vld [vmem:[%s6099 + $0x14] sm:$0xf]
        %v6822 = vld [vmem:[%s6099 + $0x18] sm:$0xf]
        %v6823 = vld [vmem:[%s6099 + $0x1c] sm:$0xf]
        %v6832 = vunpack.c.l.b16 %v6816
        %v6833 = vunpack.c.l.b16 %v6817
        %v6834 = vunpack.c.l.b16 %v6818
        %v6835 = vunpack.c.l.b16 %v6819
        %v6836 = vunpack.c.l.b16 %v6820
        %v6837 = vunpack.c.l.b16 %v6821
        %v6838 = vunpack.c.l.b16 %v6822
        %v6839 = vunpack.c.l.b16 %v6823
        %v6840 = vpack.c.b16 %v6833, %v6832
        %v6841 = vpack.c.b16 %v6835, %v6834
        %v6842 = vpack.c.b16 %v6837, %v6836
        %v6843 = vpack.c.b16 %v6839, %v6838
        %v6849 = vsel %vm5907, %v6815, 0
        %6851 = vmatprep.subr.bf16.mxu0 0
        %6852 = vmatpush1.bf16.msra.mxu0 0
        %6853 = vmatprep.subr.bf16.mxu0 0
        %6854 = vmatpush1.bf16.msra.mxu0 0
        %6855 = vmatprep.subr.bf16.mxu0 0
        %6856 = vmatpush1.bf16.msra.mxu0 0
        %6857 = vmatprep.subr.bf16.mxu0 0
        %6858 = vmatpush1.bf16.msra.mxu0 0
        %6859 = vmatprep.subr.bf16.mxu0 0
        %6860 = vmatpush1.bf16.msra.mxu0 %v6843
        %6861 = vmatprep.subr.bf16.mxu0 0
        %6862 = vmatpush1.bf16.msra.mxu0 %v6842
        %6863 = vmatprep.subr.bf16.mxu0 0
        %6864 = vmatpush1.bf16.msra.mxu0 %v6841
        %6865 = vmatprep.subr.bf16.mxu0 0
        %6866 = vmatpush1.bf16.msra.mxu0 %v6840
        %6867 = vmatprep.subr.bf16.mxu0 0
        %6868 = vmatpush2.bf16.msra.mxu0 0
        %6869 = vmatprep.subr.bf16.mxu0 0
        %6870 = vmatpush2.bf16.msra.mxu0 0
        %6871 = vmatprep.subr.bf16.mxu0 0
        %6872 = vmatpush2.bf16.msra.mxu0 0
        %6873 = vmatprep.subr.bf16.mxu0 0
        %6874 = vmatpush2.bf16.msra.mxu0 0
        %6875 = vmatprep.subr.bf16.mxu0 0
        %6876 = vmatpush2.bf16.msra.mxu0 0
        %6877 = vmatprep.subr.bf16.mxu0 0
        %6878 = vmatpush2.bf16.msra.mxu0 0
        %6879 = vmatprep.subr.bf16.mxu0 0
        %6880 = vmatpush2.bf16.msra.mxu0 0
        %6881 = vmatprep.subr.bf16.mxu0 0
        %6882 = vmatpush2.bf16.msra.mxu0 0
        %6883 = vmatprep.mubr.bf16.mxu0 0
        %6884 = vmatmul.mubr.bf16.gmra.mxu0 %v6849
        %v6885 = vpop.f32.mrf.mxu0
        %v6886 = vadd.f32 0.0, %v6885
        %v6887 = vpop.f32.mrf.mxu0
        %v6888 = vpop.f32.mrf.mxu0
        %v6889 = vpop.f32.mrf.mxu0
        %6890 = vdwg.mxu0
        %v6891 = vadd.f32 %v6813, %v6886
        %v6892 = vld [vmem:[%s5423 + $0x1] sm:$0x3]
        %v6893 = vpack.c.bf16 %v6892, %v6892
        %v6894 = vld [vmem:[%s6178] sm:$0xf]
        %v6895 = vld [vmem:[%s6178 + $0x4] sm:$0xf]
        %v6896 = vld [vmem:[%s6178 + $0x8] sm:$0xf]
        %v6897 = vld [vmem:[%s6178 + $0xc] sm:$0xf]
        %v6898 = vld [vmem:[%s6178 + $0x10] sm:$0xf]
        %v6899 = vld [vmem:[%s6178 + $0x14] sm:$0xf]
        %v6900 = vld [vmem:[%s6178 + $0x18] sm:$0xf]
        %v6901 = vld [vmem:[%s6178 + $0x1c] sm:$0xf]
        %v6910 = vunpack.c.l.b16 %v6894
        %v6911 = vunpack.c.l.b16 %v6895
        %v6912 = vunpack.c.l.b16 %v6896
        %v6913 = vunpack.c.l.b16 %v6897
        %v6914 = vunpack.c.l.b16 %v6898
        %v6915 = vunpack.c.l.b16 %v6899
        %v6916 = vunpack.c.l.b16 %v6900
        %v6917 = vunpack.c.l.b16 %v6901
        %v6918 = vpack.c.b16 %v6911, %v6910
        %v6919 = vpack.c.b16 %v6913, %v6912
        %v6920 = vpack.c.b16 %v6915, %v6914
        %v6921 = vpack.c.b16 %v6917, %v6916
        %v6927 = vsel %vm5907, %v6893, 0
        %6929 = vmatprep.subr.bf16.mxu0 0
        %6930 = vmatpush1.bf16.msra.mxu0 0
        %6931 = vmatprep.subr.bf16.mxu0 0
        %6932 = vmatpush1.bf16.msra.mxu0 0
        %6933 = vmatprep.subr.bf16.mxu0 0
        %6934 = vmatpush1.bf16.msra.mxu0 0
        %6935 = vmatprep.subr.bf16.mxu0 0
        %6936 = vmatpush1.bf16.msra.mxu0 0
        %6937 = vmatprep.subr.bf16.mxu0 0
        %6938 = vmatpush1.bf16.msra.mxu0 %v6921
        %6939 = vmatprep.subr.bf16.mxu0 0
        %6940 = vmatpush1.bf16.msra.mxu0 %v6920
        %6941 = vmatprep.subr.bf16.mxu0 0
        %6942 = vmatpush1.bf16.msra.mxu0 %v6919
        %6943 = vmatprep.subr.bf16.mxu0 0
        %6944 = vmatpush1.bf16.msra.mxu0 %v6918
        %6945 = vmatprep.subr.bf16.mxu0 0
        %6946 = vmatpush2.bf16.msra.mxu0 0
        %6947 = vmatprep.subr.bf16.mxu0 0
        %6948 = vmatpush2.bf16.msra.mxu0 0
        %6949 = vmatprep.subr.bf16.mxu0 0
        %6950 = vmatpush2.bf16.msra.mxu0 0
        %6951 = vmatprep.subr.bf16.mxu0 0
        %6952 = vmatpush2.bf16.msra.mxu0 0
        %6953 = vmatprep.subr.bf16.mxu0 0
        %6954 = vmatpush2.bf16.msra.mxu0 0
        %6955 = vmatprep.subr.bf16.mxu0 0
        %6956 = vmatpush2.bf16.msra.mxu0 0
        %6957 = vmatprep.subr.bf16.mxu0 0
        %6958 = vmatpush2.bf16.msra.mxu0 0
        %6959 = vmatprep.subr.bf16.mxu0 0
        %6960 = vmatpush2.bf16.msra.mxu0 0
        %6961 = vmatprep.mubr.bf16.mxu0 0
        %6962 = vmatmul.mubr.bf16.gmra.mxu0 %v6927
        %v6963 = vpop.f32.mrf.mxu0
        %v6964 = vadd.f32 0.0, %v6963
        %v6965 = vpop.f32.mrf.mxu0
        %v6966 = vpop.f32.mrf.mxu0
        %v6967 = vpop.f32.mrf.mxu0
        %6968 = vdwg.mxu0
        %v6969 = vadd.f32 %v6891, %v6964
        %v6970 = vld [vmem:[%s5423 + $0x2] sm:$0x3]
        %v6971 = vpack.c.bf16 %v6970, %v6970
        %v6972 = vld [vmem:[%s6257] sm:$0xf]
        %v6973 = vld [vmem:[%s6257 + $0x4] sm:$0xf]
        %v6974 = vld [vmem:[%s6257 + $0x8] sm:$0xf]
        %v6975 = vld [vmem:[%s6257 + $0xc] sm:$0xf]
        %v6976 = vld [vmem:[%s6257 + $0x10] sm:$0xf]
        %v6977 = vld [vmem:[%s6257 + $0x14] sm:$0xf]
        %v6978 = vld [vmem:[%s6257 + $0x18] sm:$0xf]
        %v6979 = vld [vmem:[%s6257 + $0x1c] sm:$0xf]
        %v6988 = vunpack.c.l.b16 %v6972
        %v6989 = vunpack.c.l.b16 %v6973
        %v6990 = vunpack.c.l.b16 %v6974
        %v6991 = vunpack.c.l.b16 %v6975
        %v6992 = vunpack.c.l.b16 %v6976
        %v6993 = vunpack.c.l.b16 %v6977
        %v6994 = vunpack.c.l.b16 %v6978
        %v6995 = vunpack.c.l.b16 %v6979
        %v6996 = vpack.c.b16 %v6989, %v6988
        %v6997 = vpack.c.b16 %v6991, %v6990
        %v6998 = vpack.c.b16 %v6993, %v6992
        %v6999 = vpack.c.b16 %v6995, %v6994
        %v7005 = vsel %vm5907, %v6971, 0
        %7007 = vmatprep.subr.bf16.mxu0 0
        %7008 = vmatpush1.bf16.msra.mxu0 0
        %7009 = vmatprep.subr.bf16.mxu0 0
        %7010 = vmatpush1.bf16.msra.mxu0 0
        %7011 = vmatprep.subr.bf16.mxu0 0
        %7012 = vmatpush1.bf16.msra.mxu0 0
        %7013 = vmatprep.subr.bf16.mxu0 0
        %7014 = vmatpush1.bf16.msra.mxu0 0
        %7015 = vmatprep.subr.bf16.mxu0 0
        %7016 = vmatpush1.bf16.msra.mxu0 %v6999
        %7017 = vmatprep.subr.bf16.mxu0 0
        %7018 = vmatpush1.bf16.msra.mxu0 %v6998
        %7019 = vmatprep.subr.bf16.mxu0 0
        %7020 = vmatpush1.bf16.msra.mxu0 %v6997
        %7021 = vmatprep.subr.bf16.mxu0 0
        %7022 = vmatpush1.bf16.msra.mxu0 %v6996
        %7023 = vmatprep.subr.bf16.mxu0 0
        %7024 = vmatpush2.bf16.msra.mxu0 0
        %7025 = vmatprep.subr.bf16.mxu0 0
        %7026 = vmatpush2.bf16.msra.mxu0 0
        %7027 = vmatprep.subr.bf16.mxu0 0
        %7028 = vmatpush2.bf16.msra.mxu0 0
        %7029 = vmatprep.subr.bf16.mxu0 0
        %7030 = vmatpush2.bf16.msra.mxu0 0
        %7031 = vmatprep.subr.bf16.mxu0 0
        %7032 = vmatpush2.bf16.msra.mxu0 0
        %7033 = vmatprep.subr.bf16.mxu0 0
        %7034 = vmatpush2.bf16.msra.mxu0 0
        %7035 = vmatprep.subr.bf16.mxu0 0
        %7036 = vmatpush2.bf16.msra.mxu0 0
        %7037 = vmatprep.subr.bf16.mxu0 0
        %7038 = vmatpush2.bf16.msra.mxu0 0
        %7039 = vmatprep.mubr.bf16.mxu0 0
        %7040 = vmatmul.mubr.bf16.gmra.mxu0 %v7005
        %v7041 = vpop.f32.mrf.mxu0
        %v7042 = vadd.f32 0.0, %v7041
        %v7043 = vpop.f32.mrf.mxu0
        %v7044 = vpop.f32.mrf.mxu0
        %v7045 = vpop.f32.mrf.mxu0
        %7046 = vdwg.mxu0
        %v7047 = vadd.f32 %v6969, %v7042
        %v7048 = vld [vmem:[%s5860] sm:$0x3]
        %v7049 = vpack.c.bf16 %v7048, %v7048
        %v7050 = vld [vmem:[%s6336] sm:$0xf]
        %v7051 = vld [vmem:[%s6336 + $0x4] sm:$0xf]
        %v7052 = vld [vmem:[%s6336 + $0x8] sm:$0xf]
        %v7053 = vld [vmem:[%s6336 + $0xc] sm:$0xf]
        %v7054 = vld [vmem:[%s6336 + $0x10] sm:$0xf]
        %v7055 = vld [vmem:[%s6336 + $0x14] sm:$0xf]
        %v7056 = vld [vmem:[%s6336 + $0x18] sm:$0xf]
        %v7057 = vld [vmem:[%s6336 + $0x1c] sm:$0xf]
        %v7066 = vunpack.c.l.b16 %v7050
        %v7067 = vunpack.c.l.b16 %v7051
        %v7068 = vunpack.c.l.b16 %v7052
        %v7069 = vunpack.c.l.b16 %v7053
        %v7070 = vunpack.c.l.b16 %v7054
        %v7071 = vunpack.c.l.b16 %v7055
        %v7072 = vunpack.c.l.b16 %v7056
        %v7073 = vunpack.c.l.b16 %v7057
        %v7074 = vpack.c.b16 %v7067, %v7066
        %v7075 = vpack.c.b16 %v7069, %v7068
        %v7076 = vpack.c.b16 %v7071, %v7070
        %v7077 = vpack.c.b16 %v7073, %v7072
        %v7083 = vsel %vm5907, %v7049, 0
        %7085 = vmatprep.subr.bf16.mxu0 0
        %7086 = vmatpush1.bf16.msra.mxu0 0
        %7087 = vmatprep.subr.bf16.mxu0 0
        %7088 = vmatpush1.bf16.msra.mxu0 0
        %7089 = vmatprep.subr.bf16.mxu0 0
        %7090 = vmatpush1.bf16.msra.mxu0 0
        %7091 = vmatprep.subr.bf16.mxu0 0
        %7092 = vmatpush1.bf16.msra.mxu0 0
        %7093 = vmatprep.subr.bf16.mxu0 0
        %7094 = vmatpush1.bf16.msra.mxu0 %v7077
        %7095 = vmatprep.subr.bf16.mxu0 0
        %7096 = vmatpush1.bf16.msra.mxu0 %v7076
        %7097 = vmatprep.subr.bf16.mxu0 0
        %7098 = vmatpush1.bf16.msra.mxu0 %v7075
        %7099 = vmatprep.subr.bf16.mxu0 0
        %7100 = vmatpush1.bf16.msra.mxu0 %v7074
        %7101 = vmatprep.subr.bf16.mxu0 0
        %7102 = vmatpush2.bf16.msra.mxu0 0
        %7103 = vmatprep.subr.bf16.mxu0 0
        %7104 = vmatpush2.bf16.msra.mxu0 0
        %7105 = vmatprep.subr.bf16.mxu0 0
        %7106 = vmatpush2.bf16.msra.mxu0 0
        %7107 = vmatprep.subr.bf16.mxu0 0
        %7108 = vmatpush2.bf16.msra.mxu0 0
        %7109 = vmatprep.subr.bf16.mxu0 0
        %7110 = vmatpush2.bf16.msra.mxu0 0
        %7111 = vmatprep.subr.bf16.mxu0 0
        %7112 = vmatpush2.bf16.msra.mxu0 0
        %7113 = vmatprep.subr.bf16.mxu0 0
        %7114 = vmatpush2.bf16.msra.mxu0 0
        %7115 = vmatprep.subr.bf16.mxu0 0
        %7116 = vmatpush2.bf16.msra.mxu0 0
        %7117 = vmatprep.mubr.bf16.mxu0 0
        %7118 = vmatmul.mubr.bf16.gmra.mxu0 %v7083
        %v7119 = vpop.f32.mrf.mxu0
        %v7120 = vadd.f32 0.0, %v7119
        %v7121 = vpop.f32.mrf.mxu0
        %v7122 = vpop.f32.mrf.mxu0
        %v7123 = vpop.f32.mrf.mxu0
        %7124 = vdwg.mxu0
        %v7125 = vadd.f32 %v7047, %v7120
        %v7126 = vld [vmem:[%s5860 + $0x1] sm:$0x3]
        %v7127 = vpack.c.bf16 %v7126, %v7126
        %v7128 = vld [vmem:[%s6415] sm:$0xf]
        %v7129 = vld [vmem:[%s6415 + $0x4] sm:$0xf]
        %v7130 = vld [vmem:[%s6415 + $0x8] sm:$0xf]
        %v7131 = vld [vmem:[%s6415 + $0xc] sm:$0xf]
        %v7132 = vld [vmem:[%s6415 + $0x10] sm:$0xf]
        %v7133 = vld [vmem:[%s6415 + $0x14] sm:$0xf]
        %v7134 = vld [vmem:[%s6415 + $0x18] sm:$0xf]
        %v7135 = vld [vmem:[%s6415 + $0x1c] sm:$0xf]
        %v7144 = vunpack.c.l.b16 %v7128
        %v7145 = vunpack.c.l.b16 %v7129
        %v7146 = vunpack.c.l.b16 %v7130
        %v7147 = vunpack.c.l.b16 %v7131
        %v7148 = vunpack.c.l.b16 %v7132
        %v7149 = vunpack.c.l.b16 %v7133
        %v7150 = vunpack.c.l.b16 %v7134
        %v7151 = vunpack.c.l.b16 %v7135
        %v7152 = vpack.c.b16 %v7145, %v7144
        %v7153 = vpack.c.b16 %v7147, %v7146
        %v7154 = vpack.c.b16 %v7149, %v7148
        %v7155 = vpack.c.b16 %v7151, %v7150
        %v7161 = vsel %vm5907, %v7127, 0
        %7163 = vmatprep.subr.bf16.mxu0 0
        %7164 = vmatpush1.bf16.msra.mxu0 0
        %7165 = vmatprep.subr.bf16.mxu0 0
        %7166 = vmatpush1.bf16.msra.mxu0 0
        %7167 = vmatprep.subr.bf16.mxu0 0
        %7168 = vmatpush1.bf16.msra.mxu0 0
        %7169 = vmatprep.subr.bf16.mxu0 0
        %7170 = vmatpush1.bf16.msra.mxu0 0
        %7171 = vmatprep.subr.bf16.mxu0 0
        %7172 = vmatpush1.bf16.msra.mxu0 %v7155
        %7173 = vmatprep.subr.bf16.mxu0 0
        %7174 = vmatpush1.bf16.msra.mxu0 %v7154
        %7175 = vmatprep.subr.bf16.mxu0 0
        %7176 = vmatpush1.bf16.msra.mxu0 %v7153
        %7177 = vmatprep.subr.bf16.mxu0 0
        %7178 = vmatpush1.bf16.msra.mxu0 %v7152
        %7179 = vmatprep.subr.bf16.mxu0 0
        %7180 = vmatpush2.bf16.msra.mxu0 0
        %7181 = vmatprep.subr.bf16.mxu0 0
        %7182 = vmatpush2.bf16.msra.mxu0 0
        %7183 = vmatprep.subr.bf16.mxu0 0
        %7184 = vmatpush2.bf16.msra.mxu0 0
        %7185 = vmatprep.subr.bf16.mxu0 0
        %7186 = vmatpush2.bf16.msra.mxu0 0
        %7187 = vmatprep.subr.bf16.mxu0 0
        %7188 = vmatpush2.bf16.msra.mxu0 0
        %7189 = vmatprep.subr.bf16.mxu0 0
        %7190 = vmatpush2.bf16.msra.mxu0 0
        %7191 = vmatprep.subr.bf16.mxu0 0
        %7192 = vmatpush2.bf16.msra.mxu0 0
        %7193 = vmatprep.subr.bf16.mxu0 0
        %7194 = vmatpush2.bf16.msra.mxu0 0
        %7195 = vmatprep.mubr.bf16.mxu0 0
        %7196 = vmatmul.mubr.bf16.gmra.mxu0 %v7161
        %v7197 = vpop.f32.mrf.mxu0
        %v7198 = vadd.f32 0.0, %v7197
        %v7199 = vpop.f32.mrf.mxu0
        %v7200 = vpop.f32.mrf.mxu0
        %v7201 = vpop.f32.mrf.mxu0
        %7202 = vdwg.mxu0
        %v7203 = vadd.f32 %v7125, %v7198
        %v7204 = vld [vmem:[%s5860 + $0x2] sm:$0x3]
        %v7205 = vpack.c.bf16 %v7204, %v7204
        %v7206 = vld [vmem:[%s6494] sm:$0xf]
        %v7207 = vld [vmem:[%s6494 + $0x4] sm:$0xf]
        %v7208 = vld [vmem:[%s6494 + $0x8] sm:$0xf]
        %v7209 = vld [vmem:[%s6494 + $0xc] sm:$0xf]
        %v7210 = vld [vmem:[%s6494 + $0x10] sm:$0xf]
        %v7211 = vld [vmem:[%s6494 + $0x14] sm:$0xf]
        %v7212 = vld [vmem:[%s6494 + $0x18] sm:$0xf]
        %v7213 = vld [vmem:[%s6494 + $0x1c] sm:$0xf]
        %v7222 = vunpack.c.l.b16 %v7206
        %v7223 = vunpack.c.l.b16 %v7207
        %v7224 = vunpack.c.l.b16 %v7208
        %v7225 = vunpack.c.l.b16 %v7209
        %v7226 = vunpack.c.l.b16 %v7210
        %v7227 = vunpack.c.l.b16 %v7211
        %v7228 = vunpack.c.l.b16 %v7212
        %v7229 = vunpack.c.l.b16 %v7213
        %v7230 = vpack.c.b16 %v7223, %v7222
        %v7231 = vpack.c.b16 %v7225, %v7224
        %v7232 = vpack.c.b16 %v7227, %v7226
        %v7233 = vpack.c.b16 %v7229, %v7228
        %v7239 = vsel %vm5907, %v7205, 0
        %7241 = vmatprep.subr.bf16.mxu0 0
        %7242 = vmatpush1.bf16.msra.mxu0 0
        %7243 = vmatprep.subr.bf16.mxu0 0
        %7244 = vmatpush1.bf16.msra.mxu0 0
        %7245 = vmatprep.subr.bf16.mxu0 0
        %7246 = vmatpush1.bf16.msra.mxu0 0
        %7247 = vmatprep.subr.bf16.mxu0 0
        %7248 = vmatpush1.bf16.msra.mxu0 0
        %7249 = vmatprep.subr.bf16.mxu0 0
        %7250 = vmatpush1.bf16.msra.mxu0 %v7233
        %7251 = vmatprep.subr.bf16.mxu0 0
        %7252 = vmatpush1.bf16.msra.mxu0 %v7232
        %7253 = vmatprep.subr.bf16.mxu0 0
        %7254 = vmatpush1.bf16.msra.mxu0 %v7231
        %7255 = vmatprep.subr.bf16.mxu0 0
        %7256 = vmatpush1.bf16.msra.mxu0 %v7230
        %7257 = vmatprep.subr.bf16.mxu0 0
        %7258 = vmatpush2.bf16.msra.mxu0 0
        %7259 = vmatprep.subr.bf16.mxu0 0
        %7260 = vmatpush2.bf16.msra.mxu0 0
        %7261 = vmatprep.subr.bf16.mxu0 0
        %7262 = vmatpush2.bf16.msra.mxu0 0
        %7263 = vmatprep.subr.bf16.mxu0 0
        %7264 = vmatpush2.bf16.msra.mxu0 0
        %7265 = vmatprep.subr.bf16.mxu0 0
        %7266 = vmatpush2.bf16.msra.mxu0 0
        %7267 = vmatprep.subr.bf16.mxu0 0
        %7268 = vmatpush2.bf16.msra.mxu0 0
        %7269 = vmatprep.subr.bf16.mxu0 0
        %7270 = vmatpush2.bf16.msra.mxu0 0
        %7271 = vmatprep.subr.bf16.mxu0 0
        %7272 = vmatpush2.bf16.msra.mxu0 0
        %7273 = vmatprep.mubr.bf16.mxu0 0
        %7274 = vmatmul.mubr.bf16.gmra.mxu0 %v7239
        %v7275 = vpop.f32.mrf.mxu0
        %v7276 = vadd.f32 0.0, %v7275
        %v7277 = vpop.f32.mrf.mxu0
        %v7278 = vpop.f32.mrf.mxu0
        %v7279 = vpop.f32.mrf.mxu0
        %7280 = vdwg.mxu0
        %v7281 = vadd.f32 %v7203, %v7276
        %v7282 = vld [vmem:[%s6] sm:$0x1]
        %v7284 = vlaneseq
        %v7285 = vshrl.u32 %v7284, 7
        %v7286 = vsub.s32 0, %v7285
        %v7287 = vrot.slane %v7282, %v7286
        %v7289 = vadd.f32 %v7281, %v7287
        %v7290 = vmax.f32 %v7289, 0.0
        %s7291 = scalar_lea.vmem [#allocation4], 2
        %7292 = vst.msk [vmem:[%s7291] sm:$0x3] %vm6580, %v7290
        %v7293 = vld [vmem:[#allocation4] sm:$0x1]
        %v7294 = vpack.c.bf16 %v7293, %v7293
        %v7295 = vld [vmem:[%s7] sm:$0xf]
        %v7296 = vld [vmem:[%s7 + $0x4] sm:$0xf]
        %v7297 = vld [vmem:[%s7 + $0x8] sm:$0xf]
        %v7298 = vld [vmem:[%s7 + $0xc] sm:$0xf]
        %v7299 = vld [vmem:[%s7 + $0x10] sm:$0xf]
        %v7300 = vld [vmem:[%s7 + $0x14] sm:$0xf]
        %v7301 = vld [vmem:[%s7 + $0x18] sm:$0xf]
        %v7302 = vld [vmem:[%s7 + $0x1c] sm:$0xf]
        %v7303 = vld [vmem:[#allocation4 + $0x1] sm:$0x1]
        %v7304 = vpack.c.bf16 %v7303, %v7303
        %s7305 = scalar_lea.vmem %s7, 32
        %v7306 = vld [vmem:[%s7305] sm:$0xf]
        %v7307 = vld [vmem:[%s7305 + $0x4] sm:$0xf]
        %v7308 = vld [vmem:[%s7305 + $0x8] sm:$0xf]
        %v7309 = vld [vmem:[%s7305 + $0xc] sm:$0xf]
        %v7310 = vld [vmem:[%s7305 + $0x10] sm:$0xf]
        %v7311 = vld [vmem:[%s7305 + $0x14] sm:$0xf]
        %v7312 = vld [vmem:[%s7305 + $0x18] sm:$0xf]
        %v7313 = vld [vmem:[%s7305 + $0x1c] sm:$0xf]
        %v7322 = vunpack.c.l.b16 %v7306
        %v7323 = vunpack.c.l.b16 %v7307
        %v7324 = vunpack.c.l.b16 %v7308
        %v7325 = vunpack.c.l.b16 %v7309
        %v7326 = vunpack.c.l.b16 %v7310
        %v7327 = vunpack.c.l.b16 %v7311
        %v7328 = vunpack.c.l.b16 %v7312
        %v7329 = vunpack.c.l.b16 %v7313
        %v7330 = vpack.c.b16 %v7323, %v7322
        %v7331 = vpack.c.b16 %v7325, %v7324
        %v7332 = vpack.c.b16 %v7327, %v7326
        %v7333 = vpack.c.b16 %v7329, %v7328
        %v7339 = vsel %vm5907, %v7304, 0
        %7341 = vmatprep.subr.bf16.mxu0 0
        %7342 = vmatpush1.bf16.msra.mxu0 0
        %7343 = vmatprep.subr.bf16.mxu0 0
        %7344 = vmatpush1.bf16.msra.mxu0 0
        %7345 = vmatprep.subr.bf16.mxu0 0
        %7346 = vmatpush1.bf16.msra.mxu0 0
        %7347 = vmatprep.subr.bf16.mxu0 0
        %7348 = vmatpush1.bf16.msra.mxu0 0
        %7349 = vmatprep.subr.bf16.mxu0 0
        %7350 = vmatpush1.bf16.msra.mxu0 %v7333
        %7351 = vmatprep.subr.bf16.mxu0 0
        %7352 = vmatpush1.bf16.msra.mxu0 %v7332
        %7353 = vmatprep.subr.bf16.mxu0 0
        %7354 = vmatpush1.bf16.msra.mxu0 %v7331
        %7355 = vmatprep.subr.bf16.mxu0 0
        %7356 = vmatpush1.bf16.msra.mxu0 %v7330
        %7357 = vmatprep.subr.bf16.mxu0 0
        %7358 = vmatpush2.bf16.msra.mxu0 0
        %7359 = vmatprep.subr.bf16.mxu0 0
        %7360 = vmatpush2.bf16.msra.mxu0 0
        %7361 = vmatprep.subr.bf16.mxu0 0
        %7362 = vmatpush2.bf16.msra.mxu0 0
        %7363 = vmatprep.subr.bf16.mxu0 0
        %7364 = vmatpush2.bf16.msra.mxu0 0
        %7365 = vmatprep.subr.bf16.mxu0 0
        %7366 = vmatpush2.bf16.msra.mxu0 0
        %7367 = vmatprep.subr.bf16.mxu0 0
        %7368 = vmatpush2.bf16.msra.mxu0 0
        %7369 = vmatprep.subr.bf16.mxu0 0
        %7370 = vmatpush2.bf16.msra.mxu0 0
        %7371 = vmatprep.subr.bf16.mxu0 0
        %7372 = vmatpush2.bf16.msra.mxu0 0
        %7373 = vmatprep.mubr.bf16.mxu0 0
        %7374 = vmatmul.mubr.bf16.gmra.mxu0 %v7339
        %v7375 = vpop.f32.mrf.mxu0
        %v7376 = vadd.f32 0.0, %v7375
        %v7377 = vpop.f32.mrf.mxu0
        %v7378 = vpop.f32.mrf.mxu0
        %v7379 = vpop.f32.mrf.mxu0
        %7380 = vdwg.mxu0
        %v7389 = vunpack.c.l.b16 %v7295
        %v7390 = vunpack.c.l.b16 %v7296
        %v7391 = vunpack.c.l.b16 %v7297
        %v7392 = vunpack.c.l.b16 %v7298
        %v7393 = vunpack.c.l.b16 %v7299
        %v7394 = vunpack.c.l.b16 %v7300
        %v7395 = vunpack.c.l.b16 %v7301
        %v7396 = vunpack.c.l.b16 %v7302
        %v7397 = vpack.c.b16 %v7390, %v7389
        %v7398 = vpack.c.b16 %v7392, %v7391
        %v7399 = vpack.c.b16 %v7394, %v7393
        %v7400 = vpack.c.b16 %v7396, %v7395
        %v7406 = vsel %vm5907, %v7294, 0
        %7408 = vmatprep.subr.bf16.mxu0 0
        %7409 = vmatpush1.bf16.msra.mxu0 0
        %7410 = vmatprep.subr.bf16.mxu0 0
        %7411 = vmatpush1.bf16.msra.mxu0 0
        %7412 = vmatprep.subr.bf16.mxu0 0
        %7413 = vmatpush1.bf16.msra.mxu0 0
        %7414 = vmatprep.subr.bf16.mxu0 0
        %7415 = vmatpush1.bf16.msra.mxu0 0
        %7416 = vmatprep.subr.bf16.mxu0 0
        %7417 = vmatpush1.bf16.msra.mxu0 %v7400
        %7418 = vmatprep.subr.bf16.mxu0 0
        %7419 = vmatpush1.bf16.msra.mxu0 %v7399
        %7420 = vmatprep.subr.bf16.mxu0 0
        %7421 = vmatpush1.bf16.msra.mxu0 %v7398
        %7422 = vmatprep.subr.bf16.mxu0 0
        %7423 = vmatpush1.bf16.msra.mxu0 %v7397
        %7424 = vmatprep.subr.bf16.mxu0 0
        %7425 = vmatpush2.bf16.msra.mxu0 0
        %7426 = vmatprep.subr.bf16.mxu0 0
        %7427 = vmatpush2.bf16.msra.mxu0 0
        %7428 = vmatprep.subr.bf16.mxu0 0
        %7429 = vmatpush2.bf16.msra.mxu0 0
        %7430 = vmatprep.subr.bf16.mxu0 0
        %7431 = vmatpush2.bf16.msra.mxu0 0
        %7432 = vmatprep.subr.bf16.mxu0 0
        %7433 = vmatpush2.bf16.msra.mxu0 0
        %7434 = vmatprep.subr.bf16.mxu0 0
        %7435 = vmatpush2.bf16.msra.mxu0 0
        %7436 = vmatprep.subr.bf16.mxu0 0
        %7437 = vmatpush2.bf16.msra.mxu0 0
        %7438 = vmatprep.subr.bf16.mxu0 0
        %7439 = vmatpush2.bf16.msra.mxu0 0
        %7440 = vmatprep.mubr.bf16.mxu0 0
        %7441 = vmatmul.mubr.bf16.gmra.mxu0 %v7406
        %v7442 = vpop.f32.mrf.mxu0
        %v7443 = vadd.f32 %v7376, %v7442
        %v7444 = vpop.f32.mrf.mxu0
        %v7445 = vpop.f32.mrf.mxu0
        %v7446 = vpop.f32.mrf.mxu0
        %7447 = vdwg.mxu0
        %v7448 = vld [vmem:[%s7291] sm:$0x1]
        %v7449 = vpack.c.bf16 %v7448, %v7448
        %s7450 = scalar_lea.vmem %s7, 64
        %v7451 = vld [vmem:[%s7450] sm:$0xf]
        %v7452 = vld [vmem:[%s7450 + $0x4] sm:$0xf]
        %v7453 = vld [vmem:[%s7450 + $0x8] sm:$0xf]
        %v7454 = vld [vmem:[%s7450 + $0xc] sm:$0xf]
        %v7455 = vld [vmem:[%s7450 + $0x10] sm:$0xf]
        %v7456 = vld [vmem:[%s7450 + $0x14] sm:$0xf]
        %v7457 = vld [vmem:[%s7450 + $0x18] sm:$0xf]
        %v7458 = vld [vmem:[%s7450 + $0x1c] sm:$0xf]
        %v7467 = vunpack.c.l.b16 %v7451
        %v7468 = vunpack.c.l.b16 %v7452
        %v7469 = vunpack.c.l.b16 %v7453
        %v7470 = vunpack.c.l.b16 %v7454
        %v7471 = vunpack.c.l.b16 %v7455
        %v7472 = vunpack.c.l.b16 %v7456
        %v7473 = vunpack.c.l.b16 %v7457
        %v7474 = vunpack.c.l.b16 %v7458
        %v7475 = vpack.c.b16 %v7468, %v7467
        %v7476 = vpack.c.b16 %v7470, %v7469
        %v7477 = vpack.c.b16 %v7472, %v7471
        %v7478 = vpack.c.b16 %v7474, %v7473
        %v7484 = vsel %vm5907, %v7449, 0
        %7486 = vmatprep.subr.bf16.mxu0 0
        %7487 = vmatpush1.bf16.msra.mxu0 0
        %7488 = vmatprep.subr.bf16.mxu0 0
        %7489 = vmatpush1.bf16.msra.mxu0 0
        %7490 = vmatprep.subr.bf16.mxu0 0
        %7491 = vmatpush1.bf16.msra.mxu0 0
        %7492 = vmatprep.subr.bf16.mxu0 0
        %7493 = vmatpush1.bf16.msra.mxu0 0
        %7494 = vmatprep.subr.bf16.mxu0 0
        %7495 = vmatpush1.bf16.msra.mxu0 %v7478
        %7496 = vmatprep.subr.bf16.mxu0 0
        %7497 = vmatpush1.bf16.msra.mxu0 %v7477
        %7498 = vmatprep.subr.bf16.mxu0 0
        %7499 = vmatpush1.bf16.msra.mxu0 %v7476
        %7500 = vmatprep.subr.bf16.mxu0 0
        %7501 = vmatpush1.bf16.msra.mxu0 %v7475
        %7502 = vmatprep.subr.bf16.mxu0 0
        %7503 = vmatpush2.bf16.msra.mxu0 0
        %7504 = vmatprep.subr.bf16.mxu0 0
        %7505 = vmatpush2.bf16.msra.mxu0 0
        %7506 = vmatprep.subr.bf16.mxu0 0
        %7507 = vmatpush2.bf16.msra.mxu0 0
        %7508 = vmatprep.subr.bf16.mxu0 0
        %7509 = vmatpush2.bf16.msra.mxu0 0
        %7510 = vmatprep.subr.bf16.mxu0 0
        %7511 = vmatpush2.bf16.msra.mxu0 0
        %7512 = vmatprep.subr.bf16.mxu0 0
        %7513 = vmatpush2.bf16.msra.mxu0 0
        %7514 = vmatprep.subr.bf16.mxu0 0
        %7515 = vmatpush2.bf16.msra.mxu0 0
        %7516 = vmatprep.subr.bf16.mxu0 0
        %7517 = vmatpush2.bf16.msra.mxu0 0
        %7518 = vmatprep.mubr.bf16.mxu0 0
        %7519 = vmatmul.mubr.bf16.gmra.mxu0 %v7484
        %v7520 = vpop.f32.mrf.mxu0
        %v7521 = vadd.f32 0.0, %v7520
        %v7522 = vpop.f32.mrf.mxu0
        %v7523 = vpop.f32.mrf.mxu0
        %v7524 = vpop.f32.mrf.mxu0
        %7525 = vdwg.mxu0
        %v7526 = vadd.f32 %v7443, %v7521
        %v7527 = vld [vmem:[%s7291 + $0x1] sm:$0x1]
        %v7528 = vpack.c.bf16 %v7527, %v7527
        %s7529 = scalar_lea.vmem %s7, 96
        %v7530 = vld [vmem:[%s7529] sm:$0xf]
        %v7531 = vld [vmem:[%s7529 + $0x4] sm:$0xf]
        %v7532 = vld [vmem:[%s7529 + $0x8] sm:$0xf]
        %v7533 = vld [vmem:[%s7529 + $0xc] sm:$0xf]
        %v7534 = vld [vmem:[%s7529 + $0x10] sm:$0xf]
        %v7535 = vld [vmem:[%s7529 + $0x14] sm:$0xf]
        %v7536 = vld [vmem:[%s7529 + $0x18] sm:$0xf]
        %v7537 = vld [vmem:[%s7529 + $0x1c] sm:$0xf]
        %v7546 = vunpack.c.l.b16 %v7530
        %v7547 = vunpack.c.l.b16 %v7531
        %v7548 = vunpack.c.l.b16 %v7532
        %v7549 = vunpack.c.l.b16 %v7533
        %v7550 = vunpack.c.l.b16 %v7534
        %v7551 = vunpack.c.l.b16 %v7535
        %v7552 = vunpack.c.l.b16 %v7536
        %v7553 = vunpack.c.l.b16 %v7537
        %v7554 = vpack.c.b16 %v7547, %v7546
        %v7555 = vpack.c.b16 %v7549, %v7548
        %v7556 = vpack.c.b16 %v7551, %v7550
        %v7557 = vpack.c.b16 %v7553, %v7552
        %v7563 = vsel %vm5907, %v7528, 0
        %7565 = vmatprep.subr.bf16.mxu0 0
        %7566 = vmatpush1.bf16.msra.mxu0 0
        %7567 = vmatprep.subr.bf16.mxu0 0
        %7568 = vmatpush1.bf16.msra.mxu0 0
        %7569 = vmatprep.subr.bf16.mxu0 0
        %7570 = vmatpush1.bf16.msra.mxu0 0
        %7571 = vmatprep.subr.bf16.mxu0 0
        %7572 = vmatpush1.bf16.msra.mxu0 0
        %7573 = vmatprep.subr.bf16.mxu0 0
        %7574 = vmatpush1.bf16.msra.mxu0 %v7557
        %7575 = vmatprep.subr.bf16.mxu0 0
        %7576 = vmatpush1.bf16.msra.mxu0 %v7556
        %7577 = vmatprep.subr.bf16.mxu0 0
        %7578 = vmatpush1.bf16.msra.mxu0 %v7555
        %7579 = vmatprep.subr.bf16.mxu0 0
        %7580 = vmatpush1.bf16.msra.mxu0 %v7554
        %7581 = vmatprep.subr.bf16.mxu0 0
        %7582 = vmatpush2.bf16.msra.mxu0 0
        %7583 = vmatprep.subr.bf16.mxu0 0
        %7584 = vmatpush2.bf16.msra.mxu0 0
        %7585 = vmatprep.subr.bf16.mxu0 0
        %7586 = vmatpush2.bf16.msra.mxu0 0
        %7587 = vmatprep.subr.bf16.mxu0 0
        %7588 = vmatpush2.bf16.msra.mxu0 0
        %7589 = vmatprep.subr.bf16.mxu0 0
        %7590 = vmatpush2.bf16.msra.mxu0 0
        %7591 = vmatprep.subr.bf16.mxu0 0
        %7592 = vmatpush2.bf16.msra.mxu0 0
        %7593 = vmatprep.subr.bf16.mxu0 0
        %7594 = vmatpush2.bf16.msra.mxu0 0
        %7595 = vmatprep.subr.bf16.mxu0 0
        %7596 = vmatpush2.bf16.msra.mxu0 0
        %7597 = vmatprep.mubr.bf16.mxu0 0
        %7598 = vmatmul.mubr.bf16.gmra.mxu0 %v7563
        %v7599 = vpop.f32.mrf.mxu0
        %v7600 = vadd.f32 0.0, %v7599
        %v7601 = vpop.f32.mrf.mxu0
        %v7602 = vpop.f32.mrf.mxu0
        %v7603 = vpop.f32.mrf.mxu0
        %7604 = vdwg.mxu0
        %v7605 = vadd.f32 %v7526, %v7600
        %v7606 = vld [vmem:[%s8] sm:$0x1]
        %v7607 = vadd.f32 %v7605, %v7606
        %v7608 = vmax.f32 %v7607, 0.0
        %v7609 = vpack.c.bf16 %v7608, %v7608
        %v7610 = vld [vmem:[%s9] sm:$0xff]
        %v7611 = vld [vmem:[%s9 + $0x8] sm:$0xff]
        %v7612 = vld [vmem:[%s9 + $0x10] sm:$0xff]
        %v7613 = vld [vmem:[%s9 + $0x18] sm:$0xff]
        %v7614 = vld [vmem:[%s9 + $0x20] sm:$0xff]
        %v7615 = vld [vmem:[%s9 + $0x28] sm:$0xff]
        %v7616 = vld [vmem:[%s9 + $0x30] sm:$0xff]
        %v7617 = vld [vmem:[%s9 + $0x38] sm:$0xff]
        %v7618 = vld [vmem:[%s9 + $0x40] sm:$0xff]
        %v7619 = vld [vmem:[%s9 + $0x48] sm:$0xff]
        %v7620 = vld [vmem:[%s9 + $0x50] sm:$0xff]
        %v7621 = vld [vmem:[%s9 + $0x58] sm:$0xff]
        %v7622 = vld [vmem:[%s9 + $0x60] sm:$0xff]
        %v7623 = vld [vmem:[%s9 + $0x68] sm:$0xff]
        %v7624 = vld [vmem:[%s9 + $0x70] sm:$0xff]
        %v7625 = vld [vmem:[%s9 + $0x78] sm:$0xff]
        %v7626 = vld [vmem:[%s10] sm:$0x3]
        %v7643 = vunpack.c.l.b16 %v7610
        %v7644 = vunpack.c.h.b16 %v7610
        %v7645 = vunpack.c.l.b16 %v7611
        %v7646 = vunpack.c.h.b16 %v7611
        %v7647 = vunpack.c.l.b16 %v7612
        %v7648 = vunpack.c.h.b16 %v7612
        %v7649 = vunpack.c.l.b16 %v7613
        %v7650 = vunpack.c.h.b16 %v7613
        %v7651 = vunpack.c.l.b16 %v7614
        %v7652 = vunpack.c.h.b16 %v7614
        %v7653 = vunpack.c.l.b16 %v7615
        %v7654 = vunpack.c.h.b16 %v7615
        %v7655 = vunpack.c.l.b16 %v7616
        %v7656 = vunpack.c.h.b16 %v7616
        %v7657 = vunpack.c.l.b16 %v7617
        %v7658 = vunpack.c.h.b16 %v7617
        %v7659 = vunpack.c.l.b16 %v7618
        %v7660 = vunpack.c.h.b16 %v7618
        %v7661 = vunpack.c.l.b16 %v7619
        %v7662 = vunpack.c.h.b16 %v7619
        %v7663 = vunpack.c.l.b16 %v7620
        %v7664 = vunpack.c.h.b16 %v7620
        %v7665 = vunpack.c.l.b16 %v7621
        %v7666 = vunpack.c.h.b16 %v7621
        %v7667 = vunpack.c.l.b16 %v7622
        %v7668 = vunpack.c.h.b16 %v7622
        %v7669 = vunpack.c.l.b16 %v7623
        %v7670 = vunpack.c.h.b16 %v7623
        %v7671 = vunpack.c.l.b16 %v7624
        %v7672 = vunpack.c.h.b16 %v7624
        %v7673 = vunpack.c.l.b16 %v7625
        %v7674 = vunpack.c.h.b16 %v7625
        %v7675 = vpack.c.b16 %v7645, %v7643
        %v7676 = vpack.c.b16 %v7646, %v7644
        %v7677 = vpack.c.b16 %v7649, %v7647
        %v7678 = vpack.c.b16 %v7650, %v7648
        %v7679 = vpack.c.b16 %v7653, %v7651
        %v7680 = vpack.c.b16 %v7654, %v7652
        %v7681 = vpack.c.b16 %v7657, %v7655
        %v7682 = vpack.c.b16 %v7658, %v7656
        %v7683 = vpack.c.b16 %v7661, %v7659
        %v7684 = vpack.c.b16 %v7662, %v7660
        %v7685 = vpack.c.b16 %v7665, %v7663
        %v7686 = vpack.c.b16 %v7666, %v7664
        %v7687 = vpack.c.b16 %v7669, %v7667
        %v7688 = vpack.c.b16 %v7670, %v7668
        %v7689 = vpack.c.b16 %v7673, %v7671
        %v7690 = vpack.c.b16 %v7674, %v7672
        %v7708 = vlaneseq
        %v7709 = vshrl.u32 %v7708, 7
        %v7710 = vsub.s32 0, %v7709
        %v7711 = vrot.slane %v7626, %v7710
        %v7712 = vlaneseq
        %v7713 = vshrl.u32 %v7712, 7
        %v7714 = vsub.s32 1, %v7713
        %v7715 = vrot.slane %v7626, %v7714
        %7718 = vmatprep.subr.bf16.mxu0 %v7690
        %7719 = vmatpush1.bf16.msra.mxu0 %v7689
        %7720 = vmatprep.subr.bf16.mxu0 %v7688
        %7721 = vmatpush1.bf16.msra.mxu0 %v7687
        %7722 = vmatprep.subr.bf16.mxu0 %v7686
        %7723 = vmatpush1.bf16.msra.mxu0 %v7685
        %7724 = vmatprep.subr.bf16.mxu0 %v7684
        %7725 = vmatpush1.bf16.msra.mxu0 %v7683
        %7726 = vmatprep.subr.bf16.mxu0 %v7682
        %7727 = vmatpush1.bf16.msra.mxu0 %v7681
        %7728 = vmatprep.subr.bf16.mxu0 %v7680
        %7729 = vmatpush1.bf16.msra.mxu0 %v7679
        %7730 = vmatprep.subr.bf16.mxu0 %v7678
        %7731 = vmatpush1.bf16.msra.mxu0 %v7677
        %7732 = vmatprep.subr.bf16.mxu0 %v7676
        %7733 = vmatpush1.bf16.msra.mxu0 %v7675
        %7734 = vmatprep.subr.bf16.mxu0 0
        %7735 = vmatpush2.bf16.msra.mxu0 0
        %7736 = vmatprep.subr.bf16.mxu0 0
        %7737 = vmatpush2.bf16.msra.mxu0 0
        %7738 = vmatprep.subr.bf16.mxu0 0
        %7739 = vmatpush2.bf16.msra.mxu0 0
        %7740 = vmatprep.subr.bf16.mxu0 0
        %7741 = vmatpush2.bf16.msra.mxu0 0
        %7742 = vmatprep.subr.bf16.mxu0 0
        %7743 = vmatpush2.bf16.msra.mxu0 0
        %7744 = vmatprep.subr.bf16.mxu0 0
        %7745 = vmatpush2.bf16.msra.mxu0 0
        %7746 = vmatprep.subr.bf16.mxu0 0
        %7747 = vmatpush2.bf16.msra.mxu0 0
        %7748 = vmatprep.subr.bf16.mxu0 0
        %7749 = vmatpush2.bf16.msra.mxu0 0
        %7750 = vmatprep.mubr.bf16.mxu0 0
        %7751 = vmatmul.mubr.bf16.gmra.mxu0 %v7609
        %v7752 = vpop.f32.mrf.mxu0
        %v7753 = vadd.f32 %v7711, %v7752
        %v7754 = vpop.f32.mrf.mxu0
        %v7755 = vadd.f32 %v7715, %v7754
        %v7756 = vpop.f32.mrf.mxu0
        %v7757 = vpop.f32.mrf.mxu0
        %7758 = vdwg.mxu0
        %v7759 = vmax.f32 %v7753, 0.0
        %v7760 = vmax.f32 %v7755, 0.0
        %v7761 = vpack.c.bf16 %v7759, %v7759
        %v7762 = vpack.c.bf16 %v7760, %v7760
        %v7763 = vld [vmem:[%s11] sm:$0xf]
        %v7764 = vld [vmem:[%s11 + $0x4] sm:$0xf]
        %v7765 = vld [vmem:[%s11 + $0x8] sm:$0xf]
        %v7766 = vld [vmem:[%s11 + $0xc] sm:$0xf]
        %v7767 = vld [vmem:[%s11 + $0x10] sm:$0xf]
        %v7768 = vld [vmem:[%s11 + $0x14] sm:$0xf]
        %v7769 = vld [vmem:[%s11 + $0x18] sm:$0xf]
        %v7770 = vld [vmem:[%s11 + $0x1c] sm:$0xf]
        %v7771 = vld [vmem:[%s11 + $0x20] sm:$0xf]
        %v7772 = vld [vmem:[%s11 + $0x24] sm:$0xf]
        %v7773 = vld [vmem:[%s11 + $0x28] sm:$0xf]
        %v7774 = vld [vmem:[%s11 + $0x2c] sm:$0xf]
        %v7775 = vld [vmem:[%s11 + $0x30] sm:$0xf]
        %v7776 = vld [vmem:[%s11 + $0x34] sm:$0xf]
        %v7777 = vld [vmem:[%s11 + $0x38] sm:$0xf]
        %v7778 = vld [vmem:[%s11 + $0x3c] sm:$0xf]
        %v7779 = vld [vmem:[%s11 + $0x40] sm:$0xf]
        %v7780 = vld [vmem:[%s11 + $0x44] sm:$0xf]
        %v7781 = vld [vmem:[%s11 + $0x48] sm:$0xf]
        %v7782 = vld [vmem:[%s11 + $0x4c] sm:$0xf]
        %v7783 = vld [vmem:[%s11 + $0x50] sm:$0xf]
        %v7784 = vld [vmem:[%s11 + $0x54] sm:$0xf]
        %v7785 = vld [vmem:[%s11 + $0x58] sm:$0xf]
        %v7786 = vld [vmem:[%s11 + $0x5c] sm:$0xf]
        %v7787 = vld [vmem:[%s11 + $0x60] sm:$0xf]
        %v7788 = vld [vmem:[%s11 + $0x64] sm:$0xf]
        %v7789 = vld [vmem:[%s11 + $0x68] sm:$0xf]
        %v7790 = vld [vmem:[%s11 + $0x6c] sm:$0xf]
        %v7791 = vld [vmem:[%s11 + $0x70] sm:$0xf]
        %v7792 = vld [vmem:[%s11 + $0x74] sm:$0xf]
        %v7793 = vld [vmem:[%s11 + $0x78] sm:$0xf]
        %v7794 = vld [vmem:[%s11 + $0x7c] sm:$0xf]
        %v7795 = vld [vmem:[%s12] sm:$0x1]
        %v7828 = vunpack.c.l.b16 %v7763
        %v7829 = vunpack.c.l.b16 %v7764
        %v7830 = vunpack.c.l.b16 %v7765
        %v7831 = vunpack.c.l.b16 %v7766
        %v7832 = vunpack.c.l.b16 %v7767
        %v7833 = vunpack.c.l.b16 %v7768
        %v7834 = vunpack.c.l.b16 %v7769
        %v7835 = vunpack.c.l.b16 %v7770
        %v7836 = vunpack.c.l.b16 %v7771
        %v7837 = vunpack.c.l.b16 %v7772
        %v7838 = vunpack.c.l.b16 %v7773
        %v7839 = vunpack.c.l.b16 %v7774
        %v7840 = vunpack.c.l.b16 %v7775
        %v7841 = vunpack.c.l.b16 %v7776
        %v7842 = vunpack.c.l.b16 %v7777
        %v7843 = vunpack.c.l.b16 %v7778
        %v7844 = vunpack.c.l.b16 %v7779
        %v7845 = vunpack.c.l.b16 %v7780
        %v7846 = vunpack.c.l.b16 %v7781
        %v7847 = vunpack.c.l.b16 %v7782
        %v7848 = vunpack.c.l.b16 %v7783
        %v7849 = vunpack.c.l.b16 %v7784
        %v7850 = vunpack.c.l.b16 %v7785
        %v7851 = vunpack.c.l.b16 %v7786
        %v7852 = vunpack.c.l.b16 %v7787
        %v7853 = vunpack.c.l.b16 %v7788
        %v7854 = vunpack.c.l.b16 %v7789
        %v7855 = vunpack.c.l.b16 %v7790
        %v7856 = vunpack.c.l.b16 %v7791
        %v7857 = vunpack.c.l.b16 %v7792
        %v7858 = vunpack.c.l.b16 %v7793
        %v7859 = vunpack.c.l.b16 %v7794
        %v7860 = vpack.c.b16 %v7829, %v7828
        %v7861 = vpack.c.b16 %v7831, %v7830
        %v7862 = vpack.c.b16 %v7833, %v7832
        %v7863 = vpack.c.b16 %v7835, %v7834
        %v7864 = vpack.c.b16 %v7837, %v7836
        %v7865 = vpack.c.b16 %v7839, %v7838
        %v7866 = vpack.c.b16 %v7841, %v7840
        %v7867 = vpack.c.b16 %v7843, %v7842
        %v7868 = vpack.c.b16 %v7845, %v7844
        %v7869 = vpack.c.b16 %v7847, %v7846
        %v7870 = vpack.c.b16 %v7849, %v7848
        %v7871 = vpack.c.b16 %v7851, %v7850
        %v7872 = vpack.c.b16 %v7853, %v7852
        %v7873 = vpack.c.b16 %v7855, %v7854
        %v7874 = vpack.c.b16 %v7857, %v7856
        %v7875 = vpack.c.b16 %v7859, %v7858
        %7892 = vmatprep.subr.bf16.mxu0 0
        %7893 = vmatpush1.bf16.msra.mxu0 %v7867
        %7894 = vmatprep.subr.bf16.mxu0 0
        %7895 = vmatpush1.bf16.msra.mxu0 %v7866
        %7896 = vmatprep.subr.bf16.mxu0 0
        %7897 = vmatpush1.bf16.msra.mxu0 %v7865
        %7898 = vmatprep.subr.bf16.mxu0 0
        %7899 = vmatpush1.bf16.msra.mxu0 %v7864
        %7900 = vmatprep.subr.bf16.mxu0 0
        %7901 = vmatpush1.bf16.msra.mxu0 %v7863
        %7902 = vmatprep.subr.bf16.mxu0 0
        %7903 = vmatpush1.bf16.msra.mxu0 %v7862
        %7904 = vmatprep.subr.bf16.mxu0 0
        %7905 = vmatpush1.bf16.msra.mxu0 %v7861
        %7906 = vmatprep.subr.bf16.mxu0 0
        %7907 = vmatpush1.bf16.msra.mxu0 %v7860
        %7908 = vmatprep.subr.bf16.mxu0 0
        %7909 = vmatpush2.bf16.msra.mxu0 %v7875
        %7910 = vmatprep.subr.bf16.mxu0 0
        %7911 = vmatpush2.bf16.msra.mxu0 %v7874
        %7912 = vmatprep.subr.bf16.mxu0 0
        %7913 = vmatpush2.bf16.msra.mxu0 %v7873
        %7914 = vmatprep.subr.bf16.mxu0 0
        %7915 = vmatpush2.bf16.msra.mxu0 %v7872
        %7916 = vmatprep.subr.bf16.mxu0 0
        %7917 = vmatpush2.bf16.msra.mxu0 %v7871
        %7918 = vmatprep.subr.bf16.mxu0 0
        %7919 = vmatpush2.bf16.msra.mxu0 %v7870
        %7920 = vmatprep.subr.bf16.mxu0 0
        %7921 = vmatpush2.bf16.msra.mxu0 %v7869
        %7922 = vmatprep.subr.bf16.mxu0 0
        %7923 = vmatpush2.bf16.msra.mxu0 %v7868
        %7924 = vmatprep.mubr.bf16.mxu0 %v7762
        %7925 = vmatmul.mubr.bf16.gmra.mxu0 %v7761
        %v7926 = vpop.f32.mrf.mxu0
        %v7927 = vadd.f32 %v7795, %v7926
        %v7928 = vpop.f32.mrf.mxu0
        %v7929 = vpop.f32.mrf.mxu0
        %v7930 = vpop.f32.mrf.mxu0
        %7931 = vdwg.mxu0
        %7932 = vst [vmem:[%s432] sm:$0x1] %v7927
        %s7933 = sand.u32 %s313, 1
        %s7934 = scalar_lea.sflag [#allocation6], %s7933
        %s7935 = sand.u32 %s313, 1
        %s7936 = scalar_lea.vmem [#allocation5], %s7935
        // Predicated region
        $region73: #{_lambda_.1} parent=71 // pred_check
          %p7937 = pneg %p323
        $region74: #{_lambda_.1} parent=71 // pred_check_branch
          %7939 = sbr.rel (%p7937) target = $region76
        $region75: #{_lambda_.1} parent=71 // pred_region
          %s7941 = ssub.s32 16, 16
          %7942 = vsyncadd %s7934, %s7941
          %s7943 = smul.addr %s27, 16
          %s7944 = scalar_lea.hbm %s13, %s7943
          %s7946 = sshll.u32 %s7936, 4
          %s7947 = int_to_ptr.vmem [resolvable:$true] %s7946
          %7949 = dma.vmem_to_hbm [thread:$0]  %s7947, 16, %s7944, %s7934
        $region76: #{_lambda_.1} parent=71 // pred_fallthru
          _
      $region72: #{_lambda_.1} parent=5 // pred_fallthru
        _
      %p7950 = scmp.le.s32.totalorder 2, %s22
      // Predicated region
      $region77: #{_lambda_.1} parent=5 // pred_check
        %p7951 = pneg %p7950
      $region78: #{_lambda_.1} parent=5 // pred_check_branch
        %7953 = sbr.rel (%p7951) target = $region80
      $region79: #{_lambda_.1} parent=5 // pred_region
        %s7954 = ssub.s32 %s22, 2
        // Predicated region
        $region81: #{_lambda_.1} parent=79 // pred_check
          %p7955 = pneg %p329
        $region82: #{_lambda_.1} parent=79 // pred_check_branch
          %7957 = sbr.rel (%p7955) target = $region84
        $region83: #{_lambda_.1} parent=79 // pred_region
          %s7958 = sand.u32 %s314, 1
          %s7959 = scalar_lea.sflag [#allocation6], %s7958
          %s7960 = sand.u32 %s314, 1
          %s7961 = scalar_lea.vmem [#allocation5], %s7960
          %7962 = dma.done %s7959, 16
        $region84: #{_lambda_.1} parent=79 // pred_fallthru
          _
      $region80: #{_lambda_.1} parent=5 // pred_fallthru
        _
    $region6: #{_lambda_.1} parent=1 // loop_footer
      %s26 = sadd.s32 1, %s22
    $region7: #{_lambda_.1} parent=1 // loop_footer_branch
      %21 = sbr.rel target = $region3
    $region8: #{_lambda_.1} parent=1 // loop_exit
      _
    %7963 = vsyncpa [#allocation6], 1
    %s7964 = scalar_lea.sflag [#allocation6], 1
    %7965 = vsyncpa %s7964, 1

</llo_original>
